<compile_context>
chip_gen: v7x
topology: tpu7x:2x2x1
jax: 0.10.0
libtpu: 0.0.40
codegen_flags: <defaults>
</compile_context>

<pallas_src>
import functools
import math

import jax
import jax.numpy as jnp
from jax import lax
from jax.experimental import pallas as pl
from jax.experimental.pallas import tpu as pltpu


def _vmem():
    return pl.BlockSpec(memory_space=pltpu.MemorySpace.VMEM)


# ----------------------------- kernel ----------------------------------------


def _rnn_encoder_kernel(x_ref, wpk_ref, out_ref, buf, fwd_buf, bwd_buf, *,
                        T, B, H, L, dins, offs):
    # x_ref   : (B, T)    raw scalar features (embedding folded into layer 0)
    # wpk_ref : (R, 3H)   packed weights; per (layer, dir): [wi | wh | bi,bhn]
    # out_ref : (B, T*H)  mean-over-direction hiddens, row-major (b, t, h)
    # buf     : (T*B, 2H) inter-layer activations, time-major rows (t*B + b)
    # fwd_buf : (B, T*H)  last-layer forward hiddens
    # bwd_buf : (B, T*H)  last-layer backward hiddens
    H3 = 3 * H
    x = x_ref[...]                                      # (B, T)

    def load_dir(l, d):
        din = dins[l]
        o_wi, o_wh, o_b = offs[l][d]
        wi = wpk_ref[o_wi:o_wi + din, :]                # (din, 3H)
        wh = wpk_ref[o_wh:o_wh + H, :]                  # (H, 3H)
        bi = wpk_ref[o_b:o_b + 1, :]                    # (1, 3H) folded biases
        bhn = wpk_ref[o_b + 1:o_b + 2, 0:H]             # (1, H)  b_hn
        return wi, wh, bi, bhn

    def step(h, gi_t, wh, bhn):
        gh = jnp.dot(h, wh, preferred_element_type=jnp.float32)     # (B, 3H)
        rz = jax.nn.sigmoid(gi_t[:, 0:2 * H] + gh[:, 0:2 * H])      # one EUP call
        r = rz[:, 0:H]
        z = rz[:, H:2 * H]
        n = jnp.tanh(gi_t[:, 2 * H:] + r * (gh[:, 2 * H:] + bhn))
        return (1.0 - z) * n + z * h

    for l in range(L):
        last = (l == L - 1)
        wi_f, wh_f, bi_f, bhn_f = load_dir(l, 0)
        wi_b, wh_b, bi_b, bhn_b = load_dir(l, 1)
        # Pre-broadcast once per layer (JAX does not CSE broadcast_in_dim).
        bhn_f = jnp.broadcast_to(bhn_f, (B, H))
        bhn_b = jnp.broadcast_to(bhn_b, (B, H))

        if l == 0:
            # Embedding folded into the input projection (rank-1 update):
            # gi(t,b) = x[b,t] * (w_emb @ Wi_cat) + (b_emb @ Wi_cat + bi_cat).
            wi_fb = jnp.broadcast_to(wi_f, (B, H3))
            bi_fb = jnp.broadcast_to(bi_f, (B, H3))
            wi_bb = jnp.broadcast_to(wi_b, (B, H3))
            bi_bb = jnp.broadcast_to(bi_b, (B, H3))
        else:
            # One big MXU-friendly matmul per direction, hoisted out of the loop.
            act = buf[...]                               # (T*B, 2H)
            gi_f_all = jnp.dot(act, wi_f, preferred_element_type=jnp.float32) + bi_f
            gi_b_all = jnp.dot(act, wi_b, preferred_element_type=jnp.float32) + bi_b

        h_f = jnp.zeros((B, H), jnp.float32)
        h_b = jnp.zeros((B, H), jnp.float32)
        # Fully unrolled (T is small & static); the two independent recurrences
        # are interleaved so their matmul/EUP latencies overlap.
        for t in range(T):
            tb = T - 1 - t
            if l == 0:
                gi_f_t = x[:, t:t + 1] * wi_fb + bi_fb          # (B, 3H)
                gi_b_t = x[:, tb:tb + 1] * wi_bb + bi_bb
            else:
                gi_f_t = gi_f_all[t * B:(t + 1) * B, :]
                gi_b_t = gi_b_all[tb * B:(tb + 1) * B, :]
            h_f = step(h_f, gi_f_t, wh_f, bhn_f)
            h_b = step(h_b, gi_b_t, wh_b, bhn_b)
            if last:
                fwd_buf[:, t * H:(t + 1) * H] = h_f
                bwd_buf[:, tb * H:(tb + 1) * H] = h_b
            else:
                buf[t * B:(t + 1) * B, 0:H] = h_f
                buf[tb * B:(tb + 1) * B, H:2 * H] = h_b

    # Fused mean over directions, one lane-dense (B, T*H) store.
    out_ref[...] = ((fwd_buf[...] + bwd_buf[...]) * 0.5).astype(out_ref.dtype)


# ----------------------------- wrappers ---------------------------------------


def rnn_encoder_forward(x, pack, meta):
    # x: (B, F) -> (B, F, d_model)
    B, F = x.shape
    T = F
    H = meta["H"]
    L = meta["L"]
    kernel = functools.partial(
        _rnn_encoder_kernel, T=T, B=B, H=H, L=L,
        dins=meta["dins"], offs=meta["offs"])
    out2d = pl.pallas_call(
        kernel,
        out_shape=jax.ShapeDtypeStruct((B, T * H), jnp.float32),
        in_specs=[_vmem(), _vmem()],
        out_specs=_vmem(),
        scratch_shapes=[
            pltpu.VMEM((T * B, 2 * H), jnp.float32),   # inter-layer activations
            pltpu.VMEM((B, T * H), jnp.float32),       # last-layer fwd hiddens
            pltpu.VMEM((B, T * H), jnp.float32),       # last-layer bwd hiddens
        ],
    )(x, pack)
    return out2d.reshape(B, T, H)


# ------------------------ parameter init & fusion -----------------------------


def init_params(key, d_model, num_layers):
    """PyTorch-layout parameters (per-gate), used by the pure-JAX reference."""
    def uniform(k, shape, scale):
        return jax.random.uniform(k, shape, jnp.float32, -scale, scale)

    keys = iter(jax.random.split(key, 4 + num_layers * 2 * 12))
    params = {
        # nn.Linear(1, d_model): stored transposed -> (1, D)
        "w_emb": uniform(next(keys), (1, d_model), 1.0),
        "b_emb": uniform(next(keys), (1, d_model), 1.0),
        "layers": [],
    }
    k_rnn = 1.0 / math.sqrt(d_model)
    for l in range(num_layers):
        d_in = d_model if l == 0 else 2 * d_model
        layer = {}
        for direction in ("fwd", "bwd"):
            p = {}
            for name in ("w_ir", "w_iz", "w_in"):
                p[name] = uniform(next(keys), (d_in, d_model), k_rnn)
            for name in ("w_hr", "w_hz", "w_hn"):
                p[name] = uniform(next(keys), (d_model, d_model), k_rnn)
            for name in ("b_ir", "b_iz", "b_in", "b_hr", "b_hz", "b_hn"):
                p[name] = uniform(next(keys), (1, d_model), k_rnn)
            layer[direction] = p
        params["layers"].append(layer)
    return params


def _pad_rows(a, mult=8):
    pad = (-a.shape[0]) % mult
    if pad:
        a = jnp.concatenate([a, jnp.zeros((pad, a.shape[1]), a.dtype)], axis=0)
    return a


def fuse_params(params, num_layers):
    """Pre-fuse gate weights/biases, fold embedding into layer 0, and pack
    everything into a single lane-aligned (R, 3H) array (8-row aligned blocks)."""
    w_emb = params["w_emb"]      # (1, D)
    b_emb = params["b_emb"]      # (1, D)
    H = params["layers"][0]["fwd"]["w_hr"].shape[0]
    blocks = []
    offs = []
    dins = []
    row_off = 0
    for l in range(num_layers):
        din = 1 if l == 0 else 2 * H
        dins.append(din)
        dir_offs = []
        for dname in ("fwd", "bwd"):
            p = params["layers"][l][dname]
            wi_cat = jnp.concatenate([p["w_ir"], p["w_iz"], p["w_in"]], axis=1)
            wh_cat = jnp.concatenate([p["w_hr"], p["w_hz"], p["w_hn"]], axis=1)
            bi_cat = jnp.concatenate(
                [p["b_ir"] + p["b_hr"], p["b_iz"] + p["b_hz"], p["b_in"]], axis=1)
            if l == 0:
                wi = w_emb @ wi_cat                      # (1, 3H): emb folded in
                bi = b_emb @ wi_cat + bi_cat             # (1, 3H)
            else:
                wi = wi_cat                              # (2H, 3H)
                bi = bi_cat                              # (1, 3H)
            bhn_pad = jnp.concatenate(
                [p["b_hn"], jnp.zeros((1, 2 * H), jnp.float32)], axis=1)
            wi_blk = _pad_rows(wi)
            wh_blk = _pad_rows(wh_cat)
            b_blk = _pad_rows(jnp.concatenate([bi, bhn_pad], axis=0))
            o_wi = row_off
            o_wh = o_wi + wi_blk.shape[0]
            o_b = o_wh + wh_blk.shape[0]
            row_off = o_b + b_blk.shape[0]
            dir_offs.append((o_wi, o_wh, o_b))
            blocks.extend([wi_blk, wh_blk, b_blk])
        offs.append(tuple(dir_offs))
    pack = jnp.concatenate(blocks, axis=0)
    meta = {"H": H, "L": num_layers, "dins": tuple(dins), "offs": tuple(offs)}
    return pack, meta


# --------------------------- pure-JAX reference --------------------------------


def _gru_dir_ref(x_tbd, p):
    B = x_tbd.shape[1]
    H = p["w_hr"].shape[0]

    def step(h, x_t):
        r = jax.nn.sigmoid(x_t @ p["w_ir"] + p["b_ir"] + h @ p["w_hr"] + p["b_hr"])
        z = jax.nn.sigmoid(x_t @ p["w_iz"] + p["b_iz"] + h @ p["w_hz"] + p["b_hz"])
        n = jnp.tanh(x_t @ p["w_in"] + p["b_in"] + r * (h @ p["w_hn"] + p["b_hn"]))
        h_new = (1.0 - z) * n + z * h
        return h_new, h_new

    _, ys = lax.scan(step, jnp.zeros((B, H), jnp.float32), x_tbd)
    return ys


def rnn_encoder_ref(x, params, num_layers):
    emb = x[:, :, None] * params["w_emb"][0][None, None, :] + params["b_emb"][0]
    layer_in = jnp.transpose(emb, (1, 0, 2))
    fwd = bwd = None
    for l in range(num_layers):
        fwd = _gru_dir_ref(layer_in, params["layers"][l]["fwd"])
        bwd = jnp.flip(_gru_dir_ref(jnp.flip(layer_in, 0),
                                    params["layers"][l]["bwd"]), 0)
        layer_in = jnp.concatenate([fwd, bwd], -1)
    return jnp.transpose(0.5 * (fwd + bwd), (1, 0, 2))


# ----------------------------------- main --------------------------------------


if __name__ == "__main__":
    batch, feature_dim, d_model, num_layers = 2, 16, 32, 2

    key = jax.random.PRNGKey(0)
    k_params, k_x = jax.random.split(key)
    params = init_params(k_params, d_model, num_layers)
    pack, meta = fuse_params(params, num_layers)
    x = jax.random.normal(k_x, (batch, feature_dim), jnp.float32)

    fwd_fn = jax.jit(lambda xx, pk: rnn_encoder_forward(xx, pk, meta))
    out = jax.block_until_ready(fwd_fn(x, pack))

    assert out.shape == (batch, feature_dim, d_model), out.shape
    assert bool(jnp.all(jnp.isfinite(out)))

    ref = rnn_encoder_ref(x, params, num_layers)
    assert bool(jnp.allclose(out, ref, atol=2e-3, rtol=2e-3)), (
        float(jnp.max(jnp.abs(out - ref))))

    print("KERNEL_OK")
</pallas_src>

<mosaic_0001>
module attributes {stable_mosaic.version = 11 : i64} {
  func.func @_rnn_encoder_kernel(%arg0: memref<2x16xf32, #tpu.memory_space<vmem>>, %arg1: memref<304x96xf32, #tpu.memory_space<vmem>>, %arg2: memref<2x512xf32, #tpu.memory_space<vmem>>, %arg3: memref<32x64xf32, #tpu.memory_space<vmem>>, %arg4: memref<2x512xf32, #tpu.memory_space<vmem>>, %arg5: memref<2x512xf32, #tpu.memory_space<vmem>>) attributes {dimension_semantics = [], scalar_prefetch = 0 : i64, scratch_operands = 3 : i64, tpu.core_type = #tpu.core_type<tc>} {
    %c0 = arith.constant 0 : index
    %c0_0 = arith.constant 0 : index
    %0 = vector.load %arg0[%c0, %c0_0] : memref<2x16xf32, #tpu.memory_space<vmem>>, vector<2x16xf32>
    %c0_1 = arith.constant 0 : index
    %c0_2 = arith.constant 0 : index
    %1 = vector.load %arg1[%c0_1, %c0_2] : memref<304x96xf32, #tpu.memory_space<vmem>>, vector<1x96xf32>
    %c8 = arith.constant 8 : index
    %c0_3 = arith.constant 0 : index
    %2 = vector.load %arg1[%c8, %c0_3] : memref<304x96xf32, #tpu.memory_space<vmem>>, vector<32x96xf32>
    %c40 = arith.constant 40 : index
    %c0_4 = arith.constant 0 : index
    %3 = vector.load %arg1[%c40, %c0_4] : memref<304x96xf32, #tpu.memory_space<vmem>>, vector<1x96xf32>
    %c41 = arith.constant 41 : index
    %c0_5 = arith.constant 0 : index
    %4 = vector.load %arg1[%c41, %c0_5] : memref<304x96xf32, #tpu.memory_space<vmem>>, vector<1x32xf32>
    %c48 = arith.constant 48 : index
    %c0_6 = arith.constant 0 : index
    %5 = vector.load %arg1[%c48, %c0_6] : memref<304x96xf32, #tpu.memory_space<vmem>>, vector<1x96xf32>
    %c56 = arith.constant 56 : index
    %c0_7 = arith.constant 0 : index
    %6 = vector.load %arg1[%c56, %c0_7] : memref<304x96xf32, #tpu.memory_space<vmem>>, vector<32x96xf32>
    %c88 = arith.constant 88 : index
    %c0_8 = arith.constant 0 : index
    %7 = vector.load %arg1[%c88, %c0_8] : memref<304x96xf32, #tpu.memory_space<vmem>>, vector<1x96xf32>
    %c89 = arith.constant 89 : index
    %c0_9 = arith.constant 0 : index
    %8 = vector.load %arg1[%c89, %c0_9] : memref<304x96xf32, #tpu.memory_space<vmem>>, vector<1x32xf32>
    %9 = vector.shape_cast %4 : vector<1x32xf32> to vector<1x32xf32>
    %10 = vector.broadcast %9 : vector<1x32xf32> to vector<2x32xf32>
    %11 = vector.shape_cast %8 : vector<1x32xf32> to vector<1x32xf32>
    %12 = vector.broadcast %11 : vector<1x32xf32> to vector<2x32xf32>
    %13 = vector.shape_cast %1 : vector<1x96xf32> to vector<1x96xf32>
    %14 = vector.broadcast %13 : vector<1x96xf32> to vector<2x96xf32>
    %15 = vector.shape_cast %3 : vector<1x96xf32> to vector<1x96xf32>
    %16 = vector.broadcast %15 : vector<1x96xf32> to vector<2x96xf32>
    %17 = vector.shape_cast %5 : vector<1x96xf32> to vector<1x96xf32>
    %18 = vector.broadcast %17 : vector<1x96xf32> to vector<2x96xf32>
    %19 = vector.shape_cast %7 : vector<1x96xf32> to vector<1x96xf32>
    %20 = vector.broadcast %19 : vector<1x96xf32> to vector<2x96xf32>
    %cst = arith.constant 0.000000e+00 : f32
    %21 = vector.broadcast %cst : f32 to vector<2x32xf32>
    %cst_10 = arith.constant 0.000000e+00 : f32
    %22 = vector.broadcast %cst_10 : f32 to vector<2x32xf32>
    %23 = vector.extract_strided_slice %0 {offsets = [0, 0], sizes = [2, 1], strides = [1, 1]} : vector<2x16xf32> to vector<2x1xf32>
    %24 = vector.broadcast %23 : vector<2x1xf32> to vector<2x96xf32>
    %25 = arith.mulf %24, %14 : vector<2x96xf32>
    %26 = arith.addf %25, %16 : vector<2x96xf32>
    %27 = vector.extract_strided_slice %0 {offsets = [0, 15], sizes = [2, 1], strides = [1, 1]} : vector<2x16xf32> to vector<2x1xf32>
    %28 = vector.broadcast %27 : vector<2x1xf32> to vector<2x96xf32>
    %29 = arith.mulf %28, %18 : vector<2x96xf32>
    %30 = arith.addf %29, %20 : vector<2x96xf32>
    %cst_11 = arith.constant dense<0.000000e+00> : vector<2x96xf32>
    %31 = tpu.matmul %21, %2, %cst_11 {dimension_numbers = #tpu.dot_dimension_numbers<[1], [0], [0], [1], [0, 0, 1, 1], [], []>} : vector<2x32xf32>, vector<32x96xf32>, vector<2x96xf32> -> vector<2x96xf32>
    %32 = vector.extract_strided_slice %26 {offsets = [0, 0], sizes = [2, 64], strides = [1, 1]} : vector<2x96xf32> to vector<2x64xf32>
    %33 = vector.extract_strided_slice %31 {offsets = [0, 0], sizes = [2, 64], strides = [1, 1]} : vector<2x96xf32> to vector<2x64xf32>
    %34 = arith.addf %32, %33 : vector<2x64xf32>
    %35 = arith.negf %34 : vector<2x64xf32>
    %36 = math.exp %35 : vector<2x64xf32>
    %cst_12 = arith.constant 1.000000e+00 : f32
    %37 = vector.broadcast %cst_12 : f32 to vector<2x64xf32>
    %38 = arith.addf %37, %36 : vector<2x64xf32>
    %39 = arith.divf %37, %38 : vector<2x64xf32>
    %40 = vector.extract_strided_slice %39 {offsets = [0, 0], sizes = [2, 32], strides = [1, 1]} : vector<2x64xf32> to vector<2x32xf32>
    %41 = vector.extract_strided_slice %39 {offsets = [0, 32], sizes = [2, 32], strides = [1, 1]} : vector<2x64xf32> to vector<2x32xf32>
    %42 = vector.extract_strided_slice %26 {offsets = [0, 64], sizes = [2, 32], strides = [1, 1]} : vector<2x96xf32> to vector<2x32xf32>
    %43 = vector.extract_strided_slice %31 {offsets = [0, 64], sizes = [2, 32], strides = [1, 1]} : vector<2x96xf32> to vector<2x32xf32>
    %44 = arith.addf %43, %10 : vector<2x32xf32>
    %45 = arith.mulf %40, %44 : vector<2x32xf32>
    %46 = arith.addf %42, %45 : vector<2x32xf32>
    %47 = math.tanh %46 : vector<2x32xf32>
    %cst_13 = arith.constant 1.000000e+00 : f32
    %48 = vector.broadcast %cst_13 : f32 to vector<2x32xf32>
    %49 = arith.subf %48, %41 : vector<2x32xf32>
    %50 = arith.mulf %49, %47 : vector<2x32xf32>
    %51 = arith.mulf %41, %21 : vector<2x32xf32>
    %52 = arith.addf %50, %51 : vector<2x32xf32>
    %cst_14 = arith.constant dense<0.000000e+00> : vector<2x96xf32>
    %53 = tpu.matmul %22, %6, %cst_14 {dimension_numbers = #tpu.dot_dimension_numbers<[1], [0], [0], [1], [0, 0, 1, 1], [], []>} : vector<2x32xf32>, vector<32x96xf32>, vector<2x96xf32> -> vector<2x96xf32>
    %54 = vector.extract_strided_slice %30 {offsets = [0, 0], sizes = [2, 64], strides = [1, 1]} : vector<2x96xf32> to vector<2x64xf32>
    %55 = vector.extract_strided_slice %53 {offsets = [0, 0], sizes = [2, 64], strides = [1, 1]} : vector<2x96xf32> to vector<2x64xf32>
    %56 = arith.addf %54, %55 : vector<2x64xf32>
    %57 = arith.negf %56 : vector<2x64xf32>
    %58 = math.exp %57 : vector<2x64xf32>
    %cst_15 = arith.constant 1.000000e+00 : f32
    %59 = vector.broadcast %cst_15 : f32 to vector<2x64xf32>
    %60 = arith.addf %59, %58 : vector<2x64xf32>
    %61 = arith.divf %59, %60 : vector<2x64xf32>
    %62 = vector.extract_strided_slice %61 {offsets = [0, 0], sizes = [2, 32], strides = [1, 1]} : vector<2x64xf32> to vector<2x32xf32>
    %63 = vector.extract_strided_slice %61 {offsets = [0, 32], sizes = [2, 32], strides = [1, 1]} : vector<2x64xf32> to vector<2x32xf32>
    %64 = vector.extract_strided_slice %30 {offsets = [0, 64], sizes = [2, 32], strides = [1, 1]} : vector<2x96xf32> to vector<2x32xf32>
    %65 = vector.extract_strided_slice %53 {offsets = [0, 64], sizes = [2, 32], strides = [1, 1]} : vector<2x96xf32> to vector<2x32xf32>
    %66 = arith.addf %65, %12 : vector<2x32xf32>
    %67 = arith.mulf %62, %66 : vector<2x32xf32>
    %68 = arith.addf %64, %67 : vector<2x32xf32>
    %69 = math.tanh %68 : vector<2x32xf32>
    %cst_16 = arith.constant 1.000000e+00 : f32
    %70 = vector.broadcast %cst_16 : f32 to vector<2x32xf32>
    %71 = arith.subf %70, %63 : vector<2x32xf32>
    %72 = arith.mulf %71, %69 : vector<2x32xf32>
    %73 = arith.mulf %63, %22 : vector<2x32xf32>
    %74 = arith.addf %72, %73 : vector<2x32xf32>
    %c0_17 = arith.constant 0 : index
    %c0_18 = arith.constant 0 : index
    %75 = vector.load %arg3[%c0_17, %c0_18] : memref<32x64xf32, #tpu.memory_space<vmem>>, vector<2x32xf32>
    tpu.vector_store %arg3[%c0_17, %c0_18], %52 {strides = array<i32>} : memref<32x64xf32, #tpu.memory_space<vmem>>, vector<2x32xf32>,
    %c30 = arith.constant 30 : index
    %c32 = arith.constant 32 : index
    %76 = vector.load %arg3[%c30, %c32] : memref<32x64xf32, #tpu.memory_space<vmem>>, vector<2x32xf32>
    tpu.vector_store %arg3[%c30, %c32], %74 {strides = array<i32>} : memref<32x64xf32, #tpu.memory_space<vmem>>, vector<2x32xf32>,
    %77 = vector.extract_strided_slice %0 {offsets = [0, 1], sizes = [2, 1], strides = [1, 1]} : vector<2x16xf32> to vector<2x1xf32>
    %78 = vector.broadcast %77 : vector<2x1xf32> to vector<2x96xf32>
    %79 = arith.mulf %78, %14 : vector<2x96xf32>
    %80 = arith.addf %79, %16 : vector<2x96xf32>
    %81 = vector.extract_strided_slice %0 {offsets = [0, 14], sizes = [2, 1], strides = [1, 1]} : vector<2x16xf32> to vector<2x1xf32>
    %82 = vector.broadcast %81 : vector<2x1xf32> to vector<2x96xf32>
    %83 = arith.mulf %82, %18 : vector<2x96xf32>
    %84 = arith.addf %83, %20 : vector<2x96xf32>
    %cst_19 = arith.constant dense<0.000000e+00> : vector<2x96xf32>
    %85 = tpu.matmul %52, %2, %cst_19 {dimension_numbers = #tpu.dot_dimension_numbers<[1], [0], [0], [1], [0, 0, 1, 1], [], []>} : vector<2x32xf32>, vector<32x96xf32>, vector<2x96xf32> -> vector<2x96xf32>
    %86 = vector.extract_strided_slice %80 {offsets = [0, 0], sizes = [2, 64], strides = [1, 1]} : vector<2x96xf32> to vector<2x64xf32>
    %87 = vector.extract_strided_slice %85 {offsets = [0, 0], sizes = [2, 64], strides = [1, 1]} : vector<2x96xf32> to vector<2x64xf32>
    %88 = arith.addf %86, %87 : vector<2x64xf32>
    %89 = arith.negf %88 : vector<2x64xf32>
    %90 = math.exp %89 : vector<2x64xf32>
    %cst_20 = arith.constant 1.000000e+00 : f32
    %91 = vector.broadcast %cst_20 : f32 to vector<2x64xf32>
    %92 = arith.addf %91, %90 : vector<2x64xf32>
    %93 = arith.divf %91, %92 : vector<2x64xf32>
    %94 = vector.extract_strided_slice %93 {offsets = [0, 0], sizes = [2, 32], strides = [1, 1]} : vector<2x64xf32> to vector<2x32xf32>
    %95 = vector.extract_strided_slice %93 {offsets = [0, 32], sizes = [2, 32], strides = [1, 1]} : vector<2x64xf32> to vector<2x32xf32>
    %96 = vector.extract_strided_slice %80 {offsets = [0, 64], sizes = [2, 32], strides = [1, 1]} : vector<2x96xf32> to vector<2x32xf32>
    %97 = vector.extract_strided_slice %85 {offsets = [0, 64], sizes = [2, 32], strides = [1, 1]} : vector<2x96xf32> to vector<2x32xf32>
    %98 = arith.addf %97, %10 : vector<2x32xf32>
    %99 = arith.mulf %94, %98 : vector<2x32xf32>
    %100 = arith.addf %96, %99 : vector<2x32xf32>
    %101 = math.tanh %100 : vector<2x32xf32>
    %cst_21 = arith.constant 1.000000e+00 : f32
    %102 = vector.broadcast %cst_21 : f32 to vector<2x32xf32>
    %103 = arith.subf %102, %95 : vector<2x32xf32>
    %104 = arith.mulf %103, %101 : vector<2x32xf32>
    %105 = arith.mulf %95, %52 : vector<2x32xf32>
    %106 = arith.addf %104, %105 : vector<2x32xf32>
    %cst_22 = arith.constant dense<0.000000e+00> : vector<2x96xf32>
    %107 = tpu.matmul %74, %6, %cst_22 {dimension_numbers = #tpu.dot_dimension_numbers<[1], [0], [0], [1], [0, 0, 1, 1], [], []>} : vector<2x32xf32>, vector<32x96xf32>, vector<2x96xf32> -> vector<2x96xf32>
    %108 = vector.extract_strided_slice %84 {offsets = [0, 0], sizes = [2, 64], strides = [1, 1]} : vector<2x96xf32> to vector<2x64xf32>
    %109 = vector.extract_strided_slice %107 {offsets = [0, 0], sizes = [2, 64], strides = [1, 1]} : vector<2x96xf32> to vector<2x64xf32>
    %110 = arith.addf %108, %109 : vector<2x64xf32>
    %111 = arith.negf %110 : vector<2x64xf32>
    %112 = math.exp %111 : vector<2x64xf32>
    %cst_23 = arith.constant 1.000000e+00 : f32
    %113 = vector.broadcast %cst_23 : f32 to vector<2x64xf32>
    %114 = arith.addf %113, %112 : vector<2x64xf32>
    %115 = arith.divf %113, %114 : vector<2x64xf32>
    %116 = vector.extract_strided_slice %115 {offsets = [0, 0], sizes = [2, 32], strides = [1, 1]} : vector<2x64xf32> to vector<2x32xf32>
    %117 = vector.extract_strided_slice %115 {offsets = [0, 32], sizes = [2, 32], strides = [1, 1]} : vector<2x64xf32> to vector<2x32xf32>
    %118 = vector.extract_strided_slice %84 {offsets = [0, 64], sizes = [2, 32], strides = [1, 1]} : vector<2x96xf32> to vector<2x32xf32>
    %119 = vector.extract_strided_slice %107 {offsets = [0, 64], sizes = [2, 32], strides = [1, 1]} : vector<2x96xf32> to vector<2x32xf32>
    %120 = arith.addf %119, %12 : vector<2x32xf32>
    %121 = arith.mulf %116, %120 : vector<2x32xf32>
    %122 = arith.addf %118, %121 : vector<2x32xf32>
    %123 = math.tanh %122 : vector<2x32xf32>
    %cst_24 = arith.constant 1.000000e+00 : f32
    %124 = vector.broadcast %cst_24 : f32 to vector<2x32xf32>
    %125 = arith.subf %124, %117 : vector<2x32xf32>
    %126 = arith.mulf %125, %123 : vector<2x32xf32>
    %127 = arith.mulf %117, %74 : vector<2x32xf32>
    %128 = arith.addf %126, %127 : vector<2x32xf32>
    %c2 = arith.constant 2 : index
    %c0_25 = arith.constant 0 : index
    %129 = vector.load %arg3[%c2, %c0_25] : memref<32x64xf32, #tpu.memory_space<vmem>>, vector<2x32xf32>
    tpu.vector_store %arg3[%c2, %c0_25], %106 {strides = array<i32>} : memref<32x64xf32, #tpu.memory_space<vmem>>, vector<2x32xf32>,
    %c28 = arith.constant 28 : index
    %c32_26 = arith.constant 32 : index
    %130 = vector.load %arg3[%c28, %c32_26] : memref<32x64xf32, #tpu.memory_space<vmem>>, vector<2x32xf32>
    tpu.vector_store %arg3[%c28, %c32_26], %128 {strides = array<i32>} : memref<32x64xf32, #tpu.memory_space<vmem>>, vector<2x32xf32>,
    %131 = vector.extract_strided_slice %0 {offsets = [0, 2], sizes = [2, 1], strides = [1, 1]} : vector<2x16xf32> to vector<2x1xf32>
    %132 = vector.broadcast %131 : vector<2x1xf32> to vector<2x96xf32>
    %133 = arith.mulf %132, %14 : vector<2x96xf32>
    %134 = arith.addf %133, %16 : vector<2x96xf32>
    %135 = vector.extract_strided_slice %0 {offsets = [0, 13], sizes = [2, 1], strides = [1, 1]} : vector<2x16xf32> to vector<2x1xf32>
    %136 = vector.broadcast %135 : vector<2x1xf32> to vector<2x96xf32>
    %137 = arith.mulf %136, %18 : vector<2x96xf32>
    %138 = arith.addf %137, %20 : vector<2x96xf32>
    %cst_27 = arith.constant dense<0.000000e+00> : vector<2x96xf32>
    %139 = tpu.matmul %106, %2, %cst_27 {dimension_numbers = #tpu.dot_dimension_numbers<[1], [0], [0], [1], [0, 0, 1, 1], [], []>} : vector<2x32xf32>, vector<32x96xf32>, vector<2x96xf32> -> vector<2x96xf32>
    %140 = vector.extract_strided_slice %134 {offsets = [0, 0], sizes = [2, 64], strides = [1, 1]} : vector<2x96xf32> to vector<2x64xf32>
    %141 = vector.extract_strided_slice %139 {offsets = [0, 0], sizes = [2, 64], strides = [1, 1]} : vector<2x96xf32> to vector<2x64xf32>
    %142 = arith.addf %140, %141 : vector<2x64xf32>
    %143 = arith.negf %142 : vector<2x64xf32>
    %144 = math.exp %143 : vector<2x64xf32>
    %cst_28 = arith.constant 1.000000e+00 : f32
    %145 = vector.broadcast %cst_28 : f32 to vector<2x64xf32>
    %146 = arith.addf %145, %144 : vector<2x64xf32>
    %147 = arith.divf %145, %146 : vector<2x64xf32>
    %148 = vector.extract_strided_slice %147 {offsets = [0, 0], sizes = [2, 32], strides = [1, 1]} : vector<2x64xf32> to vector<2x32xf32>
    %149 = vector.extract_strided_slice %147 {offsets = [0, 32], sizes = [2, 32], strides = [1, 1]} : vector<2x64xf32> to vector<2x32xf32>
    %150 = vector.extract_strided_slice %134 {offsets = [0, 64], sizes = [2, 32], strides = [1, 1]} : vector<2x96xf32> to vector<2x32xf32>
    %151 = vector.extract_strided_slice %139 {offsets = [0, 64], sizes = [2, 32], strides = [1, 1]} : vector<2x96xf32> to vector<2x32xf32>
    %152 = arith.addf %151, %10 : vector<2x32xf32>
    %153 = arith.mulf %148, %152 : vector<2x32xf32>
    %154 = arith.addf %150, %153 : vector<2x32xf32>
    %155 = math.tanh %154 : vector<2x32xf32>
    %cst_29 = arith.constant 1.000000e+00 : f32
    %156 = vector.broadcast %cst_29 : f32 to vector<2x32xf32>
    %157 = arith.subf %156, %149 : vector<2x32xf32>
    %158 = arith.mulf %157, %155 : vector<2x32xf32>
    %159 = arith.mulf %149, %106 : vector<2x32xf32>
    %160 = arith.addf %158, %159 : vector<2x32xf32>
    %cst_30 = arith.constant dense<0.000000e+00> : vector<2x96xf32>
    %161 = tpu.matmul %128, %6, %cst_30 {dimension_numbers = #tpu.dot_dimension_numbers<[1], [0], [0], [1], [0, 0, 1, 1], [], []>} : vector<2x32xf32>, vector<32x96xf32>, vector<2x96xf32> -> vector<2x96xf32>
    %162 = vector.extract_strided_slice %138 {offsets = [0, 0], sizes = [2, 64], strides = [1, 1]} : vector<2x96xf32> to vector<2x64xf32>
    %163 = vector.extract_strided_slice %161 {offsets = [0, 0], sizes = [2, 64], strides = [1, 1]} : vector<2x96xf32> to vector<2x64xf32>
    %164 = arith.addf %162, %163 : vector<2x64xf32>
    %165 = arith.negf %164 : vector<2x64xf32>
    %166 = math.exp %165 : vector<2x64xf32>
    %cst_31 = arith.constant 1.000000e+00 : f32
    %167 = vector.broadcast %cst_31 : f32 to vector<2x64xf32>
    %168 = arith.addf %167, %166 : vector<2x64xf32>
    %169 = arith.divf %167, %168 : vector<2x64xf32>
    %170 = vector.extract_strided_slice %169 {offsets = [0, 0], sizes = [2, 32], strides = [1, 1]} : vector<2x64xf32> to vector<2x32xf32>
    %171 = vector.extract_strided_slice %169 {offsets = [0, 32], sizes = [2, 32], strides = [1, 1]} : vector<2x64xf32> to vector<2x32xf32>
    %172 = vector.extract_strided_slice %138 {offsets = [0, 64], sizes = [2, 32], strides = [1, 1]} : vector<2x96xf32> to vector<2x32xf32>
    %173 = vector.extract_strided_slice %161 {offsets = [0, 64], sizes = [2, 32], strides = [1, 1]} : vector<2x96xf32> to vector<2x32xf32>
    %174 = arith.addf %173, %12 : vector<2x32xf32>
    %175 = arith.mulf %170, %174 : vector<2x32xf32>
    %176 = arith.addf %172, %175 : vector<2x32xf32>
    %177 = math.tanh %176 : vector<2x32xf32>
    %cst_32 = arith.constant 1.000000e+00 : f32
    %178 = vector.broadcast %cst_32 : f32 to vector<2x32xf32>
    %179 = arith.subf %178, %171 : vector<2x32xf32>
    %180 = arith.mulf %179, %177 : vector<2x32xf32>
    %181 = arith.mulf %171, %128 : vector<2x32xf32>
    %182 = arith.addf %180, %181 : vector<2x32xf32>
    %c4 = arith.constant 4 : index
    %c0_33 = arith.constant 0 : index
    %183 = vector.load %arg3[%c4, %c0_33] : memref<32x64xf32, #tpu.memory_space<vmem>>, vector<2x32xf32>
    tpu.vector_store %arg3[%c4, %c0_33], %160 {strides = array<i32>} : memref<32x64xf32, #tpu.memory_space<vmem>>, vector<2x32xf32>,
    %c26 = arith.constant 26 : index
    %c32_34 = arith.constant 32 : index
    %184 = vector.load %arg3[%c26, %c32_34] : memref<32x64xf32, #tpu.memory_space<vmem>>, vector<2x32xf32>
    tpu.vector_store %arg3[%c26, %c32_34], %182 {strides = array<i32>} : memref<32x64xf32, #tpu.memory_space<vmem>>, vector<2x32xf32>,
    %185 = vector.extract_strided_slice %0 {offsets = [0, 3], sizes = [2, 1], strides = [1, 1]} : vector<2x16xf32> to vector<2x1xf32>
    %186 = vector.broadcast %185 : vector<2x1xf32> to vector<2x96xf32>
    %187 = arith.mulf %186, %14 : vector<2x96xf32>
    %188 = arith.addf %187, %16 : vector<2x96xf32>
    %189 = vector.extract_strided_slice %0 {offsets = [0, 12], sizes = [2, 1], strides = [1, 1]} : vector<2x16xf32> to vector<2x1xf32>
    %190 = vector.broadcast %189 : vector<2x1xf32> to vector<2x96xf32>
    %191 = arith.mulf %190, %18 : vector<2x96xf32>
    %192 = arith.addf %191, %20 : vector<2x96xf32>
    %cst_35 = arith.constant dense<0.000000e+00> : vector<2x96xf32>
    %193 = tpu.matmul %160, %2, %cst_35 {dimension_numbers = #tpu.dot_dimension_numbers<[1], [0], [0], [1], [0, 0, 1, 1], [], []>} : vector<2x32xf32>, vector<32x96xf32>, vector<2x96xf32> -> vector<2x96xf32>
    %194 = vector.extract_strided_slice %188 {offsets = [0, 0], sizes = [2, 64], strides = [1, 1]} : vector<2x96xf32> to vector<2x64xf32>
    %195 = vector.extract_strided_slice %193 {offsets = [0, 0], sizes = [2, 64], strides = [1, 1]} : vector<2x96xf32> to vector<2x64xf32>
    %196 = arith.addf %194, %195 : vector<2x64xf32>
    %197 = arith.negf %196 : vector<2x64xf32>
    %198 = math.exp %197 : vector<2x64xf32>
    %cst_36 = arith.constant 1.000000e+00 : f32
    %199 = vector.broadcast %cst_36 : f32 to vector<2x64xf32>
    %200 = arith.addf %199, %198 : vector<2x64xf32>
    %201 = arith.divf %199, %200 : vector<2x64xf32>
    %202 = vector.extract_strided_slice %201 {offsets = [0, 0], sizes = [2, 32], strides = [1, 1]} : vector<2x64xf32> to vector<2x32xf32>
    %203 = vector.extract_strided_slice %201 {offsets = [0, 32], sizes = [2, 32], strides = [1, 1]} : vector<2x64xf32> to vector<2x32xf32>
    %204 = vector.extract_strided_slice %188 {offsets = [0, 64], sizes = [2, 32], strides = [1, 1]} : vector<2x96xf32> to vector<2x32xf32>
    %205 = vector.extract_strided_slice %193 {offsets = [0, 64], sizes = [2, 32], strides = [1, 1]} : vector<2x96xf32> to vector<2x32xf32>
    %206 = arith.addf %205, %10 : vector<2x32xf32>
    %207 = arith.mulf %202, %206 : vector<2x32xf32>
    %208 = arith.addf %204, %207 : vector<2x32xf32>
    %209 = math.tanh %208 : vector<2x32xf32>
    %cst_37 = arith.constant 1.000000e+00 : f32
    %210 = vector.broadcast %cst_37 : f32 to vector<2x32xf32>
    %211 = arith.subf %210, %203 : vector<2x32xf32>
    %212 = arith.mulf %211, %209 : vector<2x32xf32>
    %213 = arith.mulf %203, %160 : vector<2x32xf32>
    %214 = arith.addf %212, %213 : vector<2x32xf32>
    %cst_38 = arith.constant dense<0.000000e+00> : vector<2x96xf32>
    %215 = tpu.matmul %182, %6, %cst_38 {dimension_numbers = #tpu.dot_dimension_numbers<[1], [0], [0], [1], [0, 0, 1, 1], [], []>} : vector<2x32xf32>, vector<32x96xf32>, vector<2x96xf32> -> vector<2x96xf32>
    %216 = vector.extract_strided_slice %192 {offsets = [0, 0], sizes = [2, 64], strides = [1, 1]} : vector<2x96xf32> to vector<2x64xf32>
    %217 = vector.extract_strided_slice %215 {offsets = [0, 0], sizes = [2, 64], strides = [1, 1]} : vector<2x96xf32> to vector<2x64xf32>
    %218 = arith.addf %216, %217 : vector<2x64xf32>
    %219 = arith.negf %218 : vector<2x64xf32>
    %220 = math.exp %219 : vector<2x64xf32>
    %cst_39 = arith.constant 1.000000e+00 : f32
    %221 = vector.broadcast %cst_39 : f32 to vector<2x64xf32>
    %222 = arith.addf %221, %220 : vector<2x64xf32>
    %223 = arith.divf %221, %222 : vector<2x64xf32>
    %224 = vector.extract_strided_slice %223 {offsets = [0, 0], sizes = [2, 32], strides = [1, 1]} : vector<2x64xf32> to vector<2x32xf32>
    %225 = vector.extract_strided_slice %223 {offsets = [0, 32], sizes = [2, 32], strides = [1, 1]} : vector<2x64xf32> to vector<2x32xf32>
    %226 = vector.extract_strided_slice %192 {offsets = [0, 64], sizes = [2, 32], strides = [1, 1]} : vector<2x96xf32> to vector<2x32xf32>
    %227 = vector.extract_strided_slice %215 {offsets = [0, 64], sizes = [2, 32], strides = [1, 1]} : vector<2x96xf32> to vector<2x32xf32>
    %228 = arith.addf %227, %12 : vector<2x32xf32>
    %229 = arith.mulf %224, %228 : vector<2x32xf32>
    %230 = arith.addf %226, %229 : vector<2x32xf32>
    %231 = math.tanh %230 : vector<2x32xf32>
    %cst_40 = arith.constant 1.000000e+00 : f32
    %232 = vector.broadcast %cst_40 : f32 to vector<2x32xf32>
    %233 = arith.subf %232, %225 : vector<2x32xf32>
    %234 = arith.mulf %233, %231 : vector<2x32xf32>
    %235 = arith.mulf %225, %182 : vector<2x32xf32>
    %236 = arith.addf %234, %235 : vector<2x32xf32>
    %c6 = arith.constant 6 : index
    %c0_41 = arith.constant 0 : index
    %237 = vector.load %arg3[%c6, %c0_41] : memref<32x64xf32, #tpu.memory_space<vmem>>, vector<2x32xf32>
    tpu.vector_store %arg3[%c6, %c0_41], %214 {strides = array<i32>} : memref<32x64xf32, #tpu.memory_space<vmem>>, vector<2x32xf32>,
    %c24 = arith.constant 24 : index
    %c32_42 = arith.constant 32 : index
    %238 = vector.load %arg3[%c24, %c32_42] : memref<32x64xf32, #tpu.memory_space<vmem>>, vector<2x32xf32>
    tpu.vector_store %arg3[%c24, %c32_42], %236 {strides = array<i32>} : memref<32x64xf32, #tpu.memory_space<vmem>>, vector<2x32xf32>,
    %239 = vector.extract_strided_slice %0 {offsets = [0, 4], sizes = [2, 1], strides = [1, 1]} : vector<2x16xf32> to vector<2x1xf32>
    %240 = vector.broadcast %239 : vector<2x1xf32> to vector<2x96xf32>
    %241 = arith.mulf %240, %14 : vector<2x96xf32>
    %242 = arith.addf %241, %16 : vector<2x96xf32>
    %243 = vector.extract_strided_slice %0 {offsets = [0, 11], sizes = [2, 1], strides = [1, 1]} : vector<2x16xf32> to vector<2x1xf32>
    %244 = vector.broadcast %243 : vector<2x1xf32> to vector<2x96xf32>
    %245 = arith.mulf %244, %18 : vector<2x96xf32>
    %246 = arith.addf %245, %20 : vector<2x96xf32>
    %cst_43 = arith.constant dense<0.000000e+00> : vector<2x96xf32>
    %247 = tpu.matmul %214, %2, %cst_43 {dimension_numbers = #tpu.dot_dimension_numbers<[1], [0], [0], [1], [0, 0, 1, 1], [], []>} : vector<2x32xf32>, vector<32x96xf32>, vector<2x96xf32> -> vector<2x96xf32>
    %248 = vector.extract_strided_slice %242 {offsets = [0, 0], sizes = [2, 64], strides = [1, 1]} : vector<2x96xf32> to vector<2x64xf32>
    %249 = vector.extract_strided_slice %247 {offsets = [0, 0], sizes = [2, 64], strides = [1, 1]} : vector<2x96xf32> to vector<2x64xf32>
    %250 = arith.addf %248, %249 : vector<2x64xf32>
    %251 = arith.negf %250 : vector<2x64xf32>
    %252 = math.exp %251 : vector<2x64xf32>
    %cst_44 = arith.constant 1.000000e+00 : f32
    %253 = vector.broadcast %cst_44 : f32 to vector<2x64xf32>
    %254 = arith.addf %253, %252 : vector<2x64xf32>
    %255 = arith.divf %253, %254 : vector<2x64xf32>
    %256 = vector.extract_strided_slice %255 {offsets = [0, 0], sizes = [2, 32], strides = [1, 1]} : vector<2x64xf32> to vector<2x32xf32>
    %257 = vector.extract_strided_slice %255 {offsets = [0, 32], sizes = [2, 32], strides = [1, 1]} : vector<2x64xf32> to vector<2x32xf32>
    %258 = vector.extract_strided_slice %242 {offsets = [0, 64], sizes = [2, 32], strides = [1, 1]} : vector<2x96xf32> to vector<2x32xf32>
    %259 = vector.extract_strided_slice %247 {offsets = [0, 64], sizes = [2, 32], strides = [1, 1]} : vector<2x96xf32> to vector<2x32xf32>
    %260 = arith.addf %259, %10 : vector<2x32xf32>
    %261 = arith.mulf %256, %260 : vector<2x32xf32>
    %262 = arith.addf %258, %261 : vector<2x32xf32>
    %263 = math.tanh %262 : vector<2x32xf32>
    %cst_45 = arith.constant 1.000000e+00 : f32
    %264 = vector.broadcast %cst_45 : f32 to vector<2x32xf32>
    %265 = arith.subf %264, %257 : vector<2x32xf32>
    %266 = arith.mulf %265, %263 : vector<2x32xf32>
    %267 = arith.mulf %257, %214 : vector<2x32xf32>
    %268 = arith.addf %266, %267 : vector<2x32xf32>
    %cst_46 = arith.constant dense<0.000000e+00> : vector<2x96xf32>
    %269 = tpu.matmul %236, %6, %cst_46 {dimension_numbers = #tpu.dot_dimension_numbers<[1], [0], [0], [1], [0, 0, 1, 1], [], []>} : vector<2x32xf32>, vector<32x96xf32>, vector<2x96xf32> -> vector<2x96xf32>
    %270 = vector.extract_strided_slice %246 {offsets = [0, 0], sizes = [2, 64], strides = [1, 1]} : vector<2x96xf32> to vector<2x64xf32>
    %271 = vector.extract_strided_slice %269 {offsets = [0, 0], sizes = [2, 64], strides = [1, 1]} : vector<2x96xf32> to vector<2x64xf32>
    %272 = arith.addf %270, %271 : vector<2x64xf32>
    %273 = arith.negf %272 : vector<2x64xf32>
    %274 = math.exp %273 : vector<2x64xf32>
    %cst_47 = arith.constant 1.000000e+00 : f32
    %275 = vector.broadcast %cst_47 : f32 to vector<2x64xf32>
    %276 = arith.addf %275, %274 : vector<2x64xf32>
    %277 = arith.divf %275, %276 : vector<2x64xf32>
    %278 = vector.extract_strided_slice %277 {offsets = [0, 0], sizes = [2, 32], strides = [1, 1]} : vector<2x64xf32> to vector<2x32xf32>
    %279 = vector.extract_strided_slice %277 {offsets = [0, 32], sizes = [2, 32], strides = [1, 1]} : vector<2x64xf32> to vector<2x32xf32>
    %280 = vector.extract_strided_slice %246 {offsets = [0, 64], sizes = [2, 32], strides = [1, 1]} : vector<2x96xf32> to vector<2x32xf32>
    %281 = vector.extract_strided_slice %269 {offsets = [0, 64], sizes = [2, 32], strides = [1, 1]} : vector<2x96xf32> to vector<2x32xf32>
    %282 = arith.addf %281, %12 : vector<2x32xf32>
    %283 = arith.mulf %278, %282 : vector<2x32xf32>
    %284 = arith.addf %280, %283 : vector<2x32xf32>
    %285 = math.tanh %284 : vector<2x32xf32>
    %cst_48 = arith.constant 1.000000e+00 : f32
    %286 = vector.broadcast %cst_48 : f32 to vector<2x32xf32>
    %287 = arith.subf %286, %279 : vector<2x32xf32>
    %288 = arith.mulf %287, %285 : vector<2x32xf32>
    %289 = arith.mulf %279, %236 : vector<2x32xf32>
    %290 = arith.addf %288, %289 : vector<2x32xf32>
    %c8_49 = arith.constant 8 : index
    %c0_50 = arith.constant 0 : index
    %291 = vector.load %arg3[%c8_49, %c0_50] : memref<32x64xf32, #tpu.memory_space<vmem>>, vector<2x32xf32>
    tpu.vector_store %arg3[%c8_49, %c0_50], %268 {strides = array<i32>} : memref<32x64xf32, #tpu.memory_space<vmem>>, vector<2x32xf32>,
    %c22 = arith.constant 22 : index
    %c32_51 = arith.constant 32 : index
    %292 = vector.load %arg3[%c22, %c32_51] : memref<32x64xf32, #tpu.memory_space<vmem>>, vector<2x32xf32>
    tpu.vector_store %arg3[%c22, %c32_51], %290 {strides = array<i32>} : memref<32x64xf32, #tpu.memory_space<vmem>>, vector<2x32xf32>,
    %293 = vector.extract_strided_slice %0 {offsets = [0, 5], sizes = [2, 1], strides = [1, 1]} : vector<2x16xf32> to vector<2x1xf32>
    %294 = vector.broadcast %293 : vector<2x1xf32> to vector<2x96xf32>
    %295 = arith.mulf %294, %14 : vector<2x96xf32>
    %296 = arith.addf %295, %16 : vector<2x96xf32>
    %297 = vector.extract_strided_slice %0 {offsets = [0, 10], sizes = [2, 1], strides = [1, 1]} : vector<2x16xf32> to vector<2x1xf32>
    %298 = vector.broadcast %297 : vector<2x1xf32> to vector<2x96xf32>
    %299 = arith.mulf %298, %18 : vector<2x96xf32>
    %300 = arith.addf %299, %20 : vector<2x96xf32>
    %cst_52 = arith.constant dense<0.000000e+00> : vector<2x96xf32>
    %301 = tpu.matmul %268, %2, %cst_52 {dimension_numbers = #tpu.dot_dimension_numbers<[1], [0], [0], [1], [0, 0, 1, 1], [], []>} : vector<2x32xf32>, vector<32x96xf32>, vector<2x96xf32> -> vector<2x96xf32>
    %302 = vector.extract_strided_slice %296 {offsets = [0, 0], sizes = [2, 64], strides = [1, 1]} : vector<2x96xf32> to vector<2x64xf32>
    %303 = vector.extract_strided_slice %301 {offsets = [0, 0], sizes = [2, 64], strides = [1, 1]} : vector<2x96xf32> to vector<2x64xf32>
    %304 = arith.addf %302, %303 : vector<2x64xf32>
    %305 = arith.negf %304 : vector<2x64xf32>
    %306 = math.exp %305 : vector<2x64xf32>
    %cst_53 = arith.constant 1.000000e+00 : f32
    %307 = vector.broadcast %cst_53 : f32 to vector<2x64xf32>
    %308 = arith.addf %307, %306 : vector<2x64xf32>
    %309 = arith.divf %307, %308 : vector<2x64xf32>
    %310 = vector.extract_strided_slice %309 {offsets = [0, 0], sizes = [2, 32], strides = [1, 1]} : vector<2x64xf32> to vector<2x32xf32>
    %311 = vector.extract_strided_slice %309 {offsets = [0, 32], sizes = [2, 32], strides = [1, 1]} : vector<2x64xf32> to vector<2x32xf32>
    %312 = vector.extract_strided_slice %296 {offsets = [0, 64], sizes = [2, 32], strides = [1, 1]} : vector<2x96xf32> to vector<2x32xf32>
    %313 = vector.extract_strided_slice %301 {offsets = [0, 64], sizes = [2, 32], strides = [1, 1]} : vector<2x96xf32> to vector<2x32xf32>
    %314 = arith.addf %313, %10 : vector<2x32xf32>
    %315 = arith.mulf %310, %314 : vector<2x32xf32>
    %316 = arith.addf %312, %315 : vector<2x32xf32>
    %317 = math.tanh %316 : vector<2x32xf32>
    %cst_54 = arith.constant 1.000000e+00 : f32
    %318 = vector.broadcast %cst_54 : f32 to vector<2x32xf32>
    %319 = arith.subf %318, %311 : vector<2x32xf32>
    %320 = arith.mulf %319, %317 : vector<2x32xf32>
    %321 = arith.mulf %311, %268 : vector<2x32xf32>
    %322 = arith.addf %320, %321 : vector<2x32xf32>
    %cst_55 = arith.constant dense<0.000000e+00> : vector<2x96xf32>
    %323 = tpu.matmul %290, %6, %cst_55 {dimension_numbers = #tpu.dot_dimension_numbers<[1], [0], [0], [1], [0, 0, 1, 1], [], []>} : vector<2x32xf32>, vector<32x96xf32>, vector<2x96xf32> -> vector<2x96xf32>
    %324 = vector.extract_strided_slice %300 {offsets = [0, 0], sizes = [2, 64], strides = [1, 1]} : vector<2x96xf32> to vector<2x64xf32>
    %325 = vector.extract_strided_slice %323 {offsets = [0, 0], sizes = [2, 64], strides = [1, 1]} : vector<2x96xf32> to vector<2x64xf32>
    %326 = arith.addf %324, %325 : vector<2x64xf32>
    %327 = arith.negf %326 : vector<2x64xf32>
    %328 = math.exp %327 : vector<2x64xf32>
    %cst_56 = arith.constant 1.000000e+00 : f32
    %329 = vector.broadcast %cst_56 : f32 to vector<2x64xf32>
    %330 = arith.addf %329, %328 : vector<2x64xf32>
    %331 = arith.divf %329, %330 : vector<2x64xf32>
    %332 = vector.extract_strided_slice %331 {offsets = [0, 0], sizes = [2, 32], strides = [1, 1]} : vector<2x64xf32> to vector<2x32xf32>
    %333 = vector.extract_strided_slice %331 {offsets = [0, 32], sizes = [2, 32], strides = [1, 1]} : vector<2x64xf32> to vector<2x32xf32>
    %334 = vector.extract_strided_slice %300 {offsets = [0, 64], sizes = [2, 32], strides = [1, 1]} : vector<2x96xf32> to vector<2x32xf32>
    %335 = vector.extract_strided_slice %323 {offsets = [0, 64], sizes = [2, 32], strides = [1, 1]} : vector<2x96xf32> to vector<2x32xf32>
    %336 = arith.addf %335, %12 : vector<2x32xf32>
    %337 = arith.mulf %332, %336 : vector<2x32xf32>
    %338 = arith.addf %334, %337 : vector<2x32xf32>
    %339 = math.tanh %338 : vector<2x32xf32>
    %cst_57 = arith.constant 1.000000e+00 : f32
    %340 = vector.broadcast %cst_57 : f32 to vector<2x32xf32>
    %341 = arith.subf %340, %333 : vector<2x32xf32>
    %342 = arith.mulf %341, %339 : vector<2x32xf32>
    %343 = arith.mulf %333, %290 : vector<2x32xf32>
    %344 = arith.addf %342, %343 : vector<2x32xf32>
    %c10 = arith.constant 10 : index
    %c0_58 = arith.constant 0 : index
    %345 = vector.load %arg3[%c10, %c0_58] : memref<32x64xf32, #tpu.memory_space<vmem>>, vector<2x32xf32>
    tpu.vector_store %arg3[%c10, %c0_58], %322 {strides = array<i32>} : memref<32x64xf32, #tpu.memory_space<vmem>>, vector<2x32xf32>,
    %c20 = arith.constant 20 : index
    %c32_59 = arith.constant 32 : index
    %346 = vector.load %arg3[%c20, %c32_59] : memref<32x64xf32, #tpu.memory_space<vmem>>, vector<2x32xf32>
    tpu.vector_store %arg3[%c20, %c32_59], %344 {strides = array<i32>} : memref<32x64xf32, #tpu.memory_space<vmem>>, vector<2x32xf32>,
    %347 = vector.extract_strided_slice %0 {offsets = [0, 6], sizes = [2, 1], strides = [1, 1]} : vector<2x16xf32> to vector<2x1xf32>
    %348 = vector.broadcast %347 : vector<2x1xf32> to vector<2x96xf32>
    %349 = arith.mulf %348, %14 : vector<2x96xf32>
    %350 = arith.addf %349, %16 : vector<2x96xf32>
    %351 = vector.extract_strided_slice %0 {offsets = [0, 9], sizes = [2, 1], strides = [1, 1]} : vector<2x16xf32> to vector<2x1xf32>
    %352 = vector.broadcast %351 : vector<2x1xf32> to vector<2x96xf32>
    %353 = arith.mulf %352, %18 : vector<2x96xf32>
    %354 = arith.addf %353, %20 : vector<2x96xf32>
    %cst_60 = arith.constant dense<0.000000e+00> : vector<2x96xf32>
    %355 = tpu.matmul %322, %2, %cst_60 {dimension_numbers = #tpu.dot_dimension_numbers<[1], [0], [0], [1], [0, 0, 1, 1], [], []>} : vector<2x32xf32>, vector<32x96xf32>, vector<2x96xf32> -> vector<2x96xf32>
    %356 = vector.extract_strided_slice %350 {offsets = [0, 0], sizes = [2, 64], strides = [1, 1]} : vector<2x96xf32> to vector<2x64xf32>
    %357 = vector.extract_strided_slice %355 {offsets = [0, 0], sizes = [2, 64], strides = [1, 1]} : vector<2x96xf32> to vector<2x64xf32>
    %358 = arith.addf %356, %357 : vector<2x64xf32>
    %359 = arith.negf %358 : vector<2x64xf32>
    %360 = math.exp %359 : vector<2x64xf32>
    %cst_61 = arith.constant 1.000000e+00 : f32
    %361 = vector.broadcast %cst_61 : f32 to vector<2x64xf32>
    %362 = arith.addf %361, %360 : vector<2x64xf32>
    %363 = arith.divf %361, %362 : vector<2x64xf32>
    %364 = vector.extract_strided_slice %363 {offsets = [0, 0], sizes = [2, 32], strides = [1, 1]} : vector<2x64xf32> to vector<2x32xf32>
    %365 = vector.extract_strided_slice %363 {offsets = [0, 32], sizes = [2, 32], strides = [1, 1]} : vector<2x64xf32> to vector<2x32xf32>
    %366 = vector.extract_strided_slice %350 {offsets = [0, 64], sizes = [2, 32], strides = [1, 1]} : vector<2x96xf32> to vector<2x32xf32>
    %367 = vector.extract_strided_slice %355 {offsets = [0, 64], sizes = [2, 32], strides = [1, 1]} : vector<2x96xf32> to vector<2x32xf32>
    %368 = arith.addf %367, %10 : vector<2x32xf32>
    %369 = arith.mulf %364, %368 : vector<2x32xf32>
    %370 = arith.addf %366, %369 : vector<2x32xf32>
    %371 = math.tanh %370 : vector<2x32xf32>
    %cst_62 = arith.constant 1.000000e+00 : f32
    %372 = vector.broadcast %cst_62 : f32 to vector<2x32xf32>
    %373 = arith.subf %372, %365 : vector<2x32xf32>
    %374 = arith.mulf %373, %371 : vector<2x32xf32>
    %375 = arith.mulf %365, %322 : vector<2x32xf32>
    %376 = arith.addf %374, %375 : vector<2x32xf32>
    %cst_63 = arith.constant dense<0.000000e+00> : vector<2x96xf32>
    %377 = tpu.matmul %344, %6, %cst_63 {dimension_numbers = #tpu.dot_dimension_numbers<[1], [0], [0], [1], [0, 0, 1, 1], [], []>} : vector<2x32xf32>, vector<32x96xf32>, vector<2x96xf32> -> vector<2x96xf32>
    %378 = vector.extract_strided_slice %354 {offsets = [0, 0], sizes = [2, 64], strides = [1, 1]} : vector<2x96xf32> to vector<2x64xf32>
    %379 = vector.extract_strided_slice %377 {offsets = [0, 0], sizes = [2, 64], strides = [1, 1]} : vector<2x96xf32> to vector<2x64xf32>
    %380 = arith.addf %378, %379 : vector<2x64xf32>
    %381 = arith.negf %380 : vector<2x64xf32>
    %382 = math.exp %381 : vector<2x64xf32>
    %cst_64 = arith.constant 1.000000e+00 : f32
    %383 = vector.broadcast %cst_64 : f32 to vector<2x64xf32>
    %384 = arith.addf %383, %382 : vector<2x64xf32>
    %385 = arith.divf %383, %384 : vector<2x64xf32>
    %386 = vector.extract_strided_slice %385 {offsets = [0, 0], sizes = [2, 32], strides = [1, 1]} : vector<2x64xf32> to vector<2x32xf32>
    %387 = vector.extract_strided_slice %385 {offsets = [0, 32], sizes = [2, 32], strides = [1, 1]} : vector<2x64xf32> to vector<2x32xf32>
    %388 = vector.extract_strided_slice %354 {offsets = [0, 64], sizes = [2, 32], strides = [1, 1]} : vector<2x96xf32> to vector<2x32xf32>
    %389 = vector.extract_strided_slice %377 {offsets = [0, 64], sizes = [2, 32], strides = [1, 1]} : vector<2x96xf32> to vector<2x32xf32>
    %390 = arith.addf %389, %12 : vector<2x32xf32>
    %391 = arith.mulf %386, %390 : vector<2x32xf32>
    %392 = arith.addf %388, %391 : vector<2x32xf32>
    %393 = math.tanh %392 : vector<2x32xf32>
    %cst_65 = arith.constant 1.000000e+00 : f32
    %394 = vector.broadcast %cst_65 : f32 to vector<2x32xf32>
    %395 = arith.subf %394, %387 : vector<2x32xf32>
    %396 = arith.mulf %395, %393 : vector<2x32xf32>
    %397 = arith.mulf %387, %344 : vector<2x32xf32>
    %398 = arith.addf %396, %397 : vector<2x32xf32>
    %c12 = arith.constant 12 : index
    %c0_66 = arith.constant 0 : index
    %399 = vector.load %arg3[%c12, %c0_66] : memref<32x64xf32, #tpu.memory_space<vmem>>, vector<2x32xf32>
    tpu.vector_store %arg3[%c12, %c0_66], %376 {strides = array<i32>} : memref<32x64xf32, #tpu.memory_space<vmem>>, vector<2x32xf32>,
    %c18 = arith.constant 18 : index
    %c32_67 = arith.constant 32 : index
    %400 = vector.load %arg3[%c18, %c32_67] : memref<32x64xf32, #tpu.memory_space<vmem>>, vector<2x32xf32>
    tpu.vector_store %arg3[%c18, %c32_67], %398 {strides = array<i32>} : memref<32x64xf32, #tpu.memory_space<vmem>>, vector<2x32xf32>,
    %401 = vector.extract_strided_slice %0 {offsets = [0, 7], sizes = [2, 1], strides = [1, 1]} : vector<2x16xf32> to vector<2x1xf32>
    %402 = vector.broadcast %401 : vector<2x1xf32> to vector<2x96xf32>
    %403 = arith.mulf %402, %14 : vector<2x96xf32>
    %404 = arith.addf %403, %16 : vector<2x96xf32>
    %405 = vector.extract_strided_slice %0 {offsets = [0, 8], sizes = [2, 1], strides = [1, 1]} : vector<2x16xf32> to vector<2x1xf32>
    %406 = vector.broadcast %405 : vector<2x1xf32> to vector<2x96xf32>
    %407 = arith.mulf %406, %18 : vector<2x96xf32>
    %408 = arith.addf %407, %20 : vector<2x96xf32>
    %cst_68 = arith.constant dense<0.000000e+00> : vector<2x96xf32>
    %409 = tpu.matmul %376, %2, %cst_68 {dimension_numbers = #tpu.dot_dimension_numbers<[1], [0], [0], [1], [0, 0, 1, 1], [], []>} : vector<2x32xf32>, vector<32x96xf32>, vector<2x96xf32> -> vector<2x96xf32>
    %410 = vector.extract_strided_slice %404 {offsets = [0, 0], sizes = [2, 64], strides = [1, 1]} : vector<2x96xf32> to vector<2x64xf32>
    %411 = vector.extract_strided_slice %409 {offsets = [0, 0], sizes = [2, 64], strides = [1, 1]} : vector<2x96xf32> to vector<2x64xf32>
    %412 = arith.addf %410, %411 : vector<2x64xf32>
    %413 = arith.negf %412 : vector<2x64xf32>
    %414 = math.exp %413 : vector<2x64xf32>
    %cst_69 = arith.constant 1.000000e+00 : f32
    %415 = vector.broadcast %cst_69 : f32 to vector<2x64xf32>
    %416 = arith.addf %415, %414 : vector<2x64xf32>
    %417 = arith.divf %415, %416 : vector<2x64xf32>
    %418 = vector.extract_strided_slice %417 {offsets = [0, 0], sizes = [2, 32], strides = [1, 1]} : vector<2x64xf32> to vector<2x32xf32>
    %419 = vector.extract_strided_slice %417 {offsets = [0, 32], sizes = [2, 32], strides = [1, 1]} : vector<2x64xf32> to vector<2x32xf32>
    %420 = vector.extract_strided_slice %404 {offsets = [0, 64], sizes = [2, 32], strides = [1, 1]} : vector<2x96xf32> to vector<2x32xf32>
    %421 = vector.extract_strided_slice %409 {offsets = [0, 64], sizes = [2, 32], strides = [1, 1]} : vector<2x96xf32> to vector<2x32xf32>
    %422 = arith.addf %421, %10 : vector<2x32xf32>
    %423 = arith.mulf %418, %422 : vector<2x32xf32>
    %424 = arith.addf %420, %423 : vector<2x32xf32>
    %425 = math.tanh %424 : vector<2x32xf32>
    %cst_70 = arith.constant 1.000000e+00 : f32
    %426 = vector.broadcast %cst_70 : f32 to vector<2x32xf32>
    %427 = arith.subf %426, %419 : vector<2x32xf32>
    %428 = arith.mulf %427, %425 : vector<2x32xf32>
    %429 = arith.mulf %419, %376 : vector<2x32xf32>
    %430 = arith.addf %428, %429 : vector<2x32xf32>
    %cst_71 = arith.constant dense<0.000000e+00> : vector<2x96xf32>
    %431 = tpu.matmul %398, %6, %cst_71 {dimension_numbers = #tpu.dot_dimension_numbers<[1], [0], [0], [1], [0, 0, 1, 1], [], []>} : vector<2x32xf32>, vector<32x96xf32>, vector<2x96xf32> -> vector<2x96xf32>
    %432 = vector.extract_strided_slice %408 {offsets = [0, 0], sizes = [2, 64], strides = [1, 1]} : vector<2x96xf32> to vector<2x64xf32>
    %433 = vector.extract_strided_slice %431 {offsets = [0, 0], sizes = [2, 64], strides = [1, 1]} : vector<2x96xf32> to vector<2x64xf32>
    %434 = arith.addf %432, %433 : vector<2x64xf32>
    %435 = arith.negf %434 : vector<2x64xf32>
    %436 = math.exp %435 : vector<2x64xf32>
    %cst_72 = arith.constant 1.000000e+00 : f32
    %437 = vector.broadcast %cst_72 : f32 to vector<2x64xf32>
    %438 = arith.addf %437, %436 : vector<2x64xf32>
    %439 = arith.divf %437, %438 : vector<2x64xf32>
    %440 = vector.extract_strided_slice %439 {offsets = [0, 0], sizes = [2, 32], strides = [1, 1]} : vector<2x64xf32> to vector<2x32xf32>
    %441 = vector.extract_strided_slice %439 {offsets = [0, 32], sizes = [2, 32], strides = [1, 1]} : vector<2x64xf32> to vector<2x32xf32>
    %442 = vector.extract_strided_slice %408 {offsets = [0, 64], sizes = [2, 32], strides = [1, 1]} : vector<2x96xf32> to vector<2x32xf32>
    %443 = vector.extract_strided_slice %431 {offsets = [0, 64], sizes = [2, 32], strides = [1, 1]} : vector<2x96xf32> to vector<2x32xf32>
    %444 = arith.addf %443, %12 : vector<2x32xf32>
    %445 = arith.mulf %440, %444 : vector<2x32xf32>
    %446 = arith.addf %442, %445 : vector<2x32xf32>
    %447 = math.tanh %446 : vector<2x32xf32>
    %cst_73 = arith.constant 1.000000e+00 : f32
    %448 = vector.broadcast %cst_73 : f32 to vector<2x32xf32>
    %449 = arith.subf %448, %441 : vector<2x32xf32>
    %450 = arith.mulf %449, %447 : vector<2x32xf32>
    %451 = arith.mulf %441, %398 : vector<2x32xf32>
    %452 = arith.addf %450, %451 : vector<2x32xf32>
    %c14 = arith.constant 14 : index
    %c0_74 = arith.constant 0 : index
    %453 = vector.load %arg3[%c14, %c0_74] : memref<32x64xf32, #tpu.memory_space<vmem>>, vector<2x32xf32>
    tpu.vector_store %arg3[%c14, %c0_74], %430 {strides = array<i32>} : memref<32x64xf32, #tpu.memory_space<vmem>>, vector<2x32xf32>,
    %c16 = arith.constant 16 : index
    %c32_75 = arith.constant 32 : index
    %454 = vector.load %arg3[%c16, %c32_75] : memref<32x64xf32, #tpu.memory_space<vmem>>, vector<2x32xf32>
    tpu.vector_store %arg3[%c16, %c32_75], %452 {strides = array<i32>} : memref<32x64xf32, #tpu.memory_space<vmem>>, vector<2x32xf32>,
    %455 = vector.extract_strided_slice %0 {offsets = [0, 8], sizes = [2, 1], strides = [1, 1]} : vector<2x16xf32> to vector<2x1xf32>
    %456 = vector.broadcast %455 : vector<2x1xf32> to vector<2x96xf32>
    %457 = arith.mulf %456, %14 : vector<2x96xf32>
    %458 = arith.addf %457, %16 : vector<2x96xf32>
    %459 = vector.extract_strided_slice %0 {offsets = [0, 7], sizes = [2, 1], strides = [1, 1]} : vector<2x16xf32> to vector<2x1xf32>
    %460 = vector.broadcast %459 : vector<2x1xf32> to vector<2x96xf32>
    %461 = arith.mulf %460, %18 : vector<2x96xf32>
    %462 = arith.addf %461, %20 : vector<2x96xf32>
    %cst_76 = arith.constant dense<0.000000e+00> : vector<2x96xf32>
    %463 = tpu.matmul %430, %2, %cst_76 {dimension_numbers = #tpu.dot_dimension_numbers<[1], [0], [0], [1], [0, 0, 1, 1], [], []>} : vector<2x32xf32>, vector<32x96xf32>, vector<2x96xf32> -> vector<2x96xf32>
    %464 = vector.extract_strided_slice %458 {offsets = [0, 0], sizes = [2, 64], strides = [1, 1]} : vector<2x96xf32> to vector<2x64xf32>
    %465 = vector.extract_strided_slice %463 {offsets = [0, 0], sizes = [2, 64], strides = [1, 1]} : vector<2x96xf32> to vector<2x64xf32>
    %466 = arith.addf %464, %465 : vector<2x64xf32>
    %467 = arith.negf %466 : vector<2x64xf32>
    %468 = math.exp %467 : vector<2x64xf32>
    %cst_77 = arith.constant 1.000000e+00 : f32
    %469 = vector.broadcast %cst_77 : f32 to vector<2x64xf32>
    %470 = arith.addf %469, %468 : vector<2x64xf32>
    %471 = arith.divf %469, %470 : vector<2x64xf32>
    %472 = vector.extract_strided_slice %471 {offsets = [0, 0], sizes = [2, 32], strides = [1, 1]} : vector<2x64xf32> to vector<2x32xf32>
    %473 = vector.extract_strided_slice %471 {offsets = [0, 32], sizes = [2, 32], strides = [1, 1]} : vector<2x64xf32> to vector<2x32xf32>
    %474 = vector.extract_strided_slice %458 {offsets = [0, 64], sizes = [2, 32], strides = [1, 1]} : vector<2x96xf32> to vector<2x32xf32>
    %475 = vector.extract_strided_slice %463 {offsets = [0, 64], sizes = [2, 32], strides = [1, 1]} : vector<2x96xf32> to vector<2x32xf32>
    %476 = arith.addf %475, %10 : vector<2x32xf32>
    %477 = arith.mulf %472, %476 : vector<2x32xf32>
    %478 = arith.addf %474, %477 : vector<2x32xf32>
    %479 = math.tanh %478 : vector<2x32xf32>
    %cst_78 = arith.constant 1.000000e+00 : f32
    %480 = vector.broadcast %cst_78 : f32 to vector<2x32xf32>
    %481 = arith.subf %480, %473 : vector<2x32xf32>
    %482 = arith.mulf %481, %479 : vector<2x32xf32>
    %483 = arith.mulf %473, %430 : vector<2x32xf32>
    %484 = arith.addf %482, %483 : vector<2x32xf32>
    %cst_79 = arith.constant dense<0.000000e+00> : vector<2x96xf32>
    %485 = tpu.matmul %452, %6, %cst_79 {dimension_numbers = #tpu.dot_dimension_numbers<[1], [0], [0], [1], [0, 0, 1, 1], [], []>} : vector<2x32xf32>, vector<32x96xf32>, vector<2x96xf32> -> vector<2x96xf32>
    %486 = vector.extract_strided_slice %462 {offsets = [0, 0], sizes = [2, 64], strides = [1, 1]} : vector<2x96xf32> to vector<2x64xf32>
    %487 = vector.extract_strided_slice %485 {offsets = [0, 0], sizes = [2, 64], strides = [1, 1]} : vector<2x96xf32> to vector<2x64xf32>
    %488 = arith.addf %486, %487 : vector<2x64xf32>
    %489 = arith.negf %488 : vector<2x64xf32>
    %490 = math.exp %489 : vector<2x64xf32>
    %cst_80 = arith.constant 1.000000e+00 : f32
    %491 = vector.broadcast %cst_80 : f32 to vector<2x64xf32>
    %492 = arith.addf %491, %490 : vector<2x64xf32>
    %493 = arith.divf %491, %492 : vector<2x64xf32>
    %494 = vector.extract_strided_slice %493 {offsets = [0, 0], sizes = [2, 32], strides = [1, 1]} : vector<2x64xf32> to vector<2x32xf32>
    %495 = vector.extract_strided_slice %493 {offsets = [0, 32], sizes = [2, 32], strides = [1, 1]} : vector<2x64xf32> to vector<2x32xf32>
    %496 = vector.extract_strided_slice %462 {offsets = [0, 64], sizes = [2, 32], strides = [1, 1]} : vector<2x96xf32> to vector<2x32xf32>
    %497 = vector.extract_strided_slice %485 {offsets = [0, 64], sizes = [2, 32], strides = [1, 1]} : vector<2x96xf32> to vector<2x32xf32>
    %498 = arith.addf %497, %12 : vector<2x32xf32>
    %499 = arith.mulf %494, %498 : vector<2x32xf32>
    %500 = arith.addf %496, %499 : vector<2x32xf32>
    %501 = math.tanh %500 : vector<2x32xf32>
    %cst_81 = arith.constant 1.000000e+00 : f32
    %502 = vector.broadcast %cst_81 : f32 to vector<2x32xf32>
    %503 = arith.subf %502, %495 : vector<2x32xf32>
    %504 = arith.mulf %503, %501 : vector<2x32xf32>
    %505 = arith.mulf %495, %452 : vector<2x32xf32>
    %506 = arith.addf %504, %505 : vector<2x32xf32>
    %c16_82 = arith.constant 16 : index
    %c0_83 = arith.constant 0 : index
    %507 = vector.load %arg3[%c16_82, %c0_83] : memref<32x64xf32, #tpu.memory_space<vmem>>, vector<2x32xf32>
    tpu.vector_store %arg3[%c16_82, %c0_83], %484 {strides = array<i32>} : memref<32x64xf32, #tpu.memory_space<vmem>>, vector<2x32xf32>,
    %c14_84 = arith.constant 14 : index
    %c32_85 = arith.constant 32 : index
    %508 = vector.load %arg3[%c14_84, %c32_85] : memref<32x64xf32, #tpu.memory_space<vmem>>, vector<2x32xf32>
    tpu.vector_store %arg3[%c14_84, %c32_85], %506 {strides = array<i32>} : memref<32x64xf32, #tpu.memory_space<vmem>>, vector<2x32xf32>,
    %509 = vector.extract_strided_slice %0 {offsets = [0, 9], sizes = [2, 1], strides = [1, 1]} : vector<2x16xf32> to vector<2x1xf32>
    %510 = vector.broadcast %509 : vector<2x1xf32> to vector<2x96xf32>
    %511 = arith.mulf %510, %14 : vector<2x96xf32>
    %512 = arith.addf %511, %16 : vector<2x96xf32>
    %513 = vector.extract_strided_slice %0 {offsets = [0, 6], sizes = [2, 1], strides = [1, 1]} : vector<2x16xf32> to vector<2x1xf32>
    %514 = vector.broadcast %513 : vector<2x1xf32> to vector<2x96xf32>
    %515 = arith.mulf %514, %18 : vector<2x96xf32>
    %516 = arith.addf %515, %20 : vector<2x96xf32>
    %cst_86 = arith.constant dense<0.000000e+00> : vector<2x96xf32>
    %517 = tpu.matmul %484, %2, %cst_86 {dimension_numbers = #tpu.dot_dimension_numbers<[1], [0], [0], [1], [0, 0, 1, 1], [], []>} : vector<2x32xf32>, vector<32x96xf32>, vector<2x96xf32> -> vector<2x96xf32>
    %518 = vector.extract_strided_slice %512 {offsets = [0, 0], sizes = [2, 64], strides = [1, 1]} : vector<2x96xf32> to vector<2x64xf32>
    %519 = vector.extract_strided_slice %517 {offsets = [0, 0], sizes = [2, 64], strides = [1, 1]} : vector<2x96xf32> to vector<2x64xf32>
    %520 = arith.addf %518, %519 : vector<2x64xf32>
    %521 = arith.negf %520 : vector<2x64xf32>
    %522 = math.exp %521 : vector<2x64xf32>
    %cst_87 = arith.constant 1.000000e+00 : f32
    %523 = vector.broadcast %cst_87 : f32 to vector<2x64xf32>
    %524 = arith.addf %523, %522 : vector<2x64xf32>
    %525 = arith.divf %523, %524 : vector<2x64xf32>
    %526 = vector.extract_strided_slice %525 {offsets = [0, 0], sizes = [2, 32], strides = [1, 1]} : vector<2x64xf32> to vector<2x32xf32>
    %527 = vector.extract_strided_slice %525 {offsets = [0, 32], sizes = [2, 32], strides = [1, 1]} : vector<2x64xf32> to vector<2x32xf32>
    %528 = vector.extract_strided_slice %512 {offsets = [0, 64], sizes = [2, 32], strides = [1, 1]} : vector<2x96xf32> to vector<2x32xf32>
    %529 = vector.extract_strided_slice %517 {offsets = [0, 64], sizes = [2, 32], strides = [1, 1]} : vector<2x96xf32> to vector<2x32xf32>
    %530 = arith.addf %529, %10 : vector<2x32xf32>
    %531 = arith.mulf %526, %530 : vector<2x32xf32>
    %532 = arith.addf %528, %531 : vector<2x32xf32>
    %533 = math.tanh %532 : vector<2x32xf32>
    %cst_88 = arith.constant 1.000000e+00 : f32
    %534 = vector.broadcast %cst_88 : f32 to vector<2x32xf32>
    %535 = arith.subf %534, %527 : vector<2x32xf32>
    %536 = arith.mulf %535, %533 : vector<2x32xf32>
    %537 = arith.mulf %527, %484 : vector<2x32xf32>
    %538 = arith.addf %536, %537 : vector<2x32xf32>
    %cst_89 = arith.constant dense<0.000000e+00> : vector<2x96xf32>
    %539 = tpu.matmul %506, %6, %cst_89 {dimension_numbers = #tpu.dot_dimension_numbers<[1], [0], [0], [1], [0, 0, 1, 1], [], []>} : vector<2x32xf32>, vector<32x96xf32>, vector<2x96xf32> -> vector<2x96xf32>
    %540 = vector.extract_strided_slice %516 {offsets = [0, 0], sizes = [2, 64], strides = [1, 1]} : vector<2x96xf32> to vector<2x64xf32>
    %541 = vector.extract_strided_slice %539 {offsets = [0, 0], sizes = [2, 64], strides = [1, 1]} : vector<2x96xf32> to vector<2x64xf32>
    %542 = arith.addf %540, %541 : vector<2x64xf32>
    %543 = arith.negf %542 : vector<2x64xf32>
    %544 = math.exp %543 : vector<2x64xf32>
    %cst_90 = arith.constant 1.000000e+00 : f32
    %545 = vector.broadcast %cst_90 : f32 to vector<2x64xf32>
    %546 = arith.addf %545, %544 : vector<2x64xf32>
    %547 = arith.divf %545, %546 : vector<2x64xf32>
    %548 = vector.extract_strided_slice %547 {offsets = [0, 0], sizes = [2, 32], strides = [1, 1]} : vector<2x64xf32> to vector<2x32xf32>
    %549 = vector.extract_strided_slice %547 {offsets = [0, 32], sizes = [2, 32], strides = [1, 1]} : vector<2x64xf32> to vector<2x32xf32>
    %550 = vector.extract_strided_slice %516 {offsets = [0, 64], sizes = [2, 32], strides = [1, 1]} : vector<2x96xf32> to vector<2x32xf32>
    %551 = vector.extract_strided_slice %539 {offsets = [0, 64], sizes = [2, 32], strides = [1, 1]} : vector<2x96xf32> to vector<2x32xf32>
    %552 = arith.addf %551, %12 : vector<2x32xf32>
    %553 = arith.mulf %548, %552 : vector<2x32xf32>
    %554 = arith.addf %550, %553 : vector<2x32xf32>
    %555 = math.tanh %554 : vector<2x32xf32>
    %cst_91 = arith.constant 1.000000e+00 : f32
    %556 = vector.broadcast %cst_91 : f32 to vector<2x32xf32>
    %557 = arith.subf %556, %549 : vector<2x32xf32>
    %558 = arith.mulf %557, %555 : vector<2x32xf32>
    %559 = arith.mulf %549, %506 : vector<2x32xf32>
    %560 = arith.addf %558, %559 : vector<2x32xf32>
    %c18_92 = arith.constant 18 : index
    %c0_93 = arith.constant 0 : index
    %561 = vector.load %arg3[%c18_92, %c0_93] : memref<32x64xf32, #tpu.memory_space<vmem>>, vector<2x32xf32>
    tpu.vector_store %arg3[%c18_92, %c0_93], %538 {strides = array<i32>} : memref<32x64xf32, #tpu.memory_space<vmem>>, vector<2x32xf32>,
    %c12_94 = arith.constant 12 : index
    %c32_95 = arith.constant 32 : index
    %562 = vector.load %arg3[%c12_94, %c32_95] : memref<32x64xf32, #tpu.memory_space<vmem>>, vector<2x32xf32>
    tpu.vector_store %arg3[%c12_94, %c32_95], %560 {strides = array<i32>} : memref<32x64xf32, #tpu.memory_space<vmem>>, vector<2x32xf32>,
    %563 = vector.extract_strided_slice %0 {offsets = [0, 10], sizes = [2, 1], strides = [1, 1]} : vector<2x16xf32> to vector<2x1xf32>
    %564 = vector.broadcast %563 : vector<2x1xf32> to vector<2x96xf32>
    %565 = arith.mulf %564, %14 : vector<2x96xf32>
    %566 = arith.addf %565, %16 : vector<2x96xf32>
    %567 = vector.extract_strided_slice %0 {offsets = [0, 5], sizes = [2, 1], strides = [1, 1]} : vector<2x16xf32> to vector<2x1xf32>
    %568 = vector.broadcast %567 : vector<2x1xf32> to vector<2x96xf32>
    %569 = arith.mulf %568, %18 : vector<2x96xf32>
    %570 = arith.addf %569, %20 : vector<2x96xf32>
    %cst_96 = arith.constant dense<0.000000e+00> : vector<2x96xf32>
    %571 = tpu.matmul %538, %2, %cst_96 {dimension_numbers = #tpu.dot_dimension_numbers<[1], [0], [0], [1], [0, 0, 1, 1], [], []>} : vector<2x32xf32>, vector<32x96xf32>, vector<2x96xf32> -> vector<2x96xf32>
    %572 = vector.extract_strided_slice %566 {offsets = [0, 0], sizes = [2, 64], strides = [1, 1]} : vector<2x96xf32> to vector<2x64xf32>
    %573 = vector.extract_strided_slice %571 {offsets = [0, 0], sizes = [2, 64], strides = [1, 1]} : vector<2x96xf32> to vector<2x64xf32>
    %574 = arith.addf %572, %573 : vector<2x64xf32>
    %575 = arith.negf %574 : vector<2x64xf32>
    %576 = math.exp %575 : vector<2x64xf32>
    %cst_97 = arith.constant 1.000000e+00 : f32
    %577 = vector.broadcast %cst_97 : f32 to vector<2x64xf32>
    %578 = arith.addf %577, %576 : vector<2x64xf32>
    %579 = arith.divf %577, %578 : vector<2x64xf32>
    %580 = vector.extract_strided_slice %579 {offsets = [0, 0], sizes = [2, 32], strides = [1, 1]} : vector<2x64xf32> to vector<2x32xf32>
    %581 = vector.extract_strided_slice %579 {offsets = [0, 32], sizes = [2, 32], strides = [1, 1]} : vector<2x64xf32> to vector<2x32xf32>
    %582 = vector.extract_strided_slice %566 {offsets = [0, 64], sizes = [2, 32], strides = [1, 1]} : vector<2x96xf32> to vector<2x32xf32>
    %583 = vector.extract_strided_slice %571 {offsets = [0, 64], sizes = [2, 32], strides = [1, 1]} : vector<2x96xf32> to vector<2x32xf32>
    %584 = arith.addf %583, %10 : vector<2x32xf32>
    %585 = arith.mulf %580, %584 : vector<2x32xf32>
    %586 = arith.addf %582, %585 : vector<2x32xf32>
    %587 = math.tanh %586 : vector<2x32xf32>
    %cst_98 = arith.constant 1.000000e+00 : f32
    %588 = vector.broadcast %cst_98 : f32 to vector<2x32xf32>
    %589 = arith.subf %588, %581 : vector<2x32xf32>
    %590 = arith.mulf %589, %587 : vector<2x32xf32>
    %591 = arith.mulf %581, %538 : vector<2x32xf32>
    %592 = arith.addf %590, %591 : vector<2x32xf32>
    %cst_99 = arith.constant dense<0.000000e+00> : vector<2x96xf32>
    %593 = tpu.matmul %560, %6, %cst_99 {dimension_numbers = #tpu.dot_dimension_numbers<[1], [0], [0], [1], [0, 0, 1, 1], [], []>} : vector<2x32xf32>, vector<32x96xf32>, vector<2x96xf32> -> vector<2x96xf32>
    %594 = vector.extract_strided_slice %570 {offsets = [0, 0], sizes = [2, 64], strides = [1, 1]} : vector<2x96xf32> to vector<2x64xf32>
    %595 = vector.extract_strided_slice %593 {offsets = [0, 0], sizes = [2, 64], strides = [1, 1]} : vector<2x96xf32> to vector<2x64xf32>
    %596 = arith.addf %594, %595 : vector<2x64xf32>
    %597 = arith.negf %596 : vector<2x64xf32>
    %598 = math.exp %597 : vector<2x64xf32>
    %cst_100 = arith.constant 1.000000e+00 : f32
    %599 = vector.broadcast %cst_100 : f32 to vector<2x64xf32>
    %600 = arith.addf %599, %598 : vector<2x64xf32>
    %601 = arith.divf %599, %600 : vector<2x64xf32>
    %602 = vector.extract_strided_slice %601 {offsets = [0, 0], sizes = [2, 32], strides = [1, 1]} : vector<2x64xf32> to vector<2x32xf32>
    %603 = vector.extract_strided_slice %601 {offsets = [0, 32], sizes = [2, 32], strides = [1, 1]} : vector<2x64xf32> to vector<2x32xf32>
    %604 = vector.extract_strided_slice %570 {offsets = [0, 64], sizes = [2, 32], strides = [1, 1]} : vector<2x96xf32> to vector<2x32xf32>
    %605 = vector.extract_strided_slice %593 {offsets = [0, 64], sizes = [2, 32], strides = [1, 1]} : vector<2x96xf32> to vector<2x32xf32>
    %606 = arith.addf %605, %12 : vector<2x32xf32>
    %607 = arith.mulf %602, %606 : vector<2x32xf32>
    %608 = arith.addf %604, %607 : vector<2x32xf32>
    %609 = math.tanh %608 : vector<2x32xf32>
    %cst_101 = arith.constant 1.000000e+00 : f32
    %610 = vector.broadcast %cst_101 : f32 to vector<2x32xf32>
    %611 = arith.subf %610, %603 : vector<2x32xf32>
    %612 = arith.mulf %611, %609 : vector<2x32xf32>
    %613 = arith.mulf %603, %560 : vector<2x32xf32>
    %614 = arith.addf %612, %613 : vector<2x32xf32>
    %c20_102 = arith.constant 20 : index
    %c0_103 = arith.constant 0 : index
    %615 = vector.load %arg3[%c20_102, %c0_103] : memref<32x64xf32, #tpu.memory_space<vmem>>, vector<2x32xf32>
    tpu.vector_store %arg3[%c20_102, %c0_103], %592 {strides = array<i32>} : memref<32x64xf32, #tpu.memory_space<vmem>>, vector<2x32xf32>,
    %c10_104 = arith.constant 10 : index
    %c32_105 = arith.constant 32 : index
    %616 = vector.load %arg3[%c10_104, %c32_105] : memref<32x64xf32, #tpu.memory_space<vmem>>, vector<2x32xf32>
    tpu.vector_store %arg3[%c10_104, %c32_105], %614 {strides = array<i32>} : memref<32x64xf32, #tpu.memory_space<vmem>>, vector<2x32xf32>,
    %617 = vector.extract_strided_slice %0 {offsets = [0, 11], sizes = [2, 1], strides = [1, 1]} : vector<2x16xf32> to vector<2x1xf32>
    %618 = vector.broadcast %617 : vector<2x1xf32> to vector<2x96xf32>
    %619 = arith.mulf %618, %14 : vector<2x96xf32>
    %620 = arith.addf %619, %16 : vector<2x96xf32>
    %621 = vector.extract_strided_slice %0 {offsets = [0, 4], sizes = [2, 1], strides = [1, 1]} : vector<2x16xf32> to vector<2x1xf32>
    %622 = vector.broadcast %621 : vector<2x1xf32> to vector<2x96xf32>
    %623 = arith.mulf %622, %18 : vector<2x96xf32>
    %624 = arith.addf %623, %20 : vector<2x96xf32>
    %cst_106 = arith.constant dense<0.000000e+00> : vector<2x96xf32>
    %625 = tpu.matmul %592, %2, %cst_106 {dimension_numbers = #tpu.dot_dimension_numbers<[1], [0], [0], [1], [0, 0, 1, 1], [], []>} : vector<2x32xf32>, vector<32x96xf32>, vector<2x96xf32> -> vector<2x96xf32>
    %626 = vector.extract_strided_slice %620 {offsets = [0, 0], sizes = [2, 64], strides = [1, 1]} : vector<2x96xf32> to vector<2x64xf32>
    %627 = vector.extract_strided_slice %625 {offsets = [0, 0], sizes = [2, 64], strides = [1, 1]} : vector<2x96xf32> to vector<2x64xf32>
    %628 = arith.addf %626, %627 : vector<2x64xf32>
    %629 = arith.negf %628 : vector<2x64xf32>
    %630 = math.exp %629 : vector<2x64xf32>
    %cst_107 = arith.constant 1.000000e+00 : f32
    %631 = vector.broadcast %cst_107 : f32 to vector<2x64xf32>
    %632 = arith.addf %631, %630 : vector<2x64xf32>
    %633 = arith.divf %631, %632 : vector<2x64xf32>
    %634 = vector.extract_strided_slice %633 {offsets = [0, 0], sizes = [2, 32], strides = [1, 1]} : vector<2x64xf32> to vector<2x32xf32>
    %635 = vector.extract_strided_slice %633 {offsets = [0, 32], sizes = [2, 32], strides = [1, 1]} : vector<2x64xf32> to vector<2x32xf32>
    %636 = vector.extract_strided_slice %620 {offsets = [0, 64], sizes = [2, 32], strides = [1, 1]} : vector<2x96xf32> to vector<2x32xf32>
    %637 = vector.extract_strided_slice %625 {offsets = [0, 64], sizes = [2, 32], strides = [1, 1]} : vector<2x96xf32> to vector<2x32xf32>
    %638 = arith.addf %637, %10 : vector<2x32xf32>
    %639 = arith.mulf %634, %638 : vector<2x32xf32>
    %640 = arith.addf %636, %639 : vector<2x32xf32>
    %641 = math.tanh %640 : vector<2x32xf32>
    %cst_108 = arith.constant 1.000000e+00 : f32
    %642 = vector.broadcast %cst_108 : f32 to vector<2x32xf32>
    %643 = arith.subf %642, %635 : vector<2x32xf32>
    %644 = arith.mulf %643, %641 : vector<2x32xf32>
    %645 = arith.mulf %635, %592 : vector<2x32xf32>
    %646 = arith.addf %644, %645 : vector<2x32xf32>
    %cst_109 = arith.constant dense<0.000000e+00> : vector<2x96xf32>
    %647 = tpu.matmul %614, %6, %cst_109 {dimension_numbers = #tpu.dot_dimension_numbers<[1], [0], [0], [1], [0, 0, 1, 1], [], []>} : vector<2x32xf32>, vector<32x96xf32>, vector<2x96xf32> -> vector<2x96xf32>
    %648 = vector.extract_strided_slice %624 {offsets = [0, 0], sizes = [2, 64], strides = [1, 1]} : vector<2x96xf32> to vector<2x64xf32>
    %649 = vector.extract_strided_slice %647 {offsets = [0, 0], sizes = [2, 64], strides = [1, 1]} : vector<2x96xf32> to vector<2x64xf32>
    %650 = arith.addf %648, %649 : vector<2x64xf32>
    %651 = arith.negf %650 : vector<2x64xf32>
    %652 = math.exp %651 : vector<2x64xf32>
    %cst_110 = arith.constant 1.000000e+00 : f32
    %653 = vector.broadcast %cst_110 : f32 to vector<2x64xf32>
    %654 = arith.addf %653, %652 : vector<2x64xf32>
    %655 = arith.divf %653, %654 : vector<2x64xf32>
    %656 = vector.extract_strided_slice %655 {offsets = [0, 0], sizes = [2, 32], strides = [1, 1]} : vector<2x64xf32> to vector<2x32xf32>
    %657 = vector.extract_strided_slice %655 {offsets = [0, 32], sizes = [2, 32], strides = [1, 1]} : vector<2x64xf32> to vector<2x32xf32>
    %658 = vector.extract_strided_slice %624 {offsets = [0, 64], sizes = [2, 32], strides = [1, 1]} : vector<2x96xf32> to vector<2x32xf32>
    %659 = vector.extract_strided_slice %647 {offsets = [0, 64], sizes = [2, 32], strides = [1, 1]} : vector<2x96xf32> to vector<2x32xf32>
    %660 = arith.addf %659, %12 : vector<2x32xf32>
    %661 = arith.mulf %656, %660 : vector<2x32xf32>
    %662 = arith.addf %658, %661 : vector<2x32xf32>
    %663 = math.tanh %662 : vector<2x32xf32>
    %cst_111 = arith.constant 1.000000e+00 : f32
    %664 = vector.broadcast %cst_111 : f32 to vector<2x32xf32>
    %665 = arith.subf %664, %657 : vector<2x32xf32>
    %666 = arith.mulf %665, %663 : vector<2x32xf32>
    %667 = arith.mulf %657, %614 : vector<2x32xf32>
    %668 = arith.addf %666, %667 : vector<2x32xf32>
    %c22_112 = arith.constant 22 : index
    %c0_113 = arith.constant 0 : index
    %669 = vector.load %arg3[%c22_112, %c0_113] : memref<32x64xf32, #tpu.memory_space<vmem>>, vector<2x32xf32>
    tpu.vector_store %arg3[%c22_112, %c0_113], %646 {strides = array<i32>} : memref<32x64xf32, #tpu.memory_space<vmem>>, vector<2x32xf32>,
    %c8_114 = arith.constant 8 : index
    %c32_115 = arith.constant 32 : index
    %670 = vector.load %arg3[%c8_114, %c32_115] : memref<32x64xf32, #tpu.memory_space<vmem>>, vector<2x32xf32>
    tpu.vector_store %arg3[%c8_114, %c32_115], %668 {strides = array<i32>} : memref<32x64xf32, #tpu.memory_space<vmem>>, vector<2x32xf32>,
    %671 = vector.extract_strided_slice %0 {offsets = [0, 12], sizes = [2, 1], strides = [1, 1]} : vector<2x16xf32> to vector<2x1xf32>
    %672 = vector.broadcast %671 : vector<2x1xf32> to vector<2x96xf32>
    %673 = arith.mulf %672, %14 : vector<2x96xf32>
    %674 = arith.addf %673, %16 : vector<2x96xf32>
    %675 = vector.extract_strided_slice %0 {offsets = [0, 3], sizes = [2, 1], strides = [1, 1]} : vector<2x16xf32> to vector<2x1xf32>
    %676 = vector.broadcast %675 : vector<2x1xf32> to vector<2x96xf32>
    %677 = arith.mulf %676, %18 : vector<2x96xf32>
    %678 = arith.addf %677, %20 : vector<2x96xf32>
    %cst_116 = arith.constant dense<0.000000e+00> : vector<2x96xf32>
    %679 = tpu.matmul %646, %2, %cst_116 {dimension_numbers = #tpu.dot_dimension_numbers<[1], [0], [0], [1], [0, 0, 1, 1], [], []>} : vector<2x32xf32>, vector<32x96xf32>, vector<2x96xf32> -> vector<2x96xf32>
    %680 = vector.extract_strided_slice %674 {offsets = [0, 0], sizes = [2, 64], strides = [1, 1]} : vector<2x96xf32> to vector<2x64xf32>
    %681 = vector.extract_strided_slice %679 {offsets = [0, 0], sizes = [2, 64], strides = [1, 1]} : vector<2x96xf32> to vector<2x64xf32>
    %682 = arith.addf %680, %681 : vector<2x64xf32>
    %683 = arith.negf %682 : vector<2x64xf32>
    %684 = math.exp %683 : vector<2x64xf32>
    %cst_117 = arith.constant 1.000000e+00 : f32
    %685 = vector.broadcast %cst_117 : f32 to vector<2x64xf32>
    %686 = arith.addf %685, %684 : vector<2x64xf32>
    %687 = arith.divf %685, %686 : vector<2x64xf32>
    %688 = vector.extract_strided_slice %687 {offsets = [0, 0], sizes = [2, 32], strides = [1, 1]} : vector<2x64xf32> to vector<2x32xf32>
    %689 = vector.extract_strided_slice %687 {offsets = [0, 32], sizes = [2, 32], strides = [1, 1]} : vector<2x64xf32> to vector<2x32xf32>
    %690 = vector.extract_strided_slice %674 {offsets = [0, 64], sizes = [2, 32], strides = [1, 1]} : vector<2x96xf32> to vector<2x32xf32>
    %691 = vector.extract_strided_slice %679 {offsets = [0, 64], sizes = [2, 32], strides = [1, 1]} : vector<2x96xf32> to vector<2x32xf32>
    %692 = arith.addf %691, %10 : vector<2x32xf32>
    %693 = arith.mulf %688, %692 : vector<2x32xf32>
    %694 = arith.addf %690, %693 : vector<2x32xf32>
    %695 = math.tanh %694 : vector<2x32xf32>
    %cst_118 = arith.constant 1.000000e+00 : f32
    %696 = vector.broadcast %cst_118 : f32 to vector<2x32xf32>
    %697 = arith.subf %696, %689 : vector<2x32xf32>
    %698 = arith.mulf %697, %695 : vector<2x32xf32>
    %699 = arith.mulf %689, %646 : vector<2x32xf32>
    %700 = arith.addf %698, %699 : vector<2x32xf32>
    %cst_119 = arith.constant dense<0.000000e+00> : vector<2x96xf32>
    %701 = tpu.matmul %668, %6, %cst_119 {dimension_numbers = #tpu.dot_dimension_numbers<[1], [0], [0], [1], [0, 0, 1, 1], [], []>} : vector<2x32xf32>, vector<32x96xf32>, vector<2x96xf32> -> vector<2x96xf32>
    %702 = vector.extract_strided_slice %678 {offsets = [0, 0], sizes = [2, 64], strides = [1, 1]} : vector<2x96xf32> to vector<2x64xf32>
    %703 = vector.extract_strided_slice %701 {offsets = [0, 0], sizes = [2, 64], strides = [1, 1]} : vector<2x96xf32> to vector<2x64xf32>
    %704 = arith.addf %702, %703 : vector<2x64xf32>
    %705 = arith.negf %704 : vector<2x64xf32>
    %706 = math.exp %705 : vector<2x64xf32>
    %cst_120 = arith.constant 1.000000e+00 : f32
    %707 = vector.broadcast %cst_120 : f32 to vector<2x64xf32>
    %708 = arith.addf %707, %706 : vector<2x64xf32>
    %709 = arith.divf %707, %708 : vector<2x64xf32>
    %710 = vector.extract_strided_slice %709 {offsets = [0, 0], sizes = [2, 32], strides = [1, 1]} : vector<2x64xf32> to vector<2x32xf32>
    %711 = vector.extract_strided_slice %709 {offsets = [0, 32], sizes = [2, 32], strides = [1, 1]} : vector<2x64xf32> to vector<2x32xf32>
    %712 = vector.extract_strided_slice %678 {offsets = [0, 64], sizes = [2, 32], strides = [1, 1]} : vector<2x96xf32> to vector<2x32xf32>
    %713 = vector.extract_strided_slice %701 {offsets = [0, 64], sizes = [2, 32], strides = [1, 1]} : vector<2x96xf32> to vector<2x32xf32>
    %714 = arith.addf %713, %12 : vector<2x32xf32>
    %715 = arith.mulf %710, %714 : vector<2x32xf32>
    %716 = arith.addf %712, %715 : vector<2x32xf32>
    %717 = math.tanh %716 : vector<2x32xf32>
    %cst_121 = arith.constant 1.000000e+00 : f32
    %718 = vector.broadcast %cst_121 : f32 to vector<2x32xf32>
    %719 = arith.subf %718, %711 : vector<2x32xf32>
    %720 = arith.mulf %719, %717 : vector<2x32xf32>
    %721 = arith.mulf %711, %668 : vector<2x32xf32>
    %722 = arith.addf %720, %721 : vector<2x32xf32>
    %c24_122 = arith.constant 24 : index
    %c0_123 = arith.constant 0 : index
    %723 = vector.load %arg3[%c24_122, %c0_123] : memref<32x64xf32, #tpu.memory_space<vmem>>, vector<2x32xf32>
    tpu.vector_store %arg3[%c24_122, %c0_123], %700 {strides = array<i32>} : memref<32x64xf32, #tpu.memory_space<vmem>>, vector<2x32xf32>,
    %c6_124 = arith.constant 6 : index
    %c32_125 = arith.constant 32 : index
    %724 = vector.load %arg3[%c6_124, %c32_125] : memref<32x64xf32, #tpu.memory_space<vmem>>, vector<2x32xf32>
    tpu.vector_store %arg3[%c6_124, %c32_125], %722 {strides = array<i32>} : memref<32x64xf32, #tpu.memory_space<vmem>>, vector<2x32xf32>,
    %725 = vector.extract_strided_slice %0 {offsets = [0, 13], sizes = [2, 1], strides = [1, 1]} : vector<2x16xf32> to vector<2x1xf32>
    %726 = vector.broadcast %725 : vector<2x1xf32> to vector<2x96xf32>
    %727 = arith.mulf %726, %14 : vector<2x96xf32>
    %728 = arith.addf %727, %16 : vector<2x96xf32>
    %729 = vector.extract_strided_slice %0 {offsets = [0, 2], sizes = [2, 1], strides = [1, 1]} : vector<2x16xf32> to vector<2x1xf32>
    %730 = vector.broadcast %729 : vector<2x1xf32> to vector<2x96xf32>
    %731 = arith.mulf %730, %18 : vector<2x96xf32>
    %732 = arith.addf %731, %20 : vector<2x96xf32>
    %cst_126 = arith.constant dense<0.000000e+00> : vector<2x96xf32>
    %733 = tpu.matmul %700, %2, %cst_126 {dimension_numbers = #tpu.dot_dimension_numbers<[1], [0], [0], [1], [0, 0, 1, 1], [], []>} : vector<2x32xf32>, vector<32x96xf32>, vector<2x96xf32> -> vector<2x96xf32>
    %734 = vector.extract_strided_slice %728 {offsets = [0, 0], sizes = [2, 64], strides = [1, 1]} : vector<2x96xf32> to vector<2x64xf32>
    %735 = vector.extract_strided_slice %733 {offsets = [0, 0], sizes = [2, 64], strides = [1, 1]} : vector<2x96xf32> to vector<2x64xf32>
    %736 = arith.addf %734, %735 : vector<2x64xf32>
    %737 = arith.negf %736 : vector<2x64xf32>
    %738 = math.exp %737 : vector<2x64xf32>
    %cst_127 = arith.constant 1.000000e+00 : f32
    %739 = vector.broadcast %cst_127 : f32 to vector<2x64xf32>
    %740 = arith.addf %739, %738 : vector<2x64xf32>
    %741 = arith.divf %739, %740 : vector<2x64xf32>
    %742 = vector.extract_strided_slice %741 {offsets = [0, 0], sizes = [2, 32], strides = [1, 1]} : vector<2x64xf32> to vector<2x32xf32>
    %743 = vector.extract_strided_slice %741 {offsets = [0, 32], sizes = [2, 32], strides = [1, 1]} : vector<2x64xf32> to vector<2x32xf32>
    %744 = vector.extract_strided_slice %728 {offsets = [0, 64], sizes = [2, 32], strides = [1, 1]} : vector<2x96xf32> to vector<2x32xf32>
    %745 = vector.extract_strided_slice %733 {offsets = [0, 64], sizes = [2, 32], strides = [1, 1]} : vector<2x96xf32> to vector<2x32xf32>
    %746 = arith.addf %745, %10 : vector<2x32xf32>
    %747 = arith.mulf %742, %746 : vector<2x32xf32>
    %748 = arith.addf %744, %747 : vector<2x32xf32>
    %749 = math.tanh %748 : vector<2x32xf32>
    %cst_128 = arith.constant 1.000000e+00 : f32
    %750 = vector.broadcast %cst_128 : f32 to vector<2x32xf32>
    %751 = arith.subf %750, %743 : vector<2x32xf32>
    %752 = arith.mulf %751, %749 : vector<2x32xf32>
    %753 = arith.mulf %743, %700 : vector<2x32xf32>
    %754 = arith.addf %752, %753 : vector<2x32xf32>
    %cst_129 = arith.constant dense<0.000000e+00> : vector<2x96xf32>
    %755 = tpu.matmul %722, %6, %cst_129 {dimension_numbers = #tpu.dot_dimension_numbers<[1], [0], [0], [1], [0, 0, 1, 1], [], []>} : vector<2x32xf32>, vector<32x96xf32>, vector<2x96xf32> -> vector<2x96xf32>
    %756 = vector.extract_strided_slice %732 {offsets = [0, 0], sizes = [2, 64], strides = [1, 1]} : vector<2x96xf32> to vector<2x64xf32>
    %757 = vector.extract_strided_slice %755 {offsets = [0, 0], sizes = [2, 64], strides = [1, 1]} : vector<2x96xf32> to vector<2x64xf32>
    %758 = arith.addf %756, %757 : vector<2x64xf32>
    %759 = arith.negf %758 : vector<2x64xf32>
    %760 = math.exp %759 : vector<2x64xf32>
    %cst_130 = arith.constant 1.000000e+00 : f32
    %761 = vector.broadcast %cst_130 : f32 to vector<2x64xf32>
    %762 = arith.addf %761, %760 : vector<2x64xf32>
    %763 = arith.divf %761, %762 : vector<2x64xf32>
    %764 = vector.extract_strided_slice %763 {offsets = [0, 0], sizes = [2, 32], strides = [1, 1]} : vector<2x64xf32> to vector<2x32xf32>
    %765 = vector.extract_strided_slice %763 {offsets = [0, 32], sizes = [2, 32], strides = [1, 1]} : vector<2x64xf32> to vector<2x32xf32>
    %766 = vector.extract_strided_slice %732 {offsets = [0, 64], sizes = [2, 32], strides = [1, 1]} : vector<2x96xf32> to vector<2x32xf32>
    %767 = vector.extract_strided_slice %755 {offsets = [0, 64], sizes = [2, 32], strides = [1, 1]} : vector<2x96xf32> to vector<2x32xf32>
    %768 = arith.addf %767, %12 : vector<2x32xf32>
    %769 = arith.mulf %764, %768 : vector<2x32xf32>
    %770 = arith.addf %766, %769 : vector<2x32xf32>
    %771 = math.tanh %770 : vector<2x32xf32>
    %cst_131 = arith.constant 1.000000e+00 : f32
    %772 = vector.broadcast %cst_131 : f32 to vector<2x32xf32>
    %773 = arith.subf %772, %765 : vector<2x32xf32>
    %774 = arith.mulf %773, %771 : vector<2x32xf32>
    %775 = arith.mulf %765, %722 : vector<2x32xf32>
    %776 = arith.addf %774, %775 : vector<2x32xf32>
    %c26_132 = arith.constant 26 : index
    %c0_133 = arith.constant 0 : index
    %777 = vector.load %arg3[%c26_132, %c0_133] : memref<32x64xf32, #tpu.memory_space<vmem>>, vector<2x32xf32>
    tpu.vector_store %arg3[%c26_132, %c0_133], %754 {strides = array<i32>} : memref<32x64xf32, #tpu.memory_space<vmem>>, vector<2x32xf32>,
    %c4_134 = arith.constant 4 : index
    %c32_135 = arith.constant 32 : index
    %778 = vector.load %arg3[%c4_134, %c32_135] : memref<32x64xf32, #tpu.memory_space<vmem>>, vector<2x32xf32>
    tpu.vector_store %arg3[%c4_134, %c32_135], %776 {strides = array<i32>} : memref<32x64xf32, #tpu.memory_space<vmem>>, vector<2x32xf32>,
    %779 = vector.extract_strided_slice %0 {offsets = [0, 14], sizes = [2, 1], strides = [1, 1]} : vector<2x16xf32> to vector<2x1xf32>
    %780 = vector.broadcast %779 : vector<2x1xf32> to vector<2x96xf32>
    %781 = arith.mulf %780, %14 : vector<2x96xf32>
    %782 = arith.addf %781, %16 : vector<2x96xf32>
    %783 = vector.extract_strided_slice %0 {offsets = [0, 1], sizes = [2, 1], strides = [1, 1]} : vector<2x16xf32> to vector<2x1xf32>
    %784 = vector.broadcast %783 : vector<2x1xf32> to vector<2x96xf32>
    %785 = arith.mulf %784, %18 : vector<2x96xf32>
    %786 = arith.addf %785, %20 : vector<2x96xf32>
    %cst_136 = arith.constant dense<0.000000e+00> : vector<2x96xf32>
    %787 = tpu.matmul %754, %2, %cst_136 {dimension_numbers = #tpu.dot_dimension_numbers<[1], [0], [0], [1], [0, 0, 1, 1], [], []>} : vector<2x32xf32>, vector<32x96xf32>, vector<2x96xf32> -> vector<2x96xf32>
    %788 = vector.extract_strided_slice %782 {offsets = [0, 0], sizes = [2, 64], strides = [1, 1]} : vector<2x96xf32> to vector<2x64xf32>
    %789 = vector.extract_strided_slice %787 {offsets = [0, 0], sizes = [2, 64], strides = [1, 1]} : vector<2x96xf32> to vector<2x64xf32>
    %790 = arith.addf %788, %789 : vector<2x64xf32>
    %791 = arith.negf %790 : vector<2x64xf32>
    %792 = math.exp %791 : vector<2x64xf32>
    %cst_137 = arith.constant 1.000000e+00 : f32
    %793 = vector.broadcast %cst_137 : f32 to vector<2x64xf32>
    %794 = arith.addf %793, %792 : vector<2x64xf32>
    %795 = arith.divf %793, %794 : vector<2x64xf32>
    %796 = vector.extract_strided_slice %795 {offsets = [0, 0], sizes = [2, 32], strides = [1, 1]} : vector<2x64xf32> to vector<2x32xf32>
    %797 = vector.extract_strided_slice %795 {offsets = [0, 32], sizes = [2, 32], strides = [1, 1]} : vector<2x64xf32> to vector<2x32xf32>
    %798 = vector.extract_strided_slice %782 {offsets = [0, 64], sizes = [2, 32], strides = [1, 1]} : vector<2x96xf32> to vector<2x32xf32>
    %799 = vector.extract_strided_slice %787 {offsets = [0, 64], sizes = [2, 32], strides = [1, 1]} : vector<2x96xf32> to vector<2x32xf32>
    %800 = arith.addf %799, %10 : vector<2x32xf32>
    %801 = arith.mulf %796, %800 : vector<2x32xf32>
    %802 = arith.addf %798, %801 : vector<2x32xf32>
    %803 = math.tanh %802 : vector<2x32xf32>
    %cst_138 = arith.constant 1.000000e+00 : f32
    %804 = vector.broadcast %cst_138 : f32 to vector<2x32xf32>
    %805 = arith.subf %804, %797 : vector<2x32xf32>
    %806 = arith.mulf %805, %803 : vector<2x32xf32>
    %807 = arith.mulf %797, %754 : vector<2x32xf32>
    %808 = arith.addf %806, %807 : vector<2x32xf32>
    %cst_139 = arith.constant dense<0.000000e+00> : vector<2x96xf32>
    %809 = tpu.matmul %776, %6, %cst_139 {dimension_numbers = #tpu.dot_dimension_numbers<[1], [0], [0], [1], [0, 0, 1, 1], [], []>} : vector<2x32xf32>, vector<32x96xf32>, vector<2x96xf32> -> vector<2x96xf32>
    %810 = vector.extract_strided_slice %786 {offsets = [0, 0], sizes = [2, 64], strides = [1, 1]} : vector<2x96xf32> to vector<2x64xf32>
    %811 = vector.extract_strided_slice %809 {offsets = [0, 0], sizes = [2, 64], strides = [1, 1]} : vector<2x96xf32> to vector<2x64xf32>
    %812 = arith.addf %810, %811 : vector<2x64xf32>
    %813 = arith.negf %812 : vector<2x64xf32>
    %814 = math.exp %813 : vector<2x64xf32>
    %cst_140 = arith.constant 1.000000e+00 : f32
    %815 = vector.broadcast %cst_140 : f32 to vector<2x64xf32>
    %816 = arith.addf %815, %814 : vector<2x64xf32>
    %817 = arith.divf %815, %816 : vector<2x64xf32>
    %818 = vector.extract_strided_slice %817 {offsets = [0, 0], sizes = [2, 32], strides = [1, 1]} : vector<2x64xf32> to vector<2x32xf32>
    %819 = vector.extract_strided_slice %817 {offsets = [0, 32], sizes = [2, 32], strides = [1, 1]} : vector<2x64xf32> to vector<2x32xf32>
    %820 = vector.extract_strided_slice %786 {offsets = [0, 64], sizes = [2, 32], strides = [1, 1]} : vector<2x96xf32> to vector<2x32xf32>
    %821 = vector.extract_strided_slice %809 {offsets = [0, 64], sizes = [2, 32], strides = [1, 1]} : vector<2x96xf32> to vector<2x32xf32>
    %822 = arith.addf %821, %12 : vector<2x32xf32>
    %823 = arith.mulf %818, %822 : vector<2x32xf32>
    %824 = arith.addf %820, %823 : vector<2x32xf32>
    %825 = math.tanh %824 : vector<2x32xf32>
    %cst_141 = arith.constant 1.000000e+00 : f32
    %826 = vector.broadcast %cst_141 : f32 to vector<2x32xf32>
    %827 = arith.subf %826, %819 : vector<2x32xf32>
    %828 = arith.mulf %827, %825 : vector<2x32xf32>
    %829 = arith.mulf %819, %776 : vector<2x32xf32>
    %830 = arith.addf %828, %829 : vector<2x32xf32>
    %c28_142 = arith.constant 28 : index
    %c0_143 = arith.constant 0 : index
    %831 = vector.load %arg3[%c28_142, %c0_143] : memref<32x64xf32, #tpu.memory_space<vmem>>, vector<2x32xf32>
    tpu.vector_store %arg3[%c28_142, %c0_143], %808 {strides = array<i32>} : memref<32x64xf32, #tpu.memory_space<vmem>>, vector<2x32xf32>,
    %c2_144 = arith.constant 2 : index
    %c32_145 = arith.constant 32 : index
    %832 = vector.load %arg3[%c2_144, %c32_145] : memref<32x64xf32, #tpu.memory_space<vmem>>, vector<2x32xf32>
    tpu.vector_store %arg3[%c2_144, %c32_145], %830 {strides = array<i32>} : memref<32x64xf32, #tpu.memory_space<vmem>>, vector<2x32xf32>,
    %833 = vector.extract_strided_slice %0 {offsets = [0, 15], sizes = [2, 1], strides = [1, 1]} : vector<2x16xf32> to vector<2x1xf32>
    %834 = vector.broadcast %833 : vector<2x1xf32> to vector<2x96xf32>
    %835 = arith.mulf %834, %14 : vector<2x96xf32>
    %836 = arith.addf %835, %16 : vector<2x96xf32>
    %837 = vector.extract_strided_slice %0 {offsets = [0, 0], sizes = [2, 1], strides = [1, 1]} : vector<2x16xf32> to vector<2x1xf32>
    %838 = vector.broadcast %837 : vector<2x1xf32> to vector<2x96xf32>
    %839 = arith.mulf %838, %18 : vector<2x96xf32>
    %840 = arith.addf %839, %20 : vector<2x96xf32>
    %cst_146 = arith.constant dense<0.000000e+00> : vector<2x96xf32>
    %841 = tpu.matmul %808, %2, %cst_146 {dimension_numbers = #tpu.dot_dimension_numbers<[1], [0], [0], [1], [0, 0, 1, 1], [], []>} : vector<2x32xf32>, vector<32x96xf32>, vector<2x96xf32> -> vector<2x96xf32>
    %842 = vector.extract_strided_slice %836 {offsets = [0, 0], sizes = [2, 64], strides = [1, 1]} : vector<2x96xf32> to vector<2x64xf32>
    %843 = vector.extract_strided_slice %841 {offsets = [0, 0], sizes = [2, 64], strides = [1, 1]} : vector<2x96xf32> to vector<2x64xf32>
    %844 = arith.addf %842, %843 : vector<2x64xf32>
    %845 = arith.negf %844 : vector<2x64xf32>
    %846 = math.exp %845 : vector<2x64xf32>
    %cst_147 = arith.constant 1.000000e+00 : f32
    %847 = vector.broadcast %cst_147 : f32 to vector<2x64xf32>
    %848 = arith.addf %847, %846 : vector<2x64xf32>
    %849 = arith.divf %847, %848 : vector<2x64xf32>
    %850 = vector.extract_strided_slice %849 {offsets = [0, 0], sizes = [2, 32], strides = [1, 1]} : vector<2x64xf32> to vector<2x32xf32>
    %851 = vector.extract_strided_slice %849 {offsets = [0, 32], sizes = [2, 32], strides = [1, 1]} : vector<2x64xf32> to vector<2x32xf32>
    %852 = vector.extract_strided_slice %836 {offsets = [0, 64], sizes = [2, 32], strides = [1, 1]} : vector<2x96xf32> to vector<2x32xf32>
    %853 = vector.extract_strided_slice %841 {offsets = [0, 64], sizes = [2, 32], strides = [1, 1]} : vector<2x96xf32> to vector<2x32xf32>
    %854 = arith.addf %853, %10 : vector<2x32xf32>
    %855 = arith.mulf %850, %854 : vector<2x32xf32>
    %856 = arith.addf %852, %855 : vector<2x32xf32>
    %857 = math.tanh %856 : vector<2x32xf32>
    %cst_148 = arith.constant 1.000000e+00 : f32
    %858 = vector.broadcast %cst_148 : f32 to vector<2x32xf32>
    %859 = arith.subf %858, %851 : vector<2x32xf32>
    %860 = arith.mulf %859, %857 : vector<2x32xf32>
    %861 = arith.mulf %851, %808 : vector<2x32xf32>
    %862 = arith.addf %860, %861 : vector<2x32xf32>
    %cst_149 = arith.constant dense<0.000000e+00> : vector<2x96xf32>
    %863 = tpu.matmul %830, %6, %cst_149 {dimension_numbers = #tpu.dot_dimension_numbers<[1], [0], [0], [1], [0, 0, 1, 1], [], []>} : vector<2x32xf32>, vector<32x96xf32>, vector<2x96xf32> -> vector<2x96xf32>
    %864 = vector.extract_strided_slice %840 {offsets = [0, 0], sizes = [2, 64], strides = [1, 1]} : vector<2x96xf32> to vector<2x64xf32>
    %865 = vector.extract_strided_slice %863 {offsets = [0, 0], sizes = [2, 64], strides = [1, 1]} : vector<2x96xf32> to vector<2x64xf32>
    %866 = arith.addf %864, %865 : vector<2x64xf32>
    %867 = arith.negf %866 : vector<2x64xf32>
    %868 = math.exp %867 : vector<2x64xf32>
    %cst_150 = arith.constant 1.000000e+00 : f32
    %869 = vector.broadcast %cst_150 : f32 to vector<2x64xf32>
    %870 = arith.addf %869, %868 : vector<2x64xf32>
    %871 = arith.divf %869, %870 : vector<2x64xf32>
    %872 = vector.extract_strided_slice %871 {offsets = [0, 0], sizes = [2, 32], strides = [1, 1]} : vector<2x64xf32> to vector<2x32xf32>
    %873 = vector.extract_strided_slice %871 {offsets = [0, 32], sizes = [2, 32], strides = [1, 1]} : vector<2x64xf32> to vector<2x32xf32>
    %874 = vector.extract_strided_slice %840 {offsets = [0, 64], sizes = [2, 32], strides = [1, 1]} : vector<2x96xf32> to vector<2x32xf32>
    %875 = vector.extract_strided_slice %863 {offsets = [0, 64], sizes = [2, 32], strides = [1, 1]} : vector<2x96xf32> to vector<2x32xf32>
    %876 = arith.addf %875, %12 : vector<2x32xf32>
    %877 = arith.mulf %872, %876 : vector<2x32xf32>
    %878 = arith.addf %874, %877 : vector<2x32xf32>
    %879 = math.tanh %878 : vector<2x32xf32>
    %cst_151 = arith.constant 1.000000e+00 : f32
    %880 = vector.broadcast %cst_151 : f32 to vector<2x32xf32>
    %881 = arith.subf %880, %873 : vector<2x32xf32>
    %882 = arith.mulf %881, %879 : vector<2x32xf32>
    %883 = arith.mulf %873, %830 : vector<2x32xf32>
    %884 = arith.addf %882, %883 : vector<2x32xf32>
    %c30_152 = arith.constant 30 : index
    %c0_153 = arith.constant 0 : index
    %885 = vector.load %arg3[%c30_152, %c0_153] : memref<32x64xf32, #tpu.memory_space<vmem>>, vector<2x32xf32>
    tpu.vector_store %arg3[%c30_152, %c0_153], %862 {strides = array<i32>} : memref<32x64xf32, #tpu.memory_space<vmem>>, vector<2x32xf32>,
    %c0_154 = arith.constant 0 : index
    %c32_155 = arith.constant 32 : index
    %886 = vector.load %arg3[%c0_154, %c32_155] : memref<32x64xf32, #tpu.memory_space<vmem>>, vector<2x32xf32>
    tpu.vector_store %arg3[%c0_154, %c32_155], %884 {strides = array<i32>} : memref<32x64xf32, #tpu.memory_space<vmem>>, vector<2x32xf32>,
    %c96 = arith.constant 96 : index
    %c0_156 = arith.constant 0 : index
    %887 = vector.load %arg1[%c96, %c0_156] : memref<304x96xf32, #tpu.memory_space<vmem>>, vector<64x96xf32>
    %c160 = arith.constant 160 : index
    %c0_157 = arith.constant 0 : index
    %888 = vector.load %arg1[%c160, %c0_157] : memref<304x96xf32, #tpu.memory_space<vmem>>, vector<32x96xf32>
    %c192 = arith.constant 192 : index
    %c0_158 = arith.constant 0 : index
    %889 = vector.load %arg1[%c192, %c0_158] : memref<304x96xf32, #tpu.memory_space<vmem>>, vector<1x96xf32>
    %c193 = arith.constant 193 : index
    %c0_159 = arith.constant 0 : index
    %890 = vector.load %arg1[%c193, %c0_159] : memref<304x96xf32, #tpu.memory_space<vmem>>, vector<1x32xf32>
    %c200 = arith.constant 200 : index
    %c0_160 = arith.constant 0 : index
    %891 = vector.load %arg1[%c200, %c0_160] : memref<304x96xf32, #tpu.memory_space<vmem>>, vector<64x96xf32>
    %c264 = arith.constant 264 : index
    %c0_161 = arith.constant 0 : index
    %892 = vector.load %arg1[%c264, %c0_161] : memref<304x96xf32, #tpu.memory_space<vmem>>, vector<32x96xf32>
    %c296 = arith.constant 296 : index
    %c0_162 = arith.constant 0 : index
    %893 = vector.load %arg1[%c296, %c0_162] : memref<304x96xf32, #tpu.memory_space<vmem>>, vector<1x96xf32>
    %c297 = arith.constant 297 : index
    %c0_163 = arith.constant 0 : index
    %894 = vector.load %arg1[%c297, %c0_163] : memref<304x96xf32, #tpu.memory_space<vmem>>, vector<1x32xf32>
    %895 = vector.shape_cast %890 : vector<1x32xf32> to vector<1x32xf32>
    %896 = vector.broadcast %895 : vector<1x32xf32> to vector<2x32xf32>
    %897 = vector.shape_cast %894 : vector<1x32xf32> to vector<1x32xf32>
    %898 = vector.broadcast %897 : vector<1x32xf32> to vector<2x32xf32>
    %c0_164 = arith.constant 0 : index
    %c0_165 = arith.constant 0 : index
    %899 = vector.load %arg3[%c0_164, %c0_165] : memref<32x64xf32, #tpu.memory_space<vmem>>, vector<32x64xf32>
    %cst_166 = arith.constant dense<0.000000e+00> : vector<32x96xf32>
    %900 = tpu.matmul %899, %887, %cst_166 {dimension_numbers = #tpu.dot_dimension_numbers<[1], [0], [0], [1], [0, 0, 1, 1], [], []>} : vector<32x64xf32>, vector<64x96xf32>, vector<32x96xf32> -> vector<32x96xf32>
    %901 = vector.broadcast %889 : vector<1x96xf32> to vector<32x96xf32>
    %902 = arith.addf %900, %901 : vector<32x96xf32>
    %cst_167 = arith.constant dense<0.000000e+00> : vector<32x96xf32>
    %903 = tpu.matmul %899, %891, %cst_167 {dimension_numbers = #tpu.dot_dimension_numbers<[1], [0], [0], [1], [0, 0, 1, 1], [], []>} : vector<32x64xf32>, vector<64x96xf32>, vector<32x96xf32> -> vector<32x96xf32>
    %904 = vector.broadcast %893 : vector<1x96xf32> to vector<32x96xf32>
    %905 = arith.addf %903, %904 : vector<32x96xf32>
    %cst_168 = arith.constant 0.000000e+00 : f32
    %906 = vector.broadcast %cst_168 : f32 to vector<2x32xf32>
    %cst_169 = arith.constant 0.000000e+00 : f32
    %907 = vector.broadcast %cst_169 : f32 to vector<2x32xf32>
    %908 = vector.extract_strided_slice %902 {offsets = [0, 0], sizes = [2, 96], strides = [1, 1]} : vector<32x96xf32> to vector<2x96xf32>
    %909 = vector.extract_strided_slice %905 {offsets = [30, 0], sizes = [2, 96], strides = [1, 1]} : vector<32x96xf32> to vector<2x96xf32>
    %cst_170 = arith.constant dense<0.000000e+00> : vector<2x96xf32>
    %910 = tpu.matmul %906, %888, %cst_170 {dimension_numbers = #tpu.dot_dimension_numbers<[1], [0], [0], [1], [0, 0, 1, 1], [], []>} : vector<2x32xf32>, vector<32x96xf32>, vector<2x96xf32> -> vector<2x96xf32>
    %911 = vector.extract_strided_slice %908 {offsets = [0, 0], sizes = [2, 64], strides = [1, 1]} : vector<2x96xf32> to vector<2x64xf32>
    %912 = vector.extract_strided_slice %910 {offsets = [0, 0], sizes = [2, 64], strides = [1, 1]} : vector<2x96xf32> to vector<2x64xf32>
    %913 = arith.addf %911, %912 : vector<2x64xf32>
    %914 = arith.negf %913 : vector<2x64xf32>
    %915 = math.exp %914 : vector<2x64xf32>
    %cst_171 = arith.constant 1.000000e+00 : f32
    %916 = vector.broadcast %cst_171 : f32 to vector<2x64xf32>
    %917 = arith.addf %916, %915 : vector<2x64xf32>
    %918 = arith.divf %916, %917 : vector<2x64xf32>
    %919 = vector.extract_strided_slice %918 {offsets = [0, 0], sizes = [2, 32], strides = [1, 1]} : vector<2x64xf32> to vector<2x32xf32>
    %920 = vector.extract_strided_slice %918 {offsets = [0, 32], sizes = [2, 32], strides = [1, 1]} : vector<2x64xf32> to vector<2x32xf32>
    %921 = vector.extract_strided_slice %908 {offsets = [0, 64], sizes = [2, 32], strides = [1, 1]} : vector<2x96xf32> to vector<2x32xf32>
    %922 = vector.extract_strided_slice %910 {offsets = [0, 64], sizes = [2, 32], strides = [1, 1]} : vector<2x96xf32> to vector<2x32xf32>
    %923 = arith.addf %922, %896 : vector<2x32xf32>
    %924 = arith.mulf %919, %923 : vector<2x32xf32>
    %925 = arith.addf %921, %924 : vector<2x32xf32>
    %926 = math.tanh %925 : vector<2x32xf32>
    %cst_172 = arith.constant 1.000000e+00 : f32
    %927 = vector.broadcast %cst_172 : f32 to vector<2x32xf32>
    %928 = arith.subf %927, %920 : vector<2x32xf32>
    %929 = arith.mulf %928, %926 : vector<2x32xf32>
    %930 = arith.mulf %920, %906 : vector<2x32xf32>
    %931 = arith.addf %929, %930 : vector<2x32xf32>
    %cst_173 = arith.constant dense<0.000000e+00> : vector<2x96xf32>
    %932 = tpu.matmul %907, %892, %cst_173 {dimension_numbers = #tpu.dot_dimension_numbers<[1], [0], [0], [1], [0, 0, 1, 1], [], []>} : vector<2x32xf32>, vector<32x96xf32>, vector<2x96xf32> -> vector<2x96xf32>
    %933 = vector.extract_strided_slice %909 {offsets = [0, 0], sizes = [2, 64], strides = [1, 1]} : vector<2x96xf32> to vector<2x64xf32>
    %934 = vector.extract_strided_slice %932 {offsets = [0, 0], sizes = [2, 64], strides = [1, 1]} : vector<2x96xf32> to vector<2x64xf32>
    %935 = arith.addf %933, %934 : vector<2x64xf32>
    %936 = arith.negf %935 : vector<2x64xf32>
    %937 = math.exp %936 : vector<2x64xf32>
    %cst_174 = arith.constant 1.000000e+00 : f32
    %938 = vector.broadcast %cst_174 : f32 to vector<2x64xf32>
    %939 = arith.addf %938, %937 : vector<2x64xf32>
    %940 = arith.divf %938, %939 : vector<2x64xf32>
    %941 = vector.extract_strided_slice %940 {offsets = [0, 0], sizes = [2, 32], strides = [1, 1]} : vector<2x64xf32> to vector<2x32xf32>
    %942 = vector.extract_strided_slice %940 {offsets = [0, 32], sizes = [2, 32], strides = [1, 1]} : vector<2x64xf32> to vector<2x32xf32>
    %943 = vector.extract_strided_slice %909 {offsets = [0, 64], sizes = [2, 32], strides = [1, 1]} : vector<2x96xf32> to vector<2x32xf32>
    %944 = vector.extract_strided_slice %932 {offsets = [0, 64], sizes = [2, 32], strides = [1, 1]} : vector<2x96xf32> to vector<2x32xf32>
    %945 = arith.addf %944, %898 : vector<2x32xf32>
    %946 = arith.mulf %941, %945 : vector<2x32xf32>
    %947 = arith.addf %943, %946 : vector<2x32xf32>
    %948 = math.tanh %947 : vector<2x32xf32>
    %cst_175 = arith.constant 1.000000e+00 : f32
    %949 = vector.broadcast %cst_175 : f32 to vector<2x32xf32>
    %950 = arith.subf %949, %942 : vector<2x32xf32>
    %951 = arith.mulf %950, %948 : vector<2x32xf32>
    %952 = arith.mulf %942, %907 : vector<2x32xf32>
    %953 = arith.addf %951, %952 : vector<2x32xf32>
    %c0_176 = arith.constant 0 : index
    %c0_177 = arith.constant 0 : index
    %954 = vector.load %arg4[%c0_176, %c0_177] : memref<2x512xf32, #tpu.memory_space<vmem>>, vector<2x32xf32>
    tpu.vector_store %arg4[%c0_176, %c0_177], %931 {strides = array<i32>} : memref<2x512xf32, #tpu.memory_space<vmem>>, vector<2x32xf32>,
    %c0_178 = arith.constant 0 : index
    %c480 = arith.constant 480 : index
    %955 = vector.load %arg5[%c0_178, %c480] : memref<2x512xf32, #tpu.memory_space<vmem>>, vector<2x32xf32>
    tpu.vector_store %arg5[%c0_178, %c480], %953 {strides = array<i32>} : memref<2x512xf32, #tpu.memory_space<vmem>>, vector<2x32xf32>,
    %956 = vector.extract_strided_slice %902 {offsets = [2, 0], sizes = [2, 96], strides = [1, 1]} : vector<32x96xf32> to vector<2x96xf32>
    %957 = vector.extract_strided_slice %905 {offsets = [28, 0], sizes = [2, 96], strides = [1, 1]} : vector<32x96xf32> to vector<2x96xf32>
    %cst_179 = arith.constant dense<0.000000e+00> : vector<2x96xf32>
    %958 = tpu.matmul %931, %888, %cst_179 {dimension_numbers = #tpu.dot_dimension_numbers<[1], [0], [0], [1], [0, 0, 1, 1], [], []>} : vector<2x32xf32>, vector<32x96xf32>, vector<2x96xf32> -> vector<2x96xf32>
    %959 = vector.extract_strided_slice %956 {offsets = [0, 0], sizes = [2, 64], strides = [1, 1]} : vector<2x96xf32> to vector<2x64xf32>
    %960 = vector.extract_strided_slice %958 {offsets = [0, 0], sizes = [2, 64], strides = [1, 1]} : vector<2x96xf32> to vector<2x64xf32>
    %961 = arith.addf %959, %960 : vector<2x64xf32>
    %962 = arith.negf %961 : vector<2x64xf32>
    %963 = math.exp %962 : vector<2x64xf32>
    %cst_180 = arith.constant 1.000000e+00 : f32
    %964 = vector.broadcast %cst_180 : f32 to vector<2x64xf32>
    %965 = arith.addf %964, %963 : vector<2x64xf32>
    %966 = arith.divf %964, %965 : vector<2x64xf32>
    %967 = vector.extract_strided_slice %966 {offsets = [0, 0], sizes = [2, 32], strides = [1, 1]} : vector<2x64xf32> to vector<2x32xf32>
    %968 = vector.extract_strided_slice %966 {offsets = [0, 32], sizes = [2, 32], strides = [1, 1]} : vector<2x64xf32> to vector<2x32xf32>
    %969 = vector.extract_strided_slice %956 {offsets = [0, 64], sizes = [2, 32], strides = [1, 1]} : vector<2x96xf32> to vector<2x32xf32>
    %970 = vector.extract_strided_slice %958 {offsets = [0, 64], sizes = [2, 32], strides = [1, 1]} : vector<2x96xf32> to vector<2x32xf32>
    %971 = arith.addf %970, %896 : vector<2x32xf32>
    %972 = arith.mulf %967, %971 : vector<2x32xf32>
    %973 = arith.addf %969, %972 : vector<2x32xf32>
    %974 = math.tanh %973 : vector<2x32xf32>
    %cst_181 = arith.constant 1.000000e+00 : f32
    %975 = vector.broadcast %cst_181 : f32 to vector<2x32xf32>
    %976 = arith.subf %975, %968 : vector<2x32xf32>
    %977 = arith.mulf %976, %974 : vector<2x32xf32>
    %978 = arith.mulf %968, %931 : vector<2x32xf32>
    %979 = arith.addf %977, %978 : vector<2x32xf32>
    %cst_182 = arith.constant dense<0.000000e+00> : vector<2x96xf32>
    %980 = tpu.matmul %953, %892, %cst_182 {dimension_numbers = #tpu.dot_dimension_numbers<[1], [0], [0], [1], [0, 0, 1, 1], [], []>} : vector<2x32xf32>, vector<32x96xf32>, vector<2x96xf32> -> vector<2x96xf32>
    %981 = vector.extract_strided_slice %957 {offsets = [0, 0], sizes = [2, 64], strides = [1, 1]} : vector<2x96xf32> to vector<2x64xf32>
    %982 = vector.extract_strided_slice %980 {offsets = [0, 0], sizes = [2, 64], strides = [1, 1]} : vector<2x96xf32> to vector<2x64xf32>
    %983 = arith.addf %981, %982 : vector<2x64xf32>
    %984 = arith.negf %983 : vector<2x64xf32>
    %985 = math.exp %984 : vector<2x64xf32>
    %cst_183 = arith.constant 1.000000e+00 : f32
    %986 = vector.broadcast %cst_183 : f32 to vector<2x64xf32>
    %987 = arith.addf %986, %985 : vector<2x64xf32>
    %988 = arith.divf %986, %987 : vector<2x64xf32>
    %989 = vector.extract_strided_slice %988 {offsets = [0, 0], sizes = [2, 32], strides = [1, 1]} : vector<2x64xf32> to vector<2x32xf32>
    %990 = vector.extract_strided_slice %988 {offsets = [0, 32], sizes = [2, 32], strides = [1, 1]} : vector<2x64xf32> to vector<2x32xf32>
    %991 = vector.extract_strided_slice %957 {offsets = [0, 64], sizes = [2, 32], strides = [1, 1]} : vector<2x96xf32> to vector<2x32xf32>
    %992 = vector.extract_strided_slice %980 {offsets = [0, 64], sizes = [2, 32], strides = [1, 1]} : vector<2x96xf32> to vector<2x32xf32>
    %993 = arith.addf %992, %898 : vector<2x32xf32>
    %994 = arith.mulf %989, %993 : vector<2x32xf32>
    %995 = arith.addf %991, %994 : vector<2x32xf32>
    %996 = math.tanh %995 : vector<2x32xf32>
    %cst_184 = arith.constant 1.000000e+00 : f32
    %997 = vector.broadcast %cst_184 : f32 to vector<2x32xf32>
    %998 = arith.subf %997, %990 : vector<2x32xf32>
    %999 = arith.mulf %998, %996 : vector<2x32xf32>
    %1000 = arith.mulf %990, %953 : vector<2x32xf32>
    %1001 = arith.addf %999, %1000 : vector<2x32xf32>
    %c0_185 = arith.constant 0 : index
    %c32_186 = arith.constant 32 : index
    %1002 = vector.load %arg4[%c0_185, %c32_186] : memref<2x512xf32, #tpu.memory_space<vmem>>, vector<2x32xf32>
    tpu.vector_store %arg4[%c0_185, %c32_186], %979 {strides = array<i32>} : memref<2x512xf32, #tpu.memory_space<vmem>>, vector<2x32xf32>,
    %c0_187 = arith.constant 0 : index
    %c448 = arith.constant 448 : index
    %1003 = vector.load %arg5[%c0_187, %c448] : memref<2x512xf32, #tpu.memory_space<vmem>>, vector<2x32xf32>
    tpu.vector_store %arg5[%c0_187, %c448], %1001 {strides = array<i32>} : memref<2x512xf32, #tpu.memory_space<vmem>>, vector<2x32xf32>,
    %1004 = vector.extract_strided_slice %902 {offsets = [4, 0], sizes = [2, 96], strides = [1, 1]} : vector<32x96xf32> to vector<2x96xf32>
    %1005 = vector.extract_strided_slice %905 {offsets = [26, 0], sizes = [2, 96], strides = [1, 1]} : vector<32x96xf32> to vector<2x96xf32>
    %cst_188 = arith.constant dense<0.000000e+00> : vector<2x96xf32>
    %1006 = tpu.matmul %979, %888, %cst_188 {dimension_numbers = #tpu.dot_dimension_numbers<[1], [0], [0], [1], [0, 0, 1, 1], [], []>} : vector<2x32xf32>, vector<32x96xf32>, vector<2x96xf32> -> vector<2x96xf32>
    %1007 = vector.extract_strided_slice %1004 {offsets = [0, 0], sizes = [2, 64], strides = [1, 1]} : vector<2x96xf32> to vector<2x64xf32>
    %1008 = vector.extract_strided_slice %1006 {offsets = [0, 0], sizes = [2, 64], strides = [1, 1]} : vector<2x96xf32> to vector<2x64xf32>
    %1009 = arith.addf %1007, %1008 : vector<2x64xf32>
    %1010 = arith.negf %1009 : vector<2x64xf32>
    %1011 = math.exp %1010 : vector<2x64xf32>
    %cst_189 = arith.constant 1.000000e+00 : f32
    %1012 = vector.broadcast %cst_189 : f32 to vector<2x64xf32>
    %1013 = arith.addf %1012, %1011 : vector<2x64xf32>
    %1014 = arith.divf %1012, %1013 : vector<2x64xf32>
    %1015 = vector.extract_strided_slice %1014 {offsets = [0, 0], sizes = [2, 32], strides = [1, 1]} : vector<2x64xf32> to vector<2x32xf32>
    %1016 = vector.extract_strided_slice %1014 {offsets = [0, 32], sizes = [2, 32], strides = [1, 1]} : vector<2x64xf32> to vector<2x32xf32>
    %1017 = vector.extract_strided_slice %1004 {offsets = [0, 64], sizes = [2, 32], strides = [1, 1]} : vector<2x96xf32> to vector<2x32xf32>
    %1018 = vector.extract_strided_slice %1006 {offsets = [0, 64], sizes = [2, 32], strides = [1, 1]} : vector<2x96xf32> to vector<2x32xf32>
    %1019 = arith.addf %1018, %896 : vector<2x32xf32>
    %1020 = arith.mulf %1015, %1019 : vector<2x32xf32>
    %1021 = arith.addf %1017, %1020 : vector<2x32xf32>
    %1022 = math.tanh %1021 : vector<2x32xf32>
    %cst_190 = arith.constant 1.000000e+00 : f32
    %1023 = vector.broadcast %cst_190 : f32 to vector<2x32xf32>
    %1024 = arith.subf %1023, %1016 : vector<2x32xf32>
    %1025 = arith.mulf %1024, %1022 : vector<2x32xf32>
    %1026 = arith.mulf %1016, %979 : vector<2x32xf32>
    %1027 = arith.addf %1025, %1026 : vector<2x32xf32>
    %cst_191 = arith.constant dense<0.000000e+00> : vector<2x96xf32>
    %1028 = tpu.matmul %1001, %892, %cst_191 {dimension_numbers = #tpu.dot_dimension_numbers<[1], [0], [0], [1], [0, 0, 1, 1], [], []>} : vector<2x32xf32>, vector<32x96xf32>, vector<2x96xf32> -> vector<2x96xf32>
    %1029 = vector.extract_strided_slice %1005 {offsets = [0, 0], sizes = [2, 64], strides = [1, 1]} : vector<2x96xf32> to vector<2x64xf32>
    %1030 = vector.extract_strided_slice %1028 {offsets = [0, 0], sizes = [2, 64], strides = [1, 1]} : vector<2x96xf32> to vector<2x64xf32>
    %1031 = arith.addf %1029, %1030 : vector<2x64xf32>
    %1032 = arith.negf %1031 : vector<2x64xf32>
    %1033 = math.exp %1032 : vector<2x64xf32>
    %cst_192 = arith.constant 1.000000e+00 : f32
    %1034 = vector.broadcast %cst_192 : f32 to vector<2x64xf32>
    %1035 = arith.addf %1034, %1033 : vector<2x64xf32>
    %1036 = arith.divf %1034, %1035 : vector<2x64xf32>
    %1037 = vector.extract_strided_slice %1036 {offsets = [0, 0], sizes = [2, 32], strides = [1, 1]} : vector<2x64xf32> to vector<2x32xf32>
    %1038 = vector.extract_strided_slice %1036 {offsets = [0, 32], sizes = [2, 32], strides = [1, 1]} : vector<2x64xf32> to vector<2x32xf32>
    %1039 = vector.extract_strided_slice %1005 {offsets = [0, 64], sizes = [2, 32], strides = [1, 1]} : vector<2x96xf32> to vector<2x32xf32>
    %1040 = vector.extract_strided_slice %1028 {offsets = [0, 64], sizes = [2, 32], strides = [1, 1]} : vector<2x96xf32> to vector<2x32xf32>
    %1041 = arith.addf %1040, %898 : vector<2x32xf32>
    %1042 = arith.mulf %1037, %1041 : vector<2x32xf32>
    %1043 = arith.addf %1039, %1042 : vector<2x32xf32>
    %1044 = math.tanh %1043 : vector<2x32xf32>
    %cst_193 = arith.constant 1.000000e+00 : f32
    %1045 = vector.broadcast %cst_193 : f32 to vector<2x32xf32>
    %1046 = arith.subf %1045, %1038 : vector<2x32xf32>
    %1047 = arith.mulf %1046, %1044 : vector<2x32xf32>
    %1048 = arith.mulf %1038, %1001 : vector<2x32xf32>
    %1049 = arith.addf %1047, %1048 : vector<2x32xf32>
    %c0_194 = arith.constant 0 : index
    %c64 = arith.constant 64 : index
    %1050 = vector.load %arg4[%c0_194, %c64] : memref<2x512xf32, #tpu.memory_space<vmem>>, vector<2x32xf32>
    tpu.vector_store %arg4[%c0_194, %c64], %1027 {strides = array<i32>} : memref<2x512xf32, #tpu.memory_space<vmem>>, vector<2x32xf32>,
    %c0_195 = arith.constant 0 : index
    %c416 = arith.constant 416 : index
    %1051 = vector.load %arg5[%c0_195, %c416] : memref<2x512xf32, #tpu.memory_space<vmem>>, vector<2x32xf32>
    tpu.vector_store %arg5[%c0_195, %c416], %1049 {strides = array<i32>} : memref<2x512xf32, #tpu.memory_space<vmem>>, vector<2x32xf32>,
    %1052 = vector.extract_strided_slice %902 {offsets = [6, 0], sizes = [2, 96], strides = [1, 1]} : vector<32x96xf32> to vector<2x96xf32>
    %1053 = vector.extract_strided_slice %905 {offsets = [24, 0], sizes = [2, 96], strides = [1, 1]} : vector<32x96xf32> to vector<2x96xf32>
    %cst_196 = arith.constant dense<0.000000e+00> : vector<2x96xf32>
    %1054 = tpu.matmul %1027, %888, %cst_196 {dimension_numbers = #tpu.dot_dimension_numbers<[1], [0], [0], [1], [0, 0, 1, 1], [], []>} : vector<2x32xf32>, vector<32x96xf32>, vector<2x96xf32> -> vector<2x96xf32>
    %1055 = vector.extract_strided_slice %1052 {offsets = [0, 0], sizes = [2, 64], strides = [1, 1]} : vector<2x96xf32> to vector<2x64xf32>
    %1056 = vector.extract_strided_slice %1054 {offsets = [0, 0], sizes = [2, 64], strides = [1, 1]} : vector<2x96xf32> to vector<2x64xf32>
    %1057 = arith.addf %1055, %1056 : vector<2x64xf32>
    %1058 = arith.negf %1057 : vector<2x64xf32>
    %1059 = math.exp %1058 : vector<2x64xf32>
    %cst_197 = arith.constant 1.000000e+00 : f32
    %1060 = vector.broadcast %cst_197 : f32 to vector<2x64xf32>
    %1061 = arith.addf %1060, %1059 : vector<2x64xf32>
    %1062 = arith.divf %1060, %1061 : vector<2x64xf32>
    %1063 = vector.extract_strided_slice %1062 {offsets = [0, 0], sizes = [2, 32], strides = [1, 1]} : vector<2x64xf32> to vector<2x32xf32>
    %1064 = vector.extract_strided_slice %1062 {offsets = [0, 32], sizes = [2, 32], strides = [1, 1]} : vector<2x64xf32> to vector<2x32xf32>
    %1065 = vector.extract_strided_slice %1052 {offsets = [0, 64], sizes = [2, 32], strides = [1, 1]} : vector<2x96xf32> to vector<2x32xf32>
    %1066 = vector.extract_strided_slice %1054 {offsets = [0, 64], sizes = [2, 32], strides = [1, 1]} : vector<2x96xf32> to vector<2x32xf32>
    %1067 = arith.addf %1066, %896 : vector<2x32xf32>
    %1068 = arith.mulf %1063, %1067 : vector<2x32xf32>
    %1069 = arith.addf %1065, %1068 : vector<2x32xf32>
    %1070 = math.tanh %1069 : vector<2x32xf32>
    %cst_198 = arith.constant 1.000000e+00 : f32
    %1071 = vector.broadcast %cst_198 : f32 to vector<2x32xf32>
    %1072 = arith.subf %1071, %1064 : vector<2x32xf32>
    %1073 = arith.mulf %1072, %1070 : vector<2x32xf32>
    %1074 = arith.mulf %1064, %1027 : vector<2x32xf32>
    %1075 = arith.addf %1073, %1074 : vector<2x32xf32>
    %cst_199 = arith.constant dense<0.000000e+00> : vector<2x96xf32>
    %1076 = tpu.matmul %1049, %892, %cst_199 {dimension_numbers = #tpu.dot_dimension_numbers<[1], [0], [0], [1], [0, 0, 1, 1], [], []>} : vector<2x32xf32>, vector<32x96xf32>, vector<2x96xf32> -> vector<2x96xf32>
    %1077 = vector.extract_strided_slice %1053 {offsets = [0, 0], sizes = [2, 64], strides = [1, 1]} : vector<2x96xf32> to vector<2x64xf32>
    %1078 = vector.extract_strided_slice %1076 {offsets = [0, 0], sizes = [2, 64], strides = [1, 1]} : vector<2x96xf32> to vector<2x64xf32>
    %1079 = arith.addf %1077, %1078 : vector<2x64xf32>
    %1080 = arith.negf %1079 : vector<2x64xf32>
    %1081 = math.exp %1080 : vector<2x64xf32>
    %cst_200 = arith.constant 1.000000e+00 : f32
    %1082 = vector.broadcast %cst_200 : f32 to vector<2x64xf32>
    %1083 = arith.addf %1082, %1081 : vector<2x64xf32>
    %1084 = arith.divf %1082, %1083 : vector<2x64xf32>
    %1085 = vector.extract_strided_slice %1084 {offsets = [0, 0], sizes = [2, 32], strides = [1, 1]} : vector<2x64xf32> to vector<2x32xf32>
    %1086 = vector.extract_strided_slice %1084 {offsets = [0, 32], sizes = [2, 32], strides = [1, 1]} : vector<2x64xf32> to vector<2x32xf32>
    %1087 = vector.extract_strided_slice %1053 {offsets = [0, 64], sizes = [2, 32], strides = [1, 1]} : vector<2x96xf32> to vector<2x32xf32>
    %1088 = vector.extract_strided_slice %1076 {offsets = [0, 64], sizes = [2, 32], strides = [1, 1]} : vector<2x96xf32> to vector<2x32xf32>
    %1089 = arith.addf %1088, %898 : vector<2x32xf32>
    %1090 = arith.mulf %1085, %1089 : vector<2x32xf32>
    %1091 = arith.addf %1087, %1090 : vector<2x32xf32>
    %1092 = math.tanh %1091 : vector<2x32xf32>
    %cst_201 = arith.constant 1.000000e+00 : f32
    %1093 = vector.broadcast %cst_201 : f32 to vector<2x32xf32>
    %1094 = arith.subf %1093, %1086 : vector<2x32xf32>
    %1095 = arith.mulf %1094, %1092 : vector<2x32xf32>
    %1096 = arith.mulf %1086, %1049 : vector<2x32xf32>
    %1097 = arith.addf %1095, %1096 : vector<2x32xf32>
    %c0_202 = arith.constant 0 : index
    %c96_203 = arith.constant 96 : index
    %1098 = vector.load %arg4[%c0_202, %c96_203] : memref<2x512xf32, #tpu.memory_space<vmem>>, vector<2x32xf32>
    tpu.vector_store %arg4[%c0_202, %c96_203], %1075 {strides = array<i32>} : memref<2x512xf32, #tpu.memory_space<vmem>>, vector<2x32xf32>,
    %c0_204 = arith.constant 0 : index
    %c384 = arith.constant 384 : index
    %1099 = vector.load %arg5[%c0_204, %c384] : memref<2x512xf32, #tpu.memory_space<vmem>>, vector<2x32xf32>
    tpu.vector_store %arg5[%c0_204, %c384], %1097 {strides = array<i32>} : memref<2x512xf32, #tpu.memory_space<vmem>>, vector<2x32xf32>,
    %1100 = vector.extract_strided_slice %902 {offsets = [8, 0], sizes = [2, 96], strides = [1, 1]} : vector<32x96xf32> to vector<2x96xf32>
    %1101 = vector.extract_strided_slice %905 {offsets = [22, 0], sizes = [2, 96], strides = [1, 1]} : vector<32x96xf32> to vector<2x96xf32>
    %cst_205 = arith.constant dense<0.000000e+00> : vector<2x96xf32>
    %1102 = tpu.matmul %1075, %888, %cst_205 {dimension_numbers = #tpu.dot_dimension_numbers<[1], [0], [0], [1], [0, 0, 1, 1], [], []>} : vector<2x32xf32>, vector<32x96xf32>, vector<2x96xf32> -> vector<2x96xf32>
    %1103 = vector.extract_strided_slice %1100 {offsets = [0, 0], sizes = [2, 64], strides = [1, 1]} : vector<2x96xf32> to vector<2x64xf32>
    %1104 = vector.extract_strided_slice %1102 {offsets = [0, 0], sizes = [2, 64], strides = [1, 1]} : vector<2x96xf32> to vector<2x64xf32>
    %1105 = arith.addf %1103, %1104 : vector<2x64xf32>
    %1106 = arith.negf %1105 : vector<2x64xf32>
    %1107 = math.exp %1106 : vector<2x64xf32>
    %cst_206 = arith.constant 1.000000e+00 : f32
    %1108 = vector.broadcast %cst_206 : f32 to vector<2x64xf32>
    %1109 = arith.addf %1108, %1107 : vector<2x64xf32>
    %1110 = arith.divf %1108, %1109 : vector<2x64xf32>
    %1111 = vector.extract_strided_slice %1110 {offsets = [0, 0], sizes = [2, 32], strides = [1, 1]} : vector<2x64xf32> to vector<2x32xf32>
    %1112 = vector.extract_strided_slice %1110 {offsets = [0, 32], sizes = [2, 32], strides = [1, 1]} : vector<2x64xf32> to vector<2x32xf32>
    %1113 = vector.extract_strided_slice %1100 {offsets = [0, 64], sizes = [2, 32], strides = [1, 1]} : vector<2x96xf32> to vector<2x32xf32>
    %1114 = vector.extract_strided_slice %1102 {offsets = [0, 64], sizes = [2, 32], strides = [1, 1]} : vector<2x96xf32> to vector<2x32xf32>
    %1115 = arith.addf %1114, %896 : vector<2x32xf32>
    %1116 = arith.mulf %1111, %1115 : vector<2x32xf32>
    %1117 = arith.addf %1113, %1116 : vector<2x32xf32>
    %1118 = math.tanh %1117 : vector<2x32xf32>
    %cst_207 = arith.constant 1.000000e+00 : f32
    %1119 = vector.broadcast %cst_207 : f32 to vector<2x32xf32>
    %1120 = arith.subf %1119, %1112 : vector<2x32xf32>
    %1121 = arith.mulf %1120, %1118 : vector<2x32xf32>
    %1122 = arith.mulf %1112, %1075 : vector<2x32xf32>
    %1123 = arith.addf %1121, %1122 : vector<2x32xf32>
    %cst_208 = arith.constant dense<0.000000e+00> : vector<2x96xf32>
    %1124 = tpu.matmul %1097, %892, %cst_208 {dimension_numbers = #tpu.dot_dimension_numbers<[1], [0], [0], [1], [0, 0, 1, 1], [], []>} : vector<2x32xf32>, vector<32x96xf32>, vector<2x96xf32> -> vector<2x96xf32>
    %1125 = vector.extract_strided_slice %1101 {offsets = [0, 0], sizes = [2, 64], strides = [1, 1]} : vector<2x96xf32> to vector<2x64xf32>
    %1126 = vector.extract_strided_slice %1124 {offsets = [0, 0], sizes = [2, 64], strides = [1, 1]} : vector<2x96xf32> to vector<2x64xf32>
    %1127 = arith.addf %1125, %1126 : vector<2x64xf32>
    %1128 = arith.negf %1127 : vector<2x64xf32>
    %1129 = math.exp %1128 : vector<2x64xf32>
    %cst_209 = arith.constant 1.000000e+00 : f32
    %1130 = vector.broadcast %cst_209 : f32 to vector<2x64xf32>
    %1131 = arith.addf %1130, %1129 : vector<2x64xf32>
    %1132 = arith.divf %1130, %1131 : vector<2x64xf32>
    %1133 = vector.extract_strided_slice %1132 {offsets = [0, 0], sizes = [2, 32], strides = [1, 1]} : vector<2x64xf32> to vector<2x32xf32>
    %1134 = vector.extract_strided_slice %1132 {offsets = [0, 32], sizes = [2, 32], strides = [1, 1]} : vector<2x64xf32> to vector<2x32xf32>
    %1135 = vector.extract_strided_slice %1101 {offsets = [0, 64], sizes = [2, 32], strides = [1, 1]} : vector<2x96xf32> to vector<2x32xf32>
    %1136 = vector.extract_strided_slice %1124 {offsets = [0, 64], sizes = [2, 32], strides = [1, 1]} : vector<2x96xf32> to vector<2x32xf32>
    %1137 = arith.addf %1136, %898 : vector<2x32xf32>
    %1138 = arith.mulf %1133, %1137 : vector<2x32xf32>
    %1139 = arith.addf %1135, %1138 : vector<2x32xf32>
    %1140 = math.tanh %1139 : vector<2x32xf32>
    %cst_210 = arith.constant 1.000000e+00 : f32
    %1141 = vector.broadcast %cst_210 : f32 to vector<2x32xf32>
    %1142 = arith.subf %1141, %1134 : vector<2x32xf32>
    %1143 = arith.mulf %1142, %1140 : vector<2x32xf32>
    %1144 = arith.mulf %1134, %1097 : vector<2x32xf32>
    %1145 = arith.addf %1143, %1144 : vector<2x32xf32>
    %c0_211 = arith.constant 0 : index
    %c128 = arith.constant 128 : index
    %1146 = vector.load %arg4[%c0_211, %c128] : memref<2x512xf32, #tpu.memory_space<vmem>>, vector<2x32xf32>
    tpu.vector_store %arg4[%c0_211, %c128], %1123 {strides = array<i32>} : memref<2x512xf32, #tpu.memory_space<vmem>>, vector<2x32xf32>,
    %c0_212 = arith.constant 0 : index
    %c352 = arith.constant 352 : index
    %1147 = vector.load %arg5[%c0_212, %c352] : memref<2x512xf32, #tpu.memory_space<vmem>>, vector<2x32xf32>
    tpu.vector_store %arg5[%c0_212, %c352], %1145 {strides = array<i32>} : memref<2x512xf32, #tpu.memory_space<vmem>>, vector<2x32xf32>,
    %1148 = vector.extract_strided_slice %902 {offsets = [10, 0], sizes = [2, 96], strides = [1, 1]} : vector<32x96xf32> to vector<2x96xf32>
    %1149 = vector.extract_strided_slice %905 {offsets = [20, 0], sizes = [2, 96], strides = [1, 1]} : vector<32x96xf32> to vector<2x96xf32>
    %cst_213 = arith.constant dense<0.000000e+00> : vector<2x96xf32>
    %1150 = tpu.matmul %1123, %888, %cst_213 {dimension_numbers = #tpu.dot_dimension_numbers<[1], [0], [0], [1], [0, 0, 1, 1], [], []>} : vector<2x32xf32>, vector<32x96xf32>, vector<2x96xf32> -> vector<2x96xf32>
    %1151 = vector.extract_strided_slice %1148 {offsets = [0, 0], sizes = [2, 64], strides = [1, 1]} : vector<2x96xf32> to vector<2x64xf32>
    %1152 = vector.extract_strided_slice %1150 {offsets = [0, 0], sizes = [2, 64], strides = [1, 1]} : vector<2x96xf32> to vector<2x64xf32>
    %1153 = arith.addf %1151, %1152 : vector<2x64xf32>
    %1154 = arith.negf %1153 : vector<2x64xf32>
    %1155 = math.exp %1154 : vector<2x64xf32>
    %cst_214 = arith.constant 1.000000e+00 : f32
    %1156 = vector.broadcast %cst_214 : f32 to vector<2x64xf32>
    %1157 = arith.addf %1156, %1155 : vector<2x64xf32>
    %1158 = arith.divf %1156, %1157 : vector<2x64xf32>
    %1159 = vector.extract_strided_slice %1158 {offsets = [0, 0], sizes = [2, 32], strides = [1, 1]} : vector<2x64xf32> to vector<2x32xf32>
    %1160 = vector.extract_strided_slice %1158 {offsets = [0, 32], sizes = [2, 32], strides = [1, 1]} : vector<2x64xf32> to vector<2x32xf32>
    %1161 = vector.extract_strided_slice %1148 {offsets = [0, 64], sizes = [2, 32], strides = [1, 1]} : vector<2x96xf32> to vector<2x32xf32>
    %1162 = vector.extract_strided_slice %1150 {offsets = [0, 64], sizes = [2, 32], strides = [1, 1]} : vector<2x96xf32> to vector<2x32xf32>
    %1163 = arith.addf %1162, %896 : vector<2x32xf32>
    %1164 = arith.mulf %1159, %1163 : vector<2x32xf32>
    %1165 = arith.addf %1161, %1164 : vector<2x32xf32>
    %1166 = math.tanh %1165 : vector<2x32xf32>
    %cst_215 = arith.constant 1.000000e+00 : f32
    %1167 = vector.broadcast %cst_215 : f32 to vector<2x32xf32>
    %1168 = arith.subf %1167, %1160 : vector<2x32xf32>
    %1169 = arith.mulf %1168, %1166 : vector<2x32xf32>
    %1170 = arith.mulf %1160, %1123 : vector<2x32xf32>
    %1171 = arith.addf %1169, %1170 : vector<2x32xf32>
    %cst_216 = arith.constant dense<0.000000e+00> : vector<2x96xf32>
    %1172 = tpu.matmul %1145, %892, %cst_216 {dimension_numbers = #tpu.dot_dimension_numbers<[1], [0], [0], [1], [0, 0, 1, 1], [], []>} : vector<2x32xf32>, vector<32x96xf32>, vector<2x96xf32> -> vector<2x96xf32>
    %1173 = vector.extract_strided_slice %1149 {offsets = [0, 0], sizes = [2, 64], strides = [1, 1]} : vector<2x96xf32> to vector<2x64xf32>
    %1174 = vector.extract_strided_slice %1172 {offsets = [0, 0], sizes = [2, 64], strides = [1, 1]} : vector<2x96xf32> to vector<2x64xf32>
    %1175 = arith.addf %1173, %1174 : vector<2x64xf32>
    %1176 = arith.negf %1175 : vector<2x64xf32>
    %1177 = math.exp %1176 : vector<2x64xf32>
    %cst_217 = arith.constant 1.000000e+00 : f32
    %1178 = vector.broadcast %cst_217 : f32 to vector<2x64xf32>
    %1179 = arith.addf %1178, %1177 : vector<2x64xf32>
    %1180 = arith.divf %1178, %1179 : vector<2x64xf32>
    %1181 = vector.extract_strided_slice %1180 {offsets = [0, 0], sizes = [2, 32], strides = [1, 1]} : vector<2x64xf32> to vector<2x32xf32>
    %1182 = vector.extract_strided_slice %1180 {offsets = [0, 32], sizes = [2, 32], strides = [1, 1]} : vector<2x64xf32> to vector<2x32xf32>
    %1183 = vector.extract_strided_slice %1149 {offsets = [0, 64], sizes = [2, 32], strides = [1, 1]} : vector<2x96xf32> to vector<2x32xf32>
    %1184 = vector.extract_strided_slice %1172 {offsets = [0, 64], sizes = [2, 32], strides = [1, 1]} : vector<2x96xf32> to vector<2x32xf32>
    %1185 = arith.addf %1184, %898 : vector<2x32xf32>
    %1186 = arith.mulf %1181, %1185 : vector<2x32xf32>
    %1187 = arith.addf %1183, %1186 : vector<2x32xf32>
    %1188 = math.tanh %1187 : vector<2x32xf32>
    %cst_218 = arith.constant 1.000000e+00 : f32
    %1189 = vector.broadcast %cst_218 : f32 to vector<2x32xf32>
    %1190 = arith.subf %1189, %1182 : vector<2x32xf32>
    %1191 = arith.mulf %1190, %1188 : vector<2x32xf32>
    %1192 = arith.mulf %1182, %1145 : vector<2x32xf32>
    %1193 = arith.addf %1191, %1192 : vector<2x32xf32>
    %c0_219 = arith.constant 0 : index
    %c160_220 = arith.constant 160 : index
    %1194 = vector.load %arg4[%c0_219, %c160_220] : memref<2x512xf32, #tpu.memory_space<vmem>>, vector<2x32xf32>
    tpu.vector_store %arg4[%c0_219, %c160_220], %1171 {strides = array<i32>} : memref<2x512xf32, #tpu.memory_space<vmem>>, vector<2x32xf32>,
    %c0_221 = arith.constant 0 : index
    %c320 = arith.constant 320 : index
    %1195 = vector.load %arg5[%c0_221, %c320] : memref<2x512xf32, #tpu.memory_space<vmem>>, vector<2x32xf32>
    tpu.vector_store %arg5[%c0_221, %c320], %1193 {strides = array<i32>} : memref<2x512xf32, #tpu.memory_space<vmem>>, vector<2x32xf32>,
    %1196 = vector.extract_strided_slice %902 {offsets = [12, 0], sizes = [2, 96], strides = [1, 1]} : vector<32x96xf32> to vector<2x96xf32>
    %1197 = vector.extract_strided_slice %905 {offsets = [18, 0], sizes = [2, 96], strides = [1, 1]} : vector<32x96xf32> to vector<2x96xf32>
    %cst_222 = arith.constant dense<0.000000e+00> : vector<2x96xf32>
    %1198 = tpu.matmul %1171, %888, %cst_222 {dimension_numbers = #tpu.dot_dimension_numbers<[1], [0], [0], [1], [0, 0, 1, 1], [], []>} : vector<2x32xf32>, vector<32x96xf32>, vector<2x96xf32> -> vector<2x96xf32>
    %1199 = vector.extract_strided_slice %1196 {offsets = [0, 0], sizes = [2, 64], strides = [1, 1]} : vector<2x96xf32> to vector<2x64xf32>
    %1200 = vector.extract_strided_slice %1198 {offsets = [0, 0], sizes = [2, 64], strides = [1, 1]} : vector<2x96xf32> to vector<2x64xf32>
    %1201 = arith.addf %1199, %1200 : vector<2x64xf32>
    %1202 = arith.negf %1201 : vector<2x64xf32>
    %1203 = math.exp %1202 : vector<2x64xf32>
    %cst_223 = arith.constant 1.000000e+00 : f32
    %1204 = vector.broadcast %cst_223 : f32 to vector<2x64xf32>
    %1205 = arith.addf %1204, %1203 : vector<2x64xf32>
    %1206 = arith.divf %1204, %1205 : vector<2x64xf32>
    %1207 = vector.extract_strided_slice %1206 {offsets = [0, 0], sizes = [2, 32], strides = [1, 1]} : vector<2x64xf32> to vector<2x32xf32>
    %1208 = vector.extract_strided_slice %1206 {offsets = [0, 32], sizes = [2, 32], strides = [1, 1]} : vector<2x64xf32> to vector<2x32xf32>
    %1209 = vector.extract_strided_slice %1196 {offsets = [0, 64], sizes = [2, 32], strides = [1, 1]} : vector<2x96xf32> to vector<2x32xf32>
    %1210 = vector.extract_strided_slice %1198 {offsets = [0, 64], sizes = [2, 32], strides = [1, 1]} : vector<2x96xf32> to vector<2x32xf32>
    %1211 = arith.addf %1210, %896 : vector<2x32xf32>
    %1212 = arith.mulf %1207, %1211 : vector<2x32xf32>
    %1213 = arith.addf %1209, %1212 : vector<2x32xf32>
    %1214 = math.tanh %1213 : vector<2x32xf32>
    %cst_224 = arith.constant 1.000000e+00 : f32
    %1215 = vector.broadcast %cst_224 : f32 to vector<2x32xf32>
    %1216 = arith.subf %1215, %1208 : vector<2x32xf32>
    %1217 = arith.mulf %1216, %1214 : vector<2x32xf32>
    %1218 = arith.mulf %1208, %1171 : vector<2x32xf32>
    %1219 = arith.addf %1217, %1218 : vector<2x32xf32>
    %cst_225 = arith.constant dense<0.000000e+00> : vector<2x96xf32>
    %1220 = tpu.matmul %1193, %892, %cst_225 {dimension_numbers = #tpu.dot_dimension_numbers<[1], [0], [0], [1], [0, 0, 1, 1], [], []>} : vector<2x32xf32>, vector<32x96xf32>, vector<2x96xf32> -> vector<2x96xf32>
    %1221 = vector.extract_strided_slice %1197 {offsets = [0, 0], sizes = [2, 64], strides = [1, 1]} : vector<2x96xf32> to vector<2x64xf32>
    %1222 = vector.extract_strided_slice %1220 {offsets = [0, 0], sizes = [2, 64], strides = [1, 1]} : vector<2x96xf32> to vector<2x64xf32>
    %1223 = arith.addf %1221, %1222 : vector<2x64xf32>
    %1224 = arith.negf %1223 : vector<2x64xf32>
    %1225 = math.exp %1224 : vector<2x64xf32>
    %cst_226 = arith.constant 1.000000e+00 : f32
    %1226 = vector.broadcast %cst_226 : f32 to vector<2x64xf32>
    %1227 = arith.addf %1226, %1225 : vector<2x64xf32>
    %1228 = arith.divf %1226, %1227 : vector<2x64xf32>
    %1229 = vector.extract_strided_slice %1228 {offsets = [0, 0], sizes = [2, 32], strides = [1, 1]} : vector<2x64xf32> to vector<2x32xf32>
    %1230 = vector.extract_strided_slice %1228 {offsets = [0, 32], sizes = [2, 32], strides = [1, 1]} : vector<2x64xf32> to vector<2x32xf32>
    %1231 = vector.extract_strided_slice %1197 {offsets = [0, 64], sizes = [2, 32], strides = [1, 1]} : vector<2x96xf32> to vector<2x32xf32>
    %1232 = vector.extract_strided_slice %1220 {offsets = [0, 64], sizes = [2, 32], strides = [1, 1]} : vector<2x96xf32> to vector<2x32xf32>
    %1233 = arith.addf %1232, %898 : vector<2x32xf32>
    %1234 = arith.mulf %1229, %1233 : vector<2x32xf32>
    %1235 = arith.addf %1231, %1234 : vector<2x32xf32>
    %1236 = math.tanh %1235 : vector<2x32xf32>
    %cst_227 = arith.constant 1.000000e+00 : f32
    %1237 = vector.broadcast %cst_227 : f32 to vector<2x32xf32>
    %1238 = arith.subf %1237, %1230 : vector<2x32xf32>
    %1239 = arith.mulf %1238, %1236 : vector<2x32xf32>
    %1240 = arith.mulf %1230, %1193 : vector<2x32xf32>
    %1241 = arith.addf %1239, %1240 : vector<2x32xf32>
    %c0_228 = arith.constant 0 : index
    %c192_229 = arith.constant 192 : index
    %1242 = vector.load %arg4[%c0_228, %c192_229] : memref<2x512xf32, #tpu.memory_space<vmem>>, vector<2x32xf32>
    tpu.vector_store %arg4[%c0_228, %c192_229], %1219 {strides = array<i32>} : memref<2x512xf32, #tpu.memory_space<vmem>>, vector<2x32xf32>,
    %c0_230 = arith.constant 0 : index
    %c288 = arith.constant 288 : index
    %1243 = vector.load %arg5[%c0_230, %c288] : memref<2x512xf32, #tpu.memory_space<vmem>>, vector<2x32xf32>
    tpu.vector_store %arg5[%c0_230, %c288], %1241 {strides = array<i32>} : memref<2x512xf32, #tpu.memory_space<vmem>>, vector<2x32xf32>,
    %1244 = vector.extract_strided_slice %902 {offsets = [14, 0], sizes = [2, 96], strides = [1, 1]} : vector<32x96xf32> to vector<2x96xf32>
    %1245 = vector.extract_strided_slice %905 {offsets = [16, 0], sizes = [2, 96], strides = [1, 1]} : vector<32x96xf32> to vector<2x96xf32>
    %cst_231 = arith.constant dense<0.000000e+00> : vector<2x96xf32>
    %1246 = tpu.matmul %1219, %888, %cst_231 {dimension_numbers = #tpu.dot_dimension_numbers<[1], [0], [0], [1], [0, 0, 1, 1], [], []>} : vector<2x32xf32>, vector<32x96xf32>, vector<2x96xf32> -> vector<2x96xf32>
    %1247 = vector.extract_strided_slice %1244 {offsets = [0, 0], sizes = [2, 64], strides = [1, 1]} : vector<2x96xf32> to vector<2x64xf32>
    %1248 = vector.extract_strided_slice %1246 {offsets = [0, 0], sizes = [2, 64], strides = [1, 1]} : vector<2x96xf32> to vector<2x64xf32>
    %1249 = arith.addf %1247, %1248 : vector<2x64xf32>
    %1250 = arith.negf %1249 : vector<2x64xf32>
    %1251 = math.exp %1250 : vector<2x64xf32>
    %cst_232 = arith.constant 1.000000e+00 : f32
    %1252 = vector.broadcast %cst_232 : f32 to vector<2x64xf32>
    %1253 = arith.addf %1252, %1251 : vector<2x64xf32>
    %1254 = arith.divf %1252, %1253 : vector<2x64xf32>
    %1255 = vector.extract_strided_slice %1254 {offsets = [0, 0], sizes = [2, 32], strides = [1, 1]} : vector<2x64xf32> to vector<2x32xf32>
    %1256 = vector.extract_strided_slice %1254 {offsets = [0, 32], sizes = [2, 32], strides = [1, 1]} : vector<2x64xf32> to vector<2x32xf32>
    %1257 = vector.extract_strided_slice %1244 {offsets = [0, 64], sizes = [2, 32], strides = [1, 1]} : vector<2x96xf32> to vector<2x32xf32>
    %1258 = vector.extract_strided_slice %1246 {offsets = [0, 64], sizes = [2, 32], strides = [1, 1]} : vector<2x96xf32> to vector<2x32xf32>
    %1259 = arith.addf %1258, %896 : vector<2x32xf32>
    %1260 = arith.mulf %1255, %1259 : vector<2x32xf32>
    %1261 = arith.addf %1257, %1260 : vector<2x32xf32>
    %1262 = math.tanh %1261 : vector<2x32xf32>
    %cst_233 = arith.constant 1.000000e+00 : f32
    %1263 = vector.broadcast %cst_233 : f32 to vector<2x32xf32>
    %1264 = arith.subf %1263, %1256 : vector<2x32xf32>
    %1265 = arith.mulf %1264, %1262 : vector<2x32xf32>
    %1266 = arith.mulf %1256, %1219 : vector<2x32xf32>
    %1267 = arith.addf %1265, %1266 : vector<2x32xf32>
    %cst_234 = arith.constant dense<0.000000e+00> : vector<2x96xf32>
    %1268 = tpu.matmul %1241, %892, %cst_234 {dimension_numbers = #tpu.dot_dimension_numbers<[1], [0], [0], [1], [0, 0, 1, 1], [], []>} : vector<2x32xf32>, vector<32x96xf32>, vector<2x96xf32> -> vector<2x96xf32>
    %1269 = vector.extract_strided_slice %1245 {offsets = [0, 0], sizes = [2, 64], strides = [1, 1]} : vector<2x96xf32> to vector<2x64xf32>
    %1270 = vector.extract_strided_slice %1268 {offsets = [0, 0], sizes = [2, 64], strides = [1, 1]} : vector<2x96xf32> to vector<2x64xf32>
    %1271 = arith.addf %1269, %1270 : vector<2x64xf32>
    %1272 = arith.negf %1271 : vector<2x64xf32>
    %1273 = math.exp %1272 : vector<2x64xf32>
    %cst_235 = arith.constant 1.000000e+00 : f32
    %1274 = vector.broadcast %cst_235 : f32 to vector<2x64xf32>
    %1275 = arith.addf %1274, %1273 : vector<2x64xf32>
    %1276 = arith.divf %1274, %1275 : vector<2x64xf32>
    %1277 = vector.extract_strided_slice %1276 {offsets = [0, 0], sizes = [2, 32], strides = [1, 1]} : vector<2x64xf32> to vector<2x32xf32>
    %1278 = vector.extract_strided_slice %1276 {offsets = [0, 32], sizes = [2, 32], strides = [1, 1]} : vector<2x64xf32> to vector<2x32xf32>
    %1279 = vector.extract_strided_slice %1245 {offsets = [0, 64], sizes = [2, 32], strides = [1, 1]} : vector<2x96xf32> to vector<2x32xf32>
    %1280 = vector.extract_strided_slice %1268 {offsets = [0, 64], sizes = [2, 32], strides = [1, 1]} : vector<2x96xf32> to vector<2x32xf32>
    %1281 = arith.addf %1280, %898 : vector<2x32xf32>
    %1282 = arith.mulf %1277, %1281 : vector<2x32xf32>
    %1283 = arith.addf %1279, %1282 : vector<2x32xf32>
    %1284 = math.tanh %1283 : vector<2x32xf32>
    %cst_236 = arith.constant 1.000000e+00 : f32
    %1285 = vector.broadcast %cst_236 : f32 to vector<2x32xf32>
    %1286 = arith.subf %1285, %1278 : vector<2x32xf32>
    %1287 = arith.mulf %1286, %1284 : vector<2x32xf32>
    %1288 = arith.mulf %1278, %1241 : vector<2x32xf32>
    %1289 = arith.addf %1287, %1288 : vector<2x32xf32>
    %c0_237 = arith.constant 0 : index
    %c224 = arith.constant 224 : index
    %1290 = vector.load %arg4[%c0_237, %c224] : memref<2x512xf32, #tpu.memory_space<vmem>>, vector<2x32xf32>
    tpu.vector_store %arg4[%c0_237, %c224], %1267 {strides = array<i32>} : memref<2x512xf32, #tpu.memory_space<vmem>>, vector<2x32xf32>,
    %c0_238 = arith.constant 0 : index
    %c256 = arith.constant 256 : index
    %1291 = vector.load %arg5[%c0_238, %c256] : memref<2x512xf32, #tpu.memory_space<vmem>>, vector<2x32xf32>
    tpu.vector_store %arg5[%c0_238, %c256], %1289 {strides = array<i32>} : memref<2x512xf32, #tpu.memory_space<vmem>>, vector<2x32xf32>,
    %1292 = vector.extract_strided_slice %902 {offsets = [16, 0], sizes = [2, 96], strides = [1, 1]} : vector<32x96xf32> to vector<2x96xf32>
    %1293 = vector.extract_strided_slice %905 {offsets = [14, 0], sizes = [2, 96], strides = [1, 1]} : vector<32x96xf32> to vector<2x96xf32>
    %cst_239 = arith.constant dense<0.000000e+00> : vector<2x96xf32>
    %1294 = tpu.matmul %1267, %888, %cst_239 {dimension_numbers = #tpu.dot_dimension_numbers<[1], [0], [0], [1], [0, 0, 1, 1], [], []>} : vector<2x32xf32>, vector<32x96xf32>, vector<2x96xf32> -> vector<2x96xf32>
    %1295 = vector.extract_strided_slice %1292 {offsets = [0, 0], sizes = [2, 64], strides = [1, 1]} : vector<2x96xf32> to vector<2x64xf32>
    %1296 = vector.extract_strided_slice %1294 {offsets = [0, 0], sizes = [2, 64], strides = [1, 1]} : vector<2x96xf32> to vector<2x64xf32>
    %1297 = arith.addf %1295, %1296 : vector<2x64xf32>
    %1298 = arith.negf %1297 : vector<2x64xf32>
    %1299 = math.exp %1298 : vector<2x64xf32>
    %cst_240 = arith.constant 1.000000e+00 : f32
    %1300 = vector.broadcast %cst_240 : f32 to vector<2x64xf32>
    %1301 = arith.addf %1300, %1299 : vector<2x64xf32>
    %1302 = arith.divf %1300, %1301 : vector<2x64xf32>
    %1303 = vector.extract_strided_slice %1302 {offsets = [0, 0], sizes = [2, 32], strides = [1, 1]} : vector<2x64xf32> to vector<2x32xf32>
    %1304 = vector.extract_strided_slice %1302 {offsets = [0, 32], sizes = [2, 32], strides = [1, 1]} : vector<2x64xf32> to vector<2x32xf32>
    %1305 = vector.extract_strided_slice %1292 {offsets = [0, 64], sizes = [2, 32], strides = [1, 1]} : vector<2x96xf32> to vector<2x32xf32>
    %1306 = vector.extract_strided_slice %1294 {offsets = [0, 64], sizes = [2, 32], strides = [1, 1]} : vector<2x96xf32> to vector<2x32xf32>
    %1307 = arith.addf %1306, %896 : vector<2x32xf32>
    %1308 = arith.mulf %1303, %1307 : vector<2x32xf32>
    %1309 = arith.addf %1305, %1308 : vector<2x32xf32>
    %1310 = math.tanh %1309 : vector<2x32xf32>
    %cst_241 = arith.constant 1.000000e+00 : f32
    %1311 = vector.broadcast %cst_241 : f32 to vector<2x32xf32>
    %1312 = arith.subf %1311, %1304 : vector<2x32xf32>
    %1313 = arith.mulf %1312, %1310 : vector<2x32xf32>
    %1314 = arith.mulf %1304, %1267 : vector<2x32xf32>
    %1315 = arith.addf %1313, %1314 : vector<2x32xf32>
    %cst_242 = arith.constant dense<0.000000e+00> : vector<2x96xf32>
    %1316 = tpu.matmul %1289, %892, %cst_242 {dimension_numbers = #tpu.dot_dimension_numbers<[1], [0], [0], [1], [0, 0, 1, 1], [], []>} : vector<2x32xf32>, vector<32x96xf32>, vector<2x96xf32> -> vector<2x96xf32>
    %1317 = vector.extract_strided_slice %1293 {offsets = [0, 0], sizes = [2, 64], strides = [1, 1]} : vector<2x96xf32> to vector<2x64xf32>
    %1318 = vector.extract_strided_slice %1316 {offsets = [0, 0], sizes = [2, 64], strides = [1, 1]} : vector<2x96xf32> to vector<2x64xf32>
    %1319 = arith.addf %1317, %1318 : vector<2x64xf32>
    %1320 = arith.negf %1319 : vector<2x64xf32>
    %1321 = math.exp %1320 : vector<2x64xf32>
    %cst_243 = arith.constant 1.000000e+00 : f32
    %1322 = vector.broadcast %cst_243 : f32 to vector<2x64xf32>
    %1323 = arith.addf %1322, %1321 : vector<2x64xf32>
    %1324 = arith.divf %1322, %1323 : vector<2x64xf32>
    %1325 = vector.extract_strided_slice %1324 {offsets = [0, 0], sizes = [2, 32], strides = [1, 1]} : vector<2x64xf32> to vector<2x32xf32>
    %1326 = vector.extract_strided_slice %1324 {offsets = [0, 32], sizes = [2, 32], strides = [1, 1]} : vector<2x64xf32> to vector<2x32xf32>
    %1327 = vector.extract_strided_slice %1293 {offsets = [0, 64], sizes = [2, 32], strides = [1, 1]} : vector<2x96xf32> to vector<2x32xf32>
    %1328 = vector.extract_strided_slice %1316 {offsets = [0, 64], sizes = [2, 32], strides = [1, 1]} : vector<2x96xf32> to vector<2x32xf32>
    %1329 = arith.addf %1328, %898 : vector<2x32xf32>
    %1330 = arith.mulf %1325, %1329 : vector<2x32xf32>
    %1331 = arith.addf %1327, %1330 : vector<2x32xf32>
    %1332 = math.tanh %1331 : vector<2x32xf32>
    %cst_244 = arith.constant 1.000000e+00 : f32
    %1333 = vector.broadcast %cst_244 : f32 to vector<2x32xf32>
    %1334 = arith.subf %1333, %1326 : vector<2x32xf32>
    %1335 = arith.mulf %1334, %1332 : vector<2x32xf32>
    %1336 = arith.mulf %1326, %1289 : vector<2x32xf32>
    %1337 = arith.addf %1335, %1336 : vector<2x32xf32>
    %c0_245 = arith.constant 0 : index
    %c256_246 = arith.constant 256 : index
    %1338 = vector.load %arg4[%c0_245, %c256_246] : memref<2x512xf32, #tpu.memory_space<vmem>>, vector<2x32xf32>
    tpu.vector_store %arg4[%c0_245, %c256_246], %1315 {strides = array<i32>} : memref<2x512xf32, #tpu.memory_space<vmem>>, vector<2x32xf32>,
    %c0_247 = arith.constant 0 : index
    %c224_248 = arith.constant 224 : index
    %1339 = vector.load %arg5[%c0_247, %c224_248] : memref<2x512xf32, #tpu.memory_space<vmem>>, vector<2x32xf32>
    tpu.vector_store %arg5[%c0_247, %c224_248], %1337 {strides = array<i32>} : memref<2x512xf32, #tpu.memory_space<vmem>>, vector<2x32xf32>,
    %1340 = vector.extract_strided_slice %902 {offsets = [18, 0], sizes = [2, 96], strides = [1, 1]} : vector<32x96xf32> to vector<2x96xf32>
    %1341 = vector.extract_strided_slice %905 {offsets = [12, 0], sizes = [2, 96], strides = [1, 1]} : vector<32x96xf32> to vector<2x96xf32>
    %cst_249 = arith.constant dense<0.000000e+00> : vector<2x96xf32>
    %1342 = tpu.matmul %1315, %888, %cst_249 {dimension_numbers = #tpu.dot_dimension_numbers<[1], [0], [0], [1], [0, 0, 1, 1], [], []>} : vector<2x32xf32>, vector<32x96xf32>, vector<2x96xf32> -> vector<2x96xf32>
    %1343 = vector.extract_strided_slice %1340 {offsets = [0, 0], sizes = [2, 64], strides = [1, 1]} : vector<2x96xf32> to vector<2x64xf32>
    %1344 = vector.extract_strided_slice %1342 {offsets = [0, 0], sizes = [2, 64], strides = [1, 1]} : vector<2x96xf32> to vector<2x64xf32>
    %1345 = arith.addf %1343, %1344 : vector<2x64xf32>
    %1346 = arith.negf %1345 : vector<2x64xf32>
    %1347 = math.exp %1346 : vector<2x64xf32>
    %cst_250 = arith.constant 1.000000e+00 : f32
    %1348 = vector.broadcast %cst_250 : f32 to vector<2x64xf32>
    %1349 = arith.addf %1348, %1347 : vector<2x64xf32>
    %1350 = arith.divf %1348, %1349 : vector<2x64xf32>
    %1351 = vector.extract_strided_slice %1350 {offsets = [0, 0], sizes = [2, 32], strides = [1, 1]} : vector<2x64xf32> to vector<2x32xf32>
    %1352 = vector.extract_strided_slice %1350 {offsets = [0, 32], sizes = [2, 32], strides = [1, 1]} : vector<2x64xf32> to vector<2x32xf32>
    %1353 = vector.extract_strided_slice %1340 {offsets = [0, 64], sizes = [2, 32], strides = [1, 1]} : vector<2x96xf32> to vector<2x32xf32>
    %1354 = vector.extract_strided_slice %1342 {offsets = [0, 64], sizes = [2, 32], strides = [1, 1]} : vector<2x96xf32> to vector<2x32xf32>
    %1355 = arith.addf %1354, %896 : vector<2x32xf32>
    %1356 = arith.mulf %1351, %1355 : vector<2x32xf32>
    %1357 = arith.addf %1353, %1356 : vector<2x32xf32>
    %1358 = math.tanh %1357 : vector<2x32xf32>
    %cst_251 = arith.constant 1.000000e+00 : f32
    %1359 = vector.broadcast %cst_251 : f32 to vector<2x32xf32>
    %1360 = arith.subf %1359, %1352 : vector<2x32xf32>
    %1361 = arith.mulf %1360, %1358 : vector<2x32xf32>
    %1362 = arith.mulf %1352, %1315 : vector<2x32xf32>
    %1363 = arith.addf %1361, %1362 : vector<2x32xf32>
    %cst_252 = arith.constant dense<0.000000e+00> : vector<2x96xf32>
    %1364 = tpu.matmul %1337, %892, %cst_252 {dimension_numbers = #tpu.dot_dimension_numbers<[1], [0], [0], [1], [0, 0, 1, 1], [], []>} : vector<2x32xf32>, vector<32x96xf32>, vector<2x96xf32> -> vector<2x96xf32>
    %1365 = vector.extract_strided_slice %1341 {offsets = [0, 0], sizes = [2, 64], strides = [1, 1]} : vector<2x96xf32> to vector<2x64xf32>
    %1366 = vector.extract_strided_slice %1364 {offsets = [0, 0], sizes = [2, 64], strides = [1, 1]} : vector<2x96xf32> to vector<2x64xf32>
    %1367 = arith.addf %1365, %1366 : vector<2x64xf32>
    %1368 = arith.negf %1367 : vector<2x64xf32>
    %1369 = math.exp %1368 : vector<2x64xf32>
    %cst_253 = arith.constant 1.000000e+00 : f32
    %1370 = vector.broadcast %cst_253 : f32 to vector<2x64xf32>
    %1371 = arith.addf %1370, %1369 : vector<2x64xf32>
    %1372 = arith.divf %1370, %1371 : vector<2x64xf32>
    %1373 = vector.extract_strided_slice %1372 {offsets = [0, 0], sizes = [2, 32], strides = [1, 1]} : vector<2x64xf32> to vector<2x32xf32>
    %1374 = vector.extract_strided_slice %1372 {offsets = [0, 32], sizes = [2, 32], strides = [1, 1]} : vector<2x64xf32> to vector<2x32xf32>
    %1375 = vector.extract_strided_slice %1341 {offsets = [0, 64], sizes = [2, 32], strides = [1, 1]} : vector<2x96xf32> to vector<2x32xf32>
    %1376 = vector.extract_strided_slice %1364 {offsets = [0, 64], sizes = [2, 32], strides = [1, 1]} : vector<2x96xf32> to vector<2x32xf32>
    %1377 = arith.addf %1376, %898 : vector<2x32xf32>
    %1378 = arith.mulf %1373, %1377 : vector<2x32xf32>
    %1379 = arith.addf %1375, %1378 : vector<2x32xf32>
    %1380 = math.tanh %1379 : vector<2x32xf32>
    %cst_254 = arith.constant 1.000000e+00 : f32
    %1381 = vector.broadcast %cst_254 : f32 to vector<2x32xf32>
    %1382 = arith.subf %1381, %1374 : vector<2x32xf32>
    %1383 = arith.mulf %1382, %1380 : vector<2x32xf32>
    %1384 = arith.mulf %1374, %1337 : vector<2x32xf32>
    %1385 = arith.addf %1383, %1384 : vector<2x32xf32>
    %c0_255 = arith.constant 0 : index
    %c288_256 = arith.constant 288 : index
    %1386 = vector.load %arg4[%c0_255, %c288_256] : memref<2x512xf32, #tpu.memory_space<vmem>>, vector<2x32xf32>
    tpu.vector_store %arg4[%c0_255, %c288_256], %1363 {strides = array<i32>} : memref<2x512xf32, #tpu.memory_space<vmem>>, vector<2x32xf32>,
    %c0_257 = arith.constant 0 : index
    %c192_258 = arith.constant 192 : index
    %1387 = vector.load %arg5[%c0_257, %c192_258] : memref<2x512xf32, #tpu.memory_space<vmem>>, vector<2x32xf32>
    tpu.vector_store %arg5[%c0_257, %c192_258], %1385 {strides = array<i32>} : memref<2x512xf32, #tpu.memory_space<vmem>>, vector<2x32xf32>,
    %1388 = vector.extract_strided_slice %902 {offsets = [20, 0], sizes = [2, 96], strides = [1, 1]} : vector<32x96xf32> to vector<2x96xf32>
    %1389 = vector.extract_strided_slice %905 {offsets = [10, 0], sizes = [2, 96], strides = [1, 1]} : vector<32x96xf32> to vector<2x96xf32>
    %cst_259 = arith.constant dense<0.000000e+00> : vector<2x96xf32>
    %1390 = tpu.matmul %1363, %888, %cst_259 {dimension_numbers = #tpu.dot_dimension_numbers<[1], [0], [0], [1], [0, 0, 1, 1], [], []>} : vector<2x32xf32>, vector<32x96xf32>, vector<2x96xf32> -> vector<2x96xf32>
    %1391 = vector.extract_strided_slice %1388 {offsets = [0, 0], sizes = [2, 64], strides = [1, 1]} : vector<2x96xf32> to vector<2x64xf32>
    %1392 = vector.extract_strided_slice %1390 {offsets = [0, 0], sizes = [2, 64], strides = [1, 1]} : vector<2x96xf32> to vector<2x64xf32>
    %1393 = arith.addf %1391, %1392 : vector<2x64xf32>
    %1394 = arith.negf %1393 : vector<2x64xf32>
    %1395 = math.exp %1394 : vector<2x64xf32>
    %cst_260 = arith.constant 1.000000e+00 : f32
    %1396 = vector.broadcast %cst_260 : f32 to vector<2x64xf32>
    %1397 = arith.addf %1396, %1395 : vector<2x64xf32>
    %1398 = arith.divf %1396, %1397 : vector<2x64xf32>
    %1399 = vector.extract_strided_slice %1398 {offsets = [0, 0], sizes = [2, 32], strides = [1, 1]} : vector<2x64xf32> to vector<2x32xf32>
    %1400 = vector.extract_strided_slice %1398 {offsets = [0, 32], sizes = [2, 32], strides = [1, 1]} : vector<2x64xf32> to vector<2x32xf32>
    %1401 = vector.extract_strided_slice %1388 {offsets = [0, 64], sizes = [2, 32], strides = [1, 1]} : vector<2x96xf32> to vector<2x32xf32>
    %1402 = vector.extract_strided_slice %1390 {offsets = [0, 64], sizes = [2, 32], strides = [1, 1]} : vector<2x96xf32> to vector<2x32xf32>
    %1403 = arith.addf %1402, %896 : vector<2x32xf32>
    %1404 = arith.mulf %1399, %1403 : vector<2x32xf32>
    %1405 = arith.addf %1401, %1404 : vector<2x32xf32>
    %1406 = math.tanh %1405 : vector<2x32xf32>
    %cst_261 = arith.constant 1.000000e+00 : f32
    %1407 = vector.broadcast %cst_261 : f32 to vector<2x32xf32>
    %1408 = arith.subf %1407, %1400 : vector<2x32xf32>
    %1409 = arith.mulf %1408, %1406 : vector<2x32xf32>
    %1410 = arith.mulf %1400, %1363 : vector<2x32xf32>
    %1411 = arith.addf %1409, %1410 : vector<2x32xf32>
    %cst_262 = arith.constant dense<0.000000e+00> : vector<2x96xf32>
    %1412 = tpu.matmul %1385, %892, %cst_262 {dimension_numbers = #tpu.dot_dimension_numbers<[1], [0], [0], [1], [0, 0, 1, 1], [], []>} : vector<2x32xf32>, vector<32x96xf32>, vector<2x96xf32> -> vector<2x96xf32>
    %1413 = vector.extract_strided_slice %1389 {offsets = [0, 0], sizes = [2, 64], strides = [1, 1]} : vector<2x96xf32> to vector<2x64xf32>
    %1414 = vector.extract_strided_slice %1412 {offsets = [0, 0], sizes = [2, 64], strides = [1, 1]} : vector<2x96xf32> to vector<2x64xf32>
    %1415 = arith.addf %1413, %1414 : vector<2x64xf32>
    %1416 = arith.negf %1415 : vector<2x64xf32>
    %1417 = math.exp %1416 : vector<2x64xf32>
    %cst_263 = arith.constant 1.000000e+00 : f32
    %1418 = vector.broadcast %cst_263 : f32 to vector<2x64xf32>
    %1419 = arith.addf %1418, %1417 : vector<2x64xf32>
    %1420 = arith.divf %1418, %1419 : vector<2x64xf32>
    %1421 = vector.extract_strided_slice %1420 {offsets = [0, 0], sizes = [2, 32], strides = [1, 1]} : vector<2x64xf32> to vector<2x32xf32>
    %1422 = vector.extract_strided_slice %1420 {offsets = [0, 32], sizes = [2, 32], strides = [1, 1]} : vector<2x64xf32> to vector<2x32xf32>
    %1423 = vector.extract_strided_slice %1389 {offsets = [0, 64], sizes = [2, 32], strides = [1, 1]} : vector<2x96xf32> to vector<2x32xf32>
    %1424 = vector.extract_strided_slice %1412 {offsets = [0, 64], sizes = [2, 32], strides = [1, 1]} : vector<2x96xf32> to vector<2x32xf32>
    %1425 = arith.addf %1424, %898 : vector<2x32xf32>
    %1426 = arith.mulf %1421, %1425 : vector<2x32xf32>
    %1427 = arith.addf %1423, %1426 : vector<2x32xf32>
    %1428 = math.tanh %1427 : vector<2x32xf32>
    %cst_264 = arith.constant 1.000000e+00 : f32
    %1429 = vector.broadcast %cst_264 : f32 to vector<2x32xf32>
    %1430 = arith.subf %1429, %1422 : vector<2x32xf32>
    %1431 = arith.mulf %1430, %1428 : vector<2x32xf32>
    %1432 = arith.mulf %1422, %1385 : vector<2x32xf32>
    %1433 = arith.addf %1431, %1432 : vector<2x32xf32>
    %c0_265 = arith.constant 0 : index
    %c320_266 = arith.constant 320 : index
    %1434 = vector.load %arg4[%c0_265, %c320_266] : memref<2x512xf32, #tpu.memory_space<vmem>>, vector<2x32xf32>
    tpu.vector_store %arg4[%c0_265, %c320_266], %1411 {strides = array<i32>} : memref<2x512xf32, #tpu.memory_space<vmem>>, vector<2x32xf32>,
    %c0_267 = arith.constant 0 : index
    %c160_268 = arith.constant 160 : index
    %1435 = vector.load %arg5[%c0_267, %c160_268] : memref<2x512xf32, #tpu.memory_space<vmem>>, vector<2x32xf32>
    tpu.vector_store %arg5[%c0_267, %c160_268], %1433 {strides = array<i32>} : memref<2x512xf32, #tpu.memory_space<vmem>>, vector<2x32xf32>,
    %1436 = vector.extract_strided_slice %902 {offsets = [22, 0], sizes = [2, 96], strides = [1, 1]} : vector<32x96xf32> to vector<2x96xf32>
    %1437 = vector.extract_strided_slice %905 {offsets = [8, 0], sizes = [2, 96], strides = [1, 1]} : vector<32x96xf32> to vector<2x96xf32>
    %cst_269 = arith.constant dense<0.000000e+00> : vector<2x96xf32>
    %1438 = tpu.matmul %1411, %888, %cst_269 {dimension_numbers = #tpu.dot_dimension_numbers<[1], [0], [0], [1], [0, 0, 1, 1], [], []>} : vector<2x32xf32>, vector<32x96xf32>, vector<2x96xf32> -> vector<2x96xf32>
    %1439 = vector.extract_strided_slice %1436 {offsets = [0, 0], sizes = [2, 64], strides = [1, 1]} : vector<2x96xf32> to vector<2x64xf32>
    %1440 = vector.extract_strided_slice %1438 {offsets = [0, 0], sizes = [2, 64], strides = [1, 1]} : vector<2x96xf32> to vector<2x64xf32>
    %1441 = arith.addf %1439, %1440 : vector<2x64xf32>
    %1442 = arith.negf %1441 : vector<2x64xf32>
    %1443 = math.exp %1442 : vector<2x64xf32>
    %cst_270 = arith.constant 1.000000e+00 : f32
    %1444 = vector.broadcast %cst_270 : f32 to vector<2x64xf32>
    %1445 = arith.addf %1444, %1443 : vector<2x64xf32>
    %1446 = arith.divf %1444, %1445 : vector<2x64xf32>
    %1447 = vector.extract_strided_slice %1446 {offsets = [0, 0], sizes = [2, 32], strides = [1, 1]} : vector<2x64xf32> to vector<2x32xf32>
    %1448 = vector.extract_strided_slice %1446 {offsets = [0, 32], sizes = [2, 32], strides = [1, 1]} : vector<2x64xf32> to vector<2x32xf32>
    %1449 = vector.extract_strided_slice %1436 {offsets = [0, 64], sizes = [2, 32], strides = [1, 1]} : vector<2x96xf32> to vector<2x32xf32>
    %1450 = vector.extract_strided_slice %1438 {offsets = [0, 64], sizes = [2, 32], strides = [1, 1]} : vector<2x96xf32> to vector<2x32xf32>
    %1451 = arith.addf %1450, %896 : vector<2x32xf32>
    %1452 = arith.mulf %1447, %1451 : vector<2x32xf32>
    %1453 = arith.addf %1449, %1452 : vector<2x32xf32>
    %1454 = math.tanh %1453 : vector<2x32xf32>
    %cst_271 = arith.constant 1.000000e+00 : f32
    %1455 = vector.broadcast %cst_271 : f32 to vector<2x32xf32>
    %1456 = arith.subf %1455, %1448 : vector<2x32xf32>
    %1457 = arith.mulf %1456, %1454 : vector<2x32xf32>
    %1458 = arith.mulf %1448, %1411 : vector<2x32xf32>
    %1459 = arith.addf %1457, %1458 : vector<2x32xf32>
    %cst_272 = arith.constant dense<0.000000e+00> : vector<2x96xf32>
    %1460 = tpu.matmul %1433, %892, %cst_272 {dimension_numbers = #tpu.dot_dimension_numbers<[1], [0], [0], [1], [0, 0, 1, 1], [], []>} : vector<2x32xf32>, vector<32x96xf32>, vector<2x96xf32> -> vector<2x96xf32>
    %1461 = vector.extract_strided_slice %1437 {offsets = [0, 0], sizes = [2, 64], strides = [1, 1]} : vector<2x96xf32> to vector<2x64xf32>
    %1462 = vector.extract_strided_slice %1460 {offsets = [0, 0], sizes = [2, 64], strides = [1, 1]} : vector<2x96xf32> to vector<2x64xf32>
    %1463 = arith.addf %1461, %1462 : vector<2x64xf32>
    %1464 = arith.negf %1463 : vector<2x64xf32>
    %1465 = math.exp %1464 : vector<2x64xf32>
    %cst_273 = arith.constant 1.000000e+00 : f32
    %1466 = vector.broadcast %cst_273 : f32 to vector<2x64xf32>
    %1467 = arith.addf %1466, %1465 : vector<2x64xf32>
    %1468 = arith.divf %1466, %1467 : vector<2x64xf32>
    %1469 = vector.extract_strided_slice %1468 {offsets = [0, 0], sizes = [2, 32], strides = [1, 1]} : vector<2x64xf32> to vector<2x32xf32>
    %1470 = vector.extract_strided_slice %1468 {offsets = [0, 32], sizes = [2, 32], strides = [1, 1]} : vector<2x64xf32> to vector<2x32xf32>
    %1471 = vector.extract_strided_slice %1437 {offsets = [0, 64], sizes = [2, 32], strides = [1, 1]} : vector<2x96xf32> to vector<2x32xf32>
    %1472 = vector.extract_strided_slice %1460 {offsets = [0, 64], sizes = [2, 32], strides = [1, 1]} : vector<2x96xf32> to vector<2x32xf32>
    %1473 = arith.addf %1472, %898 : vector<2x32xf32>
    %1474 = arith.mulf %1469, %1473 : vector<2x32xf32>
    %1475 = arith.addf %1471, %1474 : vector<2x32xf32>
    %1476 = math.tanh %1475 : vector<2x32xf32>
    %cst_274 = arith.constant 1.000000e+00 : f32
    %1477 = vector.broadcast %cst_274 : f32 to vector<2x32xf32>
    %1478 = arith.subf %1477, %1470 : vector<2x32xf32>
    %1479 = arith.mulf %1478, %1476 : vector<2x32xf32>
    %1480 = arith.mulf %1470, %1433 : vector<2x32xf32>
    %1481 = arith.addf %1479, %1480 : vector<2x32xf32>
    %c0_275 = arith.constant 0 : index
    %c352_276 = arith.constant 352 : index
    %1482 = vector.load %arg4[%c0_275, %c352_276] : memref<2x512xf32, #tpu.memory_space<vmem>>, vector<2x32xf32>
    tpu.vector_store %arg4[%c0_275, %c352_276], %1459 {strides = array<i32>} : memref<2x512xf32, #tpu.memory_space<vmem>>, vector<2x32xf32>,
    %c0_277 = arith.constant 0 : index
    %c128_278 = arith.constant 128 : index
    %1483 = vector.load %arg5[%c0_277, %c128_278] : memref<2x512xf32, #tpu.memory_space<vmem>>, vector<2x32xf32>
    tpu.vector_store %arg5[%c0_277, %c128_278], %1481 {strides = array<i32>} : memref<2x512xf32, #tpu.memory_space<vmem>>, vector<2x32xf32>,
    %1484 = vector.extract_strided_slice %902 {offsets = [24, 0], sizes = [2, 96], strides = [1, 1]} : vector<32x96xf32> to vector<2x96xf32>
    %1485 = vector.extract_strided_slice %905 {offsets = [6, 0], sizes = [2, 96], strides = [1, 1]} : vector<32x96xf32> to vector<2x96xf32>
    %cst_279 = arith.constant dense<0.000000e+00> : vector<2x96xf32>
    %1486 = tpu.matmul %1459, %888, %cst_279 {dimension_numbers = #tpu.dot_dimension_numbers<[1], [0], [0], [1], [0, 0, 1, 1], [], []>} : vector<2x32xf32>, vector<32x96xf32>, vector<2x96xf32> -> vector<2x96xf32>
    %1487 = vector.extract_strided_slice %1484 {offsets = [0, 0], sizes = [2, 64], strides = [1, 1]} : vector<2x96xf32> to vector<2x64xf32>
    %1488 = vector.extract_strided_slice %1486 {offsets = [0, 0], sizes = [2, 64], strides = [1, 1]} : vector<2x96xf32> to vector<2x64xf32>
    %1489 = arith.addf %1487, %1488 : vector<2x64xf32>
    %1490 = arith.negf %1489 : vector<2x64xf32>
    %1491 = math.exp %1490 : vector<2x64xf32>
    %cst_280 = arith.constant 1.000000e+00 : f32
    %1492 = vector.broadcast %cst_280 : f32 to vector<2x64xf32>
    %1493 = arith.addf %1492, %1491 : vector<2x64xf32>
    %1494 = arith.divf %1492, %1493 : vector<2x64xf32>
    %1495 = vector.extract_strided_slice %1494 {offsets = [0, 0], sizes = [2, 32], strides = [1, 1]} : vector<2x64xf32> to vector<2x32xf32>
    %1496 = vector.extract_strided_slice %1494 {offsets = [0, 32], sizes = [2, 32], strides = [1, 1]} : vector<2x64xf32> to vector<2x32xf32>
    %1497 = vector.extract_strided_slice %1484 {offsets = [0, 64], sizes = [2, 32], strides = [1, 1]} : vector<2x96xf32> to vector<2x32xf32>
    %1498 = vector.extract_strided_slice %1486 {offsets = [0, 64], sizes = [2, 32], strides = [1, 1]} : vector<2x96xf32> to vector<2x32xf32>
    %1499 = arith.addf %1498, %896 : vector<2x32xf32>
    %1500 = arith.mulf %1495, %1499 : vector<2x32xf32>
    %1501 = arith.addf %1497, %1500 : vector<2x32xf32>
    %1502 = math.tanh %1501 : vector<2x32xf32>
    %cst_281 = arith.constant 1.000000e+00 : f32
    %1503 = vector.broadcast %cst_281 : f32 to vector<2x32xf32>
    %1504 = arith.subf %1503, %1496 : vector<2x32xf32>
    %1505 = arith.mulf %1504, %1502 : vector<2x32xf32>
    %1506 = arith.mulf %1496, %1459 : vector<2x32xf32>
    %1507 = arith.addf %1505, %1506 : vector<2x32xf32>
    %cst_282 = arith.constant dense<0.000000e+00> : vector<2x96xf32>
    %1508 = tpu.matmul %1481, %892, %cst_282 {dimension_numbers = #tpu.dot_dimension_numbers<[1], [0], [0], [1], [0, 0, 1, 1], [], []>} : vector<2x32xf32>, vector<32x96xf32>, vector<2x96xf32> -> vector<2x96xf32>
    %1509 = vector.extract_strided_slice %1485 {offsets = [0, 0], sizes = [2, 64], strides = [1, 1]} : vector<2x96xf32> to vector<2x64xf32>
    %1510 = vector.extract_strided_slice %1508 {offsets = [0, 0], sizes = [2, 64], strides = [1, 1]} : vector<2x96xf32> to vector<2x64xf32>
    %1511 = arith.addf %1509, %1510 : vector<2x64xf32>
    %1512 = arith.negf %1511 : vector<2x64xf32>
    %1513 = math.exp %1512 : vector<2x64xf32>
    %cst_283 = arith.constant 1.000000e+00 : f32
    %1514 = vector.broadcast %cst_283 : f32 to vector<2x64xf32>
    %1515 = arith.addf %1514, %1513 : vector<2x64xf32>
    %1516 = arith.divf %1514, %1515 : vector<2x64xf32>
    %1517 = vector.extract_strided_slice %1516 {offsets = [0, 0], sizes = [2, 32], strides = [1, 1]} : vector<2x64xf32> to vector<2x32xf32>
    %1518 = vector.extract_strided_slice %1516 {offsets = [0, 32], sizes = [2, 32], strides = [1, 1]} : vector<2x64xf32> to vector<2x32xf32>
    %1519 = vector.extract_strided_slice %1485 {offsets = [0, 64], sizes = [2, 32], strides = [1, 1]} : vector<2x96xf32> to vector<2x32xf32>
    %1520 = vector.extract_strided_slice %1508 {offsets = [0, 64], sizes = [2, 32], strides = [1, 1]} : vector<2x96xf32> to vector<2x32xf32>
    %1521 = arith.addf %1520, %898 : vector<2x32xf32>
    %1522 = arith.mulf %1517, %1521 : vector<2x32xf32>
    %1523 = arith.addf %1519, %1522 : vector<2x32xf32>
    %1524 = math.tanh %1523 : vector<2x32xf32>
    %cst_284 = arith.constant 1.000000e+00 : f32
    %1525 = vector.broadcast %cst_284 : f32 to vector<2x32xf32>
    %1526 = arith.subf %1525, %1518 : vector<2x32xf32>
    %1527 = arith.mulf %1526, %1524 : vector<2x32xf32>
    %1528 = arith.mulf %1518, %1481 : vector<2x32xf32>
    %1529 = arith.addf %1527, %1528 : vector<2x32xf32>
    %c0_285 = arith.constant 0 : index
    %c384_286 = arith.constant 384 : index
    %1530 = vector.load %arg4[%c0_285, %c384_286] : memref<2x512xf32, #tpu.memory_space<vmem>>, vector<2x32xf32>
    tpu.vector_store %arg4[%c0_285, %c384_286], %1507 {strides = array<i32>} : memref<2x512xf32, #tpu.memory_space<vmem>>, vector<2x32xf32>,
    %c0_287 = arith.constant 0 : index
    %c96_288 = arith.constant 96 : index
    %1531 = vector.load %arg5[%c0_287, %c96_288] : memref<2x512xf32, #tpu.memory_space<vmem>>, vector<2x32xf32>
    tpu.vector_store %arg5[%c0_287, %c96_288], %1529 {strides = array<i32>} : memref<2x512xf32, #tpu.memory_space<vmem>>, vector<2x32xf32>,
    %1532 = vector.extract_strided_slice %902 {offsets = [26, 0], sizes = [2, 96], strides = [1, 1]} : vector<32x96xf32> to vector<2x96xf32>
    %1533 = vector.extract_strided_slice %905 {offsets = [4, 0], sizes = [2, 96], strides = [1, 1]} : vector<32x96xf32> to vector<2x96xf32>
    %cst_289 = arith.constant dense<0.000000e+00> : vector<2x96xf32>
    %1534 = tpu.matmul %1507, %888, %cst_289 {dimension_numbers = #tpu.dot_dimension_numbers<[1], [0], [0], [1], [0, 0, 1, 1], [], []>} : vector<2x32xf32>, vector<32x96xf32>, vector<2x96xf32> -> vector<2x96xf32>
    %1535 = vector.extract_strided_slice %1532 {offsets = [0, 0], sizes = [2, 64], strides = [1, 1]} : vector<2x96xf32> to vector<2x64xf32>
    %1536 = vector.extract_strided_slice %1534 {offsets = [0, 0], sizes = [2, 64], strides = [1, 1]} : vector<2x96xf32> to vector<2x64xf32>
    %1537 = arith.addf %1535, %1536 : vector<2x64xf32>
    %1538 = arith.negf %1537 : vector<2x64xf32>
    %1539 = math.exp %1538 : vector<2x64xf32>
    %cst_290 = arith.constant 1.000000e+00 : f32
    %1540 = vector.broadcast %cst_290 : f32 to vector<2x64xf32>
    %1541 = arith.addf %1540, %1539 : vector<2x64xf32>
    %1542 = arith.divf %1540, %1541 : vector<2x64xf32>
    %1543 = vector.extract_strided_slice %1542 {offsets = [0, 0], sizes = [2, 32], strides = [1, 1]} : vector<2x64xf32> to vector<2x32xf32>
    %1544 = vector.extract_strided_slice %1542 {offsets = [0, 32], sizes = [2, 32], strides = [1, 1]} : vector<2x64xf32> to vector<2x32xf32>
    %1545 = vector.extract_strided_slice %1532 {offsets = [0, 64], sizes = [2, 32], strides = [1, 1]} : vector<2x96xf32> to vector<2x32xf32>
    %1546 = vector.extract_strided_slice %1534 {offsets = [0, 64], sizes = [2, 32], strides = [1, 1]} : vector<2x96xf32> to vector<2x32xf32>
    %1547 = arith.addf %1546, %896 : vector<2x32xf32>
    %1548 = arith.mulf %1543, %1547 : vector<2x32xf32>
    %1549 = arith.addf %1545, %1548 : vector<2x32xf32>
    %1550 = math.tanh %1549 : vector<2x32xf32>
    %cst_291 = arith.constant 1.000000e+00 : f32
    %1551 = vector.broadcast %cst_291 : f32 to vector<2x32xf32>
    %1552 = arith.subf %1551, %1544 : vector<2x32xf32>
    %1553 = arith.mulf %1552, %1550 : vector<2x32xf32>
    %1554 = arith.mulf %1544, %1507 : vector<2x32xf32>
    %1555 = arith.addf %1553, %1554 : vector<2x32xf32>
    %cst_292 = arith.constant dense<0.000000e+00> : vector<2x96xf32>
    %1556 = tpu.matmul %1529, %892, %cst_292 {dimension_numbers = #tpu.dot_dimension_numbers<[1], [0], [0], [1], [0, 0, 1, 1], [], []>} : vector<2x32xf32>, vector<32x96xf32>, vector<2x96xf32> -> vector<2x96xf32>
    %1557 = vector.extract_strided_slice %1533 {offsets = [0, 0], sizes = [2, 64], strides = [1, 1]} : vector<2x96xf32> to vector<2x64xf32>
    %1558 = vector.extract_strided_slice %1556 {offsets = [0, 0], sizes = [2, 64], strides = [1, 1]} : vector<2x96xf32> to vector<2x64xf32>
    %1559 = arith.addf %1557, %1558 : vector<2x64xf32>
    %1560 = arith.negf %1559 : vector<2x64xf32>
    %1561 = math.exp %1560 : vector<2x64xf32>
    %cst_293 = arith.constant 1.000000e+00 : f32
    %1562 = vector.broadcast %cst_293 : f32 to vector<2x64xf32>
    %1563 = arith.addf %1562, %1561 : vector<2x64xf32>
    %1564 = arith.divf %1562, %1563 : vector<2x64xf32>
    %1565 = vector.extract_strided_slice %1564 {offsets = [0, 0], sizes = [2, 32], strides = [1, 1]} : vector<2x64xf32> to vector<2x32xf32>
    %1566 = vector.extract_strided_slice %1564 {offsets = [0, 32], sizes = [2, 32], strides = [1, 1]} : vector<2x64xf32> to vector<2x32xf32>
    %1567 = vector.extract_strided_slice %1533 {offsets = [0, 64], sizes = [2, 32], strides = [1, 1]} : vector<2x96xf32> to vector<2x32xf32>
    %1568 = vector.extract_strided_slice %1556 {offsets = [0, 64], sizes = [2, 32], strides = [1, 1]} : vector<2x96xf32> to vector<2x32xf32>
    %1569 = arith.addf %1568, %898 : vector<2x32xf32>
    %1570 = arith.mulf %1565, %1569 : vector<2x32xf32>
    %1571 = arith.addf %1567, %1570 : vector<2x32xf32>
    %1572 = math.tanh %1571 : vector<2x32xf32>
    %cst_294 = arith.constant 1.000000e+00 : f32
    %1573 = vector.broadcast %cst_294 : f32 to vector<2x32xf32>
    %1574 = arith.subf %1573, %1566 : vector<2x32xf32>
    %1575 = arith.mulf %1574, %1572 : vector<2x32xf32>
    %1576 = arith.mulf %1566, %1529 : vector<2x32xf32>
    %1577 = arith.addf %1575, %1576 : vector<2x32xf32>
    %c0_295 = arith.constant 0 : index
    %c416_296 = arith.constant 416 : index
    %1578 = vector.load %arg4[%c0_295, %c416_296] : memref<2x512xf32, #tpu.memory_space<vmem>>, vector<2x32xf32>
    tpu.vector_store %arg4[%c0_295, %c416_296], %1555 {strides = array<i32>} : memref<2x512xf32, #tpu.memory_space<vmem>>, vector<2x32xf32>,
    %c0_297 = arith.constant 0 : index
    %c64_298 = arith.constant 64 : index
    %1579 = vector.load %arg5[%c0_297, %c64_298] : memref<2x512xf32, #tpu.memory_space<vmem>>, vector<2x32xf32>
    tpu.vector_store %arg5[%c0_297, %c64_298], %1577 {strides = array<i32>} : memref<2x512xf32, #tpu.memory_space<vmem>>, vector<2x32xf32>,
    %1580 = vector.extract_strided_slice %902 {offsets = [28, 0], sizes = [2, 96], strides = [1, 1]} : vector<32x96xf32> to vector<2x96xf32>
    %1581 = vector.extract_strided_slice %905 {offsets = [2, 0], sizes = [2, 96], strides = [1, 1]} : vector<32x96xf32> to vector<2x96xf32>
    %cst_299 = arith.constant dense<0.000000e+00> : vector<2x96xf32>
    %1582 = tpu.matmul %1555, %888, %cst_299 {dimension_numbers = #tpu.dot_dimension_numbers<[1], [0], [0], [1], [0, 0, 1, 1], [], []>} : vector<2x32xf32>, vector<32x96xf32>, vector<2x96xf32> -> vector<2x96xf32>
    %1583 = vector.extract_strided_slice %1580 {offsets = [0, 0], sizes = [2, 64], strides = [1, 1]} : vector<2x96xf32> to vector<2x64xf32>
    %1584 = vector.extract_strided_slice %1582 {offsets = [0, 0], sizes = [2, 64], strides = [1, 1]} : vector<2x96xf32> to vector<2x64xf32>
    %1585 = arith.addf %1583, %1584 : vector<2x64xf32>
    %1586 = arith.negf %1585 : vector<2x64xf32>
    %1587 = math.exp %1586 : vector<2x64xf32>
    %cst_300 = arith.constant 1.000000e+00 : f32
    %1588 = vector.broadcast %cst_300 : f32 to vector<2x64xf32>
    %1589 = arith.addf %1588, %1587 : vector<2x64xf32>
    %1590 = arith.divf %1588, %1589 : vector<2x64xf32>
    %1591 = vector.extract_strided_slice %1590 {offsets = [0, 0], sizes = [2, 32], strides = [1, 1]} : vector<2x64xf32> to vector<2x32xf32>
    %1592 = vector.extract_strided_slice %1590 {offsets = [0, 32], sizes = [2, 32], strides = [1, 1]} : vector<2x64xf32> to vector<2x32xf32>
    %1593 = vector.extract_strided_slice %1580 {offsets = [0, 64], sizes = [2, 32], strides = [1, 1]} : vector<2x96xf32> to vector<2x32xf32>
    %1594 = vector.extract_strided_slice %1582 {offsets = [0, 64], sizes = [2, 32], strides = [1, 1]} : vector<2x96xf32> to vector<2x32xf32>
    %1595 = arith.addf %1594, %896 : vector<2x32xf32>
    %1596 = arith.mulf %1591, %1595 : vector<2x32xf32>
    %1597 = arith.addf %1593, %1596 : vector<2x32xf32>
    %1598 = math.tanh %1597 : vector<2x32xf32>
    %cst_301 = arith.constant 1.000000e+00 : f32
    %1599 = vector.broadcast %cst_301 : f32 to vector<2x32xf32>
    %1600 = arith.subf %1599, %1592 : vector<2x32xf32>
    %1601 = arith.mulf %1600, %1598 : vector<2x32xf32>
    %1602 = arith.mulf %1592, %1555 : vector<2x32xf32>
    %1603 = arith.addf %1601, %1602 : vector<2x32xf32>
    %cst_302 = arith.constant dense<0.000000e+00> : vector<2x96xf32>
    %1604 = tpu.matmul %1577, %892, %cst_302 {dimension_numbers = #tpu.dot_dimension_numbers<[1], [0], [0], [1], [0, 0, 1, 1], [], []>} : vector<2x32xf32>, vector<32x96xf32>, vector<2x96xf32> -> vector<2x96xf32>
    %1605 = vector.extract_strided_slice %1581 {offsets = [0, 0], sizes = [2, 64], strides = [1, 1]} : vector<2x96xf32> to vector<2x64xf32>
    %1606 = vector.extract_strided_slice %1604 {offsets = [0, 0], sizes = [2, 64], strides = [1, 1]} : vector<2x96xf32> to vector<2x64xf32>
    %1607 = arith.addf %1605, %1606 : vector<2x64xf32>
    %1608 = arith.negf %1607 : vector<2x64xf32>
    %1609 = math.exp %1608 : vector<2x64xf32>
    %cst_303 = arith.constant 1.000000e+00 : f32
    %1610 = vector.broadcast %cst_303 : f32 to vector<2x64xf32>
    %1611 = arith.addf %1610, %1609 : vector<2x64xf32>
    %1612 = arith.divf %1610, %1611 : vector<2x64xf32>
    %1613 = vector.extract_strided_slice %1612 {offsets = [0, 0], sizes = [2, 32], strides = [1, 1]} : vector<2x64xf32> to vector<2x32xf32>
    %1614 = vector.extract_strided_slice %1612 {offsets = [0, 32], sizes = [2, 32], strides = [1, 1]} : vector<2x64xf32> to vector<2x32xf32>
    %1615 = vector.extract_strided_slice %1581 {offsets = [0, 64], sizes = [2, 32], strides = [1, 1]} : vector<2x96xf32> to vector<2x32xf32>
    %1616 = vector.extract_strided_slice %1604 {offsets = [0, 64], sizes = [2, 32], strides = [1, 1]} : vector<2x96xf32> to vector<2x32xf32>
    %1617 = arith.addf %1616, %898 : vector<2x32xf32>
    %1618 = arith.mulf %1613, %1617 : vector<2x32xf32>
    %1619 = arith.addf %1615, %1618 : vector<2x32xf32>
    %1620 = math.tanh %1619 : vector<2x32xf32>
    %cst_304 = arith.constant 1.000000e+00 : f32
    %1621 = vector.broadcast %cst_304 : f32 to vector<2x32xf32>
    %1622 = arith.subf %1621, %1614 : vector<2x32xf32>
    %1623 = arith.mulf %1622, %1620 : vector<2x32xf32>
    %1624 = arith.mulf %1614, %1577 : vector<2x32xf32>
    %1625 = arith.addf %1623, %1624 : vector<2x32xf32>
    %c0_305 = arith.constant 0 : index
    %c448_306 = arith.constant 448 : index
    %1626 = vector.load %arg4[%c0_305, %c448_306] : memref<2x512xf32, #tpu.memory_space<vmem>>, vector<2x32xf32>
    tpu.vector_store %arg4[%c0_305, %c448_306], %1603 {strides = array<i32>} : memref<2x512xf32, #tpu.memory_space<vmem>>, vector<2x32xf32>,
    %c0_307 = arith.constant 0 : index
    %c32_308 = arith.constant 32 : index
    %1627 = vector.load %arg5[%c0_307, %c32_308] : memref<2x512xf32, #tpu.memory_space<vmem>>, vector<2x32xf32>
    tpu.vector_store %arg5[%c0_307, %c32_308], %1625 {strides = array<i32>} : memref<2x512xf32, #tpu.memory_space<vmem>>, vector<2x32xf32>,
    %1628 = vector.extract_strided_slice %902 {offsets = [30, 0], sizes = [2, 96], strides = [1, 1]} : vector<32x96xf32> to vector<2x96xf32>
    %1629 = vector.extract_strided_slice %905 {offsets = [0, 0], sizes = [2, 96], strides = [1, 1]} : vector<32x96xf32> to vector<2x96xf32>
    %cst_309 = arith.constant dense<0.000000e+00> : vector<2x96xf32>
    %1630 = tpu.matmul %1603, %888, %cst_309 {dimension_numbers = #tpu.dot_dimension_numbers<[1], [0], [0], [1], [0, 0, 1, 1], [], []>} : vector<2x32xf32>, vector<32x96xf32>, vector<2x96xf32> -> vector<2x96xf32>
    %1631 = vector.extract_strided_slice %1628 {offsets = [0, 0], sizes = [2, 64], strides = [1, 1]} : vector<2x96xf32> to vector<2x64xf32>
    %1632 = vector.extract_strided_slice %1630 {offsets = [0, 0], sizes = [2, 64], strides = [1, 1]} : vector<2x96xf32> to vector<2x64xf32>
    %1633 = arith.addf %1631, %1632 : vector<2x64xf32>
    %1634 = arith.negf %1633 : vector<2x64xf32>
    %1635 = math.exp %1634 : vector<2x64xf32>
    %cst_310 = arith.constant 1.000000e+00 : f32
    %1636 = vector.broadcast %cst_310 : f32 to vector<2x64xf32>
    %1637 = arith.addf %1636, %1635 : vector<2x64xf32>
    %1638 = arith.divf %1636, %1637 : vector<2x64xf32>
    %1639 = vector.extract_strided_slice %1638 {offsets = [0, 0], sizes = [2, 32], strides = [1, 1]} : vector<2x64xf32> to vector<2x32xf32>
    %1640 = vector.extract_strided_slice %1638 {offsets = [0, 32], sizes = [2, 32], strides = [1, 1]} : vector<2x64xf32> to vector<2x32xf32>
    %1641 = vector.extract_strided_slice %1628 {offsets = [0, 64], sizes = [2, 32], strides = [1, 1]} : vector<2x96xf32> to vector<2x32xf32>
    %1642 = vector.extract_strided_slice %1630 {offsets = [0, 64], sizes = [2, 32], strides = [1, 1]} : vector<2x96xf32> to vector<2x32xf32>
    %1643 = arith.addf %1642, %896 : vector<2x32xf32>
    %1644 = arith.mulf %1639, %1643 : vector<2x32xf32>
    %1645 = arith.addf %1641, %1644 : vector<2x32xf32>
    %1646 = math.tanh %1645 : vector<2x32xf32>
    %cst_311 = arith.constant 1.000000e+00 : f32
    %1647 = vector.broadcast %cst_311 : f32 to vector<2x32xf32>
    %1648 = arith.subf %1647, %1640 : vector<2x32xf32>
    %1649 = arith.mulf %1648, %1646 : vector<2x32xf32>
    %1650 = arith.mulf %1640, %1603 : vector<2x32xf32>
    %1651 = arith.addf %1649, %1650 : vector<2x32xf32>
    %cst_312 = arith.constant dense<0.000000e+00> : vector<2x96xf32>
    %1652 = tpu.matmul %1625, %892, %cst_312 {dimension_numbers = #tpu.dot_dimension_numbers<[1], [0], [0], [1], [0, 0, 1, 1], [], []>} : vector<2x32xf32>, vector<32x96xf32>, vector<2x96xf32> -> vector<2x96xf32>
    %1653 = vector.extract_strided_slice %1629 {offsets = [0, 0], sizes = [2, 64], strides = [1, 1]} : vector<2x96xf32> to vector<2x64xf32>
    %1654 = vector.extract_strided_slice %1652 {offsets = [0, 0], sizes = [2, 64], strides = [1, 1]} : vector<2x96xf32> to vector<2x64xf32>
    %1655 = arith.addf %1653, %1654 : vector<2x64xf32>
    %1656 = arith.negf %1655 : vector<2x64xf32>
    %1657 = math.exp %1656 : vector<2x64xf32>
    %cst_313 = arith.constant 1.000000e+00 : f32
    %1658 = vector.broadcast %cst_313 : f32 to vector<2x64xf32>
    %1659 = arith.addf %1658, %1657 : vector<2x64xf32>
    %1660 = arith.divf %1658, %1659 : vector<2x64xf32>
    %1661 = vector.extract_strided_slice %1660 {offsets = [0, 0], sizes = [2, 32], strides = [1, 1]} : vector<2x64xf32> to vector<2x32xf32>
    %1662 = vector.extract_strided_slice %1660 {offsets = [0, 32], sizes = [2, 32], strides = [1, 1]} : vector<2x64xf32> to vector<2x32xf32>
    %1663 = vector.extract_strided_slice %1629 {offsets = [0, 64], sizes = [2, 32], strides = [1, 1]} : vector<2x96xf32> to vector<2x32xf32>
    %1664 = vector.extract_strided_slice %1652 {offsets = [0, 64], sizes = [2, 32], strides = [1, 1]} : vector<2x96xf32> to vector<2x32xf32>
    %1665 = arith.addf %1664, %898 : vector<2x32xf32>
    %1666 = arith.mulf %1661, %1665 : vector<2x32xf32>
    %1667 = arith.addf %1663, %1666 : vector<2x32xf32>
    %1668 = math.tanh %1667 : vector<2x32xf32>
    %cst_314 = arith.constant 1.000000e+00 : f32
    %1669 = vector.broadcast %cst_314 : f32 to vector<2x32xf32>
    %1670 = arith.subf %1669, %1662 : vector<2x32xf32>
    %1671 = arith.mulf %1670, %1668 : vector<2x32xf32>
    %1672 = arith.mulf %1662, %1625 : vector<2x32xf32>
    %1673 = arith.addf %1671, %1672 : vector<2x32xf32>
    %c0_315 = arith.constant 0 : index
    %c480_316 = arith.constant 480 : index
    %1674 = vector.load %arg4[%c0_315, %c480_316] : memref<2x512xf32, #tpu.memory_space<vmem>>, vector<2x32xf32>
    tpu.vector_store %arg4[%c0_315, %c480_316], %1651 {strides = array<i32>} : memref<2x512xf32, #tpu.memory_space<vmem>>, vector<2x32xf32>,
    %c0_317 = arith.constant 0 : index
    %c0_318 = arith.constant 0 : index
    %1675 = vector.load %arg5[%c0_317, %c0_318] : memref<2x512xf32, #tpu.memory_space<vmem>>, vector<2x32xf32>
    tpu.vector_store %arg5[%c0_317, %c0_318], %1673 {strides = array<i32>} : memref<2x512xf32, #tpu.memory_space<vmem>>, vector<2x32xf32>,
    %c0_319 = arith.constant 0 : index
    %c0_320 = arith.constant 0 : index
    %1676 = vector.load %arg4[%c0_319, %c0_320] : memref<2x512xf32, #tpu.memory_space<vmem>>, vector<2x512xf32>
    %c0_321 = arith.constant 0 : index
    %c0_322 = arith.constant 0 : index
    %1677 = vector.load %arg5[%c0_321, %c0_322] : memref<2x512xf32, #tpu.memory_space<vmem>>, vector<2x512xf32>
    %1678 = arith.addf %1676, %1677 : vector<2x512xf32>
    %cst_323 = arith.constant 5.000000e-01 : f32
    %1679 = vector.broadcast %cst_323 : f32 to vector<2x512xf32>
    %1680 = arith.mulf %1678, %1679 : vector<2x512xf32>
    %c0_324 = arith.constant 0 : index
    %c0_325 = arith.constant 0 : index
    %1681 = vector.load %arg2[%c0_324, %c0_325] : memref<2x512xf32, #tpu.memory_space<vmem>>, vector<2x512xf32>
    tpu.vector_store %arg2[%c0_324, %c0_325], %1680 {strides = array<i32>} : memref<2x512xf32, #tpu.memory_space<vmem>>, vector<2x512xf32>,
    return
  }
}

</mosaic_0001>

<llo_original>
// kernel: _lambda_.1
$region0: #{_lambda_.1}
  #allocation0 [shape = 'u32[]', space=smem, size = 0x4, offset = 0x4, fixed_abs, tag = 'smem constant byte address 0x4 - core index']
  #allocation1 [shape = 'u32[144,128]{1,0:T(1,128)}', space=vmem, size = 0x12000, scoped, tag = 'internal scratch']
  #allocation2 [shape = 'f32[32,64]{1,0:T(8,128)}', space=vmem, size = 0x4000, scoped, tag = 'scratch operand']
  #allocation3 [shape = 'f32[2,512]{1,0:T(2,128)}', space=vmem, size = 0x1000, scoped, tag = 'scratch operand']
  #allocation4 [shape = 'f32[2,512]{1,0:T(2,128)}', space=vmem, size = 0x1000, scoped, tag = 'scratch operand']
  %s0 = inlined_call_operand.vmem [shape: f32[2,16], index: 0, kind: input, shape index: {}]
  %s1 = inlined_call_operand.vmem [shape: f32[304,96], index: 1, kind: input, shape index: {}]
  %s2 = inlined_call_operand.vmem [shape: f32[2,512], index: 2, kind: output, shape index: {}]
  %s3 = sld [smem:[#allocation0]]
  $region18: #{_lambda_.1} parent=0
    _
  %s5 = ssub.s32 1, %s3
  %s6 = scalar_select 0, %s5, %s3
  // Predicated region
  $region2: #{_lambda_.1} parent=0 // pred_check
    _
  $region3: #{_lambda_.1} parent=0 // pred_check_branch
    %8 = sbr.rel (0) target = $region5
  $region4: #{_lambda_.1} parent=0 // pred_region
    _
  $region5: #{_lambda_.1} parent=0 // pred_fallthru
    _
  // Predicated region
  $region6: #{_lambda_.1} parent=0 // pred_check
    _
  $region7: #{_lambda_.1} parent=0 // pred_check_branch
    %10 = sbr.rel (0) target = $region9
  $region8: #{_lambda_.1} parent=0 // pred_region
    _
  $region9: #{_lambda_.1} parent=0 // pred_fallthru
    _
  %v11 = vld [vmem:[%s0] sm:$0x3]
  %v12 = vld [vmem:[%s1] sm:$0x1]
  %v13 = vld [vmem:[%s1 + $0x8] sm:$0xff]
  %v14 = vld [vmem:[%s1 + $0x10] sm:$0xff]
  %v15 = vld [vmem:[%s1 + $0x18] sm:$0xff]
  %v16 = vld [vmem:[%s1 + $0x20] sm:$0xff]
  %v17 = vld [vmem:[%s1 + $0x28] sm:$0x1]
  %v18 = vld [vmem:[%s1 + $0x29] sm:$0x1]
  %v19 = vld [vmem:[%s1 + $0x30] sm:$0x1]
  %v20 = vld [vmem:[%s1 + $0x38] sm:$0xff]
  %v21 = vld [vmem:[%s1 + $0x40] sm:$0xff]
  %v22 = vld [vmem:[%s1 + $0x48] sm:$0xff]
  %v23 = vld [vmem:[%s1 + $0x50] sm:$0xff]
  %v24 = vld [vmem:[%s1 + $0x58] sm:$0x1]
  %v25 = vld [vmem:[%s1 + $0x59] sm:$0x1]
  %v26 = vlaneseq
  %v27 = vshrl.u32 %v26, 7
  %v28 = vsub.s32 0, %v27
  %v29 = vrot.slane %v18, %v28
  %v30 = vlaneseq
  %v31 = vshrl.u32 %v30, 7
  %v32 = vsub.s32 0, %v31
  %v33 = vrot.slane %v25, %v32
  %v34 = vlaneseq
  %v35 = vshrl.u32 %v34, 7
  %v36 = vsub.s32 0, %v35
  %v37 = vrot.slane %v12, %v36
  %v38 = vlaneseq
  %v39 = vshrl.u32 %v38, 7
  %v40 = vsub.s32 0, %v39
  %v41 = vrot.slane %v17, %v40
  %v42 = vlaneseq
  %v43 = vshrl.u32 %v42, 7
  %v44 = vsub.s32 0, %v43
  %v45 = vrot.slane %v19, %v44
  %v46 = vlaneseq
  %v47 = vshrl.u32 %v46, 7
  %v48 = vsub.s32 0, %v47
  %v49 = vrot.slane %v24, %v48
  %51 = vset.pattern.permute.xlu0 0
  %52 = vperm.xlu0 %51, %v11
  %v53 = vpop.permute.xlu0 %52
  %v55 = vmul.f32 %v53, %v37
  %v56 = vadd.f32 %v55, %v41
  %57 = vset.pattern.permute.xlu0 15
  %58 = vperm.xlu0 %57, %v11
  %v59 = vpop.permute.xlu0 %58
  %v61 = vmul.f32 %v59, %v45
  %v62 = vadd.f32 %v61, %v49
  %vm63 = vcmask 261120
  %v65 = vsel %vm63, 0.0, 0
  %67 = vmatprep.subr.mxu0 0.0
  %68 = vmatpush1.msra.mxu0 %v13
  %69 = vmatprep.subr.mxu0 0.0
  %70 = vmatpush1.msra.mxu0 %v14
  %71 = vmatprep.subr.mxu0 0.0
  %72 = vmatpush1.msra.mxu0 %v15
  %73 = vmatprep.subr.mxu0 0.0
  %74 = vmatpush1.msra.mxu0 %v16
  %75 = vmatprep.subr.mxu0 0.0
  %76 = vmatpush1.msra.mxu0 0.0
  %77 = vmatprep.subr.mxu0 0.0
  %78 = vmatpush1.msra.mxu0 0.0
  %79 = vmatprep.subr.mxu0 0.0
  %80 = vmatpush1.msra.mxu0 0.0
  %81 = vmatprep.subr.mxu0 0.0
  %82 = vmatpush1.msra.mxu0 0.0
  %83 = vmatprep.subr.mxu0 0.0
  %84 = vmatpush1.msra.mxu0 0.0
  %85 = vmatprep.subr.mxu0 0.0
  %86 = vmatpush1.msra.mxu0 0.0
  %87 = vmatprep.subr.mxu0 0.0
  %88 = vmatpush1.msra.mxu0 0.0
  %89 = vmatprep.subr.mxu0 0.0
  %90 = vmatpush1.msra.mxu0 0.0
  %91 = vmatprep.subr.mxu0 0.0
  %92 = vmatpush1.msra.mxu0 0.0
  %93 = vmatprep.subr.mxu0 0.0
  %94 = vmatpush1.msra.mxu0 0.0
  %95 = vmatprep.subr.mxu0 0.0
  %96 = vmatpush1.msra.mxu0 0.0
  %97 = vmatprep.subr.mxu0 0.0
  %98 = vmatpush1.msra.mxu0 0.0
  %99 = vmatprep.subr.mxu0 0.0
  %100 = vmatpush1.msra.mxu0 0.0
  %101 = vmatprep.subr.mxu0 0.0
  %102 = vmatpush1.msra.mxu0 0.0
  %103 = vmatprep.subr.mxu0 0.0
  %104 = vmatpush1.msra.mxu0 0.0
  %105 = vmatprep.subr.mxu0 0.0
  %106 = vmatpush1.msra.mxu0 0.0
  %107 = vmatprep.subr.mxu0 0.0
  %108 = vmatpush1.msra.mxu0 0.0
  %109 = vmatprep.subr.mxu0 0.0
  %110 = vmatpush1.msra.mxu0 0.0
  %111 = vmatprep.subr.mxu0 0.0
  %112 = vmatpush1.msra.mxu0 0.0
  %113 = vmatprep.subr.mxu0 0.0
  %114 = vmatpush1.msra.mxu0 0.0
  %115 = vmatprep.subr.mxu0 0.0
  %116 = vmatpush1.msra.mxu0 0.0
  %117 = vmatprep.subr.mxu0 0.0
  %118 = vmatpush1.msra.mxu0 0.0
  %119 = vmatprep.subr.mxu0 0.0
  %120 = vmatpush1.msra.mxu0 0.0
  %121 = vmatprep.subr.mxu0 0.0
  %122 = vmatpush1.msra.mxu0 0.0
  %123 = vmatprep.subr.mxu0 0.0
  %124 = vmatpush1.msra.mxu0 0.0
  %125 = vmatprep.subr.mxu0 0.0
  %126 = vmatpush1.msra.mxu0 0.0
  %127 = vmatprep.subr.mxu0 0.0
  %128 = vmatpush1.msra.mxu0 0.0
  %129 = vmatprep.subr.mxu0 0.0
  %130 = vmatpush1.msra.mxu0 0.0
  %131 = vmatprep.mubr.f32.mxu0 0.0
  %132 = vmatmul.mubr.f32.gmra.mrb[0].mxu0 %v65
  %v133 = vpop.f32.mrb[0].mxu0
  %v134 = vadd.f32 0.0, %v133
  %v135 = vpop.f32.mrb[0].mxu0
  %136 = vdwg.mxu0
  %v137 = vadd.f32 %v56, %v134
  %v138 = vxor.u32 %v137, 2147483648
  %v139 = vmul.f32 %v138, 1.442695
  %v140 = vpow.pop %v139
  %v141 = vadd.f32 %v140, 1.0
  %v142 = vrcp.pop %v141
  %v143 = vmul.f32 1.0, %v142
  %145 = vrot.lane.b32.xlu0 %v29, 64
  %v146 = vpop.permute.xlu0 %145
  %v148 = vadd.f32 %v134, %v146
  %150 = vrot.lane.b32.xlu0 %v148, 64
  %v151 = vpop.permute.xlu0 %150
  %v153 = vmul.f32 %v143, %v151
  %155 = vrot.lane.b32.xlu0 %v153, 64
  %v156 = vpop.permute.xlu0 %155
  %v158 = vadd.f32 %v56, %v156
  %v159 = vtanh.pop %v158
  %v160 = vsub.f32 1.0, %v143
  %162 = vrot.lane.b32.xlu0 %v159, 96
  %v163 = vpop.permute.xlu0 %162
  %v165 = vmul.f32 %v160, %v163
  %v166 = vmul.f32 %v143, 0.0
  %v167 = vadd.f32 %v165, %v166
  %168 = vmatprep.subr.mxu0 0.0
  %169 = vmatpush1.msra.mxu0 %v20
  %170 = vmatprep.subr.mxu0 0.0
  %171 = vmatpush1.msra.mxu0 %v21
  %172 = vmatprep.subr.mxu0 0.0
  %173 = vmatpush1.msra.mxu0 %v22
  %174 = vmatprep.subr.mxu0 0.0
  %175 = vmatpush1.msra.mxu0 %v23
  %176 = vmatprep.subr.mxu0 0.0
  %177 = vmatpush1.msra.mxu0 0.0
  %178 = vmatprep.subr.mxu0 0.0
  %179 = vmatpush1.msra.mxu0 0.0
  %180 = vmatprep.subr.mxu0 0.0
  %181 = vmatpush1.msra.mxu0 0.0
  %182 = vmatprep.subr.mxu0 0.0
  %183 = vmatpush1.msra.mxu0 0.0
  %184 = vmatprep.subr.mxu0 0.0
  %185 = vmatpush1.msra.mxu0 0.0
  %186 = vmatprep.subr.mxu0 0.0
  %187 = vmatpush1.msra.mxu0 0.0
  %188 = vmatprep.subr.mxu0 0.0
  %189 = vmatpush1.msra.mxu0 0.0
  %190 = vmatprep.subr.mxu0 0.0
  %191 = vmatpush1.msra.mxu0 0.0
  %192 = vmatprep.subr.mxu0 0.0
  %193 = vmatpush1.msra.mxu0 0.0
  %194 = vmatprep.subr.mxu0 0.0
  %195 = vmatpush1.msra.mxu0 0.0
  %196 = vmatprep.subr.mxu0 0.0
  %197 = vmatpush1.msra.mxu0 0.0
  %198 = vmatprep.subr.mxu0 0.0
  %199 = vmatpush1.msra.mxu0 0.0
  %200 = vmatprep.subr.mxu0 0.0
  %201 = vmatpush1.msra.mxu0 0.0
  %202 = vmatprep.subr.mxu0 0.0
  %203 = vmatpush1.msra.mxu0 0.0
  %204 = vmatprep.subr.mxu0 0.0
  %205 = vmatpush1.msra.mxu0 0.0
  %206 = vmatprep.subr.mxu0 0.0
  %207 = vmatpush1.msra.mxu0 0.0
  %208 = vmatprep.subr.mxu0 0.0
  %209 = vmatpush1.msra.mxu0 0.0
  %210 = vmatprep.subr.mxu0 0.0
  %211 = vmatpush1.msra.mxu0 0.0
  %212 = vmatprep.subr.mxu0 0.0
  %213 = vmatpush1.msra.mxu0 0.0
  %214 = vmatprep.subr.mxu0 0.0
  %215 = vmatpush1.msra.mxu0 0.0
  %216 = vmatprep.subr.mxu0 0.0
  %217 = vmatpush1.msra.mxu0 0.0
  %218 = vmatprep.subr.mxu0 0.0
  %219 = vmatpush1.msra.mxu0 0.0
  %220 = vmatprep.subr.mxu0 0.0
  %221 = vmatpush1.msra.mxu0 0.0
  %222 = vmatprep.subr.mxu0 0.0
  %223 = vmatpush1.msra.mxu0 0.0
  %224 = vmatprep.subr.mxu0 0.0
  %225 = vmatpush1.msra.mxu0 0.0
  %226 = vmatprep.subr.mxu0 0.0
  %227 = vmatpush1.msra.mxu0 0.0
  %228 = vmatprep.subr.mxu0 0.0
  %229 = vmatpush1.msra.mxu0 0.0
  %230 = vmatprep.subr.mxu0 0.0
  %231 = vmatpush1.msra.mxu0 0.0
  %232 = vmatprep.mubr.f32.mxu0 0.0
  %233 = vmatmul.mubr.f32.gmra.mrb[0].mxu0 %v65
  %v234 = vpop.f32.mrb[0].mxu0
  %v235 = vadd.f32 0.0, %v234
  %v236 = vpop.f32.mrb[0].mxu0
  %237 = vdwg.mxu0
  %v238 = vadd.f32 %v62, %v235
  %v239 = vxor.u32 %v238, 2147483648
  %v240 = vmul.f32 %v239, 1.442695
  %v241 = vpow.pop %v240
  %v242 = vadd.f32 %v241, 1.0
  %v243 = vrcp.pop %v242
  %v244 = vmul.f32 1.0, %v243
  %246 = vrot.lane.b32.xlu0 %v33, 64
  %v247 = vpop.permute.xlu0 %246
  %v249 = vadd.f32 %v235, %v247
  %251 = vrot.lane.b32.xlu0 %v249, 64
  %v252 = vpop.permute.xlu0 %251
  %v254 = vmul.f32 %v244, %v252
  %256 = vrot.lane.b32.xlu0 %v254, 64
  %v257 = vpop.permute.xlu0 %256
  %v259 = vadd.f32 %v62, %v257
  %v260 = vtanh.pop %v259
  %v261 = vsub.f32 1.0, %v244
  %263 = vrot.lane.b32.xlu0 %v260, 96
  %v264 = vpop.permute.xlu0 %263
  %v266 = vmul.f32 %v261, %v264
  %v267 = vmul.f32 %v244, 0.0
  %v268 = vadd.f32 %v266, %v267
  %270 = vrot.lane.b32.xlu0 %v167, 96
  %v271 = vpop.permute.xlu0 %270
  %vm273 = vcmask 254976
  %274 = vst.msk [vmem:[#allocation2] sm:$0x3] %vm273, %v271
  %vm275 = vcmask 517376
  %276 = vst.msk [vmem:[#allocation2 + $0x1e] sm:$0x3] %vm275, %v268
  %277 = vset.pattern.permute.xlu0 1
  %278 = vperm.xlu0 %277, %v11
  %v279 = vpop.permute.xlu0 %278
  %v281 = vmul.f32 %v279, %v37
  %v282 = vadd.f32 %v281, %v41
  %283 = vset.pattern.permute.xlu0 14
  %284 = vperm.xlu0 %283, %v11
  %v285 = vpop.permute.xlu0 %284
  %v287 = vmul.f32 %v285, %v45
  %v288 = vadd.f32 %v287, %v49
  %v289 = vsel %vm63, %v271, 0
  %291 = vmatprep.subr.mxu0 0.0
  %292 = vmatpush1.msra.mxu0 %v13
  %293 = vmatprep.subr.mxu0 0.0
  %294 = vmatpush1.msra.mxu0 %v14
  %295 = vmatprep.subr.mxu0 0.0
  %296 = vmatpush1.msra.mxu0 %v15
  %297 = vmatprep.subr.mxu0 0.0
  %298 = vmatpush1.msra.mxu0 %v16
  %299 = vmatprep.subr.mxu0 0.0
  %300 = vmatpush1.msra.mxu0 0.0
  %301 = vmatprep.subr.mxu0 0.0
  %302 = vmatpush1.msra.mxu0 0.0
  %303 = vmatprep.subr.mxu0 0.0
  %304 = vmatpush1.msra.mxu0 0.0
  %305 = vmatprep.subr.mxu0 0.0
  %306 = vmatpush1.msra.mxu0 0.0
  %307 = vmatprep.subr.mxu0 0.0
  %308 = vmatpush1.msra.mxu0 0.0
  %309 = vmatprep.subr.mxu0 0.0
  %310 = vmatpush1.msra.mxu0 0.0
  %311 = vmatprep.subr.mxu0 0.0
  %312 = vmatpush1.msra.mxu0 0.0
  %313 = vmatprep.subr.mxu0 0.0
  %314 = vmatpush1.msra.mxu0 0.0
  %315 = vmatprep.subr.mxu0 0.0
  %316 = vmatpush1.msra.mxu0 0.0
  %317 = vmatprep.subr.mxu0 0.0
  %318 = vmatpush1.msra.mxu0 0.0
  %319 = vmatprep.subr.mxu0 0.0
  %320 = vmatpush1.msra.mxu0 0.0
  %321 = vmatprep.subr.mxu0 0.0
  %322 = vmatpush1.msra.mxu0 0.0
  %323 = vmatprep.subr.mxu0 0.0
  %324 = vmatpush1.msra.mxu0 0.0
  %325 = vmatprep.subr.mxu0 0.0
  %326 = vmatpush1.msra.mxu0 0.0
  %327 = vmatprep.subr.mxu0 0.0
  %328 = vmatpush1.msra.mxu0 0.0
  %329 = vmatprep.subr.mxu0 0.0
  %330 = vmatpush1.msra.mxu0 0.0
  %331 = vmatprep.subr.mxu0 0.0
  %332 = vmatpush1.msra.mxu0 0.0
  %333 = vmatprep.subr.mxu0 0.0
  %334 = vmatpush1.msra.mxu0 0.0
  %335 = vmatprep.subr.mxu0 0.0
  %336 = vmatpush1.msra.mxu0 0.0
  %337 = vmatprep.subr.mxu0 0.0
  %338 = vmatpush1.msra.mxu0 0.0
  %339 = vmatprep.subr.mxu0 0.0
  %340 = vmatpush1.msra.mxu0 0.0
  %341 = vmatprep.subr.mxu0 0.0
  %342 = vmatpush1.msra.mxu0 0.0
  %343 = vmatprep.subr.mxu0 0.0
  %344 = vmatpush1.msra.mxu0 0.0
  %345 = vmatprep.subr.mxu0 0.0
  %346 = vmatpush1.msra.mxu0 0.0
  %347 = vmatprep.subr.mxu0 0.0
  %348 = vmatpush1.msra.mxu0 0.0
  %349 = vmatprep.subr.mxu0 0.0
  %350 = vmatpush1.msra.mxu0 0.0
  %351 = vmatprep.subr.mxu0 0.0
  %352 = vmatpush1.msra.mxu0 0.0
  %353 = vmatprep.subr.mxu0 0.0
  %354 = vmatpush1.msra.mxu0 0.0
  %355 = vmatprep.mubr.f32.mxu0 0.0
  %356 = vmatmul.mubr.f32.gmra.mrb[0].mxu0 %v289
  %v357 = vpop.f32.mrb[0].mxu0
  %v358 = vadd.f32 0.0, %v357
  %v359 = vpop.f32.mrb[0].mxu0
  %360 = vdwg.mxu0
  %v361 = vadd.f32 %v282, %v358
  %v362 = vxor.u32 %v361, 2147483648
  %v363 = vmul.f32 %v362, 1.442695
  %v364 = vpow.pop %v363
  %v365 = vadd.f32 %v364, 1.0
  %v366 = vrcp.pop %v365
  %v367 = vmul.f32 1.0, %v366
  %v368 = vadd.f32 %v358, %v146
  %370 = vrot.lane.b32.xlu0 %v368, 64
  %v371 = vpop.permute.xlu0 %370
  %v373 = vmul.f32 %v367, %v371
  %375 = vrot.lane.b32.xlu0 %v373, 64
  %v376 = vpop.permute.xlu0 %375
  %v378 = vadd.f32 %v282, %v376
  %v379 = vtanh.pop %v378
  %v380 = vsub.f32 1.0, %v367
  %382 = vrot.lane.b32.xlu0 %v379, 96
  %v383 = vpop.permute.xlu0 %382
  %v385 = vmul.f32 %v380, %v383
  %v386 = vmul.f32 %v367, %v167
  %v387 = vadd.f32 %v385, %v386
  %389 = vrot.lane.b32.xlu0 %v268, 96
  %v390 = vpop.permute.xlu0 %389
  %v391 = vsel %vm63, %v390, 0
  %393 = vmatprep.subr.mxu0 0.0
  %394 = vmatpush1.msra.mxu0 %v20
  %395 = vmatprep.subr.mxu0 0.0
  %396 = vmatpush1.msra.mxu0 %v21
  %397 = vmatprep.subr.mxu0 0.0
  %398 = vmatpush1.msra.mxu0 %v22
  %399 = vmatprep.subr.mxu0 0.0
  %400 = vmatpush1.msra.mxu0 %v23
  %401 = vmatprep.subr.mxu0 0.0
  %402 = vmatpush1.msra.mxu0 0.0
  %403 = vmatprep.subr.mxu0 0.0
  %404 = vmatpush1.msra.mxu0 0.0
  %405 = vmatprep.subr.mxu0 0.0
  %406 = vmatpush1.msra.mxu0 0.0
  %407 = vmatprep.subr.mxu0 0.0
  %408 = vmatpush1.msra.mxu0 0.0
  %409 = vmatprep.subr.mxu0 0.0
  %410 = vmatpush1.msra.mxu0 0.0
  %411 = vmatprep.subr.mxu0 0.0
  %412 = vmatpush1.msra.mxu0 0.0
  %413 = vmatprep.subr.mxu0 0.0
  %414 = vmatpush1.msra.mxu0 0.0
  %415 = vmatprep.subr.mxu0 0.0
  %416 = vmatpush1.msra.mxu0 0.0
  %417 = vmatprep.subr.mxu0 0.0
  %418 = vmatpush1.msra.mxu0 0.0
  %419 = vmatprep.subr.mxu0 0.0
  %420 = vmatpush1.msra.mxu0 0.0
  %421 = vmatprep.subr.mxu0 0.0
  %422 = vmatpush1.msra.mxu0 0.0
  %423 = vmatprep.subr.mxu0 0.0
  %424 = vmatpush1.msra.mxu0 0.0
  %425 = vmatprep.subr.mxu0 0.0
  %426 = vmatpush1.msra.mxu0 0.0
  %427 = vmatprep.subr.mxu0 0.0
  %428 = vmatpush1.msra.mxu0 0.0
  %429 = vmatprep.subr.mxu0 0.0
  %430 = vmatpush1.msra.mxu0 0.0
  %431 = vmatprep.subr.mxu0 0.0
  %432 = vmatpush1.msra.mxu0 0.0
  %433 = vmatprep.subr.mxu0 0.0
  %434 = vmatpush1.msra.mxu0 0.0
  %435 = vmatprep.subr.mxu0 0.0
  %436 = vmatpush1.msra.mxu0 0.0
  %437 = vmatprep.subr.mxu0 0.0
  %438 = vmatpush1.msra.mxu0 0.0
  %439 = vmatprep.subr.mxu0 0.0
  %440 = vmatpush1.msra.mxu0 0.0
  %441 = vmatprep.subr.mxu0 0.0
  %442 = vmatpush1.msra.mxu0 0.0
  %443 = vmatprep.subr.mxu0 0.0
  %444 = vmatpush1.msra.mxu0 0.0
  %445 = vmatprep.subr.mxu0 0.0
  %446 = vmatpush1.msra.mxu0 0.0
  %447 = vmatprep.subr.mxu0 0.0
  %448 = vmatpush1.msra.mxu0 0.0
  %449 = vmatprep.subr.mxu0 0.0
  %450 = vmatpush1.msra.mxu0 0.0
  %451 = vmatprep.subr.mxu0 0.0
  %452 = vmatpush1.msra.mxu0 0.0
  %453 = vmatprep.subr.mxu0 0.0
  %454 = vmatpush1.msra.mxu0 0.0
  %455 = vmatprep.subr.mxu0 0.0
  %456 = vmatpush1.msra.mxu0 0.0
  %457 = vmatprep.mubr.f32.mxu0 0.0
  %458 = vmatmul.mubr.f32.gmra.mrb[0].mxu0 %v391
  %v459 = vpop.f32.mrb[0].mxu0
  %v460 = vadd.f32 0.0, %v459
  %v461 = vpop.f32.mrb[0].mxu0
  %462 = vdwg.mxu0
  %v463 = vadd.f32 %v288, %v460
  %v464 = vxor.u32 %v463, 2147483648
  %v465 = vmul.f32 %v464, 1.442695
  %v466 = vpow.pop %v465
  %v467 = vadd.f32 %v466, 1.0
  %v468 = vrcp.pop %v467
  %v469 = vmul.f32 1.0, %v468
  %v470 = vadd.f32 %v460, %v247
  %472 = vrot.lane.b32.xlu0 %v470, 64
  %v473 = vpop.permute.xlu0 %472
  %v475 = vmul.f32 %v469, %v473
  %477 = vrot.lane.b32.xlu0 %v475, 64
  %v478 = vpop.permute.xlu0 %477
  %v480 = vadd.f32 %v288, %v478
  %v481 = vtanh.pop %v480
  %v482 = vsub.f32 1.0, %v469
  %484 = vrot.lane.b32.xlu0 %v481, 96
  %v485 = vpop.permute.xlu0 %484
  %v487 = vmul.f32 %v482, %v485
  %v488 = vmul.f32 %v469, %v268
  %v489 = vadd.f32 %v487, %v488
  %491 = vrot.lane.b32.xlu0 %v387, 96
  %v492 = vpop.permute.xlu0 %491
  %494 = vst.msk [vmem:[#allocation2 + $0x2] sm:$0x3] %vm273, %v492
  %495 = vst.msk [vmem:[#allocation2 + $0x1c] sm:$0x3] %vm275, %v489
  %496 = vset.pattern.permute.xlu0 2
  %497 = vperm.xlu0 %496, %v11
  %v498 = vpop.permute.xlu0 %497
  %v500 = vmul.f32 %v498, %v37
  %v501 = vadd.f32 %v500, %v41
  %502 = vset.pattern.permute.xlu0 13
  %503 = vperm.xlu0 %502, %v11
  %v504 = vpop.permute.xlu0 %503
  %v506 = vmul.f32 %v504, %v45
  %v507 = vadd.f32 %v506, %v49
  %v508 = vsel %vm63, %v492, 0
  %510 = vmatprep.subr.mxu0 0.0
  %511 = vmatpush1.msra.mxu0 %v13
  %512 = vmatprep.subr.mxu0 0.0
  %513 = vmatpush1.msra.mxu0 %v14
  %514 = vmatprep.subr.mxu0 0.0
  %515 = vmatpush1.msra.mxu0 %v15
  %516 = vmatprep.subr.mxu0 0.0
  %517 = vmatpush1.msra.mxu0 %v16
  %518 = vmatprep.subr.mxu0 0.0
  %519 = vmatpush1.msra.mxu0 0.0
  %520 = vmatprep.subr.mxu0 0.0
  %521 = vmatpush1.msra.mxu0 0.0
  %522 = vmatprep.subr.mxu0 0.0
  %523 = vmatpush1.msra.mxu0 0.0
  %524 = vmatprep.subr.mxu0 0.0
  %525 = vmatpush1.msra.mxu0 0.0
  %526 = vmatprep.subr.mxu0 0.0
  %527 = vmatpush1.msra.mxu0 0.0
  %528 = vmatprep.subr.mxu0 0.0
  %529 = vmatpush1.msra.mxu0 0.0
  %530 = vmatprep.subr.mxu0 0.0
  %531 = vmatpush1.msra.mxu0 0.0
  %532 = vmatprep.subr.mxu0 0.0
  %533 = vmatpush1.msra.mxu0 0.0
  %534 = vmatprep.subr.mxu0 0.0
  %535 = vmatpush1.msra.mxu0 0.0
  %536 = vmatprep.subr.mxu0 0.0
  %537 = vmatpush1.msra.mxu0 0.0
  %538 = vmatprep.subr.mxu0 0.0
  %539 = vmatpush1.msra.mxu0 0.0
  %540 = vmatprep.subr.mxu0 0.0
  %541 = vmatpush1.msra.mxu0 0.0
  %542 = vmatprep.subr.mxu0 0.0
  %543 = vmatpush1.msra.mxu0 0.0
  %544 = vmatprep.subr.mxu0 0.0
  %545 = vmatpush1.msra.mxu0 0.0
  %546 = vmatprep.subr.mxu0 0.0
  %547 = vmatpush1.msra.mxu0 0.0
  %548 = vmatprep.subr.mxu0 0.0
  %549 = vmatpush1.msra.mxu0 0.0
  %550 = vmatprep.subr.mxu0 0.0
  %551 = vmatpush1.msra.mxu0 0.0
  %552 = vmatprep.subr.mxu0 0.0
  %553 = vmatpush1.msra.mxu0 0.0
  %554 = vmatprep.subr.mxu0 0.0
  %555 = vmatpush1.msra.mxu0 0.0
  %556 = vmatprep.subr.mxu0 0.0
  %557 = vmatpush1.msra.mxu0 0.0
  %558 = vmatprep.subr.mxu0 0.0
  %559 = vmatpush1.msra.mxu0 0.0
  %560 = vmatprep.subr.mxu0 0.0
  %561 = vmatpush1.msra.mxu0 0.0
  %562 = vmatprep.subr.mxu0 0.0
  %563 = vmatpush1.msra.mxu0 0.0
  %564 = vmatprep.subr.mxu0 0.0
  %565 = vmatpush1.msra.mxu0 0.0
  %566 = vmatprep.subr.mxu0 0.0
  %567 = vmatpush1.msra.mxu0 0.0
  %568 = vmatprep.subr.mxu0 0.0
  %569 = vmatpush1.msra.mxu0 0.0
  %570 = vmatprep.subr.mxu0 0.0
  %571 = vmatpush1.msra.mxu0 0.0
  %572 = vmatprep.subr.mxu0 0.0
  %573 = vmatpush1.msra.mxu0 0.0
  %574 = vmatprep.mubr.f32.mxu0 0.0
  %575 = vmatmul.mubr.f32.gmra.mrb[0].mxu0 %v508
  %v576 = vpop.f32.mrb[0].mxu0
  %v577 = vadd.f32 0.0, %v576
  %v578 = vpop.f32.mrb[0].mxu0
  %579 = vdwg.mxu0
  %v580 = vadd.f32 %v501, %v577
  %v581 = vxor.u32 %v580, 2147483648
  %v582 = vmul.f32 %v581, 1.442695
  %v583 = vpow.pop %v582
  %v584 = vadd.f32 %v583, 1.0
  %v585 = vrcp.pop %v584
  %v586 = vmul.f32 1.0, %v585
  %v587 = vadd.f32 %v577, %v146
  %589 = vrot.lane.b32.xlu0 %v587, 64
  %v590 = vpop.permute.xlu0 %589
  %v592 = vmul.f32 %v586, %v590
  %594 = vrot.lane.b32.xlu0 %v592, 64
  %v595 = vpop.permute.xlu0 %594
  %v597 = vadd.f32 %v501, %v595
  %v598 = vtanh.pop %v597
  %v599 = vsub.f32 1.0, %v586
  %601 = vrot.lane.b32.xlu0 %v598, 96
  %v602 = vpop.permute.xlu0 %601
  %v604 = vmul.f32 %v599, %v602
  %v605 = vmul.f32 %v586, %v387
  %v606 = vadd.f32 %v604, %v605
  %608 = vrot.lane.b32.xlu0 %v489, 96
  %v609 = vpop.permute.xlu0 %608
  %v610 = vsel %vm63, %v609, 0
  %612 = vmatprep.subr.mxu0 0.0
  %613 = vmatpush1.msra.mxu0 %v20
  %614 = vmatprep.subr.mxu0 0.0
  %615 = vmatpush1.msra.mxu0 %v21
  %616 = vmatprep.subr.mxu0 0.0
  %617 = vmatpush1.msra.mxu0 %v22
  %618 = vmatprep.subr.mxu0 0.0
  %619 = vmatpush1.msra.mxu0 %v23
  %620 = vmatprep.subr.mxu0 0.0
  %621 = vmatpush1.msra.mxu0 0.0
  %622 = vmatprep.subr.mxu0 0.0
  %623 = vmatpush1.msra.mxu0 0.0
  %624 = vmatprep.subr.mxu0 0.0
  %625 = vmatpush1.msra.mxu0 0.0
  %626 = vmatprep.subr.mxu0 0.0
  %627 = vmatpush1.msra.mxu0 0.0
  %628 = vmatprep.subr.mxu0 0.0
  %629 = vmatpush1.msra.mxu0 0.0
  %630 = vmatprep.subr.mxu0 0.0
  %631 = vmatpush1.msra.mxu0 0.0
  %632 = vmatprep.subr.mxu0 0.0
  %633 = vmatpush1.msra.mxu0 0.0
  %634 = vmatprep.subr.mxu0 0.0
  %635 = vmatpush1.msra.mxu0 0.0
  %636 = vmatprep.subr.mxu0 0.0
  %637 = vmatpush1.msra.mxu0 0.0
  %638 = vmatprep.subr.mxu0 0.0
  %639 = vmatpush1.msra.mxu0 0.0
  %640 = vmatprep.subr.mxu0 0.0
  %641 = vmatpush1.msra.mxu0 0.0
  %642 = vmatprep.subr.mxu0 0.0
  %643 = vmatpush1.msra.mxu0 0.0
  %644 = vmatprep.subr.mxu0 0.0
  %645 = vmatpush1.msra.mxu0 0.0
  %646 = vmatprep.subr.mxu0 0.0
  %647 = vmatpush1.msra.mxu0 0.0
  %648 = vmatprep.subr.mxu0 0.0
  %649 = vmatpush1.msra.mxu0 0.0
  %650 = vmatprep.subr.mxu0 0.0
  %651 = vmatpush1.msra.mxu0 0.0
  %652 = vmatprep.subr.mxu0 0.0
  %653 = vmatpush1.msra.mxu0 0.0
  %654 = vmatprep.subr.mxu0 0.0
  %655 = vmatpush1.msra.mxu0 0.0
  %656 = vmatprep.subr.mxu0 0.0
  %657 = vmatpush1.msra.mxu0 0.0
  %658 = vmatprep.subr.mxu0 0.0
  %659 = vmatpush1.msra.mxu0 0.0
  %660 = vmatprep.subr.mxu0 0.0
  %661 = vmatpush1.msra.mxu0 0.0
  %662 = vmatprep.subr.mxu0 0.0
  %663 = vmatpush1.msra.mxu0 0.0
  %664 = vmatprep.subr.mxu0 0.0
  %665 = vmatpush1.msra.mxu0 0.0
  %666 = vmatprep.subr.mxu0 0.0
  %667 = vmatpush1.msra.mxu0 0.0
  %668 = vmatprep.subr.mxu0 0.0
  %669 = vmatpush1.msra.mxu0 0.0
  %670 = vmatprep.subr.mxu0 0.0
  %671 = vmatpush1.msra.mxu0 0.0
  %672 = vmatprep.subr.mxu0 0.0
  %673 = vmatpush1.msra.mxu0 0.0
  %674 = vmatprep.subr.mxu0 0.0
  %675 = vmatpush1.msra.mxu0 0.0
  %676 = vmatprep.mubr.f32.mxu0 0.0
  %677 = vmatmul.mubr.f32.gmra.mrb[0].mxu0 %v610
  %v678 = vpop.f32.mrb[0].mxu0
  %v679 = vadd.f32 0.0, %v678
  %v680 = vpop.f32.mrb[0].mxu0
  %681 = vdwg.mxu0
  %v682 = vadd.f32 %v507, %v679
  %v683 = vxor.u32 %v682, 2147483648
  %v684 = vmul.f32 %v683, 1.442695
  %v685 = vpow.pop %v684
  %v686 = vadd.f32 %v685, 1.0
  %v687 = vrcp.pop %v686
  %v688 = vmul.f32 1.0, %v687
  %v689 = vadd.f32 %v679, %v247
  %691 = vrot.lane.b32.xlu0 %v689, 64
  %v692 = vpop.permute.xlu0 %691
  %v694 = vmul.f32 %v688, %v692
  %696 = vrot.lane.b32.xlu0 %v694, 64
  %v697 = vpop.permute.xlu0 %696
  %v699 = vadd.f32 %v507, %v697
  %v700 = vtanh.pop %v699
  %v701 = vsub.f32 1.0, %v688
  %703 = vrot.lane.b32.xlu0 %v700, 96
  %v704 = vpop.permute.xlu0 %703
  %v706 = vmul.f32 %v701, %v704
  %v707 = vmul.f32 %v688, %v489
  %v708 = vadd.f32 %v706, %v707
  %710 = vrot.lane.b32.xlu0 %v606, 96
  %v711 = vpop.permute.xlu0 %710
  %713 = vst.msk [vmem:[#allocation2 + $0x4] sm:$0x3] %vm273, %v711
  %714 = vst.msk [vmem:[#allocation2 + $0x1a] sm:$0x3] %vm275, %v708
  %715 = vset.pattern.permute.xlu0 3
  %716 = vperm.xlu0 %715, %v11
  %v717 = vpop.permute.xlu0 %716
  %v719 = vmul.f32 %v717, %v37
  %v720 = vadd.f32 %v719, %v41
  %721 = vset.pattern.permute.xlu0 12
  %722 = vperm.xlu0 %721, %v11
  %v723 = vpop.permute.xlu0 %722
  %v725 = vmul.f32 %v723, %v45
  %v726 = vadd.f32 %v725, %v49
  %v727 = vsel %vm63, %v711, 0
  %729 = vmatprep.subr.mxu0 0.0
  %730 = vmatpush1.msra.mxu0 %v13
  %731 = vmatprep.subr.mxu0 0.0
  %732 = vmatpush1.msra.mxu0 %v14
  %733 = vmatprep.subr.mxu0 0.0
  %734 = vmatpush1.msra.mxu0 %v15
  %735 = vmatprep.subr.mxu0 0.0
  %736 = vmatpush1.msra.mxu0 %v16
  %737 = vmatprep.subr.mxu0 0.0
  %738 = vmatpush1.msra.mxu0 0.0
  %739 = vmatprep.subr.mxu0 0.0
  %740 = vmatpush1.msra.mxu0 0.0
  %741 = vmatprep.subr.mxu0 0.0
  %742 = vmatpush1.msra.mxu0 0.0
  %743 = vmatprep.subr.mxu0 0.0
  %744 = vmatpush1.msra.mxu0 0.0
  %745 = vmatprep.subr.mxu0 0.0
  %746 = vmatpush1.msra.mxu0 0.0
  %747 = vmatprep.subr.mxu0 0.0
  %748 = vmatpush1.msra.mxu0 0.0
  %749 = vmatprep.subr.mxu0 0.0
  %750 = vmatpush1.msra.mxu0 0.0
  %751 = vmatprep.subr.mxu0 0.0
  %752 = vmatpush1.msra.mxu0 0.0
  %753 = vmatprep.subr.mxu0 0.0
  %754 = vmatpush1.msra.mxu0 0.0
  %755 = vmatprep.subr.mxu0 0.0
  %756 = vmatpush1.msra.mxu0 0.0
  %757 = vmatprep.subr.mxu0 0.0
  %758 = vmatpush1.msra.mxu0 0.0
  %759 = vmatprep.subr.mxu0 0.0
  %760 = vmatpush1.msra.mxu0 0.0
  %761 = vmatprep.subr.mxu0 0.0
  %762 = vmatpush1.msra.mxu0 0.0
  %763 = vmatprep.subr.mxu0 0.0
  %764 = vmatpush1.msra.mxu0 0.0
  %765 = vmatprep.subr.mxu0 0.0
  %766 = vmatpush1.msra.mxu0 0.0
  %767 = vmatprep.subr.mxu0 0.0
  %768 = vmatpush1.msra.mxu0 0.0
  %769 = vmatprep.subr.mxu0 0.0
  %770 = vmatpush1.msra.mxu0 0.0
  %771 = vmatprep.subr.mxu0 0.0
  %772 = vmatpush1.msra.mxu0 0.0
  %773 = vmatprep.subr.mxu0 0.0
  %774 = vmatpush1.msra.mxu0 0.0
  %775 = vmatprep.subr.mxu0 0.0
  %776 = vmatpush1.msra.mxu0 0.0
  %777 = vmatprep.subr.mxu0 0.0
  %778 = vmatpush1.msra.mxu0 0.0
  %779 = vmatprep.subr.mxu0 0.0
  %780 = vmatpush1.msra.mxu0 0.0
  %781 = vmatprep.subr.mxu0 0.0
  %782 = vmatpush1.msra.mxu0 0.0
  %783 = vmatprep.subr.mxu0 0.0
  %784 = vmatpush1.msra.mxu0 0.0
  %785 = vmatprep.subr.mxu0 0.0
  %786 = vmatpush1.msra.mxu0 0.0
  %787 = vmatprep.subr.mxu0 0.0
  %788 = vmatpush1.msra.mxu0 0.0
  %789 = vmatprep.subr.mxu0 0.0
  %790 = vmatpush1.msra.mxu0 0.0
  %791 = vmatprep.subr.mxu0 0.0
  %792 = vmatpush1.msra.mxu0 0.0
  %793 = vmatprep.mubr.f32.mxu0 0.0
  %794 = vmatmul.mubr.f32.gmra.mrb[0].mxu0 %v727
  %v795 = vpop.f32.mrb[0].mxu0
  %v796 = vadd.f32 0.0, %v795
  %v797 = vpop.f32.mrb[0].mxu0
  %798 = vdwg.mxu0
  %v799 = vadd.f32 %v720, %v796
  %v800 = vxor.u32 %v799, 2147483648
  %v801 = vmul.f32 %v800, 1.442695
  %v802 = vpow.pop %v801
  %v803 = vadd.f32 %v802, 1.0
  %v804 = vrcp.pop %v803
  %v805 = vmul.f32 1.0, %v804
  %v806 = vadd.f32 %v796, %v146
  %808 = vrot.lane.b32.xlu0 %v806, 64
  %v809 = vpop.permute.xlu0 %808
  %v811 = vmul.f32 %v805, %v809
  %813 = vrot.lane.b32.xlu0 %v811, 64
  %v814 = vpop.permute.xlu0 %813
  %v816 = vadd.f32 %v720, %v814
  %v817 = vtanh.pop %v816
  %v818 = vsub.f32 1.0, %v805
  %820 = vrot.lane.b32.xlu0 %v817, 96
  %v821 = vpop.permute.xlu0 %820
  %v823 = vmul.f32 %v818, %v821
  %v824 = vmul.f32 %v805, %v606
  %v825 = vadd.f32 %v823, %v824
  %827 = vrot.lane.b32.xlu0 %v708, 96
  %v828 = vpop.permute.xlu0 %827
  %v829 = vsel %vm63, %v828, 0
  %831 = vmatprep.subr.mxu0 0.0
  %832 = vmatpush1.msra.mxu0 %v20
  %833 = vmatprep.subr.mxu0 0.0
  %834 = vmatpush1.msra.mxu0 %v21
  %835 = vmatprep.subr.mxu0 0.0
  %836 = vmatpush1.msra.mxu0 %v22
  %837 = vmatprep.subr.mxu0 0.0
  %838 = vmatpush1.msra.mxu0 %v23
  %839 = vmatprep.subr.mxu0 0.0
  %840 = vmatpush1.msra.mxu0 0.0
  %841 = vmatprep.subr.mxu0 0.0
  %842 = vmatpush1.msra.mxu0 0.0
  %843 = vmatprep.subr.mxu0 0.0
  %844 = vmatpush1.msra.mxu0 0.0
  %845 = vmatprep.subr.mxu0 0.0
  %846 = vmatpush1.msra.mxu0 0.0
  %847 = vmatprep.subr.mxu0 0.0
  %848 = vmatpush1.msra.mxu0 0.0
  %849 = vmatprep.subr.mxu0 0.0
  %850 = vmatpush1.msra.mxu0 0.0
  %851 = vmatprep.subr.mxu0 0.0
  %852 = vmatpush1.msra.mxu0 0.0
  %853 = vmatprep.subr.mxu0 0.0
  %854 = vmatpush1.msra.mxu0 0.0
  %855 = vmatprep.subr.mxu0 0.0
  %856 = vmatpush1.msra.mxu0 0.0
  %857 = vmatprep.subr.mxu0 0.0
  %858 = vmatpush1.msra.mxu0 0.0
  %859 = vmatprep.subr.mxu0 0.0
  %860 = vmatpush1.msra.mxu0 0.0
  %861 = vmatprep.subr.mxu0 0.0
  %862 = vmatpush1.msra.mxu0 0.0
  %863 = vmatprep.subr.mxu0 0.0
  %864 = vmatpush1.msra.mxu0 0.0
  %865 = vmatprep.subr.mxu0 0.0
  %866 = vmatpush1.msra.mxu0 0.0
  %867 = vmatprep.subr.mxu0 0.0
  %868 = vmatpush1.msra.mxu0 0.0
  %869 = vmatprep.subr.mxu0 0.0
  %870 = vmatpush1.msra.mxu0 0.0
  %871 = vmatprep.subr.mxu0 0.0
  %872 = vmatpush1.msra.mxu0 0.0
  %873 = vmatprep.subr.mxu0 0.0
  %874 = vmatpush1.msra.mxu0 0.0
  %875 = vmatprep.subr.mxu0 0.0
  %876 = vmatpush1.msra.mxu0 0.0
  %877 = vmatprep.subr.mxu0 0.0
  %878 = vmatpush1.msra.mxu0 0.0
  %879 = vmatprep.subr.mxu0 0.0
  %880 = vmatpush1.msra.mxu0 0.0
  %881 = vmatprep.subr.mxu0 0.0
  %882 = vmatpush1.msra.mxu0 0.0
  %883 = vmatprep.subr.mxu0 0.0
  %884 = vmatpush1.msra.mxu0 0.0
  %885 = vmatprep.subr.mxu0 0.0
  %886 = vmatpush1.msra.mxu0 0.0
  %887 = vmatprep.subr.mxu0 0.0
  %888 = vmatpush1.msra.mxu0 0.0
  %889 = vmatprep.subr.mxu0 0.0
  %890 = vmatpush1.msra.mxu0 0.0
  %891 = vmatprep.subr.mxu0 0.0
  %892 = vmatpush1.msra.mxu0 0.0
  %893 = vmatprep.subr.mxu0 0.0
  %894 = vmatpush1.msra.mxu0 0.0
  %895 = vmatprep.mubr.f32.mxu0 0.0
  %896 = vmatmul.mubr.f32.gmra.mrb[0].mxu0 %v829
  %v897 = vpop.f32.mrb[0].mxu0
  %v898 = vadd.f32 0.0, %v897
  %v899 = vpop.f32.mrb[0].mxu0
  %900 = vdwg.mxu0
  %v901 = vadd.f32 %v726, %v898
  %v902 = vxor.u32 %v901, 2147483648
  %v903 = vmul.f32 %v902, 1.442695
  %v904 = vpow.pop %v903
  %v905 = vadd.f32 %v904, 1.0
  %v906 = vrcp.pop %v905
  %v907 = vmul.f32 1.0, %v906
  %v908 = vadd.f32 %v898, %v247
  %910 = vrot.lane.b32.xlu0 %v908, 64
  %v911 = vpop.permute.xlu0 %910
  %v913 = vmul.f32 %v907, %v911
  %915 = vrot.lane.b32.xlu0 %v913, 64
  %v916 = vpop.permute.xlu0 %915
  %v918 = vadd.f32 %v726, %v916
  %v919 = vtanh.pop %v918
  %v920 = vsub.f32 1.0, %v907
  %922 = vrot.lane.b32.xlu0 %v919, 96
  %v923 = vpop.permute.xlu0 %922
  %v925 = vmul.f32 %v920, %v923
  %v926 = vmul.f32 %v907, %v708
  %v927 = vadd.f32 %v925, %v926
  %929 = vrot.lane.b32.xlu0 %v825, 96
  %v930 = vpop.permute.xlu0 %929
  %932 = vst.msk [vmem:[#allocation2 + $0x6] sm:$0x3] %vm273, %v930
  %933 = vst.msk [vmem:[#allocation2 + $0x18] sm:$0x3] %vm275, %v927
  %934 = vset.pattern.permute.xlu0 4
  %935 = vperm.xlu0 %934, %v11
  %v936 = vpop.permute.xlu0 %935
  %v938 = vmul.f32 %v936, %v37
  %v939 = vadd.f32 %v938, %v41
  %940 = vset.pattern.permute.xlu0 11
  %941 = vperm.xlu0 %940, %v11
  %v942 = vpop.permute.xlu0 %941
  %v944 = vmul.f32 %v942, %v45
  %v945 = vadd.f32 %v944, %v49
  %v946 = vsel %vm63, %v930, 0
  %948 = vmatprep.subr.mxu0 0.0
  %949 = vmatpush1.msra.mxu0 %v13
  %950 = vmatprep.subr.mxu0 0.0
  %951 = vmatpush1.msra.mxu0 %v14
  %952 = vmatprep.subr.mxu0 0.0
  %953 = vmatpush1.msra.mxu0 %v15
  %954 = vmatprep.subr.mxu0 0.0
  %955 = vmatpush1.msra.mxu0 %v16
  %956 = vmatprep.subr.mxu0 0.0
  %957 = vmatpush1.msra.mxu0 0.0
  %958 = vmatprep.subr.mxu0 0.0
  %959 = vmatpush1.msra.mxu0 0.0
  %960 = vmatprep.subr.mxu0 0.0
  %961 = vmatpush1.msra.mxu0 0.0
  %962 = vmatprep.subr.mxu0 0.0
  %963 = vmatpush1.msra.mxu0 0.0
  %964 = vmatprep.subr.mxu0 0.0
  %965 = vmatpush1.msra.mxu0 0.0
  %966 = vmatprep.subr.mxu0 0.0
  %967 = vmatpush1.msra.mxu0 0.0
  %968 = vmatprep.subr.mxu0 0.0
  %969 = vmatpush1.msra.mxu0 0.0
  %970 = vmatprep.subr.mxu0 0.0
  %971 = vmatpush1.msra.mxu0 0.0
  %972 = vmatprep.subr.mxu0 0.0
  %973 = vmatpush1.msra.mxu0 0.0
  %974 = vmatprep.subr.mxu0 0.0
  %975 = vmatpush1.msra.mxu0 0.0
  %976 = vmatprep.subr.mxu0 0.0
  %977 = vmatpush1.msra.mxu0 0.0
  %978 = vmatprep.subr.mxu0 0.0
  %979 = vmatpush1.msra.mxu0 0.0
  %980 = vmatprep.subr.mxu0 0.0
  %981 = vmatpush1.msra.mxu0 0.0
  %982 = vmatprep.subr.mxu0 0.0
  %983 = vmatpush1.msra.mxu0 0.0
  %984 = vmatprep.subr.mxu0 0.0
  %985 = vmatpush1.msra.mxu0 0.0
  %986 = vmatprep.subr.mxu0 0.0
  %987 = vmatpush1.msra.mxu0 0.0
  %988 = vmatprep.subr.mxu0 0.0
  %989 = vmatpush1.msra.mxu0 0.0
  %990 = vmatprep.subr.mxu0 0.0
  %991 = vmatpush1.msra.mxu0 0.0
  %992 = vmatprep.subr.mxu0 0.0
  %993 = vmatpush1.msra.mxu0 0.0
  %994 = vmatprep.subr.mxu0 0.0
  %995 = vmatpush1.msra.mxu0 0.0
  %996 = vmatprep.subr.mxu0 0.0
  %997 = vmatpush1.msra.mxu0 0.0
  %998 = vmatprep.subr.mxu0 0.0
  %999 = vmatpush1.msra.mxu0 0.0
  %1000 = vmatprep.subr.mxu0 0.0
  %1001 = vmatpush1.msra.mxu0 0.0
  %1002 = vmatprep.subr.mxu0 0.0
  %1003 = vmatpush1.msra.mxu0 0.0
  %1004 = vmatprep.subr.mxu0 0.0
  %1005 = vmatpush1.msra.mxu0 0.0
  %1006 = vmatprep.subr.mxu0 0.0
  %1007 = vmatpush1.msra.mxu0 0.0
  %1008 = vmatprep.subr.mxu0 0.0
  %1009 = vmatpush1.msra.mxu0 0.0
  %1010 = vmatprep.subr.mxu0 0.0
  %1011 = vmatpush1.msra.mxu0 0.0
  %1012 = vmatprep.mubr.f32.mxu0 0.0
  %1013 = vmatmul.mubr.f32.gmra.mrb[0].mxu0 %v946
  %v1014 = vpop.f32.mrb[0].mxu0
  %v1015 = vadd.f32 0.0, %v1014
  %v1016 = vpop.f32.mrb[0].mxu0
  %1017 = vdwg.mxu0
  %v1018 = vadd.f32 %v939, %v1015
  %v1019 = vxor.u32 %v1018, 2147483648
  %v1020 = vmul.f32 %v1019, 1.442695
  %v1021 = vpow.pop %v1020
  %v1022 = vadd.f32 %v1021, 1.0
  %v1023 = vrcp.pop %v1022
  %v1024 = vmul.f32 1.0, %v1023
  %v1025 = vadd.f32 %v1015, %v146
  %1027 = vrot.lane.b32.xlu0 %v1025, 64
  %v1028 = vpop.permute.xlu0 %1027
  %v1030 = vmul.f32 %v1024, %v1028
  %1032 = vrot.lane.b32.xlu0 %v1030, 64
  %v1033 = vpop.permute.xlu0 %1032
  %v1035 = vadd.f32 %v939, %v1033
  %v1036 = vtanh.pop %v1035
  %v1037 = vsub.f32 1.0, %v1024
  %1039 = vrot.lane.b32.xlu0 %v1036, 96
  %v1040 = vpop.permute.xlu0 %1039
  %v1042 = vmul.f32 %v1037, %v1040
  %v1043 = vmul.f32 %v1024, %v825
  %v1044 = vadd.f32 %v1042, %v1043
  %1046 = vrot.lane.b32.xlu0 %v927, 96
  %v1047 = vpop.permute.xlu0 %1046
  %v1048 = vsel %vm63, %v1047, 0
  %1050 = vmatprep.subr.mxu0 0.0
  %1051 = vmatpush1.msra.mxu0 %v20
  %1052 = vmatprep.subr.mxu0 0.0
  %1053 = vmatpush1.msra.mxu0 %v21
  %1054 = vmatprep.subr.mxu0 0.0
  %1055 = vmatpush1.msra.mxu0 %v22
  %1056 = vmatprep.subr.mxu0 0.0
  %1057 = vmatpush1.msra.mxu0 %v23
  %1058 = vmatprep.subr.mxu0 0.0
  %1059 = vmatpush1.msra.mxu0 0.0
  %1060 = vmatprep.subr.mxu0 0.0
  %1061 = vmatpush1.msra.mxu0 0.0
  %1062 = vmatprep.subr.mxu0 0.0
  %1063 = vmatpush1.msra.mxu0 0.0
  %1064 = vmatprep.subr.mxu0 0.0
  %1065 = vmatpush1.msra.mxu0 0.0
  %1066 = vmatprep.subr.mxu0 0.0
  %1067 = vmatpush1.msra.mxu0 0.0
  %1068 = vmatprep.subr.mxu0 0.0
  %1069 = vmatpush1.msra.mxu0 0.0
  %1070 = vmatprep.subr.mxu0 0.0
  %1071 = vmatpush1.msra.mxu0 0.0
  %1072 = vmatprep.subr.mxu0 0.0
  %1073 = vmatpush1.msra.mxu0 0.0
  %1074 = vmatprep.subr.mxu0 0.0
  %1075 = vmatpush1.msra.mxu0 0.0
  %1076 = vmatprep.subr.mxu0 0.0
  %1077 = vmatpush1.msra.mxu0 0.0
  %1078 = vmatprep.subr.mxu0 0.0
  %1079 = vmatpush1.msra.mxu0 0.0
  %1080 = vmatprep.subr.mxu0 0.0
  %1081 = vmatpush1.msra.mxu0 0.0
  %1082 = vmatprep.subr.mxu0 0.0
  %1083 = vmatpush1.msra.mxu0 0.0
  %1084 = vmatprep.subr.mxu0 0.0
  %1085 = vmatpush1.msra.mxu0 0.0
  %1086 = vmatprep.subr.mxu0 0.0
  %1087 = vmatpush1.msra.mxu0 0.0
  %1088 = vmatprep.subr.mxu0 0.0
  %1089 = vmatpush1.msra.mxu0 0.0
  %1090 = vmatprep.subr.mxu0 0.0
  %1091 = vmatpush1.msra.mxu0 0.0
  %1092 = vmatprep.subr.mxu0 0.0
  %1093 = vmatpush1.msra.mxu0 0.0
  %1094 = vmatprep.subr.mxu0 0.0
  %1095 = vmatpush1.msra.mxu0 0.0
  %1096 = vmatprep.subr.mxu0 0.0
  %1097 = vmatpush1.msra.mxu0 0.0
  %1098 = vmatprep.subr.mxu0 0.0
  %1099 = vmatpush1.msra.mxu0 0.0
  %1100 = vmatprep.subr.mxu0 0.0
  %1101 = vmatpush1.msra.mxu0 0.0
  %1102 = vmatprep.subr.mxu0 0.0
  %1103 = vmatpush1.msra.mxu0 0.0
  %1104 = vmatprep.subr.mxu0 0.0
  %1105 = vmatpush1.msra.mxu0 0.0
  %1106 = vmatprep.subr.mxu0 0.0
  %1107 = vmatpush1.msra.mxu0 0.0
  %1108 = vmatprep.subr.mxu0 0.0
  %1109 = vmatpush1.msra.mxu0 0.0
  %1110 = vmatprep.subr.mxu0 0.0
  %1111 = vmatpush1.msra.mxu0 0.0
  %1112 = vmatprep.subr.mxu0 0.0
  %1113 = vmatpush1.msra.mxu0 0.0
  %1114 = vmatprep.mubr.f32.mxu0 0.0
  %1115 = vmatmul.mubr.f32.gmra.mrb[0].mxu0 %v1048
  %v1116 = vpop.f32.mrb[0].mxu0
  %v1117 = vadd.f32 0.0, %v1116
  %v1118 = vpop.f32.mrb[0].mxu0
  %1119 = vdwg.mxu0
  %v1120 = vadd.f32 %v945, %v1117
  %v1121 = vxor.u32 %v1120, 2147483648
  %v1122 = vmul.f32 %v1121, 1.442695
  %v1123 = vpow.pop %v1122
  %v1124 = vadd.f32 %v1123, 1.0
  %v1125 = vrcp.pop %v1124
  %v1126 = vmul.f32 1.0, %v1125
  %v1127 = vadd.f32 %v1117, %v247
  %1129 = vrot.lane.b32.xlu0 %v1127, 64
  %v1130 = vpop.permute.xlu0 %1129
  %v1132 = vmul.f32 %v1126, %v1130
  %1134 = vrot.lane.b32.xlu0 %v1132, 64
  %v1135 = vpop.permute.xlu0 %1134
  %v1137 = vadd.f32 %v945, %v1135
  %v1138 = vtanh.pop %v1137
  %v1139 = vsub.f32 1.0, %v1126
  %1141 = vrot.lane.b32.xlu0 %v1138, 96
  %v1142 = vpop.permute.xlu0 %1141
  %v1144 = vmul.f32 %v1139, %v1142
  %v1145 = vmul.f32 %v1126, %v927
  %v1146 = vadd.f32 %v1144, %v1145
  %1148 = vrot.lane.b32.xlu0 %v1044, 96
  %v1149 = vpop.permute.xlu0 %1148
  %1151 = vst.msk [vmem:[#allocation2 + $0x8] sm:$0x3] %vm273, %v1149
  %1152 = vst.msk [vmem:[#allocation2 + $0x16] sm:$0x3] %vm275, %v1146
  %1153 = vset.pattern.permute.xlu0 5
  %1154 = vperm.xlu0 %1153, %v11
  %v1155 = vpop.permute.xlu0 %1154
  %v1157 = vmul.f32 %v1155, %v37
  %v1158 = vadd.f32 %v1157, %v41
  %1159 = vset.pattern.permute.xlu0 10
  %1160 = vperm.xlu0 %1159, %v11
  %v1161 = vpop.permute.xlu0 %1160
  %v1163 = vmul.f32 %v1161, %v45
  %v1164 = vadd.f32 %v1163, %v49
  %v1165 = vsel %vm63, %v1149, 0
  %1167 = vmatprep.subr.mxu0 0.0
  %1168 = vmatpush1.msra.mxu0 %v13
  %1169 = vmatprep.subr.mxu0 0.0
  %1170 = vmatpush1.msra.mxu0 %v14
  %1171 = vmatprep.subr.mxu0 0.0
  %1172 = vmatpush1.msra.mxu0 %v15
  %1173 = vmatprep.subr.mxu0 0.0
  %1174 = vmatpush1.msra.mxu0 %v16
  %1175 = vmatprep.subr.mxu0 0.0
  %1176 = vmatpush1.msra.mxu0 0.0
  %1177 = vmatprep.subr.mxu0 0.0
  %1178 = vmatpush1.msra.mxu0 0.0
  %1179 = vmatprep.subr.mxu0 0.0
  %1180 = vmatpush1.msra.mxu0 0.0
  %1181 = vmatprep.subr.mxu0 0.0
  %1182 = vmatpush1.msra.mxu0 0.0
  %1183 = vmatprep.subr.mxu0 0.0
  %1184 = vmatpush1.msra.mxu0 0.0
  %1185 = vmatprep.subr.mxu0 0.0
  %1186 = vmatpush1.msra.mxu0 0.0
  %1187 = vmatprep.subr.mxu0 0.0
  %1188 = vmatpush1.msra.mxu0 0.0
  %1189 = vmatprep.subr.mxu0 0.0
  %1190 = vmatpush1.msra.mxu0 0.0
  %1191 = vmatprep.subr.mxu0 0.0
  %1192 = vmatpush1.msra.mxu0 0.0
  %1193 = vmatprep.subr.mxu0 0.0
  %1194 = vmatpush1.msra.mxu0 0.0
  %1195 = vmatprep.subr.mxu0 0.0
  %1196 = vmatpush1.msra.mxu0 0.0
  %1197 = vmatprep.subr.mxu0 0.0
  %1198 = vmatpush1.msra.mxu0 0.0
  %1199 = vmatprep.subr.mxu0 0.0
  %1200 = vmatpush1.msra.mxu0 0.0
  %1201 = vmatprep.subr.mxu0 0.0
  %1202 = vmatpush1.msra.mxu0 0.0
  %1203 = vmatprep.subr.mxu0 0.0
  %1204 = vmatpush1.msra.mxu0 0.0
  %1205 = vmatprep.subr.mxu0 0.0
  %1206 = vmatpush1.msra.mxu0 0.0
  %1207 = vmatprep.subr.mxu0 0.0
  %1208 = vmatpush1.msra.mxu0 0.0
  %1209 = vmatprep.subr.mxu0 0.0
  %1210 = vmatpush1.msra.mxu0 0.0
  %1211 = vmatprep.subr.mxu0 0.0
  %1212 = vmatpush1.msra.mxu0 0.0
  %1213 = vmatprep.subr.mxu0 0.0
  %1214 = vmatpush1.msra.mxu0 0.0
  %1215 = vmatprep.subr.mxu0 0.0
  %1216 = vmatpush1.msra.mxu0 0.0
  %1217 = vmatprep.subr.mxu0 0.0
  %1218 = vmatpush1.msra.mxu0 0.0
  %1219 = vmatprep.subr.mxu0 0.0
  %1220 = vmatpush1.msra.mxu0 0.0
  %1221 = vmatprep.subr.mxu0 0.0
  %1222 = vmatpush1.msra.mxu0 0.0
  %1223 = vmatprep.subr.mxu0 0.0
  %1224 = vmatpush1.msra.mxu0 0.0
  %1225 = vmatprep.subr.mxu0 0.0
  %1226 = vmatpush1.msra.mxu0 0.0
  %1227 = vmatprep.subr.mxu0 0.0
  %1228 = vmatpush1.msra.mxu0 0.0
  %1229 = vmatprep.subr.mxu0 0.0
  %1230 = vmatpush1.msra.mxu0 0.0
  %1231 = vmatprep.mubr.f32.mxu0 0.0
  %1232 = vmatmul.mubr.f32.gmra.mrb[0].mxu0 %v1165
  %v1233 = vpop.f32.mrb[0].mxu0
  %v1234 = vadd.f32 0.0, %v1233
  %v1235 = vpop.f32.mrb[0].mxu0
  %1236 = vdwg.mxu0
  %v1237 = vadd.f32 %v1158, %v1234
  %v1238 = vxor.u32 %v1237, 2147483648
  %v1239 = vmul.f32 %v1238, 1.442695
  %v1240 = vpow.pop %v1239
  %v1241 = vadd.f32 %v1240, 1.0
  %v1242 = vrcp.pop %v1241
  %v1243 = vmul.f32 1.0, %v1242
  %v1244 = vadd.f32 %v1234, %v146
  %1246 = vrot.lane.b32.xlu0 %v1244, 64
  %v1247 = vpop.permute.xlu0 %1246
  %v1249 = vmul.f32 %v1243, %v1247
  %1251 = vrot.lane.b32.xlu0 %v1249, 64
  %v1252 = vpop.permute.xlu0 %1251
  %v1254 = vadd.f32 %v1158, %v1252
  %v1255 = vtanh.pop %v1254
  %v1256 = vsub.f32 1.0, %v1243
  %1258 = vrot.lane.b32.xlu0 %v1255, 96
  %v1259 = vpop.permute.xlu0 %1258
  %v1261 = vmul.f32 %v1256, %v1259
  %v1262 = vmul.f32 %v1243, %v1044
  %v1263 = vadd.f32 %v1261, %v1262
  %1265 = vrot.lane.b32.xlu0 %v1146, 96
  %v1266 = vpop.permute.xlu0 %1265
  %v1267 = vsel %vm63, %v1266, 0
  %1269 = vmatprep.subr.mxu0 0.0
  %1270 = vmatpush1.msra.mxu0 %v20
  %1271 = vmatprep.subr.mxu0 0.0
  %1272 = vmatpush1.msra.mxu0 %v21
  %1273 = vmatprep.subr.mxu0 0.0
  %1274 = vmatpush1.msra.mxu0 %v22
  %1275 = vmatprep.subr.mxu0 0.0
  %1276 = vmatpush1.msra.mxu0 %v23
  %1277 = vmatprep.subr.mxu0 0.0
  %1278 = vmatpush1.msra.mxu0 0.0
  %1279 = vmatprep.subr.mxu0 0.0
  %1280 = vmatpush1.msra.mxu0 0.0
  %1281 = vmatprep.subr.mxu0 0.0
  %1282 = vmatpush1.msra.mxu0 0.0
  %1283 = vmatprep.subr.mxu0 0.0
  %1284 = vmatpush1.msra.mxu0 0.0
  %1285 = vmatprep.subr.mxu0 0.0
  %1286 = vmatpush1.msra.mxu0 0.0
  %1287 = vmatprep.subr.mxu0 0.0
  %1288 = vmatpush1.msra.mxu0 0.0
  %1289 = vmatprep.subr.mxu0 0.0
  %1290 = vmatpush1.msra.mxu0 0.0
  %1291 = vmatprep.subr.mxu0 0.0
  %1292 = vmatpush1.msra.mxu0 0.0
  %1293 = vmatprep.subr.mxu0 0.0
  %1294 = vmatpush1.msra.mxu0 0.0
  %1295 = vmatprep.subr.mxu0 0.0
  %1296 = vmatpush1.msra.mxu0 0.0
  %1297 = vmatprep.subr.mxu0 0.0
  %1298 = vmatpush1.msra.mxu0 0.0
  %1299 = vmatprep.subr.mxu0 0.0
  %1300 = vmatpush1.msra.mxu0 0.0
  %1301 = vmatprep.subr.mxu0 0.0
  %1302 = vmatpush1.msra.mxu0 0.0
  %1303 = vmatprep.subr.mxu0 0.0
  %1304 = vmatpush1.msra.mxu0 0.0
  %1305 = vmatprep.subr.mxu0 0.0
  %1306 = vmatpush1.msra.mxu0 0.0
  %1307 = vmatprep.subr.mxu0 0.0
  %1308 = vmatpush1.msra.mxu0 0.0
  %1309 = vmatprep.subr.mxu0 0.0
  %1310 = vmatpush1.msra.mxu0 0.0
  %1311 = vmatprep.subr.mxu0 0.0
  %1312 = vmatpush1.msra.mxu0 0.0
  %1313 = vmatprep.subr.mxu0 0.0
  %1314 = vmatpush1.msra.mxu0 0.0
  %1315 = vmatprep.subr.mxu0 0.0
  %1316 = vmatpush1.msra.mxu0 0.0
  %1317 = vmatprep.subr.mxu0 0.0
  %1318 = vmatpush1.msra.mxu0 0.0
  %1319 = vmatprep.subr.mxu0 0.0
  %1320 = vmatpush1.msra.mxu0 0.0
  %1321 = vmatprep.subr.mxu0 0.0
  %1322 = vmatpush1.msra.mxu0 0.0
  %1323 = vmatprep.subr.mxu0 0.0
  %1324 = vmatpush1.msra.mxu0 0.0
  %1325 = vmatprep.subr.mxu0 0.0
  %1326 = vmatpush1.msra.mxu0 0.0
  %1327 = vmatprep.subr.mxu0 0.0
  %1328 = vmatpush1.msra.mxu0 0.0
  %1329 = vmatprep.subr.mxu0 0.0
  %1330 = vmatpush1.msra.mxu0 0.0
  %1331 = vmatprep.subr.mxu0 0.0
  %1332 = vmatpush1.msra.mxu0 0.0
  %1333 = vmatprep.mubr.f32.mxu0 0.0
  %1334 = vmatmul.mubr.f32.gmra.mrb[0].mxu0 %v1267
  %v1335 = vpop.f32.mrb[0].mxu0
  %v1336 = vadd.f32 0.0, %v1335
  %v1337 = vpop.f32.mrb[0].mxu0
  %1338 = vdwg.mxu0
  %v1339 = vadd.f32 %v1164, %v1336
  %v1340 = vxor.u32 %v1339, 2147483648
  %v1341 = vmul.f32 %v1340, 1.442695
  %v1342 = vpow.pop %v1341
  %v1343 = vadd.f32 %v1342, 1.0
  %v1344 = vrcp.pop %v1343
  %v1345 = vmul.f32 1.0, %v1344
  %v1346 = vadd.f32 %v1336, %v247
  %1348 = vrot.lane.b32.xlu0 %v1346, 64
  %v1349 = vpop.permute.xlu0 %1348
  %v1351 = vmul.f32 %v1345, %v1349
  %1353 = vrot.lane.b32.xlu0 %v1351, 64
  %v1354 = vpop.permute.xlu0 %1353
  %v1356 = vadd.f32 %v1164, %v1354
  %v1357 = vtanh.pop %v1356
  %v1358 = vsub.f32 1.0, %v1345
  %1360 = vrot.lane.b32.xlu0 %v1357, 96
  %v1361 = vpop.permute.xlu0 %1360
  %v1363 = vmul.f32 %v1358, %v1361
  %v1364 = vmul.f32 %v1345, %v1146
  %v1365 = vadd.f32 %v1363, %v1364
  %1367 = vrot.lane.b32.xlu0 %v1263, 96
  %v1368 = vpop.permute.xlu0 %1367
  %1370 = vst.msk [vmem:[#allocation2 + $0xa] sm:$0x3] %vm273, %v1368
  %1371 = vst.msk [vmem:[#allocation2 + $0x14] sm:$0x3] %vm275, %v1365
  %1372 = vset.pattern.permute.xlu0 6
  %1373 = vperm.xlu0 %1372, %v11
  %v1374 = vpop.permute.xlu0 %1373
  %v1376 = vmul.f32 %v1374, %v37
  %v1377 = vadd.f32 %v1376, %v41
  %1378 = vset.pattern.permute.xlu0 9
  %1379 = vperm.xlu0 %1378, %v11
  %v1380 = vpop.permute.xlu0 %1379
  %v1382 = vmul.f32 %v1380, %v45
  %v1383 = vadd.f32 %v1382, %v49
  %v1384 = vsel %vm63, %v1368, 0
  %1386 = vmatprep.subr.mxu0 0.0
  %1387 = vmatpush1.msra.mxu0 %v13
  %1388 = vmatprep.subr.mxu0 0.0
  %1389 = vmatpush1.msra.mxu0 %v14
  %1390 = vmatprep.subr.mxu0 0.0
  %1391 = vmatpush1.msra.mxu0 %v15
  %1392 = vmatprep.subr.mxu0 0.0
  %1393 = vmatpush1.msra.mxu0 %v16
  %1394 = vmatprep.subr.mxu0 0.0
  %1395 = vmatpush1.msra.mxu0 0.0
  %1396 = vmatprep.subr.mxu0 0.0
  %1397 = vmatpush1.msra.mxu0 0.0
  %1398 = vmatprep.subr.mxu0 0.0
  %1399 = vmatpush1.msra.mxu0 0.0
  %1400 = vmatprep.subr.mxu0 0.0
  %1401 = vmatpush1.msra.mxu0 0.0
  %1402 = vmatprep.subr.mxu0 0.0
  %1403 = vmatpush1.msra.mxu0 0.0
  %1404 = vmatprep.subr.mxu0 0.0
  %1405 = vmatpush1.msra.mxu0 0.0
  %1406 = vmatprep.subr.mxu0 0.0
  %1407 = vmatpush1.msra.mxu0 0.0
  %1408 = vmatprep.subr.mxu0 0.0
  %1409 = vmatpush1.msra.mxu0 0.0
  %1410 = vmatprep.subr.mxu0 0.0
  %1411 = vmatpush1.msra.mxu0 0.0
  %1412 = vmatprep.subr.mxu0 0.0
  %1413 = vmatpush1.msra.mxu0 0.0
  %1414 = vmatprep.subr.mxu0 0.0
  %1415 = vmatpush1.msra.mxu0 0.0
  %1416 = vmatprep.subr.mxu0 0.0
  %1417 = vmatpush1.msra.mxu0 0.0
  %1418 = vmatprep.subr.mxu0 0.0
  %1419 = vmatpush1.msra.mxu0 0.0
  %1420 = vmatprep.subr.mxu0 0.0
  %1421 = vmatpush1.msra.mxu0 0.0
  %1422 = vmatprep.subr.mxu0 0.0
  %1423 = vmatpush1.msra.mxu0 0.0
  %1424 = vmatprep.subr.mxu0 0.0
  %1425 = vmatpush1.msra.mxu0 0.0
  %1426 = vmatprep.subr.mxu0 0.0
  %1427 = vmatpush1.msra.mxu0 0.0
  %1428 = vmatprep.subr.mxu0 0.0
  %1429 = vmatpush1.msra.mxu0 0.0
  %1430 = vmatprep.subr.mxu0 0.0
  %1431 = vmatpush1.msra.mxu0 0.0
  %1432 = vmatprep.subr.mxu0 0.0
  %1433 = vmatpush1.msra.mxu0 0.0
  %1434 = vmatprep.subr.mxu0 0.0
  %1435 = vmatpush1.msra.mxu0 0.0
  %1436 = vmatprep.subr.mxu0 0.0
  %1437 = vmatpush1.msra.mxu0 0.0
  %1438 = vmatprep.subr.mxu0 0.0
  %1439 = vmatpush1.msra.mxu0 0.0
  %1440 = vmatprep.subr.mxu0 0.0
  %1441 = vmatpush1.msra.mxu0 0.0
  %1442 = vmatprep.subr.mxu0 0.0
  %1443 = vmatpush1.msra.mxu0 0.0
  %1444 = vmatprep.subr.mxu0 0.0
  %1445 = vmatpush1.msra.mxu0 0.0
  %1446 = vmatprep.subr.mxu0 0.0
  %1447 = vmatpush1.msra.mxu0 0.0
  %1448 = vmatprep.subr.mxu0 0.0
  %1449 = vmatpush1.msra.mxu0 0.0
  %1450 = vmatprep.mubr.f32.mxu0 0.0
  %1451 = vmatmul.mubr.f32.gmra.mrb[0].mxu0 %v1384
  %v1452 = vpop.f32.mrb[0].mxu0
  %v1453 = vadd.f32 0.0, %v1452
  %v1454 = vpop.f32.mrb[0].mxu0
  %1455 = vdwg.mxu0
  %v1456 = vadd.f32 %v1377, %v1453
  %v1457 = vxor.u32 %v1456, 2147483648
  %v1458 = vmul.f32 %v1457, 1.442695
  %v1459 = vpow.pop %v1458
  %v1460 = vadd.f32 %v1459, 1.0
  %v1461 = vrcp.pop %v1460
  %v1462 = vmul.f32 1.0, %v1461
  %v1463 = vadd.f32 %v1453, %v146
  %1465 = vrot.lane.b32.xlu0 %v1463, 64
  %v1466 = vpop.permute.xlu0 %1465
  %v1468 = vmul.f32 %v1462, %v1466
  %1470 = vrot.lane.b32.xlu0 %v1468, 64
  %v1471 = vpop.permute.xlu0 %1470
  %v1473 = vadd.f32 %v1377, %v1471
  %v1474 = vtanh.pop %v1473
  %v1475 = vsub.f32 1.0, %v1462
  %1477 = vrot.lane.b32.xlu0 %v1474, 96
  %v1478 = vpop.permute.xlu0 %1477
  %v1480 = vmul.f32 %v1475, %v1478
  %v1481 = vmul.f32 %v1462, %v1263
  %v1482 = vadd.f32 %v1480, %v1481
  %1484 = vrot.lane.b32.xlu0 %v1365, 96
  %v1485 = vpop.permute.xlu0 %1484
  %v1486 = vsel %vm63, %v1485, 0
  %1488 = vmatprep.subr.mxu0 0.0
  %1489 = vmatpush1.msra.mxu0 %v20
  %1490 = vmatprep.subr.mxu0 0.0
  %1491 = vmatpush1.msra.mxu0 %v21
  %1492 = vmatprep.subr.mxu0 0.0
  %1493 = vmatpush1.msra.mxu0 %v22
  %1494 = vmatprep.subr.mxu0 0.0
  %1495 = vmatpush1.msra.mxu0 %v23
  %1496 = vmatprep.subr.mxu0 0.0
  %1497 = vmatpush1.msra.mxu0 0.0
  %1498 = vmatprep.subr.mxu0 0.0
  %1499 = vmatpush1.msra.mxu0 0.0
  %1500 = vmatprep.subr.mxu0 0.0
  %1501 = vmatpush1.msra.mxu0 0.0
  %1502 = vmatprep.subr.mxu0 0.0
  %1503 = vmatpush1.msra.mxu0 0.0
  %1504 = vmatprep.subr.mxu0 0.0
  %1505 = vmatpush1.msra.mxu0 0.0
  %1506 = vmatprep.subr.mxu0 0.0
  %1507 = vmatpush1.msra.mxu0 0.0
  %1508 = vmatprep.subr.mxu0 0.0
  %1509 = vmatpush1.msra.mxu0 0.0
  %1510 = vmatprep.subr.mxu0 0.0
  %1511 = vmatpush1.msra.mxu0 0.0
  %1512 = vmatprep.subr.mxu0 0.0
  %1513 = vmatpush1.msra.mxu0 0.0
  %1514 = vmatprep.subr.mxu0 0.0
  %1515 = vmatpush1.msra.mxu0 0.0
  %1516 = vmatprep.subr.mxu0 0.0
  %1517 = vmatpush1.msra.mxu0 0.0
  %1518 = vmatprep.subr.mxu0 0.0
  %1519 = vmatpush1.msra.mxu0 0.0
  %1520 = vmatprep.subr.mxu0 0.0
  %1521 = vmatpush1.msra.mxu0 0.0
  %1522 = vmatprep.subr.mxu0 0.0
  %1523 = vmatpush1.msra.mxu0 0.0
  %1524 = vmatprep.subr.mxu0 0.0
  %1525 = vmatpush1.msra.mxu0 0.0
  %1526 = vmatprep.subr.mxu0 0.0
  %1527 = vmatpush1.msra.mxu0 0.0
  %1528 = vmatprep.subr.mxu0 0.0
  %1529 = vmatpush1.msra.mxu0 0.0
  %1530 = vmatprep.subr.mxu0 0.0
  %1531 = vmatpush1.msra.mxu0 0.0
  %1532 = vmatprep.subr.mxu0 0.0
  %1533 = vmatpush1.msra.mxu0 0.0
  %1534 = vmatprep.subr.mxu0 0.0
  %1535 = vmatpush1.msra.mxu0 0.0
  %1536 = vmatprep.subr.mxu0 0.0
  %1537 = vmatpush1.msra.mxu0 0.0
  %1538 = vmatprep.subr.mxu0 0.0
  %1539 = vmatpush1.msra.mxu0 0.0
  %1540 = vmatprep.subr.mxu0 0.0
  %1541 = vmatpush1.msra.mxu0 0.0
  %1542 = vmatprep.subr.mxu0 0.0
  %1543 = vmatpush1.msra.mxu0 0.0
  %1544 = vmatprep.subr.mxu0 0.0
  %1545 = vmatpush1.msra.mxu0 0.0
  %1546 = vmatprep.subr.mxu0 0.0
  %1547 = vmatpush1.msra.mxu0 0.0
  %1548 = vmatprep.subr.mxu0 0.0
  %1549 = vmatpush1.msra.mxu0 0.0
  %1550 = vmatprep.subr.mxu0 0.0
  %1551 = vmatpush1.msra.mxu0 0.0
  %1552 = vmatprep.mubr.f32.mxu0 0.0
  %1553 = vmatmul.mubr.f32.gmra.mrb[0].mxu0 %v1486
  %v1554 = vpop.f32.mrb[0].mxu0
  %v1555 = vadd.f32 0.0, %v1554
  %v1556 = vpop.f32.mrb[0].mxu0
  %1557 = vdwg.mxu0
  %v1558 = vadd.f32 %v1383, %v1555
  %v1559 = vxor.u32 %v1558, 2147483648
  %v1560 = vmul.f32 %v1559, 1.442695
  %v1561 = vpow.pop %v1560
  %v1562 = vadd.f32 %v1561, 1.0
  %v1563 = vrcp.pop %v1562
  %v1564 = vmul.f32 1.0, %v1563
  %v1565 = vadd.f32 %v1555, %v247
  %1567 = vrot.lane.b32.xlu0 %v1565, 64
  %v1568 = vpop.permute.xlu0 %1567
  %v1570 = vmul.f32 %v1564, %v1568
  %1572 = vrot.lane.b32.xlu0 %v1570, 64
  %v1573 = vpop.permute.xlu0 %1572
  %v1575 = vadd.f32 %v1383, %v1573
  %v1576 = vtanh.pop %v1575
  %v1577 = vsub.f32 1.0, %v1564
  %1579 = vrot.lane.b32.xlu0 %v1576, 96
  %v1580 = vpop.permute.xlu0 %1579
  %v1582 = vmul.f32 %v1577, %v1580
  %v1583 = vmul.f32 %v1564, %v1365
  %v1584 = vadd.f32 %v1582, %v1583
  %1586 = vrot.lane.b32.xlu0 %v1482, 96
  %v1587 = vpop.permute.xlu0 %1586
  %1589 = vst.msk [vmem:[#allocation2 + $0xc] sm:$0x3] %vm273, %v1587
  %1590 = vst.msk [vmem:[#allocation2 + $0x12] sm:$0x3] %vm275, %v1584
  %1591 = vset.pattern.permute.xlu0 7
  %1592 = vperm.xlu0 %1591, %v11
  %v1593 = vpop.permute.xlu0 %1592
  %v1595 = vmul.f32 %v1593, %v37
  %v1596 = vadd.f32 %v1595, %v41
  %1597 = vset.pattern.permute.xlu0 8
  %1598 = vperm.xlu0 %1597, %v11
  %v1599 = vpop.permute.xlu0 %1598
  %v1601 = vmul.f32 %v1599, %v45
  %v1602 = vadd.f32 %v1601, %v49
  %v1603 = vsel %vm63, %v1587, 0
  %1605 = vmatprep.subr.mxu0 0.0
  %1606 = vmatpush1.msra.mxu0 %v13
  %1607 = vmatprep.subr.mxu0 0.0
  %1608 = vmatpush1.msra.mxu0 %v14
  %1609 = vmatprep.subr.mxu0 0.0
  %1610 = vmatpush1.msra.mxu0 %v15
  %1611 = vmatprep.subr.mxu0 0.0
  %1612 = vmatpush1.msra.mxu0 %v16
  %1613 = vmatprep.subr.mxu0 0.0
  %1614 = vmatpush1.msra.mxu0 0.0
  %1615 = vmatprep.subr.mxu0 0.0
  %1616 = vmatpush1.msra.mxu0 0.0
  %1617 = vmatprep.subr.mxu0 0.0
  %1618 = vmatpush1.msra.mxu0 0.0
  %1619 = vmatprep.subr.mxu0 0.0
  %1620 = vmatpush1.msra.mxu0 0.0
  %1621 = vmatprep.subr.mxu0 0.0
  %1622 = vmatpush1.msra.mxu0 0.0
  %1623 = vmatprep.subr.mxu0 0.0
  %1624 = vmatpush1.msra.mxu0 0.0
  %1625 = vmatprep.subr.mxu0 0.0
  %1626 = vmatpush1.msra.mxu0 0.0
  %1627 = vmatprep.subr.mxu0 0.0
  %1628 = vmatpush1.msra.mxu0 0.0
  %1629 = vmatprep.subr.mxu0 0.0
  %1630 = vmatpush1.msra.mxu0 0.0
  %1631 = vmatprep.subr.mxu0 0.0
  %1632 = vmatpush1.msra.mxu0 0.0
  %1633 = vmatprep.subr.mxu0 0.0
  %1634 = vmatpush1.msra.mxu0 0.0
  %1635 = vmatprep.subr.mxu0 0.0
  %1636 = vmatpush1.msra.mxu0 0.0
  %1637 = vmatprep.subr.mxu0 0.0
  %1638 = vmatpush1.msra.mxu0 0.0
  %1639 = vmatprep.subr.mxu0 0.0
  %1640 = vmatpush1.msra.mxu0 0.0
  %1641 = vmatprep.subr.mxu0 0.0
  %1642 = vmatpush1.msra.mxu0 0.0
  %1643 = vmatprep.subr.mxu0 0.0
  %1644 = vmatpush1.msra.mxu0 0.0
  %1645 = vmatprep.subr.mxu0 0.0
  %1646 = vmatpush1.msra.mxu0 0.0
  %1647 = vmatprep.subr.mxu0 0.0
  %1648 = vmatpush1.msra.mxu0 0.0
  %1649 = vmatprep.subr.mxu0 0.0
  %1650 = vmatpush1.msra.mxu0 0.0
  %1651 = vmatprep.subr.mxu0 0.0
  %1652 = vmatpush1.msra.mxu0 0.0
  %1653 = vmatprep.subr.mxu0 0.0
  %1654 = vmatpush1.msra.mxu0 0.0
  %1655 = vmatprep.subr.mxu0 0.0
  %1656 = vmatpush1.msra.mxu0 0.0
  %1657 = vmatprep.subr.mxu0 0.0
  %1658 = vmatpush1.msra.mxu0 0.0
  %1659 = vmatprep.subr.mxu0 0.0
  %1660 = vmatpush1.msra.mxu0 0.0
  %1661 = vmatprep.subr.mxu0 0.0
  %1662 = vmatpush1.msra.mxu0 0.0
  %1663 = vmatprep.subr.mxu0 0.0
  %1664 = vmatpush1.msra.mxu0 0.0
  %1665 = vmatprep.subr.mxu0 0.0
  %1666 = vmatpush1.msra.mxu0 0.0
  %1667 = vmatprep.subr.mxu0 0.0
  %1668 = vmatpush1.msra.mxu0 0.0
  %1669 = vmatprep.mubr.f32.mxu0 0.0
  %1670 = vmatmul.mubr.f32.gmra.mrb[0].mxu0 %v1603
  %v1671 = vpop.f32.mrb[0].mxu0
  %v1672 = vadd.f32 0.0, %v1671
  %v1673 = vpop.f32.mrb[0].mxu0
  %1674 = vdwg.mxu0
  %v1675 = vadd.f32 %v1596, %v1672
  %v1676 = vxor.u32 %v1675, 2147483648
  %v1677 = vmul.f32 %v1676, 1.442695
  %v1678 = vpow.pop %v1677
  %v1679 = vadd.f32 %v1678, 1.0
  %v1680 = vrcp.pop %v1679
  %v1681 = vmul.f32 1.0, %v1680
  %v1682 = vadd.f32 %v1672, %v146
  %1684 = vrot.lane.b32.xlu0 %v1682, 64
  %v1685 = vpop.permute.xlu0 %1684
  %v1687 = vmul.f32 %v1681, %v1685
  %1689 = vrot.lane.b32.xlu0 %v1687, 64
  %v1690 = vpop.permute.xlu0 %1689
  %v1692 = vadd.f32 %v1596, %v1690
  %v1693 = vtanh.pop %v1692
  %v1694 = vsub.f32 1.0, %v1681
  %1696 = vrot.lane.b32.xlu0 %v1693, 96
  %v1697 = vpop.permute.xlu0 %1696
  %v1699 = vmul.f32 %v1694, %v1697
  %v1700 = vmul.f32 %v1681, %v1482
  %v1701 = vadd.f32 %v1699, %v1700
  %1703 = vrot.lane.b32.xlu0 %v1584, 96
  %v1704 = vpop.permute.xlu0 %1703
  %v1705 = vsel %vm63, %v1704, 0
  %1707 = vmatprep.subr.mxu0 0.0
  %1708 = vmatpush1.msra.mxu0 %v20
  %1709 = vmatprep.subr.mxu0 0.0
  %1710 = vmatpush1.msra.mxu0 %v21
  %1711 = vmatprep.subr.mxu0 0.0
  %1712 = vmatpush1.msra.mxu0 %v22
  %1713 = vmatprep.subr.mxu0 0.0
  %1714 = vmatpush1.msra.mxu0 %v23
  %1715 = vmatprep.subr.mxu0 0.0
  %1716 = vmatpush1.msra.mxu0 0.0
  %1717 = vmatprep.subr.mxu0 0.0
  %1718 = vmatpush1.msra.mxu0 0.0
  %1719 = vmatprep.subr.mxu0 0.0
  %1720 = vmatpush1.msra.mxu0 0.0
  %1721 = vmatprep.subr.mxu0 0.0
  %1722 = vmatpush1.msra.mxu0 0.0
  %1723 = vmatprep.subr.mxu0 0.0
  %1724 = vmatpush1.msra.mxu0 0.0
  %1725 = vmatprep.subr.mxu0 0.0
  %1726 = vmatpush1.msra.mxu0 0.0
  %1727 = vmatprep.subr.mxu0 0.0
  %1728 = vmatpush1.msra.mxu0 0.0
  %1729 = vmatprep.subr.mxu0 0.0
  %1730 = vmatpush1.msra.mxu0 0.0
  %1731 = vmatprep.subr.mxu0 0.0
  %1732 = vmatpush1.msra.mxu0 0.0
  %1733 = vmatprep.subr.mxu0 0.0
  %1734 = vmatpush1.msra.mxu0 0.0
  %1735 = vmatprep.subr.mxu0 0.0
  %1736 = vmatpush1.msra.mxu0 0.0
  %1737 = vmatprep.subr.mxu0 0.0
  %1738 = vmatpush1.msra.mxu0 0.0
  %1739 = vmatprep.subr.mxu0 0.0
  %1740 = vmatpush1.msra.mxu0 0.0
  %1741 = vmatprep.subr.mxu0 0.0
  %1742 = vmatpush1.msra.mxu0 0.0
  %1743 = vmatprep.subr.mxu0 0.0
  %1744 = vmatpush1.msra.mxu0 0.0
  %1745 = vmatprep.subr.mxu0 0.0
  %1746 = vmatpush1.msra.mxu0 0.0
  %1747 = vmatprep.subr.mxu0 0.0
  %1748 = vmatpush1.msra.mxu0 0.0
  %1749 = vmatprep.subr.mxu0 0.0
  %1750 = vmatpush1.msra.mxu0 0.0
  %1751 = vmatprep.subr.mxu0 0.0
  %1752 = vmatpush1.msra.mxu0 0.0
  %1753 = vmatprep.subr.mxu0 0.0
  %1754 = vmatpush1.msra.mxu0 0.0
  %1755 = vmatprep.subr.mxu0 0.0
  %1756 = vmatpush1.msra.mxu0 0.0
  %1757 = vmatprep.subr.mxu0 0.0
  %1758 = vmatpush1.msra.mxu0 0.0
  %1759 = vmatprep.subr.mxu0 0.0
  %1760 = vmatpush1.msra.mxu0 0.0
  %1761 = vmatprep.subr.mxu0 0.0
  %1762 = vmatpush1.msra.mxu0 0.0
  %1763 = vmatprep.subr.mxu0 0.0
  %1764 = vmatpush1.msra.mxu0 0.0
  %1765 = vmatprep.subr.mxu0 0.0
  %1766 = vmatpush1.msra.mxu0 0.0
  %1767 = vmatprep.subr.mxu0 0.0
  %1768 = vmatpush1.msra.mxu0 0.0
  %1769 = vmatprep.subr.mxu0 0.0
  %1770 = vmatpush1.msra.mxu0 0.0
  %1771 = vmatprep.mubr.f32.mxu0 0.0
  %1772 = vmatmul.mubr.f32.gmra.mrb[0].mxu0 %v1705
  %v1773 = vpop.f32.mrb[0].mxu0
  %v1774 = vadd.f32 0.0, %v1773
  %v1775 = vpop.f32.mrb[0].mxu0
  %1776 = vdwg.mxu0
  %v1777 = vadd.f32 %v1602, %v1774
  %v1778 = vxor.u32 %v1777, 2147483648
  %v1779 = vmul.f32 %v1778, 1.442695
  %v1780 = vpow.pop %v1779
  %v1781 = vadd.f32 %v1780, 1.0
  %v1782 = vrcp.pop %v1781
  %v1783 = vmul.f32 1.0, %v1782
  %v1784 = vadd.f32 %v1774, %v247
  %1786 = vrot.lane.b32.xlu0 %v1784, 64
  %v1787 = vpop.permute.xlu0 %1786
  %v1789 = vmul.f32 %v1783, %v1787
  %1791 = vrot.lane.b32.xlu0 %v1789, 64
  %v1792 = vpop.permute.xlu0 %1791
  %v1794 = vadd.f32 %v1602, %v1792
  %v1795 = vtanh.pop %v1794
  %v1796 = vsub.f32 1.0, %v1783
  %1798 = vrot.lane.b32.xlu0 %v1795, 96
  %v1799 = vpop.permute.xlu0 %1798
  %v1801 = vmul.f32 %v1796, %v1799
  %v1802 = vmul.f32 %v1783, %v1584
  %v1803 = vadd.f32 %v1801, %v1802
  %1805 = vrot.lane.b32.xlu0 %v1701, 96
  %v1806 = vpop.permute.xlu0 %1805
  %1808 = vst.msk [vmem:[#allocation2 + $0xe] sm:$0x3] %vm273, %v1806
  %1809 = vst.msk [vmem:[#allocation2 + $0x10] sm:$0x3] %vm275, %v1803
  %v1810 = vmul.f32 %v1599, %v37
  %v1811 = vadd.f32 %v1810, %v41
  %v1812 = vmul.f32 %v1593, %v45
  %v1813 = vadd.f32 %v1812, %v49
  %v1814 = vsel %vm63, %v1806, 0
  %1816 = vmatprep.subr.mxu0 0.0
  %1817 = vmatpush1.msra.mxu0 %v13
  %1818 = vmatprep.subr.mxu0 0.0
  %1819 = vmatpush1.msra.mxu0 %v14
  %1820 = vmatprep.subr.mxu0 0.0
  %1821 = vmatpush1.msra.mxu0 %v15
  %1822 = vmatprep.subr.mxu0 0.0
  %1823 = vmatpush1.msra.mxu0 %v16
  %1824 = vmatprep.subr.mxu0 0.0
  %1825 = vmatpush1.msra.mxu0 0.0
  %1826 = vmatprep.subr.mxu0 0.0
  %1827 = vmatpush1.msra.mxu0 0.0
  %1828 = vmatprep.subr.mxu0 0.0
  %1829 = vmatpush1.msra.mxu0 0.0
  %1830 = vmatprep.subr.mxu0 0.0
  %1831 = vmatpush1.msra.mxu0 0.0
  %1832 = vmatprep.subr.mxu0 0.0
  %1833 = vmatpush1.msra.mxu0 0.0
  %1834 = vmatprep.subr.mxu0 0.0
  %1835 = vmatpush1.msra.mxu0 0.0
  %1836 = vmatprep.subr.mxu0 0.0
  %1837 = vmatpush1.msra.mxu0 0.0
  %1838 = vmatprep.subr.mxu0 0.0
  %1839 = vmatpush1.msra.mxu0 0.0
  %1840 = vmatprep.subr.mxu0 0.0
  %1841 = vmatpush1.msra.mxu0 0.0
  %1842 = vmatprep.subr.mxu0 0.0
  %1843 = vmatpush1.msra.mxu0 0.0
  %1844 = vmatprep.subr.mxu0 0.0
  %1845 = vmatpush1.msra.mxu0 0.0
  %1846 = vmatprep.subr.mxu0 0.0
  %1847 = vmatpush1.msra.mxu0 0.0
  %1848 = vmatprep.subr.mxu0 0.0
  %1849 = vmatpush1.msra.mxu0 0.0
  %1850 = vmatprep.subr.mxu0 0.0
  %1851 = vmatpush1.msra.mxu0 0.0
  %1852 = vmatprep.subr.mxu0 0.0
  %1853 = vmatpush1.msra.mxu0 0.0
  %1854 = vmatprep.subr.mxu0 0.0
  %1855 = vmatpush1.msra.mxu0 0.0
  %1856 = vmatprep.subr.mxu0 0.0
  %1857 = vmatpush1.msra.mxu0 0.0
  %1858 = vmatprep.subr.mxu0 0.0
  %1859 = vmatpush1.msra.mxu0 0.0
  %1860 = vmatprep.subr.mxu0 0.0
  %1861 = vmatpush1.msra.mxu0 0.0
  %1862 = vmatprep.subr.mxu0 0.0
  %1863 = vmatpush1.msra.mxu0 0.0
  %1864 = vmatprep.subr.mxu0 0.0
  %1865 = vmatpush1.msra.mxu0 0.0
  %1866 = vmatprep.subr.mxu0 0.0
  %1867 = vmatpush1.msra.mxu0 0.0
  %1868 = vmatprep.subr.mxu0 0.0
  %1869 = vmatpush1.msra.mxu0 0.0
  %1870 = vmatprep.subr.mxu0 0.0
  %1871 = vmatpush1.msra.mxu0 0.0
  %1872 = vmatprep.subr.mxu0 0.0
  %1873 = vmatpush1.msra.mxu0 0.0
  %1874 = vmatprep.subr.mxu0 0.0
  %1875 = vmatpush1.msra.mxu0 0.0
  %1876 = vmatprep.subr.mxu0 0.0
  %1877 = vmatpush1.msra.mxu0 0.0
  %1878 = vmatprep.subr.mxu0 0.0
  %1879 = vmatpush1.msra.mxu0 0.0
  %1880 = vmatprep.mubr.f32.mxu0 0.0
  %1881 = vmatmul.mubr.f32.gmra.mrb[0].mxu0 %v1814
  %v1882 = vpop.f32.mrb[0].mxu0
  %v1883 = vadd.f32 0.0, %v1882
  %v1884 = vpop.f32.mrb[0].mxu0
  %1885 = vdwg.mxu0
  %v1886 = vadd.f32 %v1811, %v1883
  %v1887 = vxor.u32 %v1886, 2147483648
  %v1888 = vmul.f32 %v1887, 1.442695
  %v1889 = vpow.pop %v1888
  %v1890 = vadd.f32 %v1889, 1.0
  %v1891 = vrcp.pop %v1890
  %v1892 = vmul.f32 1.0, %v1891
  %v1893 = vadd.f32 %v1883, %v146
  %1895 = vrot.lane.b32.xlu0 %v1893, 64
  %v1896 = vpop.permute.xlu0 %1895
  %v1898 = vmul.f32 %v1892, %v1896
  %1900 = vrot.lane.b32.xlu0 %v1898, 64
  %v1901 = vpop.permute.xlu0 %1900
  %v1903 = vadd.f32 %v1811, %v1901
  %v1904 = vtanh.pop %v1903
  %v1905 = vsub.f32 1.0, %v1892
  %1907 = vrot.lane.b32.xlu0 %v1904, 96
  %v1908 = vpop.permute.xlu0 %1907
  %v1910 = vmul.f32 %v1905, %v1908
  %v1911 = vmul.f32 %v1892, %v1701
  %v1912 = vadd.f32 %v1910, %v1911
  %1914 = vrot.lane.b32.xlu0 %v1803, 96
  %v1915 = vpop.permute.xlu0 %1914
  %v1916 = vsel %vm63, %v1915, 0
  %1918 = vmatprep.subr.mxu0 0.0
  %1919 = vmatpush1.msra.mxu0 %v20
  %1920 = vmatprep.subr.mxu0 0.0
  %1921 = vmatpush1.msra.mxu0 %v21
  %1922 = vmatprep.subr.mxu0 0.0
  %1923 = vmatpush1.msra.mxu0 %v22
  %1924 = vmatprep.subr.mxu0 0.0
  %1925 = vmatpush1.msra.mxu0 %v23
  %1926 = vmatprep.subr.mxu0 0.0
  %1927 = vmatpush1.msra.mxu0 0.0
  %1928 = vmatprep.subr.mxu0 0.0
  %1929 = vmatpush1.msra.mxu0 0.0
  %1930 = vmatprep.subr.mxu0 0.0
  %1931 = vmatpush1.msra.mxu0 0.0
  %1932 = vmatprep.subr.mxu0 0.0
  %1933 = vmatpush1.msra.mxu0 0.0
  %1934 = vmatprep.subr.mxu0 0.0
  %1935 = vmatpush1.msra.mxu0 0.0
  %1936 = vmatprep.subr.mxu0 0.0
  %1937 = vmatpush1.msra.mxu0 0.0
  %1938 = vmatprep.subr.mxu0 0.0
  %1939 = vmatpush1.msra.mxu0 0.0
  %1940 = vmatprep.subr.mxu0 0.0
  %1941 = vmatpush1.msra.mxu0 0.0
  %1942 = vmatprep.subr.mxu0 0.0
  %1943 = vmatpush1.msra.mxu0 0.0
  %1944 = vmatprep.subr.mxu0 0.0
  %1945 = vmatpush1.msra.mxu0 0.0
  %1946 = vmatprep.subr.mxu0 0.0
  %1947 = vmatpush1.msra.mxu0 0.0
  %1948 = vmatprep.subr.mxu0 0.0
  %1949 = vmatpush1.msra.mxu0 0.0
  %1950 = vmatprep.subr.mxu0 0.0
  %1951 = vmatpush1.msra.mxu0 0.0
  %1952 = vmatprep.subr.mxu0 0.0
  %1953 = vmatpush1.msra.mxu0 0.0
  %1954 = vmatprep.subr.mxu0 0.0
  %1955 = vmatpush1.msra.mxu0 0.0
  %1956 = vmatprep.subr.mxu0 0.0
  %1957 = vmatpush1.msra.mxu0 0.0
  %1958 = vmatprep.subr.mxu0 0.0
  %1959 = vmatpush1.msra.mxu0 0.0
  %1960 = vmatprep.subr.mxu0 0.0
  %1961 = vmatpush1.msra.mxu0 0.0
  %1962 = vmatprep.subr.mxu0 0.0
  %1963 = vmatpush1.msra.mxu0 0.0
  %1964 = vmatprep.subr.mxu0 0.0
  %1965 = vmatpush1.msra.mxu0 0.0
  %1966 = vmatprep.subr.mxu0 0.0
  %1967 = vmatpush1.msra.mxu0 0.0
  %1968 = vmatprep.subr.mxu0 0.0
  %1969 = vmatpush1.msra.mxu0 0.0
  %1970 = vmatprep.subr.mxu0 0.0
  %1971 = vmatpush1.msra.mxu0 0.0
  %1972 = vmatprep.subr.mxu0 0.0
  %1973 = vmatpush1.msra.mxu0 0.0
  %1974 = vmatprep.subr.mxu0 0.0
  %1975 = vmatpush1.msra.mxu0 0.0
  %1976 = vmatprep.subr.mxu0 0.0
  %1977 = vmatpush1.msra.mxu0 0.0
  %1978 = vmatprep.subr.mxu0 0.0
  %1979 = vmatpush1.msra.mxu0 0.0
  %1980 = vmatprep.subr.mxu0 0.0
  %1981 = vmatpush1.msra.mxu0 0.0
  %1982 = vmatprep.mubr.f32.mxu0 0.0
  %1983 = vmatmul.mubr.f32.gmra.mrb[0].mxu0 %v1916
  %v1984 = vpop.f32.mrb[0].mxu0
  %v1985 = vadd.f32 0.0, %v1984
  %v1986 = vpop.f32.mrb[0].mxu0
  %1987 = vdwg.mxu0
  %v1988 = vadd.f32 %v1813, %v1985
  %v1989 = vxor.u32 %v1988, 2147483648
  %v1990 = vmul.f32 %v1989, 1.442695
  %v1991 = vpow.pop %v1990
  %v1992 = vadd.f32 %v1991, 1.0
  %v1993 = vrcp.pop %v1992
  %v1994 = vmul.f32 1.0, %v1993
  %v1995 = vadd.f32 %v1985, %v247
  %1997 = vrot.lane.b32.xlu0 %v1995, 64
  %v1998 = vpop.permute.xlu0 %1997
  %v2000 = vmul.f32 %v1994, %v1998
  %2002 = vrot.lane.b32.xlu0 %v2000, 64
  %v2003 = vpop.permute.xlu0 %2002
  %v2005 = vadd.f32 %v1813, %v2003
  %v2006 = vtanh.pop %v2005
  %v2007 = vsub.f32 1.0, %v1994
  %2009 = vrot.lane.b32.xlu0 %v2006, 96
  %v2010 = vpop.permute.xlu0 %2009
  %v2012 = vmul.f32 %v2007, %v2010
  %v2013 = vmul.f32 %v1994, %v1803
  %v2014 = vadd.f32 %v2012, %v2013
  %2016 = vrot.lane.b32.xlu0 %v1912, 96
  %v2017 = vpop.permute.xlu0 %2016
  %2019 = vst.msk [vmem:[#allocation2 + $0x10] sm:$0x3] %vm273, %v2017
  %2020 = vst.msk [vmem:[#allocation2 + $0xe] sm:$0x3] %vm275, %v2014
  %v2021 = vmul.f32 %v1380, %v37
  %v2022 = vadd.f32 %v2021, %v41
  %v2023 = vmul.f32 %v1374, %v45
  %v2024 = vadd.f32 %v2023, %v49
  %v2025 = vsel %vm63, %v2017, 0
  %2027 = vmatprep.subr.mxu0 0.0
  %2028 = vmatpush1.msra.mxu0 %v13
  %2029 = vmatprep.subr.mxu0 0.0
  %2030 = vmatpush1.msra.mxu0 %v14
  %2031 = vmatprep.subr.mxu0 0.0
  %2032 = vmatpush1.msra.mxu0 %v15
  %2033 = vmatprep.subr.mxu0 0.0
  %2034 = vmatpush1.msra.mxu0 %v16
  %2035 = vmatprep.subr.mxu0 0.0
  %2036 = vmatpush1.msra.mxu0 0.0
  %2037 = vmatprep.subr.mxu0 0.0
  %2038 = vmatpush1.msra.mxu0 0.0
  %2039 = vmatprep.subr.mxu0 0.0
  %2040 = vmatpush1.msra.mxu0 0.0
  %2041 = vmatprep.subr.mxu0 0.0
  %2042 = vmatpush1.msra.mxu0 0.0
  %2043 = vmatprep.subr.mxu0 0.0
  %2044 = vmatpush1.msra.mxu0 0.0
  %2045 = vmatprep.subr.mxu0 0.0
  %2046 = vmatpush1.msra.mxu0 0.0
  %2047 = vmatprep.subr.mxu0 0.0
  %2048 = vmatpush1.msra.mxu0 0.0
  %2049 = vmatprep.subr.mxu0 0.0
  %2050 = vmatpush1.msra.mxu0 0.0
  %2051 = vmatprep.subr.mxu0 0.0
  %2052 = vmatpush1.msra.mxu0 0.0
  %2053 = vmatprep.subr.mxu0 0.0
  %2054 = vmatpush1.msra.mxu0 0.0
  %2055 = vmatprep.subr.mxu0 0.0
  %2056 = vmatpush1.msra.mxu0 0.0
  %2057 = vmatprep.subr.mxu0 0.0
  %2058 = vmatpush1.msra.mxu0 0.0
  %2059 = vmatprep.subr.mxu0 0.0
  %2060 = vmatpush1.msra.mxu0 0.0
  %2061 = vmatprep.subr.mxu0 0.0
  %2062 = vmatpush1.msra.mxu0 0.0
  %2063 = vmatprep.subr.mxu0 0.0
  %2064 = vmatpush1.msra.mxu0 0.0
  %2065 = vmatprep.subr.mxu0 0.0
  %2066 = vmatpush1.msra.mxu0 0.0
  %2067 = vmatprep.subr.mxu0 0.0
  %2068 = vmatpush1.msra.mxu0 0.0
  %2069 = vmatprep.subr.mxu0 0.0
  %2070 = vmatpush1.msra.mxu0 0.0
  %2071 = vmatprep.subr.mxu0 0.0
  %2072 = vmatpush1.msra.mxu0 0.0
  %2073 = vmatprep.subr.mxu0 0.0
  %2074 = vmatpush1.msra.mxu0 0.0
  %2075 = vmatprep.subr.mxu0 0.0
  %2076 = vmatpush1.msra.mxu0 0.0
  %2077 = vmatprep.subr.mxu0 0.0
  %2078 = vmatpush1.msra.mxu0 0.0
  %2079 = vmatprep.subr.mxu0 0.0
  %2080 = vmatpush1.msra.mxu0 0.0
  %2081 = vmatprep.subr.mxu0 0.0
  %2082 = vmatpush1.msra.mxu0 0.0
  %2083 = vmatprep.subr.mxu0 0.0
  %2084 = vmatpush1.msra.mxu0 0.0
  %2085 = vmatprep.subr.mxu0 0.0
  %2086 = vmatpush1.msra.mxu0 0.0
  %2087 = vmatprep.subr.mxu0 0.0
  %2088 = vmatpush1.msra.mxu0 0.0
  %2089 = vmatprep.subr.mxu0 0.0
  %2090 = vmatpush1.msra.mxu0 0.0
  %2091 = vmatprep.mubr.f32.mxu0 0.0
  %2092 = vmatmul.mubr.f32.gmra.mrb[0].mxu0 %v2025
  %v2093 = vpop.f32.mrb[0].mxu0
  %v2094 = vadd.f32 0.0, %v2093
  %v2095 = vpop.f32.mrb[0].mxu0
  %2096 = vdwg.mxu0
  %v2097 = vadd.f32 %v2022, %v2094
  %v2098 = vxor.u32 %v2097, 2147483648
  %v2099 = vmul.f32 %v2098, 1.442695
  %v2100 = vpow.pop %v2099
  %v2101 = vadd.f32 %v2100, 1.0
  %v2102 = vrcp.pop %v2101
  %v2103 = vmul.f32 1.0, %v2102
  %v2104 = vadd.f32 %v2094, %v146
  %2106 = vrot.lane.b32.xlu0 %v2104, 64
  %v2107 = vpop.permute.xlu0 %2106
  %v2109 = vmul.f32 %v2103, %v2107
  %2111 = vrot.lane.b32.xlu0 %v2109, 64
  %v2112 = vpop.permute.xlu0 %2111
  %v2114 = vadd.f32 %v2022, %v2112
  %v2115 = vtanh.pop %v2114
  %v2116 = vsub.f32 1.0, %v2103
  %2118 = vrot.lane.b32.xlu0 %v2115, 96
  %v2119 = vpop.permute.xlu0 %2118
  %v2121 = vmul.f32 %v2116, %v2119
  %v2122 = vmul.f32 %v2103, %v1912
  %v2123 = vadd.f32 %v2121, %v2122
  %2125 = vrot.lane.b32.xlu0 %v2014, 96
  %v2126 = vpop.permute.xlu0 %2125
  %v2127 = vsel %vm63, %v2126, 0
  %2129 = vmatprep.subr.mxu0 0.0
  %2130 = vmatpush1.msra.mxu0 %v20
  %2131 = vmatprep.subr.mxu0 0.0
  %2132 = vmatpush1.msra.mxu0 %v21
  %2133 = vmatprep.subr.mxu0 0.0
  %2134 = vmatpush1.msra.mxu0 %v22
  %2135 = vmatprep.subr.mxu0 0.0
  %2136 = vmatpush1.msra.mxu0 %v23
  %2137 = vmatprep.subr.mxu0 0.0
  %2138 = vmatpush1.msra.mxu0 0.0
  %2139 = vmatprep.subr.mxu0 0.0
  %2140 = vmatpush1.msra.mxu0 0.0
  %2141 = vmatprep.subr.mxu0 0.0
  %2142 = vmatpush1.msra.mxu0 0.0
  %2143 = vmatprep.subr.mxu0 0.0
  %2144 = vmatpush1.msra.mxu0 0.0
  %2145 = vmatprep.subr.mxu0 0.0
  %2146 = vmatpush1.msra.mxu0 0.0
  %2147 = vmatprep.subr.mxu0 0.0
  %2148 = vmatpush1.msra.mxu0 0.0
  %2149 = vmatprep.subr.mxu0 0.0
  %2150 = vmatpush1.msra.mxu0 0.0
  %2151 = vmatprep.subr.mxu0 0.0
  %2152 = vmatpush1.msra.mxu0 0.0
  %2153 = vmatprep.subr.mxu0 0.0
  %2154 = vmatpush1.msra.mxu0 0.0
  %2155 = vmatprep.subr.mxu0 0.0
  %2156 = vmatpush1.msra.mxu0 0.0
  %2157 = vmatprep.subr.mxu0 0.0
  %2158 = vmatpush1.msra.mxu0 0.0
  %2159 = vmatprep.subr.mxu0 0.0
  %2160 = vmatpush1.msra.mxu0 0.0
  %2161 = vmatprep.subr.mxu0 0.0
  %2162 = vmatpush1.msra.mxu0 0.0
  %2163 = vmatprep.subr.mxu0 0.0
  %2164 = vmatpush1.msra.mxu0 0.0
  %2165 = vmatprep.subr.mxu0 0.0
  %2166 = vmatpush1.msra.mxu0 0.0
  %2167 = vmatprep.subr.mxu0 0.0
  %2168 = vmatpush1.msra.mxu0 0.0
  %2169 = vmatprep.subr.mxu0 0.0
  %2170 = vmatpush1.msra.mxu0 0.0
  %2171 = vmatprep.subr.mxu0 0.0
  %2172 = vmatpush1.msra.mxu0 0.0
  %2173 = vmatprep.subr.mxu0 0.0
  %2174 = vmatpush1.msra.mxu0 0.0
  %2175 = vmatprep.subr.mxu0 0.0
  %2176 = vmatpush1.msra.mxu0 0.0
  %2177 = vmatprep.subr.mxu0 0.0
  %2178 = vmatpush1.msra.mxu0 0.0
  %2179 = vmatprep.subr.mxu0 0.0
  %2180 = vmatpush1.msra.mxu0 0.0
  %2181 = vmatprep.subr.mxu0 0.0
  %2182 = vmatpush1.msra.mxu0 0.0
  %2183 = vmatprep.subr.mxu0 0.0
  %2184 = vmatpush1.msra.mxu0 0.0
  %2185 = vmatprep.subr.mxu0 0.0
  %2186 = vmatpush1.msra.mxu0 0.0
  %2187 = vmatprep.subr.mxu0 0.0
  %2188 = vmatpush1.msra.mxu0 0.0
  %2189 = vmatprep.subr.mxu0 0.0
  %2190 = vmatpush1.msra.mxu0 0.0
  %2191 = vmatprep.subr.mxu0 0.0
  %2192 = vmatpush1.msra.mxu0 0.0
  %2193 = vmatprep.mubr.f32.mxu0 0.0
  %2194 = vmatmul.mubr.f32.gmra.mrb[0].mxu0 %v2127
  %v2195 = vpop.f32.mrb[0].mxu0
  %v2196 = vadd.f32 0.0, %v2195
  %v2197 = vpop.f32.mrb[0].mxu0
  %2198 = vdwg.mxu0
  %v2199 = vadd.f32 %v2024, %v2196
  %v2200 = vxor.u32 %v2199, 2147483648
  %v2201 = vmul.f32 %v2200, 1.442695
  %v2202 = vpow.pop %v2201
  %v2203 = vadd.f32 %v2202, 1.0
  %v2204 = vrcp.pop %v2203
  %v2205 = vmul.f32 1.0, %v2204
  %v2206 = vadd.f32 %v2196, %v247
  %2208 = vrot.lane.b32.xlu0 %v2206, 64
  %v2209 = vpop.permute.xlu0 %2208
  %v2211 = vmul.f32 %v2205, %v2209
  %2213 = vrot.lane.b32.xlu0 %v2211, 64
  %v2214 = vpop.permute.xlu0 %2213
  %v2216 = vadd.f32 %v2024, %v2214
  %v2217 = vtanh.pop %v2216
  %v2218 = vsub.f32 1.0, %v2205
  %2220 = vrot.lane.b32.xlu0 %v2217, 96
  %v2221 = vpop.permute.xlu0 %2220
  %v2223 = vmul.f32 %v2218, %v2221
  %v2224 = vmul.f32 %v2205, %v2014
  %v2225 = vadd.f32 %v2223, %v2224
  %2227 = vrot.lane.b32.xlu0 %v2123, 96
  %v2228 = vpop.permute.xlu0 %2227
  %2230 = vst.msk [vmem:[#allocation2 + $0x12] sm:$0x3] %vm273, %v2228
  %2231 = vst.msk [vmem:[#allocation2 + $0xc] sm:$0x3] %vm275, %v2225
  %v2232 = vmul.f32 %v1161, %v37
  %v2233 = vadd.f32 %v2232, %v41
  %v2234 = vmul.f32 %v1155, %v45
  %v2235 = vadd.f32 %v2234, %v49
  %v2236 = vsel %vm63, %v2228, 0
  %2238 = vmatprep.subr.mxu0 0.0
  %2239 = vmatpush1.msra.mxu0 %v13
  %2240 = vmatprep.subr.mxu0 0.0
  %2241 = vmatpush1.msra.mxu0 %v14
  %2242 = vmatprep.subr.mxu0 0.0
  %2243 = vmatpush1.msra.mxu0 %v15
  %2244 = vmatprep.subr.mxu0 0.0
  %2245 = vmatpush1.msra.mxu0 %v16
  %2246 = vmatprep.subr.mxu0 0.0
  %2247 = vmatpush1.msra.mxu0 0.0
  %2248 = vmatprep.subr.mxu0 0.0
  %2249 = vmatpush1.msra.mxu0 0.0
  %2250 = vmatprep.subr.mxu0 0.0
  %2251 = vmatpush1.msra.mxu0 0.0
  %2252 = vmatprep.subr.mxu0 0.0
  %2253 = vmatpush1.msra.mxu0 0.0
  %2254 = vmatprep.subr.mxu0 0.0
  %2255 = vmatpush1.msra.mxu0 0.0
  %2256 = vmatprep.subr.mxu0 0.0
  %2257 = vmatpush1.msra.mxu0 0.0
  %2258 = vmatprep.subr.mxu0 0.0
  %2259 = vmatpush1.msra.mxu0 0.0
  %2260 = vmatprep.subr.mxu0 0.0
  %2261 = vmatpush1.msra.mxu0 0.0
  %2262 = vmatprep.subr.mxu0 0.0
  %2263 = vmatpush1.msra.mxu0 0.0
  %2264 = vmatprep.subr.mxu0 0.0
  %2265 = vmatpush1.msra.mxu0 0.0
  %2266 = vmatprep.subr.mxu0 0.0
  %2267 = vmatpush1.msra.mxu0 0.0
  %2268 = vmatprep.subr.mxu0 0.0
  %2269 = vmatpush1.msra.mxu0 0.0
  %2270 = vmatprep.subr.mxu0 0.0
  %2271 = vmatpush1.msra.mxu0 0.0
  %2272 = vmatprep.subr.mxu0 0.0
  %2273 = vmatpush1.msra.mxu0 0.0
  %2274 = vmatprep.subr.mxu0 0.0
  %2275 = vmatpush1.msra.mxu0 0.0
  %2276 = vmatprep.subr.mxu0 0.0
  %2277 = vmatpush1.msra.mxu0 0.0
  %2278 = vmatprep.subr.mxu0 0.0
  %2279 = vmatpush1.msra.mxu0 0.0
  %2280 = vmatprep.subr.mxu0 0.0
  %2281 = vmatpush1.msra.mxu0 0.0
  %2282 = vmatprep.subr.mxu0 0.0
  %2283 = vmatpush1.msra.mxu0 0.0
  %2284 = vmatprep.subr.mxu0 0.0
  %2285 = vmatpush1.msra.mxu0 0.0
  %2286 = vmatprep.subr.mxu0 0.0
  %2287 = vmatpush1.msra.mxu0 0.0
  %2288 = vmatprep.subr.mxu0 0.0
  %2289 = vmatpush1.msra.mxu0 0.0
  %2290 = vmatprep.subr.mxu0 0.0
  %2291 = vmatpush1.msra.mxu0 0.0
  %2292 = vmatprep.subr.mxu0 0.0
  %2293 = vmatpush1.msra.mxu0 0.0
  %2294 = vmatprep.subr.mxu0 0.0
  %2295 = vmatpush1.msra.mxu0 0.0
  %2296 = vmatprep.subr.mxu0 0.0
  %2297 = vmatpush1.msra.mxu0 0.0
  %2298 = vmatprep.subr.mxu0 0.0
  %2299 = vmatpush1.msra.mxu0 0.0
  %2300 = vmatprep.subr.mxu0 0.0
  %2301 = vmatpush1.msra.mxu0 0.0
  %2302 = vmatprep.mubr.f32.mxu0 0.0
  %2303 = vmatmul.mubr.f32.gmra.mrb[0].mxu0 %v2236
  %v2304 = vpop.f32.mrb[0].mxu0
  %v2305 = vadd.f32 0.0, %v2304
  %v2306 = vpop.f32.mrb[0].mxu0
  %2307 = vdwg.mxu0
  %v2308 = vadd.f32 %v2233, %v2305
  %v2309 = vxor.u32 %v2308, 2147483648
  %v2310 = vmul.f32 %v2309, 1.442695
  %v2311 = vpow.pop %v2310
  %v2312 = vadd.f32 %v2311, 1.0
  %v2313 = vrcp.pop %v2312
  %v2314 = vmul.f32 1.0, %v2313
  %v2315 = vadd.f32 %v2305, %v146
  %2317 = vrot.lane.b32.xlu0 %v2315, 64
  %v2318 = vpop.permute.xlu0 %2317
  %v2320 = vmul.f32 %v2314, %v2318
  %2322 = vrot.lane.b32.xlu0 %v2320, 64
  %v2323 = vpop.permute.xlu0 %2322
  %v2325 = vadd.f32 %v2233, %v2323
  %v2326 = vtanh.pop %v2325
  %v2327 = vsub.f32 1.0, %v2314
  %2329 = vrot.lane.b32.xlu0 %v2326, 96
  %v2330 = vpop.permute.xlu0 %2329
  %v2332 = vmul.f32 %v2327, %v2330
  %v2333 = vmul.f32 %v2314, %v2123
  %v2334 = vadd.f32 %v2332, %v2333
  %2336 = vrot.lane.b32.xlu0 %v2225, 96
  %v2337 = vpop.permute.xlu0 %2336
  %v2338 = vsel %vm63, %v2337, 0
  %2340 = vmatprep.subr.mxu0 0.0
  %2341 = vmatpush1.msra.mxu0 %v20
  %2342 = vmatprep.subr.mxu0 0.0
  %2343 = vmatpush1.msra.mxu0 %v21
  %2344 = vmatprep.subr.mxu0 0.0
  %2345 = vmatpush1.msra.mxu0 %v22
  %2346 = vmatprep.subr.mxu0 0.0
  %2347 = vmatpush1.msra.mxu0 %v23
  %2348 = vmatprep.subr.mxu0 0.0
  %2349 = vmatpush1.msra.mxu0 0.0
  %2350 = vmatprep.subr.mxu0 0.0
  %2351 = vmatpush1.msra.mxu0 0.0
  %2352 = vmatprep.subr.mxu0 0.0
  %2353 = vmatpush1.msra.mxu0 0.0
  %2354 = vmatprep.subr.mxu0 0.0
  %2355 = vmatpush1.msra.mxu0 0.0
  %2356 = vmatprep.subr.mxu0 0.0
  %2357 = vmatpush1.msra.mxu0 0.0
  %2358 = vmatprep.subr.mxu0 0.0
  %2359 = vmatpush1.msra.mxu0 0.0
  %2360 = vmatprep.subr.mxu0 0.0
  %2361 = vmatpush1.msra.mxu0 0.0
  %2362 = vmatprep.subr.mxu0 0.0
  %2363 = vmatpush1.msra.mxu0 0.0
  %2364 = vmatprep.subr.mxu0 0.0
  %2365 = vmatpush1.msra.mxu0 0.0
  %2366 = vmatprep.subr.mxu0 0.0
  %2367 = vmatpush1.msra.mxu0 0.0
  %2368 = vmatprep.subr.mxu0 0.0
  %2369 = vmatpush1.msra.mxu0 0.0
  %2370 = vmatprep.subr.mxu0 0.0
  %2371 = vmatpush1.msra.mxu0 0.0
  %2372 = vmatprep.subr.mxu0 0.0
  %2373 = vmatpush1.msra.mxu0 0.0
  %2374 = vmatprep.subr.mxu0 0.0
  %2375 = vmatpush1.msra.mxu0 0.0
  %2376 = vmatprep.subr.mxu0 0.0
  %2377 = vmatpush1.msra.mxu0 0.0
  %2378 = vmatprep.subr.mxu0 0.0
  %2379 = vmatpush1.msra.mxu0 0.0
  %2380 = vmatprep.subr.mxu0 0.0
  %2381 = vmatpush1.msra.mxu0 0.0
  %2382 = vmatprep.subr.mxu0 0.0
  %2383 = vmatpush1.msra.mxu0 0.0
  %2384 = vmatprep.subr.mxu0 0.0
  %2385 = vmatpush1.msra.mxu0 0.0
  %2386 = vmatprep.subr.mxu0 0.0
  %2387 = vmatpush1.msra.mxu0 0.0
  %2388 = vmatprep.subr.mxu0 0.0
  %2389 = vmatpush1.msra.mxu0 0.0
  %2390 = vmatprep.subr.mxu0 0.0
  %2391 = vmatpush1.msra.mxu0 0.0
  %2392 = vmatprep.subr.mxu0 0.0
  %2393 = vmatpush1.msra.mxu0 0.0
  %2394 = vmatprep.subr.mxu0 0.0
  %2395 = vmatpush1.msra.mxu0 0.0
  %2396 = vmatprep.subr.mxu0 0.0
  %2397 = vmatpush1.msra.mxu0 0.0
  %2398 = vmatprep.subr.mxu0 0.0
  %2399 = vmatpush1.msra.mxu0 0.0
  %2400 = vmatprep.subr.mxu0 0.0
  %2401 = vmatpush1.msra.mxu0 0.0
  %2402 = vmatprep.subr.mxu0 0.0
  %2403 = vmatpush1.msra.mxu0 0.0
  %2404 = vmatprep.mubr.f32.mxu0 0.0
  %2405 = vmatmul.mubr.f32.gmra.mrb[0].mxu0 %v2338
  %v2406 = vpop.f32.mrb[0].mxu0
  %v2407 = vadd.f32 0.0, %v2406
  %v2408 = vpop.f32.mrb[0].mxu0
  %2409 = vdwg.mxu0
  %v2410 = vadd.f32 %v2235, %v2407
  %v2411 = vxor.u32 %v2410, 2147483648
  %v2412 = vmul.f32 %v2411, 1.442695
  %v2413 = vpow.pop %v2412
  %v2414 = vadd.f32 %v2413, 1.0
  %v2415 = vrcp.pop %v2414
  %v2416 = vmul.f32 1.0, %v2415
  %v2417 = vadd.f32 %v2407, %v247
  %2419 = vrot.lane.b32.xlu0 %v2417, 64
  %v2420 = vpop.permute.xlu0 %2419
  %v2422 = vmul.f32 %v2416, %v2420
  %2424 = vrot.lane.b32.xlu0 %v2422, 64
  %v2425 = vpop.permute.xlu0 %2424
  %v2427 = vadd.f32 %v2235, %v2425
  %v2428 = vtanh.pop %v2427
  %v2429 = vsub.f32 1.0, %v2416
  %2431 = vrot.lane.b32.xlu0 %v2428, 96
  %v2432 = vpop.permute.xlu0 %2431
  %v2434 = vmul.f32 %v2429, %v2432
  %v2435 = vmul.f32 %v2416, %v2225
  %v2436 = vadd.f32 %v2434, %v2435
  %2438 = vrot.lane.b32.xlu0 %v2334, 96
  %v2439 = vpop.permute.xlu0 %2438
  %2441 = vst.msk [vmem:[#allocation2 + $0x14] sm:$0x3] %vm273, %v2439
  %2442 = vst.msk [vmem:[#allocation2 + $0xa] sm:$0x3] %vm275, %v2436
  %v2443 = vmul.f32 %v942, %v37
  %v2444 = vadd.f32 %v2443, %v41
  %v2445 = vmul.f32 %v936, %v45
  %v2446 = vadd.f32 %v2445, %v49
  %v2447 = vsel %vm63, %v2439, 0
  %2449 = vmatprep.subr.mxu0 0.0
  %2450 = vmatpush1.msra.mxu0 %v13
  %2451 = vmatprep.subr.mxu0 0.0
  %2452 = vmatpush1.msra.mxu0 %v14
  %2453 = vmatprep.subr.mxu0 0.0
  %2454 = vmatpush1.msra.mxu0 %v15
  %2455 = vmatprep.subr.mxu0 0.0
  %2456 = vmatpush1.msra.mxu0 %v16
  %2457 = vmatprep.subr.mxu0 0.0
  %2458 = vmatpush1.msra.mxu0 0.0
  %2459 = vmatprep.subr.mxu0 0.0
  %2460 = vmatpush1.msra.mxu0 0.0
  %2461 = vmatprep.subr.mxu0 0.0
  %2462 = vmatpush1.msra.mxu0 0.0
  %2463 = vmatprep.subr.mxu0 0.0
  %2464 = vmatpush1.msra.mxu0 0.0
  %2465 = vmatprep.subr.mxu0 0.0
  %2466 = vmatpush1.msra.mxu0 0.0
  %2467 = vmatprep.subr.mxu0 0.0
  %2468 = vmatpush1.msra.mxu0 0.0
  %2469 = vmatprep.subr.mxu0 0.0
  %2470 = vmatpush1.msra.mxu0 0.0
  %2471 = vmatprep.subr.mxu0 0.0
  %2472 = vmatpush1.msra.mxu0 0.0
  %2473 = vmatprep.subr.mxu0 0.0
  %2474 = vmatpush1.msra.mxu0 0.0
  %2475 = vmatprep.subr.mxu0 0.0
  %2476 = vmatpush1.msra.mxu0 0.0
  %2477 = vmatprep.subr.mxu0 0.0
  %2478 = vmatpush1.msra.mxu0 0.0
  %2479 = vmatprep.subr.mxu0 0.0
  %2480 = vmatpush1.msra.mxu0 0.0
  %2481 = vmatprep.subr.mxu0 0.0
  %2482 = vmatpush1.msra.mxu0 0.0
  %2483 = vmatprep.subr.mxu0 0.0
  %2484 = vmatpush1.msra.mxu0 0.0
  %2485 = vmatprep.subr.mxu0 0.0
  %2486 = vmatpush1.msra.mxu0 0.0
  %2487 = vmatprep.subr.mxu0 0.0
  %2488 = vmatpush1.msra.mxu0 0.0
  %2489 = vmatprep.subr.mxu0 0.0
  %2490 = vmatpush1.msra.mxu0 0.0
  %2491 = vmatprep.subr.mxu0 0.0
  %2492 = vmatpush1.msra.mxu0 0.0
  %2493 = vmatprep.subr.mxu0 0.0
  %2494 = vmatpush1.msra.mxu0 0.0
  %2495 = vmatprep.subr.mxu0 0.0
  %2496 = vmatpush1.msra.mxu0 0.0
  %2497 = vmatprep.subr.mxu0 0.0
  %2498 = vmatpush1.msra.mxu0 0.0
  %2499 = vmatprep.subr.mxu0 0.0
  %2500 = vmatpush1.msra.mxu0 0.0
  %2501 = vmatprep.subr.mxu0 0.0
  %2502 = vmatpush1.msra.mxu0 0.0
  %2503 = vmatprep.subr.mxu0 0.0
  %2504 = vmatpush1.msra.mxu0 0.0
  %2505 = vmatprep.subr.mxu0 0.0
  %2506 = vmatpush1.msra.mxu0 0.0
  %2507 = vmatprep.subr.mxu0 0.0
  %2508 = vmatpush1.msra.mxu0 0.0
  %2509 = vmatprep.subr.mxu0 0.0
  %2510 = vmatpush1.msra.mxu0 0.0
  %2511 = vmatprep.subr.mxu0 0.0
  %2512 = vmatpush1.msra.mxu0 0.0
  %2513 = vmatprep.mubr.f32.mxu0 0.0
  %2514 = vmatmul.mubr.f32.gmra.mrb[0].mxu0 %v2447
  %v2515 = vpop.f32.mrb[0].mxu0
  %v2516 = vadd.f32 0.0, %v2515
  %v2517 = vpop.f32.mrb[0].mxu0
  %2518 = vdwg.mxu0
  %v2519 = vadd.f32 %v2444, %v2516
  %v2520 = vxor.u32 %v2519, 2147483648
  %v2521 = vmul.f32 %v2520, 1.442695
  %v2522 = vpow.pop %v2521
  %v2523 = vadd.f32 %v2522, 1.0
  %v2524 = vrcp.pop %v2523
  %v2525 = vmul.f32 1.0, %v2524
  %v2526 = vadd.f32 %v2516, %v146
  %2528 = vrot.lane.b32.xlu0 %v2526, 64
  %v2529 = vpop.permute.xlu0 %2528
  %v2531 = vmul.f32 %v2525, %v2529
  %2533 = vrot.lane.b32.xlu0 %v2531, 64
  %v2534 = vpop.permute.xlu0 %2533
  %v2536 = vadd.f32 %v2444, %v2534
  %v2537 = vtanh.pop %v2536
  %v2538 = vsub.f32 1.0, %v2525
  %2540 = vrot.lane.b32.xlu0 %v2537, 96
  %v2541 = vpop.permute.xlu0 %2540
  %v2543 = vmul.f32 %v2538, %v2541
  %v2544 = vmul.f32 %v2525, %v2334
  %v2545 = vadd.f32 %v2543, %v2544
  %2547 = vrot.lane.b32.xlu0 %v2436, 96
  %v2548 = vpop.permute.xlu0 %2547
  %v2549 = vsel %vm63, %v2548, 0
  %2551 = vmatprep.subr.mxu0 0.0
  %2552 = vmatpush1.msra.mxu0 %v20
  %2553 = vmatprep.subr.mxu0 0.0
  %2554 = vmatpush1.msra.mxu0 %v21
  %2555 = vmatprep.subr.mxu0 0.0
  %2556 = vmatpush1.msra.mxu0 %v22
  %2557 = vmatprep.subr.mxu0 0.0
  %2558 = vmatpush1.msra.mxu0 %v23
  %2559 = vmatprep.subr.mxu0 0.0
  %2560 = vmatpush1.msra.mxu0 0.0
  %2561 = vmatprep.subr.mxu0 0.0
  %2562 = vmatpush1.msra.mxu0 0.0
  %2563 = vmatprep.subr.mxu0 0.0
  %2564 = vmatpush1.msra.mxu0 0.0
  %2565 = vmatprep.subr.mxu0 0.0
  %2566 = vmatpush1.msra.mxu0 0.0
  %2567 = vmatprep.subr.mxu0 0.0
  %2568 = vmatpush1.msra.mxu0 0.0
  %2569 = vmatprep.subr.mxu0 0.0
  %2570 = vmatpush1.msra.mxu0 0.0
  %2571 = vmatprep.subr.mxu0 0.0
  %2572 = vmatpush1.msra.mxu0 0.0
  %2573 = vmatprep.subr.mxu0 0.0
  %2574 = vmatpush1.msra.mxu0 0.0
  %2575 = vmatprep.subr.mxu0 0.0
  %2576 = vmatpush1.msra.mxu0 0.0
  %2577 = vmatprep.subr.mxu0 0.0
  %2578 = vmatpush1.msra.mxu0 0.0
  %2579 = vmatprep.subr.mxu0 0.0
  %2580 = vmatpush1.msra.mxu0 0.0
  %2581 = vmatprep.subr.mxu0 0.0
  %2582 = vmatpush1.msra.mxu0 0.0
  %2583 = vmatprep.subr.mxu0 0.0
  %2584 = vmatpush1.msra.mxu0 0.0
  %2585 = vmatprep.subr.mxu0 0.0
  %2586 = vmatpush1.msra.mxu0 0.0
  %2587 = vmatprep.subr.mxu0 0.0
  %2588 = vmatpush1.msra.mxu0 0.0
  %2589 = vmatprep.subr.mxu0 0.0
  %2590 = vmatpush1.msra.mxu0 0.0
  %2591 = vmatprep.subr.mxu0 0.0
  %2592 = vmatpush1.msra.mxu0 0.0
  %2593 = vmatprep.subr.mxu0 0.0
  %2594 = vmatpush1.msra.mxu0 0.0
  %2595 = vmatprep.subr.mxu0 0.0
  %2596 = vmatpush1.msra.mxu0 0.0
  %2597 = vmatprep.subr.mxu0 0.0
  %2598 = vmatpush1.msra.mxu0 0.0
  %2599 = vmatprep.subr.mxu0 0.0
  %2600 = vmatpush1.msra.mxu0 0.0
  %2601 = vmatprep.subr.mxu0 0.0
  %2602 = vmatpush1.msra.mxu0 0.0
  %2603 = vmatprep.subr.mxu0 0.0
  %2604 = vmatpush1.msra.mxu0 0.0
  %2605 = vmatprep.subr.mxu0 0.0
  %2606 = vmatpush1.msra.mxu0 0.0
  %2607 = vmatprep.subr.mxu0 0.0
  %2608 = vmatpush1.msra.mxu0 0.0
  %2609 = vmatprep.subr.mxu0 0.0
  %2610 = vmatpush1.msra.mxu0 0.0
  %2611 = vmatprep.subr.mxu0 0.0
  %2612 = vmatpush1.msra.mxu0 0.0
  %2613 = vmatprep.subr.mxu0 0.0
  %2614 = vmatpush1.msra.mxu0 0.0
  %2615 = vmatprep.mubr.f32.mxu0 0.0
  %2616 = vmatmul.mubr.f32.gmra.mrb[0].mxu0 %v2549
  %v2617 = vpop.f32.mrb[0].mxu0
  %v2618 = vadd.f32 0.0, %v2617
  %v2619 = vpop.f32.mrb[0].mxu0
  %2620 = vdwg.mxu0
  %v2621 = vadd.f32 %v2446, %v2618
  %v2622 = vxor.u32 %v2621, 2147483648
  %v2623 = vmul.f32 %v2622, 1.442695
  %v2624 = vpow.pop %v2623
  %v2625 = vadd.f32 %v2624, 1.0
  %v2626 = vrcp.pop %v2625
  %v2627 = vmul.f32 1.0, %v2626
  %v2628 = vadd.f32 %v2618, %v247
  %2630 = vrot.lane.b32.xlu0 %v2628, 64
  %v2631 = vpop.permute.xlu0 %2630
  %v2633 = vmul.f32 %v2627, %v2631
  %2635 = vrot.lane.b32.xlu0 %v2633, 64
  %v2636 = vpop.permute.xlu0 %2635
  %v2638 = vadd.f32 %v2446, %v2636
  %v2639 = vtanh.pop %v2638
  %v2640 = vsub.f32 1.0, %v2627
  %2642 = vrot.lane.b32.xlu0 %v2639, 96
  %v2643 = vpop.permute.xlu0 %2642
  %v2645 = vmul.f32 %v2640, %v2643
  %v2646 = vmul.f32 %v2627, %v2436
  %v2647 = vadd.f32 %v2645, %v2646
  %2649 = vrot.lane.b32.xlu0 %v2545, 96
  %v2650 = vpop.permute.xlu0 %2649
  %2652 = vst.msk [vmem:[#allocation2 + $0x16] sm:$0x3] %vm273, %v2650
  %2653 = vst.msk [vmem:[#allocation2 + $0x8] sm:$0x3] %vm275, %v2647
  %v2654 = vmul.f32 %v723, %v37
  %v2655 = vadd.f32 %v2654, %v41
  %v2656 = vmul.f32 %v717, %v45
  %v2657 = vadd.f32 %v2656, %v49
  %v2658 = vsel %vm63, %v2650, 0
  %2660 = vmatprep.subr.mxu0 0.0
  %2661 = vmatpush1.msra.mxu0 %v13
  %2662 = vmatprep.subr.mxu0 0.0
  %2663 = vmatpush1.msra.mxu0 %v14
  %2664 = vmatprep.subr.mxu0 0.0
  %2665 = vmatpush1.msra.mxu0 %v15
  %2666 = vmatprep.subr.mxu0 0.0
  %2667 = vmatpush1.msra.mxu0 %v16
  %2668 = vmatprep.subr.mxu0 0.0
  %2669 = vmatpush1.msra.mxu0 0.0
  %2670 = vmatprep.subr.mxu0 0.0
  %2671 = vmatpush1.msra.mxu0 0.0
  %2672 = vmatprep.subr.mxu0 0.0
  %2673 = vmatpush1.msra.mxu0 0.0
  %2674 = vmatprep.subr.mxu0 0.0
  %2675 = vmatpush1.msra.mxu0 0.0
  %2676 = vmatprep.subr.mxu0 0.0
  %2677 = vmatpush1.msra.mxu0 0.0
  %2678 = vmatprep.subr.mxu0 0.0
  %2679 = vmatpush1.msra.mxu0 0.0
  %2680 = vmatprep.subr.mxu0 0.0
  %2681 = vmatpush1.msra.mxu0 0.0
  %2682 = vmatprep.subr.mxu0 0.0
  %2683 = vmatpush1.msra.mxu0 0.0
  %2684 = vmatprep.subr.mxu0 0.0
  %2685 = vmatpush1.msra.mxu0 0.0
  %2686 = vmatprep.subr.mxu0 0.0
  %2687 = vmatpush1.msra.mxu0 0.0
  %2688 = vmatprep.subr.mxu0 0.0
  %2689 = vmatpush1.msra.mxu0 0.0
  %2690 = vmatprep.subr.mxu0 0.0
  %2691 = vmatpush1.msra.mxu0 0.0
  %2692 = vmatprep.subr.mxu0 0.0
  %2693 = vmatpush1.msra.mxu0 0.0
  %2694 = vmatprep.subr.mxu0 0.0
  %2695 = vmatpush1.msra.mxu0 0.0
  %2696 = vmatprep.subr.mxu0 0.0
  %2697 = vmatpush1.msra.mxu0 0.0
  %2698 = vmatprep.subr.mxu0 0.0
  %2699 = vmatpush1.msra.mxu0 0.0
  %2700 = vmatprep.subr.mxu0 0.0
  %2701 = vmatpush1.msra.mxu0 0.0
  %2702 = vmatprep.subr.mxu0 0.0
  %2703 = vmatpush1.msra.mxu0 0.0
  %2704 = vmatprep.subr.mxu0 0.0
  %2705 = vmatpush1.msra.mxu0 0.0
  %2706 = vmatprep.subr.mxu0 0.0
  %2707 = vmatpush1.msra.mxu0 0.0
  %2708 = vmatprep.subr.mxu0 0.0
  %2709 = vmatpush1.msra.mxu0 0.0
  %2710 = vmatprep.subr.mxu0 0.0
  %2711 = vmatpush1.msra.mxu0 0.0
  %2712 = vmatprep.subr.mxu0 0.0
  %2713 = vmatpush1.msra.mxu0 0.0
  %2714 = vmatprep.subr.mxu0 0.0
  %2715 = vmatpush1.msra.mxu0 0.0
  %2716 = vmatprep.subr.mxu0 0.0
  %2717 = vmatpush1.msra.mxu0 0.0
  %2718 = vmatprep.subr.mxu0 0.0
  %2719 = vmatpush1.msra.mxu0 0.0
  %2720 = vmatprep.subr.mxu0 0.0
  %2721 = vmatpush1.msra.mxu0 0.0
  %2722 = vmatprep.subr.mxu0 0.0
  %2723 = vmatpush1.msra.mxu0 0.0
  %2724 = vmatprep.mubr.f32.mxu0 0.0
  %2725 = vmatmul.mubr.f32.gmra.mrb[0].mxu0 %v2658
  %v2726 = vpop.f32.mrb[0].mxu0
  %v2727 = vadd.f32 0.0, %v2726
  %v2728 = vpop.f32.mrb[0].mxu0
  %2729 = vdwg.mxu0
  %v2730 = vadd.f32 %v2655, %v2727
  %v2731 = vxor.u32 %v2730, 2147483648
  %v2732 = vmul.f32 %v2731, 1.442695
  %v2733 = vpow.pop %v2732
  %v2734 = vadd.f32 %v2733, 1.0
  %v2735 = vrcp.pop %v2734
  %v2736 = vmul.f32 1.0, %v2735
  %v2737 = vadd.f32 %v2727, %v146
  %2739 = vrot.lane.b32.xlu0 %v2737, 64
  %v2740 = vpop.permute.xlu0 %2739
  %v2742 = vmul.f32 %v2736, %v2740
  %2744 = vrot.lane.b32.xlu0 %v2742, 64
  %v2745 = vpop.permute.xlu0 %2744
  %v2747 = vadd.f32 %v2655, %v2745
  %v2748 = vtanh.pop %v2747
  %v2749 = vsub.f32 1.0, %v2736
  %2751 = vrot.lane.b32.xlu0 %v2748, 96
  %v2752 = vpop.permute.xlu0 %2751
  %v2754 = vmul.f32 %v2749, %v2752
  %v2755 = vmul.f32 %v2736, %v2545
  %v2756 = vadd.f32 %v2754, %v2755
  %2758 = vrot.lane.b32.xlu0 %v2647, 96
  %v2759 = vpop.permute.xlu0 %2758
  %v2760 = vsel %vm63, %v2759, 0
  %2762 = vmatprep.subr.mxu0 0.0
  %2763 = vmatpush1.msra.mxu0 %v20
  %2764 = vmatprep.subr.mxu0 0.0
  %2765 = vmatpush1.msra.mxu0 %v21
  %2766 = vmatprep.subr.mxu0 0.0
  %2767 = vmatpush1.msra.mxu0 %v22
  %2768 = vmatprep.subr.mxu0 0.0
  %2769 = vmatpush1.msra.mxu0 %v23
  %2770 = vmatprep.subr.mxu0 0.0
  %2771 = vmatpush1.msra.mxu0 0.0
  %2772 = vmatprep.subr.mxu0 0.0
  %2773 = vmatpush1.msra.mxu0 0.0
  %2774 = vmatprep.subr.mxu0 0.0
  %2775 = vmatpush1.msra.mxu0 0.0
  %2776 = vmatprep.subr.mxu0 0.0
  %2777 = vmatpush1.msra.mxu0 0.0
  %2778 = vmatprep.subr.mxu0 0.0
  %2779 = vmatpush1.msra.mxu0 0.0
  %2780 = vmatprep.subr.mxu0 0.0
  %2781 = vmatpush1.msra.mxu0 0.0
  %2782 = vmatprep.subr.mxu0 0.0
  %2783 = vmatpush1.msra.mxu0 0.0
  %2784 = vmatprep.subr.mxu0 0.0
  %2785 = vmatpush1.msra.mxu0 0.0
  %2786 = vmatprep.subr.mxu0 0.0
  %2787 = vmatpush1.msra.mxu0 0.0
  %2788 = vmatprep.subr.mxu0 0.0
  %2789 = vmatpush1.msra.mxu0 0.0
  %2790 = vmatprep.subr.mxu0 0.0
  %2791 = vmatpush1.msra.mxu0 0.0
  %2792 = vmatprep.subr.mxu0 0.0
  %2793 = vmatpush1.msra.mxu0 0.0
  %2794 = vmatprep.subr.mxu0 0.0
  %2795 = vmatpush1.msra.mxu0 0.0
  %2796 = vmatprep.subr.mxu0 0.0
  %2797 = vmatpush1.msra.mxu0 0.0
  %2798 = vmatprep.subr.mxu0 0.0
  %2799 = vmatpush1.msra.mxu0 0.0
  %2800 = vmatprep.subr.mxu0 0.0
  %2801 = vmatpush1.msra.mxu0 0.0
  %2802 = vmatprep.subr.mxu0 0.0
  %2803 = vmatpush1.msra.mxu0 0.0
  %2804 = vmatprep.subr.mxu0 0.0
  %2805 = vmatpush1.msra.mxu0 0.0
  %2806 = vmatprep.subr.mxu0 0.0
  %2807 = vmatpush1.msra.mxu0 0.0
  %2808 = vmatprep.subr.mxu0 0.0
  %2809 = vmatpush1.msra.mxu0 0.0
  %2810 = vmatprep.subr.mxu0 0.0
  %2811 = vmatpush1.msra.mxu0 0.0
  %2812 = vmatprep.subr.mxu0 0.0
  %2813 = vmatpush1.msra.mxu0 0.0
  %2814 = vmatprep.subr.mxu0 0.0
  %2815 = vmatpush1.msra.mxu0 0.0
  %2816 = vmatprep.subr.mxu0 0.0
  %2817 = vmatpush1.msra.mxu0 0.0
  %2818 = vmatprep.subr.mxu0 0.0
  %2819 = vmatpush1.msra.mxu0 0.0
  %2820 = vmatprep.subr.mxu0 0.0
  %2821 = vmatpush1.msra.mxu0 0.0
  %2822 = vmatprep.subr.mxu0 0.0
  %2823 = vmatpush1.msra.mxu0 0.0
  %2824 = vmatprep.subr.mxu0 0.0
  %2825 = vmatpush1.msra.mxu0 0.0
  %2826 = vmatprep.mubr.f32.mxu0 0.0
  %2827 = vmatmul.mubr.f32.gmra.mrb[0].mxu0 %v2760
  %v2828 = vpop.f32.mrb[0].mxu0
  %v2829 = vadd.f32 0.0, %v2828
  %v2830 = vpop.f32.mrb[0].mxu0
  %2831 = vdwg.mxu0
  %v2832 = vadd.f32 %v2657, %v2829
  %v2833 = vxor.u32 %v2832, 2147483648
  %v2834 = vmul.f32 %v2833, 1.442695
  %v2835 = vpow.pop %v2834
  %v2836 = vadd.f32 %v2835, 1.0
  %v2837 = vrcp.pop %v2836
  %v2838 = vmul.f32 1.0, %v2837
  %v2839 = vadd.f32 %v2829, %v247
  %2841 = vrot.lane.b32.xlu0 %v2839, 64
  %v2842 = vpop.permute.xlu0 %2841
  %v2844 = vmul.f32 %v2838, %v2842
  %2846 = vrot.lane.b32.xlu0 %v2844, 64
  %v2847 = vpop.permute.xlu0 %2846
  %v2849 = vadd.f32 %v2657, %v2847
  %v2850 = vtanh.pop %v2849
  %v2851 = vsub.f32 1.0, %v2838
  %2853 = vrot.lane.b32.xlu0 %v2850, 96
  %v2854 = vpop.permute.xlu0 %2853
  %v2856 = vmul.f32 %v2851, %v2854
  %v2857 = vmul.f32 %v2838, %v2647
  %v2858 = vadd.f32 %v2856, %v2857
  %2860 = vrot.lane.b32.xlu0 %v2756, 96
  %v2861 = vpop.permute.xlu0 %2860
  %2863 = vst.msk [vmem:[#allocation2 + $0x18] sm:$0x3] %vm273, %v2861
  %2864 = vst.msk [vmem:[#allocation2 + $0x6] sm:$0x3] %vm275, %v2858
  %v2865 = vmul.f32 %v504, %v37
  %v2866 = vadd.f32 %v2865, %v41
  %v2867 = vmul.f32 %v498, %v45
  %v2868 = vadd.f32 %v2867, %v49
  %v2869 = vsel %vm63, %v2861, 0
  %2871 = vmatprep.subr.mxu0 0.0
  %2872 = vmatpush1.msra.mxu0 %v13
  %2873 = vmatprep.subr.mxu0 0.0
  %2874 = vmatpush1.msra.mxu0 %v14
  %2875 = vmatprep.subr.mxu0 0.0
  %2876 = vmatpush1.msra.mxu0 %v15
  %2877 = vmatprep.subr.mxu0 0.0
  %2878 = vmatpush1.msra.mxu0 %v16
  %2879 = vmatprep.subr.mxu0 0.0
  %2880 = vmatpush1.msra.mxu0 0.0
  %2881 = vmatprep.subr.mxu0 0.0
  %2882 = vmatpush1.msra.mxu0 0.0
  %2883 = vmatprep.subr.mxu0 0.0
  %2884 = vmatpush1.msra.mxu0 0.0
  %2885 = vmatprep.subr.mxu0 0.0
  %2886 = vmatpush1.msra.mxu0 0.0
  %2887 = vmatprep.subr.mxu0 0.0
  %2888 = vmatpush1.msra.mxu0 0.0
  %2889 = vmatprep.subr.mxu0 0.0
  %2890 = vmatpush1.msra.mxu0 0.0
  %2891 = vmatprep.subr.mxu0 0.0
  %2892 = vmatpush1.msra.mxu0 0.0
  %2893 = vmatprep.subr.mxu0 0.0
  %2894 = vmatpush1.msra.mxu0 0.0
  %2895 = vmatprep.subr.mxu0 0.0
  %2896 = vmatpush1.msra.mxu0 0.0
  %2897 = vmatprep.subr.mxu0 0.0
  %2898 = vmatpush1.msra.mxu0 0.0
  %2899 = vmatprep.subr.mxu0 0.0
  %2900 = vmatpush1.msra.mxu0 0.0
  %2901 = vmatprep.subr.mxu0 0.0
  %2902 = vmatpush1.msra.mxu0 0.0
  %2903 = vmatprep.subr.mxu0 0.0
  %2904 = vmatpush1.msra.mxu0 0.0
  %2905 = vmatprep.subr.mxu0 0.0
  %2906 = vmatpush1.msra.mxu0 0.0
  %2907 = vmatprep.subr.mxu0 0.0
  %2908 = vmatpush1.msra.mxu0 0.0
  %2909 = vmatprep.subr.mxu0 0.0
  %2910 = vmatpush1.msra.mxu0 0.0
  %2911 = vmatprep.subr.mxu0 0.0
  %2912 = vmatpush1.msra.mxu0 0.0
  %2913 = vmatprep.subr.mxu0 0.0
  %2914 = vmatpush1.msra.mxu0 0.0
  %2915 = vmatprep.subr.mxu0 0.0
  %2916 = vmatpush1.msra.mxu0 0.0
  %2917 = vmatprep.subr.mxu0 0.0
  %2918 = vmatpush1.msra.mxu0 0.0
  %2919 = vmatprep.subr.mxu0 0.0
  %2920 = vmatpush1.msra.mxu0 0.0
  %2921 = vmatprep.subr.mxu0 0.0
  %2922 = vmatpush1.msra.mxu0 0.0
  %2923 = vmatprep.subr.mxu0 0.0
  %2924 = vmatpush1.msra.mxu0 0.0
  %2925 = vmatprep.subr.mxu0 0.0
  %2926 = vmatpush1.msra.mxu0 0.0
  %2927 = vmatprep.subr.mxu0 0.0
  %2928 = vmatpush1.msra.mxu0 0.0
  %2929 = vmatprep.subr.mxu0 0.0
  %2930 = vmatpush1.msra.mxu0 0.0
  %2931 = vmatprep.subr.mxu0 0.0
  %2932 = vmatpush1.msra.mxu0 0.0
  %2933 = vmatprep.subr.mxu0 0.0
  %2934 = vmatpush1.msra.mxu0 0.0
  %2935 = vmatprep.mubr.f32.mxu0 0.0
  %2936 = vmatmul.mubr.f32.gmra.mrb[0].mxu0 %v2869
  %v2937 = vpop.f32.mrb[0].mxu0
  %v2938 = vadd.f32 0.0, %v2937
  %v2939 = vpop.f32.mrb[0].mxu0
  %2940 = vdwg.mxu0
  %v2941 = vadd.f32 %v2866, %v2938
  %v2942 = vxor.u32 %v2941, 2147483648
  %v2943 = vmul.f32 %v2942, 1.442695
  %v2944 = vpow.pop %v2943
  %v2945 = vadd.f32 %v2944, 1.0
  %v2946 = vrcp.pop %v2945
  %v2947 = vmul.f32 1.0, %v2946
  %v2948 = vadd.f32 %v2938, %v146
  %2950 = vrot.lane.b32.xlu0 %v2948, 64
  %v2951 = vpop.permute.xlu0 %2950
  %v2953 = vmul.f32 %v2947, %v2951
  %2955 = vrot.lane.b32.xlu0 %v2953, 64
  %v2956 = vpop.permute.xlu0 %2955
  %v2958 = vadd.f32 %v2866, %v2956
  %v2959 = vtanh.pop %v2958
  %v2960 = vsub.f32 1.0, %v2947
  %2962 = vrot.lane.b32.xlu0 %v2959, 96
  %v2963 = vpop.permute.xlu0 %2962
  %v2965 = vmul.f32 %v2960, %v2963
  %v2966 = vmul.f32 %v2947, %v2756
  %v2967 = vadd.f32 %v2965, %v2966
  %2969 = vrot.lane.b32.xlu0 %v2858, 96
  %v2970 = vpop.permute.xlu0 %2969
  %v2971 = vsel %vm63, %v2970, 0
  %2973 = vmatprep.subr.mxu0 0.0
  %2974 = vmatpush1.msra.mxu0 %v20
  %2975 = vmatprep.subr.mxu0 0.0
  %2976 = vmatpush1.msra.mxu0 %v21
  %2977 = vmatprep.subr.mxu0 0.0
  %2978 = vmatpush1.msra.mxu0 %v22
  %2979 = vmatprep.subr.mxu0 0.0
  %2980 = vmatpush1.msra.mxu0 %v23
  %2981 = vmatprep.subr.mxu0 0.0
  %2982 = vmatpush1.msra.mxu0 0.0
  %2983 = vmatprep.subr.mxu0 0.0
  %2984 = vmatpush1.msra.mxu0 0.0
  %2985 = vmatprep.subr.mxu0 0.0
  %2986 = vmatpush1.msra.mxu0 0.0
  %2987 = vmatprep.subr.mxu0 0.0
  %2988 = vmatpush1.msra.mxu0 0.0
  %2989 = vmatprep.subr.mxu0 0.0
  %2990 = vmatpush1.msra.mxu0 0.0
  %2991 = vmatprep.subr.mxu0 0.0
  %2992 = vmatpush1.msra.mxu0 0.0
  %2993 = vmatprep.subr.mxu0 0.0
  %2994 = vmatpush1.msra.mxu0 0.0
  %2995 = vmatprep.subr.mxu0 0.0
  %2996 = vmatpush1.msra.mxu0 0.0
  %2997 = vmatprep.subr.mxu0 0.0
  %2998 = vmatpush1.msra.mxu0 0.0
  %2999 = vmatprep.subr.mxu0 0.0
  %3000 = vmatpush1.msra.mxu0 0.0
  %3001 = vmatprep.subr.mxu0 0.0
  %3002 = vmatpush1.msra.mxu0 0.0
  %3003 = vmatprep.subr.mxu0 0.0
  %3004 = vmatpush1.msra.mxu0 0.0
  %3005 = vmatprep.subr.mxu0 0.0
  %3006 = vmatpush1.msra.mxu0 0.0
  %3007 = vmatprep.subr.mxu0 0.0
  %3008 = vmatpush1.msra.mxu0 0.0
  %3009 = vmatprep.subr.mxu0 0.0
  %3010 = vmatpush1.msra.mxu0 0.0
  %3011 = vmatprep.subr.mxu0 0.0
  %3012 = vmatpush1.msra.mxu0 0.0
  %3013 = vmatprep.subr.mxu0 0.0
  %3014 = vmatpush1.msra.mxu0 0.0
  %3015 = vmatprep.subr.mxu0 0.0
  %3016 = vmatpush1.msra.mxu0 0.0
  %3017 = vmatprep.subr.mxu0 0.0
  %3018 = vmatpush1.msra.mxu0 0.0
  %3019 = vmatprep.subr.mxu0 0.0
  %3020 = vmatpush1.msra.mxu0 0.0
  %3021 = vmatprep.subr.mxu0 0.0
  %3022 = vmatpush1.msra.mxu0 0.0
  %3023 = vmatprep.subr.mxu0 0.0
  %3024 = vmatpush1.msra.mxu0 0.0
  %3025 = vmatprep.subr.mxu0 0.0
  %3026 = vmatpush1.msra.mxu0 0.0
  %3027 = vmatprep.subr.mxu0 0.0
  %3028 = vmatpush1.msra.mxu0 0.0
  %3029 = vmatprep.subr.mxu0 0.0
  %3030 = vmatpush1.msra.mxu0 0.0
  %3031 = vmatprep.subr.mxu0 0.0
  %3032 = vmatpush1.msra.mxu0 0.0
  %3033 = vmatprep.subr.mxu0 0.0
  %3034 = vmatpush1.msra.mxu0 0.0
  %3035 = vmatprep.subr.mxu0 0.0
  %3036 = vmatpush1.msra.mxu0 0.0
  %3037 = vmatprep.mubr.f32.mxu0 0.0
  %3038 = vmatmul.mubr.f32.gmra.mrb[0].mxu0 %v2971
  %v3039 = vpop.f32.mrb[0].mxu0
  %v3040 = vadd.f32 0.0, %v3039
  %v3041 = vpop.f32.mrb[0].mxu0
  %3042 = vdwg.mxu0
  %v3043 = vadd.f32 %v2868, %v3040
  %v3044 = vxor.u32 %v3043, 2147483648
  %v3045 = vmul.f32 %v3044, 1.442695
  %v3046 = vpow.pop %v3045
  %v3047 = vadd.f32 %v3046, 1.0
  %v3048 = vrcp.pop %v3047
  %v3049 = vmul.f32 1.0, %v3048
  %v3050 = vadd.f32 %v3040, %v247
  %3052 = vrot.lane.b32.xlu0 %v3050, 64
  %v3053 = vpop.permute.xlu0 %3052
  %v3055 = vmul.f32 %v3049, %v3053
  %3057 = vrot.lane.b32.xlu0 %v3055, 64
  %v3058 = vpop.permute.xlu0 %3057
  %v3060 = vadd.f32 %v2868, %v3058
  %v3061 = vtanh.pop %v3060
  %v3062 = vsub.f32 1.0, %v3049
  %3064 = vrot.lane.b32.xlu0 %v3061, 96
  %v3065 = vpop.permute.xlu0 %3064
  %v3067 = vmul.f32 %v3062, %v3065
  %v3068 = vmul.f32 %v3049, %v2858
  %v3069 = vadd.f32 %v3067, %v3068
  %3071 = vrot.lane.b32.xlu0 %v2967, 96
  %v3072 = vpop.permute.xlu0 %3071
  %3074 = vst.msk [vmem:[#allocation2 + $0x1a] sm:$0x3] %vm273, %v3072
  %3075 = vst.msk [vmem:[#allocation2 + $0x4] sm:$0x3] %vm275, %v3069
  %v3076 = vmul.f32 %v285, %v37
  %v3077 = vadd.f32 %v3076, %v41
  %v3078 = vmul.f32 %v279, %v45
  %v3079 = vadd.f32 %v3078, %v49
  %v3080 = vsel %vm63, %v3072, 0
  %3082 = vmatprep.subr.mxu0 0.0
  %3083 = vmatpush1.msra.mxu0 %v13
  %3084 = vmatprep.subr.mxu0 0.0
  %3085 = vmatpush1.msra.mxu0 %v14
  %3086 = vmatprep.subr.mxu0 0.0
  %3087 = vmatpush1.msra.mxu0 %v15
  %3088 = vmatprep.subr.mxu0 0.0
  %3089 = vmatpush1.msra.mxu0 %v16
  %3090 = vmatprep.subr.mxu0 0.0
  %3091 = vmatpush1.msra.mxu0 0.0
  %3092 = vmatprep.subr.mxu0 0.0
  %3093 = vmatpush1.msra.mxu0 0.0
  %3094 = vmatprep.subr.mxu0 0.0
  %3095 = vmatpush1.msra.mxu0 0.0
  %3096 = vmatprep.subr.mxu0 0.0
  %3097 = vmatpush1.msra.mxu0 0.0
  %3098 = vmatprep.subr.mxu0 0.0
  %3099 = vmatpush1.msra.mxu0 0.0
  %3100 = vmatprep.subr.mxu0 0.0
  %3101 = vmatpush1.msra.mxu0 0.0
  %3102 = vmatprep.subr.mxu0 0.0
  %3103 = vmatpush1.msra.mxu0 0.0
  %3104 = vmatprep.subr.mxu0 0.0
  %3105 = vmatpush1.msra.mxu0 0.0
  %3106 = vmatprep.subr.mxu0 0.0
  %3107 = vmatpush1.msra.mxu0 0.0
  %3108 = vmatprep.subr.mxu0 0.0
  %3109 = vmatpush1.msra.mxu0 0.0
  %3110 = vmatprep.subr.mxu0 0.0
  %3111 = vmatpush1.msra.mxu0 0.0
  %3112 = vmatprep.subr.mxu0 0.0
  %3113 = vmatpush1.msra.mxu0 0.0
  %3114 = vmatprep.subr.mxu0 0.0
  %3115 = vmatpush1.msra.mxu0 0.0
  %3116 = vmatprep.subr.mxu0 0.0
  %3117 = vmatpush1.msra.mxu0 0.0
  %3118 = vmatprep.subr.mxu0 0.0
  %3119 = vmatpush1.msra.mxu0 0.0
  %3120 = vmatprep.subr.mxu0 0.0
  %3121 = vmatpush1.msra.mxu0 0.0
  %3122 = vmatprep.subr.mxu0 0.0
  %3123 = vmatpush1.msra.mxu0 0.0
  %3124 = vmatprep.subr.mxu0 0.0
  %3125 = vmatpush1.msra.mxu0 0.0
  %3126 = vmatprep.subr.mxu0 0.0
  %3127 = vmatpush1.msra.mxu0 0.0
  %3128 = vmatprep.subr.mxu0 0.0
  %3129 = vmatpush1.msra.mxu0 0.0
  %3130 = vmatprep.subr.mxu0 0.0
  %3131 = vmatpush1.msra.mxu0 0.0
  %3132 = vmatprep.subr.mxu0 0.0
  %3133 = vmatpush1.msra.mxu0 0.0
  %3134 = vmatprep.subr.mxu0 0.0
  %3135 = vmatpush1.msra.mxu0 0.0
  %3136 = vmatprep.subr.mxu0 0.0
  %3137 = vmatpush1.msra.mxu0 0.0
  %3138 = vmatprep.subr.mxu0 0.0
  %3139 = vmatpush1.msra.mxu0 0.0
  %3140 = vmatprep.subr.mxu0 0.0
  %3141 = vmatpush1.msra.mxu0 0.0
  %3142 = vmatprep.subr.mxu0 0.0
  %3143 = vmatpush1.msra.mxu0 0.0
  %3144 = vmatprep.subr.mxu0 0.0
  %3145 = vmatpush1.msra.mxu0 0.0
  %3146 = vmatprep.mubr.f32.mxu0 0.0
  %3147 = vmatmul.mubr.f32.gmra.mrb[0].mxu0 %v3080
  %v3148 = vpop.f32.mrb[0].mxu0
  %v3149 = vadd.f32 0.0, %v3148
  %v3150 = vpop.f32.mrb[0].mxu0
  %3151 = vdwg.mxu0
  %v3152 = vadd.f32 %v3077, %v3149
  %v3153 = vxor.u32 %v3152, 2147483648
  %v3154 = vmul.f32 %v3153, 1.442695
  %v3155 = vpow.pop %v3154
  %v3156 = vadd.f32 %v3155, 1.0
  %v3157 = vrcp.pop %v3156
  %v3158 = vmul.f32 1.0, %v3157
  %v3159 = vadd.f32 %v3149, %v146
  %3161 = vrot.lane.b32.xlu0 %v3159, 64
  %v3162 = vpop.permute.xlu0 %3161
  %v3164 = vmul.f32 %v3158, %v3162
  %3166 = vrot.lane.b32.xlu0 %v3164, 64
  %v3167 = vpop.permute.xlu0 %3166
  %v3169 = vadd.f32 %v3077, %v3167
  %v3170 = vtanh.pop %v3169
  %v3171 = vsub.f32 1.0, %v3158
  %3173 = vrot.lane.b32.xlu0 %v3170, 96
  %v3174 = vpop.permute.xlu0 %3173
  %v3176 = vmul.f32 %v3171, %v3174
  %v3177 = vmul.f32 %v3158, %v2967
  %v3178 = vadd.f32 %v3176, %v3177
  %3180 = vrot.lane.b32.xlu0 %v3069, 96
  %v3181 = vpop.permute.xlu0 %3180
  %v3182 = vsel %vm63, %v3181, 0
  %3184 = vmatprep.subr.mxu0 0.0
  %3185 = vmatpush1.msra.mxu0 %v20
  %3186 = vmatprep.subr.mxu0 0.0
  %3187 = vmatpush1.msra.mxu0 %v21
  %3188 = vmatprep.subr.mxu0 0.0
  %3189 = vmatpush1.msra.mxu0 %v22
  %3190 = vmatprep.subr.mxu0 0.0
  %3191 = vmatpush1.msra.mxu0 %v23
  %3192 = vmatprep.subr.mxu0 0.0
  %3193 = vmatpush1.msra.mxu0 0.0
  %3194 = vmatprep.subr.mxu0 0.0
  %3195 = vmatpush1.msra.mxu0 0.0
  %3196 = vmatprep.subr.mxu0 0.0
  %3197 = vmatpush1.msra.mxu0 0.0
  %3198 = vmatprep.subr.mxu0 0.0
  %3199 = vmatpush1.msra.mxu0 0.0
  %3200 = vmatprep.subr.mxu0 0.0
  %3201 = vmatpush1.msra.mxu0 0.0
  %3202 = vmatprep.subr.mxu0 0.0
  %3203 = vmatpush1.msra.mxu0 0.0
  %3204 = vmatprep.subr.mxu0 0.0
  %3205 = vmatpush1.msra.mxu0 0.0
  %3206 = vmatprep.subr.mxu0 0.0
  %3207 = vmatpush1.msra.mxu0 0.0
  %3208 = vmatprep.subr.mxu0 0.0
  %3209 = vmatpush1.msra.mxu0 0.0
  %3210 = vmatprep.subr.mxu0 0.0
  %3211 = vmatpush1.msra.mxu0 0.0
  %3212 = vmatprep.subr.mxu0 0.0
  %3213 = vmatpush1.msra.mxu0 0.0
  %3214 = vmatprep.subr.mxu0 0.0
  %3215 = vmatpush1.msra.mxu0 0.0
  %3216 = vmatprep.subr.mxu0 0.0
  %3217 = vmatpush1.msra.mxu0 0.0
  %3218 = vmatprep.subr.mxu0 0.0
  %3219 = vmatpush1.msra.mxu0 0.0
  %3220 = vmatprep.subr.mxu0 0.0
  %3221 = vmatpush1.msra.mxu0 0.0
  %3222 = vmatprep.subr.mxu0 0.0
  %3223 = vmatpush1.msra.mxu0 0.0
  %3224 = vmatprep.subr.mxu0 0.0
  %3225 = vmatpush1.msra.mxu0 0.0
  %3226 = vmatprep.subr.mxu0 0.0
  %3227 = vmatpush1.msra.mxu0 0.0
  %3228 = vmatprep.subr.mxu0 0.0
  %3229 = vmatpush1.msra.mxu0 0.0
  %3230 = vmatprep.subr.mxu0 0.0
  %3231 = vmatpush1.msra.mxu0 0.0
  %3232 = vmatprep.subr.mxu0 0.0
  %3233 = vmatpush1.msra.mxu0 0.0
  %3234 = vmatprep.subr.mxu0 0.0
  %3235 = vmatpush1.msra.mxu0 0.0
  %3236 = vmatprep.subr.mxu0 0.0
  %3237 = vmatpush1.msra.mxu0 0.0
  %3238 = vmatprep.subr.mxu0 0.0
  %3239 = vmatpush1.msra.mxu0 0.0
  %3240 = vmatprep.subr.mxu0 0.0
  %3241 = vmatpush1.msra.mxu0 0.0
  %3242 = vmatprep.subr.mxu0 0.0
  %3243 = vmatpush1.msra.mxu0 0.0
  %3244 = vmatprep.subr.mxu0 0.0
  %3245 = vmatpush1.msra.mxu0 0.0
  %3246 = vmatprep.subr.mxu0 0.0
  %3247 = vmatpush1.msra.mxu0 0.0
  %3248 = vmatprep.mubr.f32.mxu0 0.0
  %3249 = vmatmul.mubr.f32.gmra.mrb[0].mxu0 %v3182
  %v3250 = vpop.f32.mrb[0].mxu0
  %v3251 = vadd.f32 0.0, %v3250
  %v3252 = vpop.f32.mrb[0].mxu0
  %3253 = vdwg.mxu0
  %v3254 = vadd.f32 %v3079, %v3251
  %v3255 = vxor.u32 %v3254, 2147483648
  %v3256 = vmul.f32 %v3255, 1.442695
  %v3257 = vpow.pop %v3256
  %v3258 = vadd.f32 %v3257, 1.0
  %v3259 = vrcp.pop %v3258
  %v3260 = vmul.f32 1.0, %v3259
  %v3261 = vadd.f32 %v3251, %v247
  %3263 = vrot.lane.b32.xlu0 %v3261, 64
  %v3264 = vpop.permute.xlu0 %3263
  %v3266 = vmul.f32 %v3260, %v3264
  %3268 = vrot.lane.b32.xlu0 %v3266, 64
  %v3269 = vpop.permute.xlu0 %3268
  %v3271 = vadd.f32 %v3079, %v3269
  %v3272 = vtanh.pop %v3271
  %v3273 = vsub.f32 1.0, %v3260
  %3275 = vrot.lane.b32.xlu0 %v3272, 96
  %v3276 = vpop.permute.xlu0 %3275
  %v3278 = vmul.f32 %v3273, %v3276
  %v3279 = vmul.f32 %v3260, %v3069
  %v3280 = vadd.f32 %v3278, %v3279
  %3282 = vrot.lane.b32.xlu0 %v3178, 96
  %v3283 = vpop.permute.xlu0 %3282
  %3285 = vst.msk [vmem:[#allocation2 + $0x1c] sm:$0x3] %vm273, %v3283
  %3286 = vst.msk [vmem:[#allocation2 + $0x2] sm:$0x3] %vm275, %v3280
  %v3287 = vmul.f32 %v59, %v37
  %v3288 = vadd.f32 %v3287, %v41
  %v3289 = vmul.f32 %v53, %v45
  %v3290 = vadd.f32 %v3289, %v49
  %v3291 = vsel %vm63, %v3283, 0
  %3293 = vmatprep.subr.mxu0 0.0
  %3294 = vmatpush1.msra.mxu0 %v13
  %3295 = vmatprep.subr.mxu0 0.0
  %3296 = vmatpush1.msra.mxu0 %v14
  %3297 = vmatprep.subr.mxu0 0.0
  %3298 = vmatpush1.msra.mxu0 %v15
  %3299 = vmatprep.subr.mxu0 0.0
  %3300 = vmatpush1.msra.mxu0 %v16
  %3301 = vmatprep.subr.mxu0 0.0
  %3302 = vmatpush1.msra.mxu0 0.0
  %3303 = vmatprep.subr.mxu0 0.0
  %3304 = vmatpush1.msra.mxu0 0.0
  %3305 = vmatprep.subr.mxu0 0.0
  %3306 = vmatpush1.msra.mxu0 0.0
  %3307 = vmatprep.subr.mxu0 0.0
  %3308 = vmatpush1.msra.mxu0 0.0
  %3309 = vmatprep.subr.mxu0 0.0
  %3310 = vmatpush1.msra.mxu0 0.0
  %3311 = vmatprep.subr.mxu0 0.0
  %3312 = vmatpush1.msra.mxu0 0.0
  %3313 = vmatprep.subr.mxu0 0.0
  %3314 = vmatpush1.msra.mxu0 0.0
  %3315 = vmatprep.subr.mxu0 0.0
  %3316 = vmatpush1.msra.mxu0 0.0
  %3317 = vmatprep.subr.mxu0 0.0
  %3318 = vmatpush1.msra.mxu0 0.0
  %3319 = vmatprep.subr.mxu0 0.0
  %3320 = vmatpush1.msra.mxu0 0.0
  %3321 = vmatprep.subr.mxu0 0.0
  %3322 = vmatpush1.msra.mxu0 0.0
  %3323 = vmatprep.subr.mxu0 0.0
  %3324 = vmatpush1.msra.mxu0 0.0
  %3325 = vmatprep.subr.mxu0 0.0
  %3326 = vmatpush1.msra.mxu0 0.0
  %3327 = vmatprep.subr.mxu0 0.0
  %3328 = vmatpush1.msra.mxu0 0.0
  %3329 = vmatprep.subr.mxu0 0.0
  %3330 = vmatpush1.msra.mxu0 0.0
  %3331 = vmatprep.subr.mxu0 0.0
  %3332 = vmatpush1.msra.mxu0 0.0
  %3333 = vmatprep.subr.mxu0 0.0
  %3334 = vmatpush1.msra.mxu0 0.0
  %3335 = vmatprep.subr.mxu0 0.0
  %3336 = vmatpush1.msra.mxu0 0.0
  %3337 = vmatprep.subr.mxu0 0.0
  %3338 = vmatpush1.msra.mxu0 0.0
  %3339 = vmatprep.subr.mxu0 0.0
  %3340 = vmatpush1.msra.mxu0 0.0
  %3341 = vmatprep.subr.mxu0 0.0
  %3342 = vmatpush1.msra.mxu0 0.0
  %3343 = vmatprep.subr.mxu0 0.0
  %3344 = vmatpush1.msra.mxu0 0.0
  %3345 = vmatprep.subr.mxu0 0.0
  %3346 = vmatpush1.msra.mxu0 0.0
  %3347 = vmatprep.subr.mxu0 0.0
  %3348 = vmatpush1.msra.mxu0 0.0
  %3349 = vmatprep.subr.mxu0 0.0
  %3350 = vmatpush1.msra.mxu0 0.0
  %3351 = vmatprep.subr.mxu0 0.0
  %3352 = vmatpush1.msra.mxu0 0.0
  %3353 = vmatprep.subr.mxu0 0.0
  %3354 = vmatpush1.msra.mxu0 0.0
  %3355 = vmatprep.subr.mxu0 0.0
  %3356 = vmatpush1.msra.mxu0 0.0
  %3357 = vmatprep.mubr.f32.mxu0 0.0
  %3358 = vmatmul.mubr.f32.gmra.mrb[0].mxu0 %v3291
  %v3359 = vpop.f32.mrb[0].mxu0
  %v3360 = vadd.f32 0.0, %v3359
  %v3361 = vpop.f32.mrb[0].mxu0
  %3362 = vdwg.mxu0
  %v3363 = vadd.f32 %v3288, %v3360
  %v3364 = vxor.u32 %v3363, 2147483648
  %v3365 = vmul.f32 %v3364, 1.442695
  %v3366 = vpow.pop %v3365
  %v3367 = vadd.f32 %v3366, 1.0
  %v3368 = vrcp.pop %v3367
  %v3369 = vmul.f32 1.0, %v3368
  %v3370 = vadd.f32 %v3360, %v146
  %3372 = vrot.lane.b32.xlu0 %v3370, 64
  %v3373 = vpop.permute.xlu0 %3372
  %v3375 = vmul.f32 %v3369, %v3373
  %3377 = vrot.lane.b32.xlu0 %v3375, 64
  %v3378 = vpop.permute.xlu0 %3377
  %v3380 = vadd.f32 %v3288, %v3378
  %v3381 = vtanh.pop %v3380
  %v3382 = vsub.f32 1.0, %v3369
  %3384 = vrot.lane.b32.xlu0 %v3381, 96
  %v3385 = vpop.permute.xlu0 %3384
  %v3387 = vmul.f32 %v3382, %v3385
  %v3388 = vmul.f32 %v3369, %v3178
  %v3389 = vadd.f32 %v3387, %v3388
  %3391 = vrot.lane.b32.xlu0 %v3280, 96
  %v3392 = vpop.permute.xlu0 %3391
  %v3393 = vsel %vm63, %v3392, 0
  %3395 = vmatprep.subr.mxu0 0.0
  %3396 = vmatpush1.msra.mxu0 %v20
  %3397 = vmatprep.subr.mxu0 0.0
  %3398 = vmatpush1.msra.mxu0 %v21
  %3399 = vmatprep.subr.mxu0 0.0
  %3400 = vmatpush1.msra.mxu0 %v22
  %3401 = vmatprep.subr.mxu0 0.0
  %3402 = vmatpush1.msra.mxu0 %v23
  %3403 = vmatprep.subr.mxu0 0.0
  %3404 = vmatpush1.msra.mxu0 0.0
  %3405 = vmatprep.subr.mxu0 0.0
  %3406 = vmatpush1.msra.mxu0 0.0
  %3407 = vmatprep.subr.mxu0 0.0
  %3408 = vmatpush1.msra.mxu0 0.0
  %3409 = vmatprep.subr.mxu0 0.0
  %3410 = vmatpush1.msra.mxu0 0.0
  %3411 = vmatprep.subr.mxu0 0.0
  %3412 = vmatpush1.msra.mxu0 0.0
  %3413 = vmatprep.subr.mxu0 0.0
  %3414 = vmatpush1.msra.mxu0 0.0
  %3415 = vmatprep.subr.mxu0 0.0
  %3416 = vmatpush1.msra.mxu0 0.0
  %3417 = vmatprep.subr.mxu0 0.0
  %3418 = vmatpush1.msra.mxu0 0.0
  %3419 = vmatprep.subr.mxu0 0.0
  %3420 = vmatpush1.msra.mxu0 0.0
  %3421 = vmatprep.subr.mxu0 0.0
  %3422 = vmatpush1.msra.mxu0 0.0
  %3423 = vmatprep.subr.mxu0 0.0
  %3424 = vmatpush1.msra.mxu0 0.0
  %3425 = vmatprep.subr.mxu0 0.0
  %3426 = vmatpush1.msra.mxu0 0.0
  %3427 = vmatprep.subr.mxu0 0.0
  %3428 = vmatpush1.msra.mxu0 0.0
  %3429 = vmatprep.subr.mxu0 0.0
  %3430 = vmatpush1.msra.mxu0 0.0
  %3431 = vmatprep.subr.mxu0 0.0
  %3432 = vmatpush1.msra.mxu0 0.0
  %3433 = vmatprep.subr.mxu0 0.0
  %3434 = vmatpush1.msra.mxu0 0.0
  %3435 = vmatprep.subr.mxu0 0.0
  %3436 = vmatpush1.msra.mxu0 0.0
  %3437 = vmatprep.subr.mxu0 0.0
  %3438 = vmatpush1.msra.mxu0 0.0
  %3439 = vmatprep.subr.mxu0 0.0
  %3440 = vmatpush1.msra.mxu0 0.0
  %3441 = vmatprep.subr.mxu0 0.0
  %3442 = vmatpush1.msra.mxu0 0.0
  %3443 = vmatprep.subr.mxu0 0.0
  %3444 = vmatpush1.msra.mxu0 0.0
  %3445 = vmatprep.subr.mxu0 0.0
  %3446 = vmatpush1.msra.mxu0 0.0
  %3447 = vmatprep.subr.mxu0 0.0
  %3448 = vmatpush1.msra.mxu0 0.0
  %3449 = vmatprep.subr.mxu0 0.0
  %3450 = vmatpush1.msra.mxu0 0.0
  %3451 = vmatprep.subr.mxu0 0.0
  %3452 = vmatpush1.msra.mxu0 0.0
  %3453 = vmatprep.subr.mxu0 0.0
  %3454 = vmatpush1.msra.mxu0 0.0
  %3455 = vmatprep.subr.mxu0 0.0
  %3456 = vmatpush1.msra.mxu0 0.0
  %3457 = vmatprep.subr.mxu0 0.0
  %3458 = vmatpush1.msra.mxu0 0.0
  %3459 = vmatprep.mubr.f32.mxu0 0.0
  %3460 = vmatmul.mubr.f32.gmra.mrb[0].mxu0 %v3393
  %v3461 = vpop.f32.mrb[0].mxu0
  %v3462 = vadd.f32 0.0, %v3461
  %v3463 = vpop.f32.mrb[0].mxu0
  %3464 = vdwg.mxu0
  %v3465 = vadd.f32 %v3290, %v3462
  %v3466 = vxor.u32 %v3465, 2147483648
  %v3467 = vmul.f32 %v3466, 1.442695
  %v3468 = vpow.pop %v3467
  %v3469 = vadd.f32 %v3468, 1.0
  %v3470 = vrcp.pop %v3469
  %v3471 = vmul.f32 1.0, %v3470
  %v3472 = vadd.f32 %v3462, %v247
  %3474 = vrot.lane.b32.xlu0 %v3472, 64
  %v3475 = vpop.permute.xlu0 %3474
  %v3477 = vmul.f32 %v3471, %v3475
  %3479 = vrot.lane.b32.xlu0 %v3477, 64
  %v3480 = vpop.permute.xlu0 %3479
  %v3482 = vadd.f32 %v3290, %v3480
  %v3483 = vtanh.pop %v3482
  %v3484 = vsub.f32 1.0, %v3471
  %3486 = vrot.lane.b32.xlu0 %v3483, 96
  %v3487 = vpop.permute.xlu0 %3486
  %v3489 = vmul.f32 %v3484, %v3487
  %v3490 = vmul.f32 %v3471, %v3280
  %v3491 = vadd.f32 %v3489, %v3490
  %3493 = vrot.lane.b32.xlu0 %v3389, 96
  %v3494 = vpop.permute.xlu0 %3493
  %3496 = vst.msk [vmem:[#allocation2 + $0x1e] sm:$0x3] %vm273, %v3494
  %3497 = vst.msk [vmem:[#allocation2] sm:$0x3] %vm275, %v3491
  %v3498 = vld [vmem:[%s1 + $0x60] sm:$0xff]
  %v3499 = vld [vmem:[%s1 + $0x68] sm:$0xff]
  %v3500 = vld [vmem:[%s1 + $0x70] sm:$0xff]
  %v3501 = vld [vmem:[%s1 + $0x78] sm:$0xff]
  %v3502 = vld [vmem:[%s1 + $0x80] sm:$0xff]
  %v3503 = vld [vmem:[%s1 + $0x88] sm:$0xff]
  %v3504 = vld [vmem:[%s1 + $0x90] sm:$0xff]
  %v3505 = vld [vmem:[%s1 + $0x98] sm:$0xff]
  %v3506 = vld [vmem:[%s1 + $0xa0] sm:$0xff]
  %v3507 = vld [vmem:[%s1 + $0xa8] sm:$0xff]
  %v3508 = vld [vmem:[%s1 + $0xb0] sm:$0xff]
  %v3509 = vld [vmem:[%s1 + $0xb8] sm:$0xff]
  %v3510 = vld [vmem:[%s1 + $0xc0] sm:$0x1]
  %v3511 = vld [vmem:[%s1 + $0xc1] sm:$0x1]
  %v3512 = vld [vmem:[%s1 + $0xc8] sm:$0xff]
  %v3513 = vld [vmem:[%s1 + $0xd0] sm:$0xff]
  %v3514 = vld [vmem:[%s1 + $0xd8] sm:$0xff]
  %v3515 = vld [vmem:[%s1 + $0xe0] sm:$0xff]
  %v3516 = vld [vmem:[%s1 + $0xe8] sm:$0xff]
  %v3517 = vld [vmem:[%s1 + $0xf0] sm:$0xff]
  %v3518 = vld [vmem:[%s1 + $0xf8] sm:$0xff]
  %v3519 = vld [vmem:[%s1 + $0x100] sm:$0xff]
  %v3520 = vld [vmem:[%s1 + $0x108] sm:$0xff]
  %v3521 = vld [vmem:[%s1 + $0x110] sm:$0xff]
  %v3522 = vld [vmem:[%s1 + $0x118] sm:$0xff]
  %v3523 = vld [vmem:[%s1 + $0x120] sm:$0xff]
  %v3524 = vld [vmem:[%s1 + $0x128] sm:$0x1]
  %v3525 = vld [vmem:[%s1 + $0x129] sm:$0x1]
  %v3526 = vlaneseq
  %v3527 = vshrl.u32 %v3526, 7
  %v3528 = vsub.s32 0, %v3527
  %v3529 = vrot.slane %v3511, %v3528
  %v3530 = vlaneseq
  %v3531 = vshrl.u32 %v3530, 7
  %v3532 = vsub.s32 0, %v3531
  %v3533 = vrot.slane %v3525, %v3532
  %v3534 = vld [vmem:[#allocation2] sm:$0xff]
  %v3535 = vld [vmem:[#allocation2 + $0x8] sm:$0xff]
  %v3536 = vld [vmem:[#allocation2 + $0x10] sm:$0xff]
  %v3537 = vld [vmem:[#allocation2 + $0x18] sm:$0xff]
  %v3538 = vlaneseq
  %v3539 = vshrl.u32 %v3538, 7
  %v3540 = vsub.s32 0, %v3539
  %v3541 = vrot.slane %v3510, %v3540
  %vm3542 = vcmask 523264
  %v3544 = vsel %vm3542, %v3534, 0
  %v3547 = vsel %vm3542, %v3535, 0
  %v3550 = vsel %vm3542, %v3536, 0
  %v3553 = vsel %vm3542, %v3537, 0
  %3555 = vmatprep.subr.mxu0 0.0
  %3556 = vmatpush1.msra.mxu0 %v3498
  %3557 = vmatprep.subr.mxu0 0.0
  %3558 = vmatpush1.msra.mxu0 %v3499
  %3559 = vmatprep.subr.mxu0 0.0
  %3560 = vmatpush1.msra.mxu0 %v3500
  %3561 = vmatprep.subr.mxu0 0.0
  %3562 = vmatpush1.msra.mxu0 %v3501
  %3563 = vmatprep.subr.mxu0 0.0
  %3564 = vmatpush1.msra.mxu0 %v3502
  %3565 = vmatprep.subr.mxu0 0.0
  %3566 = vmatpush1.msra.mxu0 %v3503
  %3567 = vmatprep.subr.mxu0 0.0
  %3568 = vmatpush1.msra.mxu0 %v3504
  %3569 = vmatprep.subr.mxu0 0.0
  %3570 = vmatpush1.msra.mxu0 %v3505
  %3571 = vmatprep.subr.mxu0 0.0
  %3572 = vmatpush1.msra.mxu0 0.0
  %3573 = vmatprep.subr.mxu0 0.0
  %3574 = vmatpush1.msra.mxu0 0.0
  %3575 = vmatprep.subr.mxu0 0.0
  %3576 = vmatpush1.msra.mxu0 0.0
  %3577 = vmatprep.subr.mxu0 0.0
  %3578 = vmatpush1.msra.mxu0 0.0
  %3579 = vmatprep.subr.mxu0 0.0
  %3580 = vmatpush1.msra.mxu0 0.0
  %3581 = vmatprep.subr.mxu0 0.0
  %3582 = vmatpush1.msra.mxu0 0.0
  %3583 = vmatprep.subr.mxu0 0.0
  %3584 = vmatpush1.msra.mxu0 0.0
  %3585 = vmatprep.subr.mxu0 0.0
  %3586 = vmatpush1.msra.mxu0 0.0
  %3587 = vmatprep.subr.mxu0 0.0
  %3588 = vmatpush1.msra.mxu0 0.0
  %3589 = vmatprep.subr.mxu0 0.0
  %3590 = vmatpush1.msra.mxu0 0.0
  %3591 = vmatprep.subr.mxu0 0.0
  %3592 = vmatpush1.msra.mxu0 0.0
  %3593 = vmatprep.subr.mxu0 0.0
  %3594 = vmatpush1.msra.mxu0 0.0
  %3595 = vmatprep.subr.mxu0 0.0
  %3596 = vmatpush1.msra.mxu0 0.0
  %3597 = vmatprep.subr.mxu0 0.0
  %3598 = vmatpush1.msra.mxu0 0.0
  %3599 = vmatprep.subr.mxu0 0.0
  %3600 = vmatpush1.msra.mxu0 0.0
  %3601 = vmatprep.subr.mxu0 0.0
  %3602 = vmatpush1.msra.mxu0 0.0
  %3603 = vmatprep.subr.mxu0 0.0
  %3604 = vmatpush1.msra.mxu0 0.0
  %3605 = vmatprep.subr.mxu0 0.0
  %3606 = vmatpush1.msra.mxu0 0.0
  %3607 = vmatprep.subr.mxu0 0.0
  %3608 = vmatpush1.msra.mxu0 0.0
  %3609 = vmatprep.subr.mxu0 0.0
  %3610 = vmatpush1.msra.mxu0 0.0
  %3611 = vmatprep.subr.mxu0 0.0
  %3612 = vmatpush1.msra.mxu0 0.0
  %3613 = vmatprep.subr.mxu0 0.0
  %3614 = vmatpush1.msra.mxu0 0.0
  %3615 = vmatprep.subr.mxu0 0.0
  %3616 = vmatpush1.msra.mxu0 0.0
  %3617 = vmatprep.subr.mxu0 0.0
  %3618 = vmatpush1.msra.mxu0 0.0
  %3619 = vmatprep.mubr.f32.mxu0 0.0
  %3620 = vmatmul.mubr.f32.gmra.mrb[0].mxu0 %v3544
  %v3621 = vpop.f32.mrb[0].mxu0
  %v3622 = vadd.f32 %v3541, %v3621
  %v3623 = vpop.f32.mrb[0].mxu0
  %3624 = vmatprep.mubr.f32.mxu0 0.0
  %3625 = vmatmul.mubr.f32.gmra.mrb[0].mxu0 %v3547
  %v3626 = vpop.f32.mrb[0].mxu0
  %v3627 = vadd.f32 %v3541, %v3626
  %v3628 = vpop.f32.mrb[0].mxu0
  %3629 = vmatprep.mubr.f32.mxu0 0.0
  %3630 = vmatmul.mubr.f32.gmra.mrb[0].mxu0 %v3550
  %v3631 = vpop.f32.mrb[0].mxu0
  %v3632 = vadd.f32 %v3541, %v3631
  %v3633 = vpop.f32.mrb[0].mxu0
  %3634 = vmatprep.mubr.f32.mxu0 0.0
  %3635 = vmatmul.mubr.f32.gmra.mrb[0].mxu0 %v3553
  %v3636 = vpop.f32.mrb[0].mxu0
  %v3637 = vadd.f32 %v3541, %v3636
  %v3638 = vpop.f32.mrb[0].mxu0
  %3639 = vdwg.mxu0
  %v3640 = vlaneseq
  %v3641 = vshrl.u32 %v3640, 7
  %v3642 = vsub.s32 0, %v3641
  %v3643 = vrot.slane %v3524, %v3642
  %3644 = vmatprep.subr.mxu0 0.0
  %3645 = vmatpush1.msra.mxu0 %v3512
  %3646 = vmatprep.subr.mxu0 0.0
  %3647 = vmatpush1.msra.mxu0 %v3513
  %3648 = vmatprep.subr.mxu0 0.0
  %3649 = vmatpush1.msra.mxu0 %v3514
  %3650 = vmatprep.subr.mxu0 0.0
  %3651 = vmatpush1.msra.mxu0 %v3515
  %3652 = vmatprep.subr.mxu0 0.0
  %3653 = vmatpush1.msra.mxu0 %v3516
  %3654 = vmatprep.subr.mxu0 0.0
  %3655 = vmatpush1.msra.mxu0 %v3517
  %3656 = vmatprep.subr.mxu0 0.0
  %3657 = vmatpush1.msra.mxu0 %v3518
  %3658 = vmatprep.subr.mxu0 0.0
  %3659 = vmatpush1.msra.mxu0 %v3519
  %3660 = vmatprep.subr.mxu0 0.0
  %3661 = vmatpush1.msra.mxu0 0.0
  %3662 = vmatprep.subr.mxu0 0.0
  %3663 = vmatpush1.msra.mxu0 0.0
  %3664 = vmatprep.subr.mxu0 0.0
  %3665 = vmatpush1.msra.mxu0 0.0
  %3666 = vmatprep.subr.mxu0 0.0
  %3667 = vmatpush1.msra.mxu0 0.0
  %3668 = vmatprep.subr.mxu0 0.0
  %3669 = vmatpush1.msra.mxu0 0.0
  %3670 = vmatprep.subr.mxu0 0.0
  %3671 = vmatpush1.msra.mxu0 0.0
  %3672 = vmatprep.subr.mxu0 0.0
  %3673 = vmatpush1.msra.mxu0 0.0
  %3674 = vmatprep.subr.mxu0 0.0
  %3675 = vmatpush1.msra.mxu0 0.0
  %3676 = vmatprep.subr.mxu0 0.0
  %3677 = vmatpush1.msra.mxu0 0.0
  %3678 = vmatprep.subr.mxu0 0.0
  %3679 = vmatpush1.msra.mxu0 0.0
  %3680 = vmatprep.subr.mxu0 0.0
  %3681 = vmatpush1.msra.mxu0 0.0
  %3682 = vmatprep.subr.mxu0 0.0
  %3683 = vmatpush1.msra.mxu0 0.0
  %3684 = vmatprep.subr.mxu0 0.0
  %3685 = vmatpush1.msra.mxu0 0.0
  %3686 = vmatprep.subr.mxu0 0.0
  %3687 = vmatpush1.msra.mxu0 0.0
  %3688 = vmatprep.subr.mxu0 0.0
  %3689 = vmatpush1.msra.mxu0 0.0
  %3690 = vmatprep.subr.mxu0 0.0
  %3691 = vmatpush1.msra.mxu0 0.0
  %3692 = vmatprep.subr.mxu0 0.0
  %3693 = vmatpush1.msra.mxu0 0.0
  %3694 = vmatprep.subr.mxu0 0.0
  %3695 = vmatpush1.msra.mxu0 0.0
  %3696 = vmatprep.subr.mxu0 0.0
  %3697 = vmatpush1.msra.mxu0 0.0
  %3698 = vmatprep.subr.mxu0 0.0
  %3699 = vmatpush1.msra.mxu0 0.0
  %3700 = vmatprep.subr.mxu0 0.0
  %3701 = vmatpush1.msra.mxu0 0.0
  %3702 = vmatprep.subr.mxu0 0.0
  %3703 = vmatpush1.msra.mxu0 0.0
  %3704 = vmatprep.subr.mxu0 0.0
  %3705 = vmatpush1.msra.mxu0 0.0
  %3706 = vmatprep.subr.mxu0 0.0
  %3707 = vmatpush1.msra.mxu0 0.0
  %3708 = vmatprep.mubr.f32.mxu0 0.0
  %3709 = vmatmul.mubr.f32.gmra.mrb[0].mxu0 %v3544
  %v3710 = vpop.f32.mrb[0].mxu0
  %v3711 = vadd.f32 %v3643, %v3710
  %v3712 = vpop.f32.mrb[0].mxu0
  %3713 = vmatprep.mubr.f32.mxu0 0.0
  %3714 = vmatmul.mubr.f32.gmra.mrb[0].mxu0 %v3547
  %v3715 = vpop.f32.mrb[0].mxu0
  %v3716 = vadd.f32 %v3643, %v3715
  %v3717 = vpop.f32.mrb[0].mxu0
  %3718 = vmatprep.mubr.f32.mxu0 0.0
  %3719 = vmatmul.mubr.f32.gmra.mrb[0].mxu0 %v3550
  %v3720 = vpop.f32.mrb[0].mxu0
  %v3721 = vadd.f32 %v3643, %v3720
  %v3722 = vpop.f32.mrb[0].mxu0
  %3723 = vmatprep.mubr.f32.mxu0 0.0
  %3724 = vmatmul.mubr.f32.gmra.mrb[0].mxu0 %v3553
  %v3725 = vpop.f32.mrb[0].mxu0
  %v3726 = vadd.f32 %v3643, %v3725
  %v3727 = vpop.f32.mrb[0].mxu0
  %3728 = vdwg.mxu0
  %3729 = vmatprep.subr.mxu0 0.0
  %3730 = vmatpush1.msra.mxu0 %v3506
  %3731 = vmatprep.subr.mxu0 0.0
  %3732 = vmatpush1.msra.mxu0 %v3507
  %3733 = vmatprep.subr.mxu0 0.0
  %3734 = vmatpush1.msra.mxu0 %v3508
  %3735 = vmatprep.subr.mxu0 0.0
  %3736 = vmatpush1.msra.mxu0 %v3509
  %3737 = vmatprep.subr.mxu0 0.0
  %3738 = vmatpush1.msra.mxu0 0.0
  %3739 = vmatprep.subr.mxu0 0.0
  %3740 = vmatpush1.msra.mxu0 0.0
  %3741 = vmatprep.subr.mxu0 0.0
  %3742 = vmatpush1.msra.mxu0 0.0
  %3743 = vmatprep.subr.mxu0 0.0
  %3744 = vmatpush1.msra.mxu0 0.0
  %3745 = vmatprep.subr.mxu0 0.0
  %3746 = vmatpush1.msra.mxu0 0.0
  %3747 = vmatprep.subr.mxu0 0.0
  %3748 = vmatpush1.msra.mxu0 0.0
  %3749 = vmatprep.subr.mxu0 0.0
  %3750 = vmatpush1.msra.mxu0 0.0
  %3751 = vmatprep.subr.mxu0 0.0
  %3752 = vmatpush1.msra.mxu0 0.0
  %3753 = vmatprep.subr.mxu0 0.0
  %3754 = vmatpush1.msra.mxu0 0.0
  %3755 = vmatprep.subr.mxu0 0.0
  %3756 = vmatpush1.msra.mxu0 0.0
  %3757 = vmatprep.subr.mxu0 0.0
  %3758 = vmatpush1.msra.mxu0 0.0
  %3759 = vmatprep.subr.mxu0 0.0
  %3760 = vmatpush1.msra.mxu0 0.0
  %3761 = vmatprep.subr.mxu0 0.0
  %3762 = vmatpush1.msra.mxu0 0.0
  %3763 = vmatprep.subr.mxu0 0.0
  %3764 = vmatpush1.msra.mxu0 0.0
  %3765 = vmatprep.subr.mxu0 0.0
  %3766 = vmatpush1.msra.mxu0 0.0
  %3767 = vmatprep.subr.mxu0 0.0
  %3768 = vmatpush1.msra.mxu0 0.0
  %3769 = vmatprep.subr.mxu0 0.0
  %3770 = vmatpush1.msra.mxu0 0.0
  %3771 = vmatprep.subr.mxu0 0.0
  %3772 = vmatpush1.msra.mxu0 0.0
  %3773 = vmatprep.subr.mxu0 0.0
  %3774 = vmatpush1.msra.mxu0 0.0
  %3775 = vmatprep.subr.mxu0 0.0
  %3776 = vmatpush1.msra.mxu0 0.0
  %3777 = vmatprep.subr.mxu0 0.0
  %3778 = vmatpush1.msra.mxu0 0.0
  %3779 = vmatprep.subr.mxu0 0.0
  %3780 = vmatpush1.msra.mxu0 0.0
  %3781 = vmatprep.subr.mxu0 0.0
  %3782 = vmatpush1.msra.mxu0 0.0
  %3783 = vmatprep.subr.mxu0 0.0
  %3784 = vmatpush1.msra.mxu0 0.0
  %3785 = vmatprep.subr.mxu0 0.0
  %3786 = vmatpush1.msra.mxu0 0.0
  %3787 = vmatprep.subr.mxu0 0.0
  %3788 = vmatpush1.msra.mxu0 0.0
  %3789 = vmatprep.subr.mxu0 0.0
  %3790 = vmatpush1.msra.mxu0 0.0
  %3791 = vmatprep.subr.mxu0 0.0
  %3792 = vmatpush1.msra.mxu0 0.0
  %3793 = vmatprep.mubr.f32.mxu0 0.0
  %3794 = vmatmul.mubr.f32.gmra.mrb[0].mxu0 %v65
  %v3795 = vpop.f32.mrb[0].mxu0
  %v3796 = vadd.f32 0.0, %v3795
  %v3797 = vpop.f32.mrb[0].mxu0
  %3798 = vdwg.mxu0
  %v3799 = vadd.f32 %v3622, %v3796
  %v3800 = vxor.u32 %v3799, 2147483648
  %v3801 = vmul.f32 %v3800, 1.442695
  %v3802 = vpow.pop %v3801
  %v3803 = vadd.f32 %v3802, 1.0
  %v3804 = vrcp.pop %v3803
  %v3805 = vmul.f32 1.0, %v3804
  %3807 = vrot.lane.b32.xlu0 %v3529, 64
  %v3808 = vpop.permute.xlu0 %3807
  %v3810 = vadd.f32 %v3796, %v3808
  %3812 = vrot.lane.b32.xlu0 %v3810, 64
  %v3813 = vpop.permute.xlu0 %3812
  %v3815 = vmul.f32 %v3805, %v3813
  %3817 = vrot.lane.b32.xlu0 %v3815, 64
  %v3818 = vpop.permute.xlu0 %3817
  %v3820 = vadd.f32 %v3622, %v3818
  %v3821 = vtanh.pop %v3820
  %v3822 = vsub.f32 1.0, %v3805
  %3824 = vrot.lane.b32.xlu0 %v3821, 96
  %v3825 = vpop.permute.xlu0 %3824
  %v3827 = vmul.f32 %v3822, %v3825
  %v3828 = vmul.f32 %v3805, 0.0
  %v3829 = vadd.f32 %v3827, %v3828
  %3830 = vmatprep.subr.mxu0 0.0
  %3831 = vmatpush1.msra.mxu0 %v3520
  %3832 = vmatprep.subr.mxu0 0.0
  %3833 = vmatpush1.msra.mxu0 %v3521
  %3834 = vmatprep.subr.mxu0 0.0
  %3835 = vmatpush1.msra.mxu0 %v3522
  %3836 = vmatprep.subr.mxu0 0.0
  %3837 = vmatpush1.msra.mxu0 %v3523
  %3838 = vmatprep.subr.mxu0 0.0
  %3839 = vmatpush1.msra.mxu0 0.0
  %3840 = vmatprep.subr.mxu0 0.0
  %3841 = vmatpush1.msra.mxu0 0.0
  %3842 = vmatprep.subr.mxu0 0.0
  %3843 = vmatpush1.msra.mxu0 0.0
  %3844 = vmatprep.subr.mxu0 0.0
  %3845 = vmatpush1.msra.mxu0 0.0
  %3846 = vmatprep.subr.mxu0 0.0
  %3847 = vmatpush1.msra.mxu0 0.0
  %3848 = vmatprep.subr.mxu0 0.0
  %3849 = vmatpush1.msra.mxu0 0.0
  %3850 = vmatprep.subr.mxu0 0.0
  %3851 = vmatpush1.msra.mxu0 0.0
  %3852 = vmatprep.subr.mxu0 0.0
  %3853 = vmatpush1.msra.mxu0 0.0
  %3854 = vmatprep.subr.mxu0 0.0
  %3855 = vmatpush1.msra.mxu0 0.0
  %3856 = vmatprep.subr.mxu0 0.0
  %3857 = vmatpush1.msra.mxu0 0.0
  %3858 = vmatprep.subr.mxu0 0.0
  %3859 = vmatpush1.msra.mxu0 0.0
  %3860 = vmatprep.subr.mxu0 0.0
  %3861 = vmatpush1.msra.mxu0 0.0
  %3862 = vmatprep.subr.mxu0 0.0
  %3863 = vmatpush1.msra.mxu0 0.0
  %3864 = vmatprep.subr.mxu0 0.0
  %3865 = vmatpush1.msra.mxu0 0.0
  %3866 = vmatprep.subr.mxu0 0.0
  %3867 = vmatpush1.msra.mxu0 0.0
  %3868 = vmatprep.subr.mxu0 0.0
  %3869 = vmatpush1.msra.mxu0 0.0
  %3870 = vmatprep.subr.mxu0 0.0
  %3871 = vmatpush1.msra.mxu0 0.0
  %3872 = vmatprep.subr.mxu0 0.0
  %3873 = vmatpush1.msra.mxu0 0.0
  %3874 = vmatprep.subr.mxu0 0.0
  %3875 = vmatpush1.msra.mxu0 0.0
  %3876 = vmatprep.subr.mxu0 0.0
  %3877 = vmatpush1.msra.mxu0 0.0
  %3878 = vmatprep.subr.mxu0 0.0
  %3879 = vmatpush1.msra.mxu0 0.0
  %3880 = vmatprep.subr.mxu0 0.0
  %3881 = vmatpush1.msra.mxu0 0.0
  %3882 = vmatprep.subr.mxu0 0.0
  %3883 = vmatpush1.msra.mxu0 0.0
  %3884 = vmatprep.subr.mxu0 0.0
  %3885 = vmatpush1.msra.mxu0 0.0
  %3886 = vmatprep.subr.mxu0 0.0
  %3887 = vmatpush1.msra.mxu0 0.0
  %3888 = vmatprep.subr.mxu0 0.0
  %3889 = vmatpush1.msra.mxu0 0.0
  %3890 = vmatprep.subr.mxu0 0.0
  %3891 = vmatpush1.msra.mxu0 0.0
  %3892 = vmatprep.subr.mxu0 0.0
  %3893 = vmatpush1.msra.mxu0 0.0
  %3894 = vmatprep.mubr.f32.mxu0 0.0
  %3895 = vmatmul.mubr.f32.gmra.mrb[0].mxu0 %v65
  %v3896 = vpop.f32.mrb[0].mxu0
  %v3897 = vadd.f32 0.0, %v3896
  %v3898 = vpop.f32.mrb[0].mxu0
  %3899 = vdwg.mxu0
  %v3901 = vrot.slane %v3897, 2
  %v3903 = vadd.f32 %v3726, %v3901
  %v3904 = vxor.u32 %v3903, 2147483648
  %v3905 = vmul.f32 %v3904, 1.442695
  %v3906 = vpow.pop %v3905
  %v3907 = vadd.f32 %v3906, 1.0
  %v3908 = vrcp.pop %v3907
  %v3909 = vmul.f32 1.0, %v3908
  %3911 = vrot.lane.b32.xlu0 %v3533, 64
  %v3912 = vpop.permute.xlu0 %3911
  %v3914 = vadd.f32 %v3897, %v3912
  %v3916 = vrot.slane %v3914, 2
  %3917 = vrot.lane.b32.xlu0 %v3916, 64
  %v3918 = vpop.permute.xlu0 %3917
  %v3920 = vmul.f32 %v3909, %v3918
  %3922 = vrot.lane.b32.xlu0 %v3920, 64
  %v3923 = vpop.permute.xlu0 %3922
  %v3925 = vadd.f32 %v3726, %v3923
  %v3926 = vtanh.pop %v3925
  %v3927 = vsub.f32 1.0, %v3909
  %3929 = vrot.lane.b32.xlu0 %v3926, 96
  %v3930 = vpop.permute.xlu0 %3929
  %v3932 = vmul.f32 %v3927, %v3930
  %v3933 = vmul.f32 %v3909, 0.0
  %v3934 = vadd.f32 %v3932, %v3933
  %v3937 = vunpack.c.l.s4 1983009808
  %v3938 = vunpack.c.0.s8 %v3937
  %v3939 = vlaneseq
  %v3940 = vshrl.u32 %v3939, 7
  %v3941 = vsub.s32 %v3938, %v3940
  %v3942 = vrot.slane %v3829, %v3941
  %3943 = vrot.lane.b32.xlu0 %v3942, 96
  %v3944 = vpop.permute.xlu0 %3943
  %3946 = vst.msk [vmem:[#allocation3] sm:$0x3] %vm273, %v3944
  %v3948 = vcombine.high %v3934, %v3934
  %v3950 = vunpack.c.l.s4 1983009808
  %v3951 = vunpack.c.0.s8 %v3950
  %v3952 = vlaneseq
  %v3953 = vshrl.u32 %v3952, 7
  %v3954 = vsub.s32 %v3951, %v3953
  %v3955 = vrot.slane %v3948, %v3954
  %v3956 = vcombine.high %v3955, %v3955
  %3957 = vrot.lane.b32.xlu0 %v3956, 64
  %v3958 = vpop.permute.xlu0 %3957
  %vm3960 = vcmask 1042176
  %3961 = vst.msk [vmem:[#allocation4 + $0x6] sm:$0x3] %vm3960, %v3958
  %3962 = vrot.lane.b32.xlu0 %v3829, 96
  %v3963 = vpop.permute.xlu0 %3962
  %v3964 = vsel %vm63, %v3963, 0
  %3966 = vmatprep.subr.mxu0 0.0
  %3967 = vmatpush1.msra.mxu0 %v3506
  %3968 = vmatprep.subr.mxu0 0.0
  %3969 = vmatpush1.msra.mxu0 %v3507
  %3970 = vmatprep.subr.mxu0 0.0
  %3971 = vmatpush1.msra.mxu0 %v3508
  %3972 = vmatprep.subr.mxu0 0.0
  %3973 = vmatpush1.msra.mxu0 %v3509
  %3974 = vmatprep.subr.mxu0 0.0
  %3975 = vmatpush1.msra.mxu0 0.0
  %3976 = vmatprep.subr.mxu0 0.0
  %3977 = vmatpush1.msra.mxu0 0.0
  %3978 = vmatprep.subr.mxu0 0.0
  %3979 = vmatpush1.msra.mxu0 0.0
  %3980 = vmatprep.subr.mxu0 0.0
  %3981 = vmatpush1.msra.mxu0 0.0
  %3982 = vmatprep.subr.mxu0 0.0
  %3983 = vmatpush1.msra.mxu0 0.0
  %3984 = vmatprep.subr.mxu0 0.0
  %3985 = vmatpush1.msra.mxu0 0.0
  %3986 = vmatprep.subr.mxu0 0.0
  %3987 = vmatpush1.msra.mxu0 0.0
  %3988 = vmatprep.subr.mxu0 0.0
  %3989 = vmatpush1.msra.mxu0 0.0
  %3990 = vmatprep.subr.mxu0 0.0
  %3991 = vmatpush1.msra.mxu0 0.0
  %3992 = vmatprep.subr.mxu0 0.0
  %3993 = vmatpush1.msra.mxu0 0.0
  %3994 = vmatprep.subr.mxu0 0.0
  %3995 = vmatpush1.msra.mxu0 0.0
  %3996 = vmatprep.subr.mxu0 0.0
  %3997 = vmatpush1.msra.mxu0 0.0
  %3998 = vmatprep.subr.mxu0 0.0
  %3999 = vmatpush1.msra.mxu0 0.0
  %4000 = vmatprep.subr.mxu0 0.0
  %4001 = vmatpush1.msra.mxu0 0.0
  %4002 = vmatprep.subr.mxu0 0.0
  %4003 = vmatpush1.msra.mxu0 0.0
  %4004 = vmatprep.subr.mxu0 0.0
  %4005 = vmatpush1.msra.mxu0 0.0
  %4006 = vmatprep.subr.mxu0 0.0
  %4007 = vmatpush1.msra.mxu0 0.0
  %4008 = vmatprep.subr.mxu0 0.0
  %4009 = vmatpush1.msra.mxu0 0.0
  %4010 = vmatprep.subr.mxu0 0.0
  %4011 = vmatpush1.msra.mxu0 0.0
  %4012 = vmatprep.subr.mxu0 0.0
  %4013 = vmatpush1.msra.mxu0 0.0
  %4014 = vmatprep.subr.mxu0 0.0
  %4015 = vmatpush1.msra.mxu0 0.0
  %4016 = vmatprep.subr.mxu0 0.0
  %4017 = vmatpush1.msra.mxu0 0.0
  %4018 = vmatprep.subr.mxu0 0.0
  %4019 = vmatpush1.msra.mxu0 0.0
  %4020 = vmatprep.subr.mxu0 0.0
  %4021 = vmatpush1.msra.mxu0 0.0
  %4022 = vmatprep.subr.mxu0 0.0
  %4023 = vmatpush1.msra.mxu0 0.0
  %4024 = vmatprep.subr.mxu0 0.0
  %4025 = vmatpush1.msra.mxu0 0.0
  %4026 = vmatprep.subr.mxu0 0.0
  %4027 = vmatpush1.msra.mxu0 0.0
  %4028 = vmatprep.subr.mxu0 0.0
  %4029 = vmatpush1.msra.mxu0 0.0
  %4030 = vmatprep.mubr.f32.mxu0 0.0
  %4031 = vmatmul.mubr.f32.gmra.mrb[0].mxu0 %v3964
  %v4032 = vpop.f32.mrb[0].mxu0
  %v4033 = vadd.f32 0.0, %v4032
  %v4034 = vpop.f32.mrb[0].mxu0
  %4035 = vdwg.mxu0
  %v4037 = vrot.slane %v4033, 6
  %v4039 = vadd.f32 %v3622, %v4037
  %v4040 = vxor.u32 %v4039, 2147483648
  %v4041 = vmul.f32 %v4040, 1.442695
  %v4042 = vpow.pop %v4041
  %v4043 = vadd.f32 %v4042, 1.0
  %v4044 = vrcp.pop %v4043
  %v4045 = vmul.f32 1.0, %v4044
  %v4046 = vadd.f32 %v4033, %v3808
  %v4048 = vrot.slane %v4046, 6
  %4049 = vrot.lane.b32.xlu0 %v4048, 64
  %v4050 = vpop.permute.xlu0 %4049
  %v4052 = vmul.f32 %v4045, %v4050
  %4054 = vrot.lane.b32.xlu0 %v4052, 64
  %v4055 = vpop.permute.xlu0 %4054
  %v4057 = vadd.f32 %v3622, %v4055
  %v4058 = vtanh.pop %v4057
  %v4059 = vsub.f32 1.0, %v4045
  %4061 = vrot.lane.b32.xlu0 %v4058, 96
  %v4062 = vpop.permute.xlu0 %4061
  %v4064 = vmul.f32 %v4059, %v4062
  %v4065 = vrot.slane %v3829, 6
  %v4067 = vmul.f32 %v4045, %v4065
  %v4068 = vadd.f32 %v4064, %v4067
  %v4069 = vrot.slane %v3934, 6
  %4070 = vrot.lane.b32.xlu0 %v4069, 96
  %v4071 = vpop.permute.xlu0 %4070
  %v4072 = vsel %vm63, %v4071, 0
  %4074 = vmatprep.subr.mxu0 0.0
  %4075 = vmatpush1.msra.mxu0 %v3520
  %4076 = vmatprep.subr.mxu0 0.0
  %4077 = vmatpush1.msra.mxu0 %v3521
  %4078 = vmatprep.subr.mxu0 0.0
  %4079 = vmatpush1.msra.mxu0 %v3522
  %4080 = vmatprep.subr.mxu0 0.0
  %4081 = vmatpush1.msra.mxu0 %v3523
  %4082 = vmatprep.subr.mxu0 0.0
  %4083 = vmatpush1.msra.mxu0 0.0
  %4084 = vmatprep.subr.mxu0 0.0
  %4085 = vmatpush1.msra.mxu0 0.0
  %4086 = vmatprep.subr.mxu0 0.0
  %4087 = vmatpush1.msra.mxu0 0.0
  %4088 = vmatprep.subr.mxu0 0.0
  %4089 = vmatpush1.msra.mxu0 0.0
  %4090 = vmatprep.subr.mxu0 0.0
  %4091 = vmatpush1.msra.mxu0 0.0
  %4092 = vmatprep.subr.mxu0 0.0
  %4093 = vmatpush1.msra.mxu0 0.0
  %4094 = vmatprep.subr.mxu0 0.0
  %4095 = vmatpush1.msra.mxu0 0.0
  %4096 = vmatprep.subr.mxu0 0.0
  %4097 = vmatpush1.msra.mxu0 0.0
  %4098 = vmatprep.subr.mxu0 0.0
  %4099 = vmatpush1.msra.mxu0 0.0
  %4100 = vmatprep.subr.mxu0 0.0
  %4101 = vmatpush1.msra.mxu0 0.0
  %4102 = vmatprep.subr.mxu0 0.0
  %4103 = vmatpush1.msra.mxu0 0.0
  %4104 = vmatprep.subr.mxu0 0.0
  %4105 = vmatpush1.msra.mxu0 0.0
  %4106 = vmatprep.subr.mxu0 0.0
  %4107 = vmatpush1.msra.mxu0 0.0
  %4108 = vmatprep.subr.mxu0 0.0
  %4109 = vmatpush1.msra.mxu0 0.0
  %4110 = vmatprep.subr.mxu0 0.0
  %4111 = vmatpush1.msra.mxu0 0.0
  %4112 = vmatprep.subr.mxu0 0.0
  %4113 = vmatpush1.msra.mxu0 0.0
  %4114 = vmatprep.subr.mxu0 0.0
  %4115 = vmatpush1.msra.mxu0 0.0
  %4116 = vmatprep.subr.mxu0 0.0
  %4117 = vmatpush1.msra.mxu0 0.0
  %4118 = vmatprep.subr.mxu0 0.0
  %4119 = vmatpush1.msra.mxu0 0.0
  %4120 = vmatprep.subr.mxu0 0.0
  %4121 = vmatpush1.msra.mxu0 0.0
  %4122 = vmatprep.subr.mxu0 0.0
  %4123 = vmatpush1.msra.mxu0 0.0
  %4124 = vmatprep.subr.mxu0 0.0
  %4125 = vmatpush1.msra.mxu0 0.0
  %4126 = vmatprep.subr.mxu0 0.0
  %4127 = vmatpush1.msra.mxu0 0.0
  %4128 = vmatprep.subr.mxu0 0.0
  %4129 = vmatpush1.msra.mxu0 0.0
  %4130 = vmatprep.subr.mxu0 0.0
  %4131 = vmatpush1.msra.mxu0 0.0
  %4132 = vmatprep.subr.mxu0 0.0
  %4133 = vmatpush1.msra.mxu0 0.0
  %4134 = vmatprep.subr.mxu0 0.0
  %4135 = vmatpush1.msra.mxu0 0.0
  %4136 = vmatprep.subr.mxu0 0.0
  %4137 = vmatpush1.msra.mxu0 0.0
  %4138 = vmatprep.mubr.f32.mxu0 0.0
  %4139 = vmatmul.mubr.f32.gmra.mrb[0].mxu0 %v4072
  %v4140 = vpop.f32.mrb[0].mxu0
  %v4141 = vadd.f32 0.0, %v4140
  %v4142 = vpop.f32.mrb[0].mxu0
  %4143 = vdwg.mxu0
  %v4145 = vrot.slane %v4141, 4
  %v4147 = vadd.f32 %v3726, %v4145
  %v4148 = vxor.u32 %v4147, 2147483648
  %v4149 = vmul.f32 %v4148, 1.442695
  %v4150 = vpow.pop %v4149
  %v4151 = vadd.f32 %v4150, 1.0
  %v4152 = vrcp.pop %v4151
  %v4153 = vmul.f32 1.0, %v4152
  %v4154 = vadd.f32 %v4141, %v3912
  %v4156 = vrot.slane %v4154, 4
  %4157 = vrot.lane.b32.xlu0 %v4156, 64
  %v4158 = vpop.permute.xlu0 %4157
  %v4160 = vmul.f32 %v4153, %v4158
  %4162 = vrot.lane.b32.xlu0 %v4160, 64
  %v4163 = vpop.permute.xlu0 %4162
  %v4165 = vadd.f32 %v3726, %v4163
  %v4166 = vtanh.pop %v4165
  %v4167 = vsub.f32 1.0, %v4153
  %4169 = vrot.lane.b32.xlu0 %v4166, 96
  %v4170 = vpop.permute.xlu0 %4169
  %v4172 = vmul.f32 %v4167, %v4170
  %v4173 = vrot.slane %v3934, 2
  %v4175 = vmul.f32 %v4153, %v4173
  %v4176 = vadd.f32 %v4172, %v4175
  %v4179 = vunpack.c.l.s4 1983009808
  %v4180 = vunpack.c.0.s8 %v4179
  %v4181 = vlaneseq
  %v4182 = vshrl.u32 %v4181, 7
  %v4183 = vsub.s32 %v4180, %v4182
  %v4184 = vrot.slane %v4068, %v4183
  %v4185 = vcombine.high %v4184, %v4184
  %4187 = vst.msk [vmem:[#allocation3] sm:$0x3] %vm275, %v4185
  %v4189 = vcombine.high %v4176, %v4176
  %v4191 = vunpack.c.l.s4 1983009808
  %v4192 = vunpack.c.0.s8 %v4191
  %v4193 = vlaneseq
  %v4194 = vshrl.u32 %v4193, 7
  %v4195 = vsub.s32 %v4192, %v4194
  %v4196 = vrot.slane %v4189, %v4195
  %4197 = vrot.lane.b32.xlu0 %v4196, 32
  %v4198 = vpop.permute.xlu0 %4197
  %vm4200 = vcmask 779776
  %4201 = vst.msk [vmem:[#allocation4 + $0x6] sm:$0x3] %vm4200, %v4198
  %v4202 = vrot.slane %v4068, 2
  %4203 = vrot.lane.b32.xlu0 %v4202, 96
  %v4204 = vpop.permute.xlu0 %4203
  %v4205 = vsel %vm63, %v4204, 0
  %4207 = vmatprep.subr.mxu0 0.0
  %4208 = vmatpush1.msra.mxu0 %v3506
  %4209 = vmatprep.subr.mxu0 0.0
  %4210 = vmatpush1.msra.mxu0 %v3507
  %4211 = vmatprep.subr.mxu0 0.0
  %4212 = vmatpush1.msra.mxu0 %v3508
  %4213 = vmatprep.subr.mxu0 0.0
  %4214 = vmatpush1.msra.mxu0 %v3509
  %4215 = vmatprep.subr.mxu0 0.0
  %4216 = vmatpush1.msra.mxu0 0.0
  %4217 = vmatprep.subr.mxu0 0.0
  %4218 = vmatpush1.msra.mxu0 0.0
  %4219 = vmatprep.subr.mxu0 0.0
  %4220 = vmatpush1.msra.mxu0 0.0
  %4221 = vmatprep.subr.mxu0 0.0
  %4222 = vmatpush1.msra.mxu0 0.0
  %4223 = vmatprep.subr.mxu0 0.0
  %4224 = vmatpush1.msra.mxu0 0.0
  %4225 = vmatprep.subr.mxu0 0.0
  %4226 = vmatpush1.msra.mxu0 0.0
  %4227 = vmatprep.subr.mxu0 0.0
  %4228 = vmatpush1.msra.mxu0 0.0
  %4229 = vmatprep.subr.mxu0 0.0
  %4230 = vmatpush1.msra.mxu0 0.0
  %4231 = vmatprep.subr.mxu0 0.0
  %4232 = vmatpush1.msra.mxu0 0.0
  %4233 = vmatprep.subr.mxu0 0.0
  %4234 = vmatpush1.msra.mxu0 0.0
  %4235 = vmatprep.subr.mxu0 0.0
  %4236 = vmatpush1.msra.mxu0 0.0
  %4237 = vmatprep.subr.mxu0 0.0
  %4238 = vmatpush1.msra.mxu0 0.0
  %4239 = vmatprep.subr.mxu0 0.0
  %4240 = vmatpush1.msra.mxu0 0.0
  %4241 = vmatprep.subr.mxu0 0.0
  %4242 = vmatpush1.msra.mxu0 0.0
  %4243 = vmatprep.subr.mxu0 0.0
  %4244 = vmatpush1.msra.mxu0 0.0
  %4245 = vmatprep.subr.mxu0 0.0
  %4246 = vmatpush1.msra.mxu0 0.0
  %4247 = vmatprep.subr.mxu0 0.0
  %4248 = vmatpush1.msra.mxu0 0.0
  %4249 = vmatprep.subr.mxu0 0.0
  %4250 = vmatpush1.msra.mxu0 0.0
  %4251 = vmatprep.subr.mxu0 0.0
  %4252 = vmatpush1.msra.mxu0 0.0
  %4253 = vmatprep.subr.mxu0 0.0
  %4254 = vmatpush1.msra.mxu0 0.0
  %4255 = vmatprep.subr.mxu0 0.0
  %4256 = vmatpush1.msra.mxu0 0.0
  %4257 = vmatprep.subr.mxu0 0.0
  %4258 = vmatpush1.msra.mxu0 0.0
  %4259 = vmatprep.subr.mxu0 0.0
  %4260 = vmatpush1.msra.mxu0 0.0
  %4261 = vmatprep.subr.mxu0 0.0
  %4262 = vmatpush1.msra.mxu0 0.0
  %4263 = vmatprep.subr.mxu0 0.0
  %4264 = vmatpush1.msra.mxu0 0.0
  %4265 = vmatprep.subr.mxu0 0.0
  %4266 = vmatpush1.msra.mxu0 0.0
  %4267 = vmatprep.subr.mxu0 0.0
  %4268 = vmatpush1.msra.mxu0 0.0
  %4269 = vmatprep.subr.mxu0 0.0
  %4270 = vmatpush1.msra.mxu0 0.0
  %4271 = vmatprep.mubr.f32.mxu0 0.0
  %4272 = vmatmul.mubr.f32.gmra.mrb[0].mxu0 %v4205
  %v4273 = vpop.f32.mrb[0].mxu0
  %v4274 = vadd.f32 0.0, %v4273
  %v4275 = vpop.f32.mrb[0].mxu0
  %4276 = vdwg.mxu0
  %v4278 = vrot.slane %v4274, 4
  %v4280 = vadd.f32 %v3622, %v4278
  %v4281 = vxor.u32 %v4280, 2147483648
  %v4282 = vmul.f32 %v4281, 1.442695
  %v4283 = vpow.pop %v4282
  %v4284 = vadd.f32 %v4283, 1.0
  %v4285 = vrcp.pop %v4284
  %v4286 = vmul.f32 1.0, %v4285
  %v4287 = vadd.f32 %v4274, %v3808
  %v4289 = vrot.slane %v4287, 4
  %4290 = vrot.lane.b32.xlu0 %v4289, 64
  %v4291 = vpop.permute.xlu0 %4290
  %v4293 = vmul.f32 %v4286, %v4291
  %4295 = vrot.lane.b32.xlu0 %v4293, 64
  %v4296 = vpop.permute.xlu0 %4295
  %v4298 = vadd.f32 %v3622, %v4296
  %v4299 = vtanh.pop %v4298
  %v4300 = vsub.f32 1.0, %v4286
  %4302 = vrot.lane.b32.xlu0 %v4299, 96
  %v4303 = vpop.permute.xlu0 %4302
  %v4305 = vmul.f32 %v4300, %v4303
  %v4306 = vrot.slane %v4068, 6
  %v4308 = vmul.f32 %v4286, %v4306
  %v4309 = vadd.f32 %v4305, %v4308
  %v4310 = vrot.slane %v4176, 4
  %4311 = vrot.lane.b32.xlu0 %v4310, 96
  %v4312 = vpop.permute.xlu0 %4311
  %v4313 = vsel %vm63, %v4312, 0
  %4315 = vmatprep.subr.mxu0 0.0
  %4316 = vmatpush1.msra.mxu0 %v3520
  %4317 = vmatprep.subr.mxu0 0.0
  %4318 = vmatpush1.msra.mxu0 %v3521
  %4319 = vmatprep.subr.mxu0 0.0
  %4320 = vmatpush1.msra.mxu0 %v3522
  %4321 = vmatprep.subr.mxu0 0.0
  %4322 = vmatpush1.msra.mxu0 %v3523
  %4323 = vmatprep.subr.mxu0 0.0
  %4324 = vmatpush1.msra.mxu0 0.0
  %4325 = vmatprep.subr.mxu0 0.0
  %4326 = vmatpush1.msra.mxu0 0.0
  %4327 = vmatprep.subr.mxu0 0.0
  %4328 = vmatpush1.msra.mxu0 0.0
  %4329 = vmatprep.subr.mxu0 0.0
  %4330 = vmatpush1.msra.mxu0 0.0
  %4331 = vmatprep.subr.mxu0 0.0
  %4332 = vmatpush1.msra.mxu0 0.0
  %4333 = vmatprep.subr.mxu0 0.0
  %4334 = vmatpush1.msra.mxu0 0.0
  %4335 = vmatprep.subr.mxu0 0.0
  %4336 = vmatpush1.msra.mxu0 0.0
  %4337 = vmatprep.subr.mxu0 0.0
  %4338 = vmatpush1.msra.mxu0 0.0
  %4339 = vmatprep.subr.mxu0 0.0
  %4340 = vmatpush1.msra.mxu0 0.0
  %4341 = vmatprep.subr.mxu0 0.0
  %4342 = vmatpush1.msra.mxu0 0.0
  %4343 = vmatprep.subr.mxu0 0.0
  %4344 = vmatpush1.msra.mxu0 0.0
  %4345 = vmatprep.subr.mxu0 0.0
  %4346 = vmatpush1.msra.mxu0 0.0
  %4347 = vmatprep.subr.mxu0 0.0
  %4348 = vmatpush1.msra.mxu0 0.0
  %4349 = vmatprep.subr.mxu0 0.0
  %4350 = vmatpush1.msra.mxu0 0.0
  %4351 = vmatprep.subr.mxu0 0.0
  %4352 = vmatpush1.msra.mxu0 0.0
  %4353 = vmatprep.subr.mxu0 0.0
  %4354 = vmatpush1.msra.mxu0 0.0
  %4355 = vmatprep.subr.mxu0 0.0
  %4356 = vmatpush1.msra.mxu0 0.0
  %4357 = vmatprep.subr.mxu0 0.0
  %4358 = vmatpush1.msra.mxu0 0.0
  %4359 = vmatprep.subr.mxu0 0.0
  %4360 = vmatpush1.msra.mxu0 0.0
  %4361 = vmatprep.subr.mxu0 0.0
  %4362 = vmatpush1.msra.mxu0 0.0
  %4363 = vmatprep.subr.mxu0 0.0
  %4364 = vmatpush1.msra.mxu0 0.0
  %4365 = vmatprep.subr.mxu0 0.0
  %4366 = vmatpush1.msra.mxu0 0.0
  %4367 = vmatprep.subr.mxu0 0.0
  %4368 = vmatpush1.msra.mxu0 0.0
  %4369 = vmatprep.subr.mxu0 0.0
  %4370 = vmatpush1.msra.mxu0 0.0
  %4371 = vmatprep.subr.mxu0 0.0
  %4372 = vmatpush1.msra.mxu0 0.0
  %4373 = vmatprep.subr.mxu0 0.0
  %4374 = vmatpush1.msra.mxu0 0.0
  %4375 = vmatprep.subr.mxu0 0.0
  %4376 = vmatpush1.msra.mxu0 0.0
  %4377 = vmatprep.subr.mxu0 0.0
  %4378 = vmatpush1.msra.mxu0 0.0
  %4379 = vmatprep.mubr.f32.mxu0 0.0
  %4380 = vmatmul.mubr.f32.gmra.mrb[0].mxu0 %v4313
  %v4381 = vpop.f32.mrb[0].mxu0
  %v4382 = vadd.f32 0.0, %v4381
  %v4383 = vpop.f32.mrb[0].mxu0
  %4384 = vdwg.mxu0
  %v4386 = vrot.slane %v4382, 6
  %v4388 = vadd.f32 %v3726, %v4386
  %v4389 = vxor.u32 %v4388, 2147483648
  %v4390 = vmul.f32 %v4389, 1.442695
  %v4391 = vpow.pop %v4390
  %v4392 = vadd.f32 %v4391, 1.0
  %v4393 = vrcp.pop %v4392
  %v4394 = vmul.f32 1.0, %v4393
  %v4395 = vadd.f32 %v4382, %v3912
  %v4397 = vrot.slane %v4395, 6
  %4398 = vrot.lane.b32.xlu0 %v4397, 64
  %v4399 = vpop.permute.xlu0 %4398
  %v4401 = vmul.f32 %v4394, %v4399
  %4403 = vrot.lane.b32.xlu0 %v4401, 64
  %v4404 = vpop.permute.xlu0 %4403
  %v4406 = vadd.f32 %v3726, %v4404
  %v4407 = vtanh.pop %v4406
  %v4408 = vsub.f32 1.0, %v4394
  %4410 = vrot.lane.b32.xlu0 %v4407, 96
  %v4411 = vpop.permute.xlu0 %4410
  %v4413 = vmul.f32 %v4408, %v4411
  %v4414 = vrot.slane %v4176, 2
  %v4416 = vmul.f32 %v4394, %v4414
  %v4417 = vadd.f32 %v4413, %v4416
  %v4419 = vcombine.high %v4309, %v4309
  %v4421 = vunpack.c.l.s4 1983009808
  %v4422 = vunpack.c.0.s8 %v4421
  %v4423 = vlaneseq
  %v4424 = vshrl.u32 %v4423, 7
  %v4425 = vsub.s32 %v4422, %v4424
  %v4426 = vrot.slane %v4419, %v4425
  %4427 = vrot.lane.b32.xlu0 %v4426, 32
  %v4428 = vpop.permute.xlu0 %4427
  %4430 = vst.msk [vmem:[#allocation3] sm:$0x3] %vm4200, %v4428
  %v4433 = vunpack.c.l.s4 1983009808
  %v4434 = vunpack.c.0.s8 %v4433
  %v4435 = vlaneseq
  %v4436 = vshrl.u32 %v4435, 7
  %v4437 = vsub.s32 %v4434, %v4436
  %v4438 = vrot.slane %v4417, %v4437
  %v4439 = vcombine.high %v4438, %v4438
  %4441 = vst.msk [vmem:[#allocation4 + $0x6] sm:$0x3] %vm275, %v4439
  %v4442 = vrot.slane %v4309, 4
  %4443 = vrot.lane.b32.xlu0 %v4442, 96
  %v4444 = vpop.permute.xlu0 %4443
  %v4445 = vsel %vm63, %v4444, 0
  %4447 = vmatprep.subr.mxu0 0.0
  %4448 = vmatpush1.msra.mxu0 %v3506
  %4449 = vmatprep.subr.mxu0 0.0
  %4450 = vmatpush1.msra.mxu0 %v3507
  %4451 = vmatprep.subr.mxu0 0.0
  %4452 = vmatpush1.msra.mxu0 %v3508
  %4453 = vmatprep.subr.mxu0 0.0
  %4454 = vmatpush1.msra.mxu0 %v3509
  %4455 = vmatprep.subr.mxu0 0.0
  %4456 = vmatpush1.msra.mxu0 0.0
  %4457 = vmatprep.subr.mxu0 0.0
  %4458 = vmatpush1.msra.mxu0 0.0
  %4459 = vmatprep.subr.mxu0 0.0
  %4460 = vmatpush1.msra.mxu0 0.0
  %4461 = vmatprep.subr.mxu0 0.0
  %4462 = vmatpush1.msra.mxu0 0.0
  %4463 = vmatprep.subr.mxu0 0.0
  %4464 = vmatpush1.msra.mxu0 0.0
  %4465 = vmatprep.subr.mxu0 0.0
  %4466 = vmatpush1.msra.mxu0 0.0
  %4467 = vmatprep.subr.mxu0 0.0
  %4468 = vmatpush1.msra.mxu0 0.0
  %4469 = vmatprep.subr.mxu0 0.0
  %4470 = vmatpush1.msra.mxu0 0.0
  %4471 = vmatprep.subr.mxu0 0.0
  %4472 = vmatpush1.msra.mxu0 0.0
  %4473 = vmatprep.subr.mxu0 0.0
  %4474 = vmatpush1.msra.mxu0 0.0
  %4475 = vmatprep.subr.mxu0 0.0
  %4476 = vmatpush1.msra.mxu0 0.0
  %4477 = vmatprep.subr.mxu0 0.0
  %4478 = vmatpush1.msra.mxu0 0.0
  %4479 = vmatprep.subr.mxu0 0.0
  %4480 = vmatpush1.msra.mxu0 0.0
  %4481 = vmatprep.subr.mxu0 0.0
  %4482 = vmatpush1.msra.mxu0 0.0
  %4483 = vmatprep.subr.mxu0 0.0
  %4484 = vmatpush1.msra.mxu0 0.0
  %4485 = vmatprep.subr.mxu0 0.0
  %4486 = vmatpush1.msra.mxu0 0.0
  %4487 = vmatprep.subr.mxu0 0.0
  %4488 = vmatpush1.msra.mxu0 0.0
  %4489 = vmatprep.subr.mxu0 0.0
  %4490 = vmatpush1.msra.mxu0 0.0
  %4491 = vmatprep.subr.mxu0 0.0
  %4492 = vmatpush1.msra.mxu0 0.0
  %4493 = vmatprep.subr.mxu0 0.0
  %4494 = vmatpush1.msra.mxu0 0.0
  %4495 = vmatprep.subr.mxu0 0.0
  %4496 = vmatpush1.msra.mxu0 0.0
  %4497 = vmatprep.subr.mxu0 0.0
  %4498 = vmatpush1.msra.mxu0 0.0
  %4499 = vmatprep.subr.mxu0 0.0
  %4500 = vmatpush1.msra.mxu0 0.0
  %4501 = vmatprep.subr.mxu0 0.0
  %4502 = vmatpush1.msra.mxu0 0.0
  %4503 = vmatprep.subr.mxu0 0.0
  %4504 = vmatpush1.msra.mxu0 0.0
  %4505 = vmatprep.subr.mxu0 0.0
  %4506 = vmatpush1.msra.mxu0 0.0
  %4507 = vmatprep.subr.mxu0 0.0
  %4508 = vmatpush1.msra.mxu0 0.0
  %4509 = vmatprep.subr.mxu0 0.0
  %4510 = vmatpush1.msra.mxu0 0.0
  %4511 = vmatprep.mubr.f32.mxu0 0.0
  %4512 = vmatmul.mubr.f32.gmra.mrb[0].mxu0 %v4445
  %v4513 = vpop.f32.mrb[0].mxu0
  %v4514 = vadd.f32 0.0, %v4513
  %v4515 = vpop.f32.mrb[0].mxu0
  %4516 = vdwg.mxu0
  %v4518 = vrot.slane %v4514, 2
  %v4520 = vadd.f32 %v3622, %v4518
  %v4521 = vxor.u32 %v4520, 2147483648
  %v4522 = vmul.f32 %v4521, 1.442695
  %v4523 = vpow.pop %v4522
  %v4524 = vadd.f32 %v4523, 1.0
  %v4525 = vrcp.pop %v4524
  %v4526 = vmul.f32 1.0, %v4525
  %v4527 = vadd.f32 %v4514, %v3808
  %v4529 = vrot.slane %v4527, 2
  %4530 = vrot.lane.b32.xlu0 %v4529, 64
  %v4531 = vpop.permute.xlu0 %4530
  %v4533 = vmul.f32 %v4526, %v4531
  %4535 = vrot.lane.b32.xlu0 %v4533, 64
  %v4536 = vpop.permute.xlu0 %4535
  %v4538 = vadd.f32 %v3622, %v4536
  %v4539 = vtanh.pop %v4538
  %v4540 = vsub.f32 1.0, %v4526
  %4542 = vrot.lane.b32.xlu0 %v4539, 96
  %v4543 = vpop.permute.xlu0 %4542
  %v4545 = vmul.f32 %v4540, %v4543
  %v4546 = vrot.slane %v4309, 6
  %v4548 = vmul.f32 %v4526, %v4546
  %v4549 = vadd.f32 %v4545, %v4548
  %v4550 = vrot.slane %v4417, 2
  %4551 = vrot.lane.b32.xlu0 %v4550, 96
  %v4552 = vpop.permute.xlu0 %4551
  %v4553 = vsel %vm63, %v4552, 0
  %4555 = vmatprep.subr.mxu0 0.0
  %4556 = vmatpush1.msra.mxu0 %v3520
  %4557 = vmatprep.subr.mxu0 0.0
  %4558 = vmatpush1.msra.mxu0 %v3521
  %4559 = vmatprep.subr.mxu0 0.0
  %4560 = vmatpush1.msra.mxu0 %v3522
  %4561 = vmatprep.subr.mxu0 0.0
  %4562 = vmatpush1.msra.mxu0 %v3523
  %4563 = vmatprep.subr.mxu0 0.0
  %4564 = vmatpush1.msra.mxu0 0.0
  %4565 = vmatprep.subr.mxu0 0.0
  %4566 = vmatpush1.msra.mxu0 0.0
  %4567 = vmatprep.subr.mxu0 0.0
  %4568 = vmatpush1.msra.mxu0 0.0
  %4569 = vmatprep.subr.mxu0 0.0
  %4570 = vmatpush1.msra.mxu0 0.0
  %4571 = vmatprep.subr.mxu0 0.0
  %4572 = vmatpush1.msra.mxu0 0.0
  %4573 = vmatprep.subr.mxu0 0.0
  %4574 = vmatpush1.msra.mxu0 0.0
  %4575 = vmatprep.subr.mxu0 0.0
  %4576 = vmatpush1.msra.mxu0 0.0
  %4577 = vmatprep.subr.mxu0 0.0
  %4578 = vmatpush1.msra.mxu0 0.0
  %4579 = vmatprep.subr.mxu0 0.0
  %4580 = vmatpush1.msra.mxu0 0.0
  %4581 = vmatprep.subr.mxu0 0.0
  %4582 = vmatpush1.msra.mxu0 0.0
  %4583 = vmatprep.subr.mxu0 0.0
  %4584 = vmatpush1.msra.mxu0 0.0
  %4585 = vmatprep.subr.mxu0 0.0
  %4586 = vmatpush1.msra.mxu0 0.0
  %4587 = vmatprep.subr.mxu0 0.0
  %4588 = vmatpush1.msra.mxu0 0.0
  %4589 = vmatprep.subr.mxu0 0.0
  %4590 = vmatpush1.msra.mxu0 0.0
  %4591 = vmatprep.subr.mxu0 0.0
  %4592 = vmatpush1.msra.mxu0 0.0
  %4593 = vmatprep.subr.mxu0 0.0
  %4594 = vmatpush1.msra.mxu0 0.0
  %4595 = vmatprep.subr.mxu0 0.0
  %4596 = vmatpush1.msra.mxu0 0.0
  %4597 = vmatprep.subr.mxu0 0.0
  %4598 = vmatpush1.msra.mxu0 0.0
  %4599 = vmatprep.subr.mxu0 0.0
  %4600 = vmatpush1.msra.mxu0 0.0
  %4601 = vmatprep.subr.mxu0 0.0
  %4602 = vmatpush1.msra.mxu0 0.0
  %4603 = vmatprep.subr.mxu0 0.0
  %4604 = vmatpush1.msra.mxu0 0.0
  %4605 = vmatprep.subr.mxu0 0.0
  %4606 = vmatpush1.msra.mxu0 0.0
  %4607 = vmatprep.subr.mxu0 0.0
  %4608 = vmatpush1.msra.mxu0 0.0
  %4609 = vmatprep.subr.mxu0 0.0
  %4610 = vmatpush1.msra.mxu0 0.0
  %4611 = vmatprep.subr.mxu0 0.0
  %4612 = vmatpush1.msra.mxu0 0.0
  %4613 = vmatprep.subr.mxu0 0.0
  %4614 = vmatpush1.msra.mxu0 0.0
  %4615 = vmatprep.subr.mxu0 0.0
  %4616 = vmatpush1.msra.mxu0 0.0
  %4617 = vmatprep.subr.mxu0 0.0
  %4618 = vmatpush1.msra.mxu0 0.0
  %4619 = vmatprep.mubr.f32.mxu0 0.0
  %4620 = vmatmul.mubr.f32.gmra.mrb[0].mxu0 %v4553
  %v4621 = vpop.f32.mrb[0].mxu0
  %v4622 = vadd.f32 0.0, %v4621
  %v4623 = vpop.f32.mrb[0].mxu0
  %4624 = vdwg.mxu0
  %v4625 = vadd.f32 %v3726, %v4622
  %v4626 = vxor.u32 %v4625, 2147483648
  %v4627 = vmul.f32 %v4626, 1.442695
  %v4628 = vpow.pop %v4627
  %v4629 = vadd.f32 %v4628, 1.0
  %v4630 = vrcp.pop %v4629
  %v4631 = vmul.f32 1.0, %v4630
  %v4632 = vadd.f32 %v4622, %v3912
  %4634 = vrot.lane.b32.xlu0 %v4632, 64
  %v4635 = vpop.permute.xlu0 %4634
  %v4637 = vmul.f32 %v4631, %v4635
  %4639 = vrot.lane.b32.xlu0 %v4637, 64
  %v4640 = vpop.permute.xlu0 %4639
  %v4642 = vadd.f32 %v3726, %v4640
  %v4643 = vtanh.pop %v4642
  %v4644 = vsub.f32 1.0, %v4631
  %4646 = vrot.lane.b32.xlu0 %v4643, 96
  %v4647 = vpop.permute.xlu0 %4646
  %v4649 = vmul.f32 %v4644, %v4647
  %v4651 = vmul.f32 %v4631, %v4550
  %v4652 = vadd.f32 %v4649, %v4651
  %v4654 = vcombine.high %v4549, %v4549
  %v4656 = vunpack.c.l.s4 1983009808
  %v4657 = vunpack.c.0.s8 %v4656
  %v4658 = vlaneseq
  %v4659 = vshrl.u32 %v4658, 7
  %v4660 = vsub.s32 %v4657, %v4659
  %v4661 = vrot.slane %v4654, %v4660
  %v4662 = vcombine.high %v4661, %v4661
  %4663 = vrot.lane.b32.xlu0 %v4662, 64
  %v4664 = vpop.permute.xlu0 %4663
  %4666 = vst.msk [vmem:[#allocation3] sm:$0x3] %vm3960, %v4664
  %v4669 = vunpack.c.l.s4 1983009808
  %v4670 = vunpack.c.0.s8 %v4669
  %v4671 = vlaneseq
  %v4672 = vshrl.u32 %v4671, 7
  %v4673 = vsub.s32 %v4670, %v4672
  %v4674 = vrot.slane %v4652, %v4673
  %4675 = vrot.lane.b32.xlu0 %v4674, 96
  %v4676 = vpop.permute.xlu0 %4675
  %4678 = vst.msk [vmem:[#allocation4 + $0x6] sm:$0x3] %vm273, %v4676
  %v4679 = vrot.slane %v4549, 6
  %4680 = vrot.lane.b32.xlu0 %v4679, 96
  %v4681 = vpop.permute.xlu0 %4680
  %v4682 = vsel %vm63, %v4681, 0
  %4684 = vmatprep.subr.mxu0 0.0
  %4685 = vmatpush1.msra.mxu0 %v3506
  %4686 = vmatprep.subr.mxu0 0.0
  %4687 = vmatpush1.msra.mxu0 %v3507
  %4688 = vmatprep.subr.mxu0 0.0
  %4689 = vmatpush1.msra.mxu0 %v3508
  %4690 = vmatprep.subr.mxu0 0.0
  %4691 = vmatpush1.msra.mxu0 %v3509
  %4692 = vmatprep.subr.mxu0 0.0
  %4693 = vmatpush1.msra.mxu0 0.0
  %4694 = vmatprep.subr.mxu0 0.0
  %4695 = vmatpush1.msra.mxu0 0.0
  %4696 = vmatprep.subr.mxu0 0.0
  %4697 = vmatpush1.msra.mxu0 0.0
  %4698 = vmatprep.subr.mxu0 0.0
  %4699 = vmatpush1.msra.mxu0 0.0
  %4700 = vmatprep.subr.mxu0 0.0
  %4701 = vmatpush1.msra.mxu0 0.0
  %4702 = vmatprep.subr.mxu0 0.0
  %4703 = vmatpush1.msra.mxu0 0.0
  %4704 = vmatprep.subr.mxu0 0.0
  %4705 = vmatpush1.msra.mxu0 0.0
  %4706 = vmatprep.subr.mxu0 0.0
  %4707 = vmatpush1.msra.mxu0 0.0
  %4708 = vmatprep.subr.mxu0 0.0
  %4709 = vmatpush1.msra.mxu0 0.0
  %4710 = vmatprep.subr.mxu0 0.0
  %4711 = vmatpush1.msra.mxu0 0.0
  %4712 = vmatprep.subr.mxu0 0.0
  %4713 = vmatpush1.msra.mxu0 0.0
  %4714 = vmatprep.subr.mxu0 0.0
  %4715 = vmatpush1.msra.mxu0 0.0
  %4716 = vmatprep.subr.mxu0 0.0
  %4717 = vmatpush1.msra.mxu0 0.0
  %4718 = vmatprep.subr.mxu0 0.0
  %4719 = vmatpush1.msra.mxu0 0.0
  %4720 = vmatprep.subr.mxu0 0.0
  %4721 = vmatpush1.msra.mxu0 0.0
  %4722 = vmatprep.subr.mxu0 0.0
  %4723 = vmatpush1.msra.mxu0 0.0
  %4724 = vmatprep.subr.mxu0 0.0
  %4725 = vmatpush1.msra.mxu0 0.0
  %4726 = vmatprep.subr.mxu0 0.0
  %4727 = vmatpush1.msra.mxu0 0.0
  %4728 = vmatprep.subr.mxu0 0.0
  %4729 = vmatpush1.msra.mxu0 0.0
  %4730 = vmatprep.subr.mxu0 0.0
  %4731 = vmatpush1.msra.mxu0 0.0
  %4732 = vmatprep.subr.mxu0 0.0
  %4733 = vmatpush1.msra.mxu0 0.0
  %4734 = vmatprep.subr.mxu0 0.0
  %4735 = vmatpush1.msra.mxu0 0.0
  %4736 = vmatprep.subr.mxu0 0.0
  %4737 = vmatpush1.msra.mxu0 0.0
  %4738 = vmatprep.subr.mxu0 0.0
  %4739 = vmatpush1.msra.mxu0 0.0
  %4740 = vmatprep.subr.mxu0 0.0
  %4741 = vmatpush1.msra.mxu0 0.0
  %4742 = vmatprep.subr.mxu0 0.0
  %4743 = vmatpush1.msra.mxu0 0.0
  %4744 = vmatprep.subr.mxu0 0.0
  %4745 = vmatpush1.msra.mxu0 0.0
  %4746 = vmatprep.subr.mxu0 0.0
  %4747 = vmatpush1.msra.mxu0 0.0
  %4748 = vmatprep.mubr.f32.mxu0 0.0
  %4749 = vmatmul.mubr.f32.gmra.mrb[0].mxu0 %v4682
  %v4750 = vpop.f32.mrb[0].mxu0
  %v4751 = vadd.f32 0.0, %v4750
  %v4752 = vpop.f32.mrb[0].mxu0
  %4753 = vdwg.mxu0
  %v4754 = vadd.f32 %v3627, %v4751
  %v4755 = vxor.u32 %v4754, 2147483648
  %v4756 = vmul.f32 %v4755, 1.442695
  %v4757 = vpow.pop %v4756
  %v4758 = vadd.f32 %v4757, 1.0
  %v4759 = vrcp.pop %v4758
  %v4760 = vmul.f32 1.0, %v4759
  %v4761 = vadd.f32 %v4751, %v3808
  %4763 = vrot.lane.b32.xlu0 %v4761, 64
  %v4764 = vpop.permute.xlu0 %4763
  %v4766 = vmul.f32 %v4760, %v4764
  %4768 = vrot.lane.b32.xlu0 %v4766, 64
  %v4769 = vpop.permute.xlu0 %4768
  %v4771 = vadd.f32 %v3627, %v4769
  %v4772 = vtanh.pop %v4771
  %v4773 = vsub.f32 1.0, %v4760
  %4775 = vrot.lane.b32.xlu0 %v4772, 96
  %v4776 = vpop.permute.xlu0 %4775
  %v4778 = vmul.f32 %v4773, %v4776
  %v4780 = vmul.f32 %v4760, %v4679
  %v4781 = vadd.f32 %v4778, %v4780
  %4782 = vrot.lane.b32.xlu0 %v4652, 96
  %v4783 = vpop.permute.xlu0 %4782
  %v4784 = vsel %vm63, %v4783, 0
  %4786 = vmatprep.subr.mxu0 0.0
  %4787 = vmatpush1.msra.mxu0 %v3520
  %4788 = vmatprep.subr.mxu0 0.0
  %4789 = vmatpush1.msra.mxu0 %v3521
  %4790 = vmatprep.subr.mxu0 0.0
  %4791 = vmatpush1.msra.mxu0 %v3522
  %4792 = vmatprep.subr.mxu0 0.0
  %4793 = vmatpush1.msra.mxu0 %v3523
  %4794 = vmatprep.subr.mxu0 0.0
  %4795 = vmatpush1.msra.mxu0 0.0
  %4796 = vmatprep.subr.mxu0 0.0
  %4797 = vmatpush1.msra.mxu0 0.0
  %4798 = vmatprep.subr.mxu0 0.0
  %4799 = vmatpush1.msra.mxu0 0.0
  %4800 = vmatprep.subr.mxu0 0.0
  %4801 = vmatpush1.msra.mxu0 0.0
  %4802 = vmatprep.subr.mxu0 0.0
  %4803 = vmatpush1.msra.mxu0 0.0
  %4804 = vmatprep.subr.mxu0 0.0
  %4805 = vmatpush1.msra.mxu0 0.0
  %4806 = vmatprep.subr.mxu0 0.0
  %4807 = vmatpush1.msra.mxu0 0.0
  %4808 = vmatprep.subr.mxu0 0.0
  %4809 = vmatpush1.msra.mxu0 0.0
  %4810 = vmatprep.subr.mxu0 0.0
  %4811 = vmatpush1.msra.mxu0 0.0
  %4812 = vmatprep.subr.mxu0 0.0
  %4813 = vmatpush1.msra.mxu0 0.0
  %4814 = vmatprep.subr.mxu0 0.0
  %4815 = vmatpush1.msra.mxu0 0.0
  %4816 = vmatprep.subr.mxu0 0.0
  %4817 = vmatpush1.msra.mxu0 0.0
  %4818 = vmatprep.subr.mxu0 0.0
  %4819 = vmatpush1.msra.mxu0 0.0
  %4820 = vmatprep.subr.mxu0 0.0
  %4821 = vmatpush1.msra.mxu0 0.0
  %4822 = vmatprep.subr.mxu0 0.0
  %4823 = vmatpush1.msra.mxu0 0.0
  %4824 = vmatprep.subr.mxu0 0.0
  %4825 = vmatpush1.msra.mxu0 0.0
  %4826 = vmatprep.subr.mxu0 0.0
  %4827 = vmatpush1.msra.mxu0 0.0
  %4828 = vmatprep.subr.mxu0 0.0
  %4829 = vmatpush1.msra.mxu0 0.0
  %4830 = vmatprep.subr.mxu0 0.0
  %4831 = vmatpush1.msra.mxu0 0.0
  %4832 = vmatprep.subr.mxu0 0.0
  %4833 = vmatpush1.msra.mxu0 0.0
  %4834 = vmatprep.subr.mxu0 0.0
  %4835 = vmatpush1.msra.mxu0 0.0
  %4836 = vmatprep.subr.mxu0 0.0
  %4837 = vmatpush1.msra.mxu0 0.0
  %4838 = vmatprep.subr.mxu0 0.0
  %4839 = vmatpush1.msra.mxu0 0.0
  %4840 = vmatprep.subr.mxu0 0.0
  %4841 = vmatpush1.msra.mxu0 0.0
  %4842 = vmatprep.subr.mxu0 0.0
  %4843 = vmatpush1.msra.mxu0 0.0
  %4844 = vmatprep.subr.mxu0 0.0
  %4845 = vmatpush1.msra.mxu0 0.0
  %4846 = vmatprep.subr.mxu0 0.0
  %4847 = vmatpush1.msra.mxu0 0.0
  %4848 = vmatprep.subr.mxu0 0.0
  %4849 = vmatpush1.msra.mxu0 0.0
  %4850 = vmatprep.mubr.f32.mxu0 0.0
  %4851 = vmatmul.mubr.f32.gmra.mrb[0].mxu0 %v4784
  %v4852 = vpop.f32.mrb[0].mxu0
  %v4853 = vadd.f32 0.0, %v4852
  %v4854 = vpop.f32.mrb[0].mxu0
  %4855 = vdwg.mxu0
  %v4857 = vrot.slane %v4853, 2
  %v4859 = vadd.f32 %v3721, %v4857
  %v4860 = vxor.u32 %v4859, 2147483648
  %v4861 = vmul.f32 %v4860, 1.442695
  %v4862 = vpow.pop %v4861
  %v4863 = vadd.f32 %v4862, 1.0
  %v4864 = vrcp.pop %v4863
  %v4865 = vmul.f32 1.0, %v4864
  %v4866 = vadd.f32 %v4853, %v3912
  %v4868 = vrot.slane %v4866, 2
  %4869 = vrot.lane.b32.xlu0 %v4868, 64
  %v4870 = vpop.permute.xlu0 %4869
  %v4872 = vmul.f32 %v4865, %v4870
  %4874 = vrot.lane.b32.xlu0 %v4872, 64
  %v4875 = vpop.permute.xlu0 %4874
  %v4877 = vadd.f32 %v3721, %v4875
  %v4878 = vtanh.pop %v4877
  %v4879 = vsub.f32 1.0, %v4865
  %4881 = vrot.lane.b32.xlu0 %v4878, 96
  %v4882 = vpop.permute.xlu0 %4881
  %v4884 = vmul.f32 %v4879, %v4882
  %v4885 = vrot.slane %v4652, 2
  %v4887 = vmul.f32 %v4865, %v4885
  %v4888 = vadd.f32 %v4884, %v4887
  %v4891 = vunpack.c.l.s4 1983009808
  %v4892 = vunpack.c.0.s8 %v4891
  %v4893 = vlaneseq
  %v4894 = vshrl.u32 %v4893, 7
  %v4895 = vsub.s32 %v4892, %v4894
  %v4896 = vrot.slane %v4781, %v4895
  %4897 = vrot.lane.b32.xlu0 %v4896, 96
  %v4898 = vpop.permute.xlu0 %4897
  %4900 = vst.msk [vmem:[#allocation3 + $0x2] sm:$0x3] %vm273, %v4898
  %v4902 = vcombine.high %v4888, %v4888
  %v4904 = vunpack.c.l.s4 1983009808
  %v4905 = vunpack.c.0.s8 %v4904
  %v4906 = vlaneseq
  %v4907 = vshrl.u32 %v4906, 7
  %v4908 = vsub.s32 %v4905, %v4907
  %v4909 = vrot.slane %v4902, %v4908
  %v4910 = vcombine.high %v4909, %v4909
  %4911 = vrot.lane.b32.xlu0 %v4910, 64
  %v4912 = vpop.permute.xlu0 %4911
  %4914 = vst.msk [vmem:[#allocation4 + $0x4] sm:$0x3] %vm3960, %v4912
  %4915 = vrot.lane.b32.xlu0 %v4781, 96
  %v4916 = vpop.permute.xlu0 %4915
  %v4917 = vsel %vm63, %v4916, 0
  %4919 = vmatprep.subr.mxu0 0.0
  %4920 = vmatpush1.msra.mxu0 %v3506
  %4921 = vmatprep.subr.mxu0 0.0
  %4922 = vmatpush1.msra.mxu0 %v3507
  %4923 = vmatprep.subr.mxu0 0.0
  %4924 = vmatpush1.msra.mxu0 %v3508
  %4925 = vmatprep.subr.mxu0 0.0
  %4926 = vmatpush1.msra.mxu0 %v3509
  %4927 = vmatprep.subr.mxu0 0.0
  %4928 = vmatpush1.msra.mxu0 0.0
  %4929 = vmatprep.subr.mxu0 0.0
  %4930 = vmatpush1.msra.mxu0 0.0
  %4931 = vmatprep.subr.mxu0 0.0
  %4932 = vmatpush1.msra.mxu0 0.0
  %4933 = vmatprep.subr.mxu0 0.0
  %4934 = vmatpush1.msra.mxu0 0.0
  %4935 = vmatprep.subr.mxu0 0.0
  %4936 = vmatpush1.msra.mxu0 0.0
  %4937 = vmatprep.subr.mxu0 0.0
  %4938 = vmatpush1.msra.mxu0 0.0
  %4939 = vmatprep.subr.mxu0 0.0
  %4940 = vmatpush1.msra.mxu0 0.0
  %4941 = vmatprep.subr.mxu0 0.0
  %4942 = vmatpush1.msra.mxu0 0.0
  %4943 = vmatprep.subr.mxu0 0.0
  %4944 = vmatpush1.msra.mxu0 0.0
  %4945 = vmatprep.subr.mxu0 0.0
  %4946 = vmatpush1.msra.mxu0 0.0
  %4947 = vmatprep.subr.mxu0 0.0
  %4948 = vmatpush1.msra.mxu0 0.0
  %4949 = vmatprep.subr.mxu0 0.0
  %4950 = vmatpush1.msra.mxu0 0.0
  %4951 = vmatprep.subr.mxu0 0.0
  %4952 = vmatpush1.msra.mxu0 0.0
  %4953 = vmatprep.subr.mxu0 0.0
  %4954 = vmatpush1.msra.mxu0 0.0
  %4955 = vmatprep.subr.mxu0 0.0
  %4956 = vmatpush1.msra.mxu0 0.0
  %4957 = vmatprep.subr.mxu0 0.0
  %4958 = vmatpush1.msra.mxu0 0.0
  %4959 = vmatprep.subr.mxu0 0.0
  %4960 = vmatpush1.msra.mxu0 0.0
  %4961 = vmatprep.subr.mxu0 0.0
  %4962 = vmatpush1.msra.mxu0 0.0
  %4963 = vmatprep.subr.mxu0 0.0
  %4964 = vmatpush1.msra.mxu0 0.0
  %4965 = vmatprep.subr.mxu0 0.0
  %4966 = vmatpush1.msra.mxu0 0.0
  %4967 = vmatprep.subr.mxu0 0.0
  %4968 = vmatpush1.msra.mxu0 0.0
  %4969 = vmatprep.subr.mxu0 0.0
  %4970 = vmatpush1.msra.mxu0 0.0
  %4971 = vmatprep.subr.mxu0 0.0
  %4972 = vmatpush1.msra.mxu0 0.0
  %4973 = vmatprep.subr.mxu0 0.0
  %4974 = vmatpush1.msra.mxu0 0.0
  %4975 = vmatprep.subr.mxu0 0.0
  %4976 = vmatpush1.msra.mxu0 0.0
  %4977 = vmatprep.subr.mxu0 0.0
  %4978 = vmatpush1.msra.mxu0 0.0
  %4979 = vmatprep.subr.mxu0 0.0
  %4980 = vmatpush1.msra.mxu0 0.0
  %4981 = vmatprep.subr.mxu0 0.0
  %4982 = vmatpush1.msra.mxu0 0.0
  %4983 = vmatprep.mubr.f32.mxu0 0.0
  %4984 = vmatmul.mubr.f32.gmra.mrb[0].mxu0 %v4917
  %v4985 = vpop.f32.mrb[0].mxu0
  %v4986 = vadd.f32 0.0, %v4985
  %v4987 = vpop.f32.mrb[0].mxu0
  %4988 = vdwg.mxu0
  %v4990 = vrot.slane %v4986, 6
  %v4992 = vadd.f32 %v3627, %v4990
  %v4993 = vxor.u32 %v4992, 2147483648
  %v4994 = vmul.f32 %v4993, 1.442695
  %v4995 = vpow.pop %v4994
  %v4996 = vadd.f32 %v4995, 1.0
  %v4997 = vrcp.pop %v4996
  %v4998 = vmul.f32 1.0, %v4997
  %v4999 = vadd.f32 %v4986, %v3808
  %v5001 = vrot.slane %v4999, 6
  %5002 = vrot.lane.b32.xlu0 %v5001, 64
  %v5003 = vpop.permute.xlu0 %5002
  %v5005 = vmul.f32 %v4998, %v5003
  %5007 = vrot.lane.b32.xlu0 %v5005, 64
  %v5008 = vpop.permute.xlu0 %5007
  %v5010 = vadd.f32 %v3627, %v5008
  %v5011 = vtanh.pop %v5010
  %v5012 = vsub.f32 1.0, %v4998
  %5014 = vrot.lane.b32.xlu0 %v5011, 96
  %v5015 = vpop.permute.xlu0 %5014
  %v5017 = vmul.f32 %v5012, %v5015
  %v5018 = vrot.slane %v4781, 6
  %v5020 = vmul.f32 %v4998, %v5018
  %v5021 = vadd.f32 %v5017, %v5020
  %v5022 = vrot.slane %v4888, 6
  %5023 = vrot.lane.b32.xlu0 %v5022, 96
  %v5024 = vpop.permute.xlu0 %5023
  %v5025 = vsel %vm63, %v5024, 0
  %5027 = vmatprep.subr.mxu0 0.0
  %5028 = vmatpush1.msra.mxu0 %v3520
  %5029 = vmatprep.subr.mxu0 0.0
  %5030 = vmatpush1.msra.mxu0 %v3521
  %5031 = vmatprep.subr.mxu0 0.0
  %5032 = vmatpush1.msra.mxu0 %v3522
  %5033 = vmatprep.subr.mxu0 0.0
  %5034 = vmatpush1.msra.mxu0 %v3523
  %5035 = vmatprep.subr.mxu0 0.0
  %5036 = vmatpush1.msra.mxu0 0.0
  %5037 = vmatprep.subr.mxu0 0.0
  %5038 = vmatpush1.msra.mxu0 0.0
  %5039 = vmatprep.subr.mxu0 0.0
  %5040 = vmatpush1.msra.mxu0 0.0
  %5041 = vmatprep.subr.mxu0 0.0
  %5042 = vmatpush1.msra.mxu0 0.0
  %5043 = vmatprep.subr.mxu0 0.0
  %5044 = vmatpush1.msra.mxu0 0.0
  %5045 = vmatprep.subr.mxu0 0.0
  %5046 = vmatpush1.msra.mxu0 0.0
  %5047 = vmatprep.subr.mxu0 0.0
  %5048 = vmatpush1.msra.mxu0 0.0
  %5049 = vmatprep.subr.mxu0 0.0
  %5050 = vmatpush1.msra.mxu0 0.0
  %5051 = vmatprep.subr.mxu0 0.0
  %5052 = vmatpush1.msra.mxu0 0.0
  %5053 = vmatprep.subr.mxu0 0.0
  %5054 = vmatpush1.msra.mxu0 0.0
  %5055 = vmatprep.subr.mxu0 0.0
  %5056 = vmatpush1.msra.mxu0 0.0
  %5057 = vmatprep.subr.mxu0 0.0
  %5058 = vmatpush1.msra.mxu0 0.0
  %5059 = vmatprep.subr.mxu0 0.0
  %5060 = vmatpush1.msra.mxu0 0.0
  %5061 = vmatprep.subr.mxu0 0.0
  %5062 = vmatpush1.msra.mxu0 0.0
  %5063 = vmatprep.subr.mxu0 0.0
  %5064 = vmatpush1.msra.mxu0 0.0
  %5065 = vmatprep.subr.mxu0 0.0
  %5066 = vmatpush1.msra.mxu0 0.0
  %5067 = vmatprep.subr.mxu0 0.0
  %5068 = vmatpush1.msra.mxu0 0.0
  %5069 = vmatprep.subr.mxu0 0.0
  %5070 = vmatpush1.msra.mxu0 0.0
  %5071 = vmatprep.subr.mxu0 0.0
  %5072 = vmatpush1.msra.mxu0 0.0
  %5073 = vmatprep.subr.mxu0 0.0
  %5074 = vmatpush1.msra.mxu0 0.0
  %5075 = vmatprep.subr.mxu0 0.0
  %5076 = vmatpush1.msra.mxu0 0.0
  %5077 = vmatprep.subr.mxu0 0.0
  %5078 = vmatpush1.msra.mxu0 0.0
  %5079 = vmatprep.subr.mxu0 0.0
  %5080 = vmatpush1.msra.mxu0 0.0
  %5081 = vmatprep.subr.mxu0 0.0
  %5082 = vmatpush1.msra.mxu0 0.0
  %5083 = vmatprep.subr.mxu0 0.0
  %5084 = vmatpush1.msra.mxu0 0.0
  %5085 = vmatprep.subr.mxu0 0.0
  %5086 = vmatpush1.msra.mxu0 0.0
  %5087 = vmatprep.subr.mxu0 0.0
  %5088 = vmatpush1.msra.mxu0 0.0
  %5089 = vmatprep.subr.mxu0 0.0
  %5090 = vmatpush1.msra.mxu0 0.0
  %5091 = vmatprep.mubr.f32.mxu0 0.0
  %5092 = vmatmul.mubr.f32.gmra.mrb[0].mxu0 %v5025
  %v5093 = vpop.f32.mrb[0].mxu0
  %v5094 = vadd.f32 0.0, %v5093
  %v5095 = vpop.f32.mrb[0].mxu0
  %5096 = vdwg.mxu0
  %v5098 = vrot.slane %v5094, 4
  %v5100 = vadd.f32 %v3721, %v5098
  %v5101 = vxor.u32 %v5100, 2147483648
  %v5102 = vmul.f32 %v5101, 1.442695
  %v5103 = vpow.pop %v5102
  %v5104 = vadd.f32 %v5103, 1.0
  %v5105 = vrcp.pop %v5104
  %v5106 = vmul.f32 1.0, %v5105
  %v5107 = vadd.f32 %v5094, %v3912
  %v5109 = vrot.slane %v5107, 4
  %5110 = vrot.lane.b32.xlu0 %v5109, 64
  %v5111 = vpop.permute.xlu0 %5110
  %v5113 = vmul.f32 %v5106, %v5111
  %5115 = vrot.lane.b32.xlu0 %v5113, 64
  %v5116 = vpop.permute.xlu0 %5115
  %v5118 = vadd.f32 %v3721, %v5116
  %v5119 = vtanh.pop %v5118
  %v5120 = vsub.f32 1.0, %v5106
  %5122 = vrot.lane.b32.xlu0 %v5119, 96
  %v5123 = vpop.permute.xlu0 %5122
  %v5125 = vmul.f32 %v5120, %v5123
  %v5126 = vrot.slane %v4888, 2
  %v5128 = vmul.f32 %v5106, %v5126
  %v5129 = vadd.f32 %v5125, %v5128
  %v5132 = vunpack.c.l.s4 1983009808
  %v5133 = vunpack.c.0.s8 %v5132
  %v5134 = vlaneseq
  %v5135 = vshrl.u32 %v5134, 7
  %v5136 = vsub.s32 %v5133, %v5135
  %v5137 = vrot.slane %v5021, %v5136
  %v5138 = vcombine.high %v5137, %v5137
  %5140 = vst.msk [vmem:[#allocation3 + $0x2] sm:$0x3] %vm275, %v5138
  %v5142 = vcombine.high %v5129, %v5129
  %v5144 = vunpack.c.l.s4 1983009808
  %v5145 = vunpack.c.0.s8 %v5144
  %v5146 = vlaneseq
  %v5147 = vshrl.u32 %v5146, 7
  %v5148 = vsub.s32 %v5145, %v5147
  %v5149 = vrot.slane %v5142, %v5148
  %5150 = vrot.lane.b32.xlu0 %v5149, 32
  %v5151 = vpop.permute.xlu0 %5150
  %5153 = vst.msk [vmem:[#allocation4 + $0x4] sm:$0x3] %vm4200, %v5151
  %v5154 = vrot.slane %v5021, 2
  %5155 = vrot.lane.b32.xlu0 %v5154, 96
  %v5156 = vpop.permute.xlu0 %5155
  %v5157 = vsel %vm63, %v5156, 0
  %5159 = vmatprep.subr.mxu0 0.0
  %5160 = vmatpush1.msra.mxu0 %v3506
  %5161 = vmatprep.subr.mxu0 0.0
  %5162 = vmatpush1.msra.mxu0 %v3507
  %5163 = vmatprep.subr.mxu0 0.0
  %5164 = vmatpush1.msra.mxu0 %v3508
  %5165 = vmatprep.subr.mxu0 0.0
  %5166 = vmatpush1.msra.mxu0 %v3509
  %5167 = vmatprep.subr.mxu0 0.0
  %5168 = vmatpush1.msra.mxu0 0.0
  %5169 = vmatprep.subr.mxu0 0.0
  %5170 = vmatpush1.msra.mxu0 0.0
  %5171 = vmatprep.subr.mxu0 0.0
  %5172 = vmatpush1.msra.mxu0 0.0
  %5173 = vmatprep.subr.mxu0 0.0
  %5174 = vmatpush1.msra.mxu0 0.0
  %5175 = vmatprep.subr.mxu0 0.0
  %5176 = vmatpush1.msra.mxu0 0.0
  %5177 = vmatprep.subr.mxu0 0.0
  %5178 = vmatpush1.msra.mxu0 0.0
  %5179 = vmatprep.subr.mxu0 0.0
  %5180 = vmatpush1.msra.mxu0 0.0
  %5181 = vmatprep.subr.mxu0 0.0
  %5182 = vmatpush1.msra.mxu0 0.0
  %5183 = vmatprep.subr.mxu0 0.0
  %5184 = vmatpush1.msra.mxu0 0.0
  %5185 = vmatprep.subr.mxu0 0.0
  %5186 = vmatpush1.msra.mxu0 0.0
  %5187 = vmatprep.subr.mxu0 0.0
  %5188 = vmatpush1.msra.mxu0 0.0
  %5189 = vmatprep.subr.mxu0 0.0
  %5190 = vmatpush1.msra.mxu0 0.0
  %5191 = vmatprep.subr.mxu0 0.0
  %5192 = vmatpush1.msra.mxu0 0.0
  %5193 = vmatprep.subr.mxu0 0.0
  %5194 = vmatpush1.msra.mxu0 0.0
  %5195 = vmatprep.subr.mxu0 0.0
  %5196 = vmatpush1.msra.mxu0 0.0
  %5197 = vmatprep.subr.mxu0 0.0
  %5198 = vmatpush1.msra.mxu0 0.0
  %5199 = vmatprep.subr.mxu0 0.0
  %5200 = vmatpush1.msra.mxu0 0.0
  %5201 = vmatprep.subr.mxu0 0.0
  %5202 = vmatpush1.msra.mxu0 0.0
  %5203 = vmatprep.subr.mxu0 0.0
  %5204 = vmatpush1.msra.mxu0 0.0
  %5205 = vmatprep.subr.mxu0 0.0
  %5206 = vmatpush1.msra.mxu0 0.0
  %5207 = vmatprep.subr.mxu0 0.0
  %5208 = vmatpush1.msra.mxu0 0.0
  %5209 = vmatprep.subr.mxu0 0.0
  %5210 = vmatpush1.msra.mxu0 0.0
  %5211 = vmatprep.subr.mxu0 0.0
  %5212 = vmatpush1.msra.mxu0 0.0
  %5213 = vmatprep.subr.mxu0 0.0
  %5214 = vmatpush1.msra.mxu0 0.0
  %5215 = vmatprep.subr.mxu0 0.0
  %5216 = vmatpush1.msra.mxu0 0.0
  %5217 = vmatprep.subr.mxu0 0.0
  %5218 = vmatpush1.msra.mxu0 0.0
  %5219 = vmatprep.subr.mxu0 0.0
  %5220 = vmatpush1.msra.mxu0 0.0
  %5221 = vmatprep.subr.mxu0 0.0
  %5222 = vmatpush1.msra.mxu0 0.0
  %5223 = vmatprep.mubr.f32.mxu0 0.0
  %5224 = vmatmul.mubr.f32.gmra.mrb[0].mxu0 %v5157
  %v5225 = vpop.f32.mrb[0].mxu0
  %v5226 = vadd.f32 0.0, %v5225
  %v5227 = vpop.f32.mrb[0].mxu0
  %5228 = vdwg.mxu0
  %v5230 = vrot.slane %v5226, 4
  %v5232 = vadd.f32 %v3627, %v5230
  %v5233 = vxor.u32 %v5232, 2147483648
  %v5234 = vmul.f32 %v5233, 1.442695
  %v5235 = vpow.pop %v5234
  %v5236 = vadd.f32 %v5235, 1.0
  %v5237 = vrcp.pop %v5236
  %v5238 = vmul.f32 1.0, %v5237
  %v5239 = vadd.f32 %v5226, %v3808
  %v5241 = vrot.slane %v5239, 4
  %5242 = vrot.lane.b32.xlu0 %v5241, 64
  %v5243 = vpop.permute.xlu0 %5242
  %v5245 = vmul.f32 %v5238, %v5243
  %5247 = vrot.lane.b32.xlu0 %v5245, 64
  %v5248 = vpop.permute.xlu0 %5247
  %v5250 = vadd.f32 %v3627, %v5248
  %v5251 = vtanh.pop %v5250
  %v5252 = vsub.f32 1.0, %v5238
  %5254 = vrot.lane.b32.xlu0 %v5251, 96
  %v5255 = vpop.permute.xlu0 %5254
  %v5257 = vmul.f32 %v5252, %v5255
  %v5258 = vrot.slane %v5021, 6
  %v5260 = vmul.f32 %v5238, %v5258
  %v5261 = vadd.f32 %v5257, %v5260
  %v5262 = vrot.slane %v5129, 4
  %5263 = vrot.lane.b32.xlu0 %v5262, 96
  %v5264 = vpop.permute.xlu0 %5263
  %v5265 = vsel %vm63, %v5264, 0
  %5267 = vmatprep.subr.mxu0 0.0
  %5268 = vmatpush1.msra.mxu0 %v3520
  %5269 = vmatprep.subr.mxu0 0.0
  %5270 = vmatpush1.msra.mxu0 %v3521
  %5271 = vmatprep.subr.mxu0 0.0
  %5272 = vmatpush1.msra.mxu0 %v3522
  %5273 = vmatprep.subr.mxu0 0.0
  %5274 = vmatpush1.msra.mxu0 %v3523
  %5275 = vmatprep.subr.mxu0 0.0
  %5276 = vmatpush1.msra.mxu0 0.0
  %5277 = vmatprep.subr.mxu0 0.0
  %5278 = vmatpush1.msra.mxu0 0.0
  %5279 = vmatprep.subr.mxu0 0.0
  %5280 = vmatpush1.msra.mxu0 0.0
  %5281 = vmatprep.subr.mxu0 0.0
  %5282 = vmatpush1.msra.mxu0 0.0
  %5283 = vmatprep.subr.mxu0 0.0
  %5284 = vmatpush1.msra.mxu0 0.0
  %5285 = vmatprep.subr.mxu0 0.0
  %5286 = vmatpush1.msra.mxu0 0.0
  %5287 = vmatprep.subr.mxu0 0.0
  %5288 = vmatpush1.msra.mxu0 0.0
  %5289 = vmatprep.subr.mxu0 0.0
  %5290 = vmatpush1.msra.mxu0 0.0
  %5291 = vmatprep.subr.mxu0 0.0
  %5292 = vmatpush1.msra.mxu0 0.0
  %5293 = vmatprep.subr.mxu0 0.0
  %5294 = vmatpush1.msra.mxu0 0.0
  %5295 = vmatprep.subr.mxu0 0.0
  %5296 = vmatpush1.msra.mxu0 0.0
  %5297 = vmatprep.subr.mxu0 0.0
  %5298 = vmatpush1.msra.mxu0 0.0
  %5299 = vmatprep.subr.mxu0 0.0
  %5300 = vmatpush1.msra.mxu0 0.0
  %5301 = vmatprep.subr.mxu0 0.0
  %5302 = vmatpush1.msra.mxu0 0.0
  %5303 = vmatprep.subr.mxu0 0.0
  %5304 = vmatpush1.msra.mxu0 0.0
  %5305 = vmatprep.subr.mxu0 0.0
  %5306 = vmatpush1.msra.mxu0 0.0
  %5307 = vmatprep.subr.mxu0 0.0
  %5308 = vmatpush1.msra.mxu0 0.0
  %5309 = vmatprep.subr.mxu0 0.0
  %5310 = vmatpush1.msra.mxu0 0.0
  %5311 = vmatprep.subr.mxu0 0.0
  %5312 = vmatpush1.msra.mxu0 0.0
  %5313 = vmatprep.subr.mxu0 0.0
  %5314 = vmatpush1.msra.mxu0 0.0
  %5315 = vmatprep.subr.mxu0 0.0
  %5316 = vmatpush1.msra.mxu0 0.0
  %5317 = vmatprep.subr.mxu0 0.0
  %5318 = vmatpush1.msra.mxu0 0.0
  %5319 = vmatprep.subr.mxu0 0.0
  %5320 = vmatpush1.msra.mxu0 0.0
  %5321 = vmatprep.subr.mxu0 0.0
  %5322 = vmatpush1.msra.mxu0 0.0
  %5323 = vmatprep.subr.mxu0 0.0
  %5324 = vmatpush1.msra.mxu0 0.0
  %5325 = vmatprep.subr.mxu0 0.0
  %5326 = vmatpush1.msra.mxu0 0.0
  %5327 = vmatprep.subr.mxu0 0.0
  %5328 = vmatpush1.msra.mxu0 0.0
  %5329 = vmatprep.subr.mxu0 0.0
  %5330 = vmatpush1.msra.mxu0 0.0
  %5331 = vmatprep.mubr.f32.mxu0 0.0
  %5332 = vmatmul.mubr.f32.gmra.mrb[0].mxu0 %v5265
  %v5333 = vpop.f32.mrb[0].mxu0
  %v5334 = vadd.f32 0.0, %v5333
  %v5335 = vpop.f32.mrb[0].mxu0
  %5336 = vdwg.mxu0
  %v5338 = vrot.slane %v5334, 6
  %v5340 = vadd.f32 %v3721, %v5338
  %v5341 = vxor.u32 %v5340, 2147483648
  %v5342 = vmul.f32 %v5341, 1.442695
  %v5343 = vpow.pop %v5342
  %v5344 = vadd.f32 %v5343, 1.0
  %v5345 = vrcp.pop %v5344
  %v5346 = vmul.f32 1.0, %v5345
  %v5347 = vadd.f32 %v5334, %v3912
  %v5349 = vrot.slane %v5347, 6
  %5350 = vrot.lane.b32.xlu0 %v5349, 64
  %v5351 = vpop.permute.xlu0 %5350
  %v5353 = vmul.f32 %v5346, %v5351
  %5355 = vrot.lane.b32.xlu0 %v5353, 64
  %v5356 = vpop.permute.xlu0 %5355
  %v5358 = vadd.f32 %v3721, %v5356
  %v5359 = vtanh.pop %v5358
  %v5360 = vsub.f32 1.0, %v5346
  %5362 = vrot.lane.b32.xlu0 %v5359, 96
  %v5363 = vpop.permute.xlu0 %5362
  %v5365 = vmul.f32 %v5360, %v5363
  %v5366 = vrot.slane %v5129, 2
  %v5368 = vmul.f32 %v5346, %v5366
  %v5369 = vadd.f32 %v5365, %v5368
  %v5371 = vcombine.high %v5261, %v5261
  %v5373 = vunpack.c.l.s4 1983009808
  %v5374 = vunpack.c.0.s8 %v5373
  %v5375 = vlaneseq
  %v5376 = vshrl.u32 %v5375, 7
  %v5377 = vsub.s32 %v5374, %v5376
  %v5378 = vrot.slane %v5371, %v5377
  %5379 = vrot.lane.b32.xlu0 %v5378, 32
  %v5380 = vpop.permute.xlu0 %5379
  %5382 = vst.msk [vmem:[#allocation3 + $0x2] sm:$0x3] %vm4200, %v5380
  %v5385 = vunpack.c.l.s4 1983009808
  %v5386 = vunpack.c.0.s8 %v5385
  %v5387 = vlaneseq
  %v5388 = vshrl.u32 %v5387, 7
  %v5389 = vsub.s32 %v5386, %v5388
  %v5390 = vrot.slane %v5369, %v5389
  %v5391 = vcombine.high %v5390, %v5390
  %5393 = vst.msk [vmem:[#allocation4 + $0x4] sm:$0x3] %vm275, %v5391
  %v5394 = vrot.slane %v5261, 4
  %5395 = vrot.lane.b32.xlu0 %v5394, 96
  %v5396 = vpop.permute.xlu0 %5395
  %v5397 = vsel %vm63, %v5396, 0
  %5399 = vmatprep.subr.mxu0 0.0
  %5400 = vmatpush1.msra.mxu0 %v3506
  %5401 = vmatprep.subr.mxu0 0.0
  %5402 = vmatpush1.msra.mxu0 %v3507
  %5403 = vmatprep.subr.mxu0 0.0
  %5404 = vmatpush1.msra.mxu0 %v3508
  %5405 = vmatprep.subr.mxu0 0.0
  %5406 = vmatpush1.msra.mxu0 %v3509
  %5407 = vmatprep.subr.mxu0 0.0
  %5408 = vmatpush1.msra.mxu0 0.0
  %5409 = vmatprep.subr.mxu0 0.0
  %5410 = vmatpush1.msra.mxu0 0.0
  %5411 = vmatprep.subr.mxu0 0.0
  %5412 = vmatpush1.msra.mxu0 0.0
  %5413 = vmatprep.subr.mxu0 0.0
  %5414 = vmatpush1.msra.mxu0 0.0
  %5415 = vmatprep.subr.mxu0 0.0
  %5416 = vmatpush1.msra.mxu0 0.0
  %5417 = vmatprep.subr.mxu0 0.0
  %5418 = vmatpush1.msra.mxu0 0.0
  %5419 = vmatprep.subr.mxu0 0.0
  %5420 = vmatpush1.msra.mxu0 0.0
  %5421 = vmatprep.subr.mxu0 0.0
  %5422 = vmatpush1.msra.mxu0 0.0
  %5423 = vmatprep.subr.mxu0 0.0
  %5424 = vmatpush1.msra.mxu0 0.0
  %5425 = vmatprep.subr.mxu0 0.0
  %5426 = vmatpush1.msra.mxu0 0.0
  %5427 = vmatprep.subr.mxu0 0.0
  %5428 = vmatpush1.msra.mxu0 0.0
  %5429 = vmatprep.subr.mxu0 0.0
  %5430 = vmatpush1.msra.mxu0 0.0
  %5431 = vmatprep.subr.mxu0 0.0
  %5432 = vmatpush1.msra.mxu0 0.0
  %5433 = vmatprep.subr.mxu0 0.0
  %5434 = vmatpush1.msra.mxu0 0.0
  %5435 = vmatprep.subr.mxu0 0.0
  %5436 = vmatpush1.msra.mxu0 0.0
  %5437 = vmatprep.subr.mxu0 0.0
  %5438 = vmatpush1.msra.mxu0 0.0
  %5439 = vmatprep.subr.mxu0 0.0
  %5440 = vmatpush1.msra.mxu0 0.0
  %5441 = vmatprep.subr.mxu0 0.0
  %5442 = vmatpush1.msra.mxu0 0.0
  %5443 = vmatprep.subr.mxu0 0.0
  %5444 = vmatpush1.msra.mxu0 0.0
  %5445 = vmatprep.subr.mxu0 0.0
  %5446 = vmatpush1.msra.mxu0 0.0
  %5447 = vmatprep.subr.mxu0 0.0
  %5448 = vmatpush1.msra.mxu0 0.0
  %5449 = vmatprep.subr.mxu0 0.0
  %5450 = vmatpush1.msra.mxu0 0.0
  %5451 = vmatprep.subr.mxu0 0.0
  %5452 = vmatpush1.msra.mxu0 0.0
  %5453 = vmatprep.subr.mxu0 0.0
  %5454 = vmatpush1.msra.mxu0 0.0
  %5455 = vmatprep.subr.mxu0 0.0
  %5456 = vmatpush1.msra.mxu0 0.0
  %5457 = vmatprep.subr.mxu0 0.0
  %5458 = vmatpush1.msra.mxu0 0.0
  %5459 = vmatprep.subr.mxu0 0.0
  %5460 = vmatpush1.msra.mxu0 0.0
  %5461 = vmatprep.subr.mxu0 0.0
  %5462 = vmatpush1.msra.mxu0 0.0
  %5463 = vmatprep.mubr.f32.mxu0 0.0
  %5464 = vmatmul.mubr.f32.gmra.mrb[0].mxu0 %v5397
  %v5465 = vpop.f32.mrb[0].mxu0
  %v5466 = vadd.f32 0.0, %v5465
  %v5467 = vpop.f32.mrb[0].mxu0
  %5468 = vdwg.mxu0
  %v5470 = vrot.slane %v5466, 2
  %v5472 = vadd.f32 %v3627, %v5470
  %v5473 = vxor.u32 %v5472, 2147483648
  %v5474 = vmul.f32 %v5473, 1.442695
  %v5475 = vpow.pop %v5474
  %v5476 = vadd.f32 %v5475, 1.0
  %v5477 = vrcp.pop %v5476
  %v5478 = vmul.f32 1.0, %v5477
  %v5479 = vadd.f32 %v5466, %v3808
  %v5481 = vrot.slane %v5479, 2
  %5482 = vrot.lane.b32.xlu0 %v5481, 64
  %v5483 = vpop.permute.xlu0 %5482
  %v5485 = vmul.f32 %v5478, %v5483
  %5487 = vrot.lane.b32.xlu0 %v5485, 64
  %v5488 = vpop.permute.xlu0 %5487
  %v5490 = vadd.f32 %v3627, %v5488
  %v5491 = vtanh.pop %v5490
  %v5492 = vsub.f32 1.0, %v5478
  %5494 = vrot.lane.b32.xlu0 %v5491, 96
  %v5495 = vpop.permute.xlu0 %5494
  %v5497 = vmul.f32 %v5492, %v5495
  %v5498 = vrot.slane %v5261, 6
  %v5500 = vmul.f32 %v5478, %v5498
  %v5501 = vadd.f32 %v5497, %v5500
  %v5502 = vrot.slane %v5369, 2
  %5503 = vrot.lane.b32.xlu0 %v5502, 96
  %v5504 = vpop.permute.xlu0 %5503
  %v5505 = vsel %vm63, %v5504, 0
  %5507 = vmatprep.subr.mxu0 0.0
  %5508 = vmatpush1.msra.mxu0 %v3520
  %5509 = vmatprep.subr.mxu0 0.0
  %5510 = vmatpush1.msra.mxu0 %v3521
  %5511 = vmatprep.subr.mxu0 0.0
  %5512 = vmatpush1.msra.mxu0 %v3522
  %5513 = vmatprep.subr.mxu0 0.0
  %5514 = vmatpush1.msra.mxu0 %v3523
  %5515 = vmatprep.subr.mxu0 0.0
  %5516 = vmatpush1.msra.mxu0 0.0
  %5517 = vmatprep.subr.mxu0 0.0
  %5518 = vmatpush1.msra.mxu0 0.0
  %5519 = vmatprep.subr.mxu0 0.0
  %5520 = vmatpush1.msra.mxu0 0.0
  %5521 = vmatprep.subr.mxu0 0.0
  %5522 = vmatpush1.msra.mxu0 0.0
  %5523 = vmatprep.subr.mxu0 0.0
  %5524 = vmatpush1.msra.mxu0 0.0
  %5525 = vmatprep.subr.mxu0 0.0
  %5526 = vmatpush1.msra.mxu0 0.0
  %5527 = vmatprep.subr.mxu0 0.0
  %5528 = vmatpush1.msra.mxu0 0.0
  %5529 = vmatprep.subr.mxu0 0.0
  %5530 = vmatpush1.msra.mxu0 0.0
  %5531 = vmatprep.subr.mxu0 0.0
  %5532 = vmatpush1.msra.mxu0 0.0
  %5533 = vmatprep.subr.mxu0 0.0
  %5534 = vmatpush1.msra.mxu0 0.0
  %5535 = vmatprep.subr.mxu0 0.0
  %5536 = vmatpush1.msra.mxu0 0.0
  %5537 = vmatprep.subr.mxu0 0.0
  %5538 = vmatpush1.msra.mxu0 0.0
  %5539 = vmatprep.subr.mxu0 0.0
  %5540 = vmatpush1.msra.mxu0 0.0
  %5541 = vmatprep.subr.mxu0 0.0
  %5542 = vmatpush1.msra.mxu0 0.0
  %5543 = vmatprep.subr.mxu0 0.0
  %5544 = vmatpush1.msra.mxu0 0.0
  %5545 = vmatprep.subr.mxu0 0.0
  %5546 = vmatpush1.msra.mxu0 0.0
  %5547 = vmatprep.subr.mxu0 0.0
  %5548 = vmatpush1.msra.mxu0 0.0
  %5549 = vmatprep.subr.mxu0 0.0
  %5550 = vmatpush1.msra.mxu0 0.0
  %5551 = vmatprep.subr.mxu0 0.0
  %5552 = vmatpush1.msra.mxu0 0.0
  %5553 = vmatprep.subr.mxu0 0.0
  %5554 = vmatpush1.msra.mxu0 0.0
  %5555 = vmatprep.subr.mxu0 0.0
  %5556 = vmatpush1.msra.mxu0 0.0
  %5557 = vmatprep.subr.mxu0 0.0
  %5558 = vmatpush1.msra.mxu0 0.0
  %5559 = vmatprep.subr.mxu0 0.0
  %5560 = vmatpush1.msra.mxu0 0.0
  %5561 = vmatprep.subr.mxu0 0.0
  %5562 = vmatpush1.msra.mxu0 0.0
  %5563 = vmatprep.subr.mxu0 0.0
  %5564 = vmatpush1.msra.mxu0 0.0
  %5565 = vmatprep.subr.mxu0 0.0
  %5566 = vmatpush1.msra.mxu0 0.0
  %5567 = vmatprep.subr.mxu0 0.0
  %5568 = vmatpush1.msra.mxu0 0.0
  %5569 = vmatprep.subr.mxu0 0.0
  %5570 = vmatpush1.msra.mxu0 0.0
  %5571 = vmatprep.mubr.f32.mxu0 0.0
  %5572 = vmatmul.mubr.f32.gmra.mrb[0].mxu0 %v5505
  %v5573 = vpop.f32.mrb[0].mxu0
  %v5574 = vadd.f32 0.0, %v5573
  %v5575 = vpop.f32.mrb[0].mxu0
  %5576 = vdwg.mxu0
  %v5577 = vadd.f32 %v3721, %v5574
  %v5578 = vxor.u32 %v5577, 2147483648
  %v5579 = vmul.f32 %v5578, 1.442695
  %v5580 = vpow.pop %v5579
  %v5581 = vadd.f32 %v5580, 1.0
  %v5582 = vrcp.pop %v5581
  %v5583 = vmul.f32 1.0, %v5582
  %v5584 = vadd.f32 %v5574, %v3912
  %5586 = vrot.lane.b32.xlu0 %v5584, 64
  %v5587 = vpop.permute.xlu0 %5586
  %v5589 = vmul.f32 %v5583, %v5587
  %5591 = vrot.lane.b32.xlu0 %v5589, 64
  %v5592 = vpop.permute.xlu0 %5591
  %v5594 = vadd.f32 %v3721, %v5592
  %v5595 = vtanh.pop %v5594
  %v5596 = vsub.f32 1.0, %v5583
  %5598 = vrot.lane.b32.xlu0 %v5595, 96
  %v5599 = vpop.permute.xlu0 %5598
  %v5601 = vmul.f32 %v5596, %v5599
  %v5603 = vmul.f32 %v5583, %v5502
  %v5604 = vadd.f32 %v5601, %v5603
  %v5606 = vcombine.high %v5501, %v5501
  %v5608 = vunpack.c.l.s4 1983009808
  %v5609 = vunpack.c.0.s8 %v5608
  %v5610 = vlaneseq
  %v5611 = vshrl.u32 %v5610, 7
  %v5612 = vsub.s32 %v5609, %v5611
  %v5613 = vrot.slane %v5606, %v5612
  %v5614 = vcombine.high %v5613, %v5613
  %5615 = vrot.lane.b32.xlu0 %v5614, 64
  %v5616 = vpop.permute.xlu0 %5615
  %5618 = vst.msk [vmem:[#allocation3 + $0x2] sm:$0x3] %vm3960, %v5616
  %v5621 = vunpack.c.l.s4 1983009808
  %v5622 = vunpack.c.0.s8 %v5621
  %v5623 = vlaneseq
  %v5624 = vshrl.u32 %v5623, 7
  %v5625 = vsub.s32 %v5622, %v5624
  %v5626 = vrot.slane %v5604, %v5625
  %5627 = vrot.lane.b32.xlu0 %v5626, 96
  %v5628 = vpop.permute.xlu0 %5627
  %5630 = vst.msk [vmem:[#allocation4 + $0x4] sm:$0x3] %vm273, %v5628
  %v5631 = vrot.slane %v5501, 6
  %5632 = vrot.lane.b32.xlu0 %v5631, 96
  %v5633 = vpop.permute.xlu0 %5632
  %v5634 = vsel %vm63, %v5633, 0
  %5636 = vmatprep.subr.mxu0 0.0
  %5637 = vmatpush1.msra.mxu0 %v3506
  %5638 = vmatprep.subr.mxu0 0.0
  %5639 = vmatpush1.msra.mxu0 %v3507
  %5640 = vmatprep.subr.mxu0 0.0
  %5641 = vmatpush1.msra.mxu0 %v3508
  %5642 = vmatprep.subr.mxu0 0.0
  %5643 = vmatpush1.msra.mxu0 %v3509
  %5644 = vmatprep.subr.mxu0 0.0
  %5645 = vmatpush1.msra.mxu0 0.0
  %5646 = vmatprep.subr.mxu0 0.0
  %5647 = vmatpush1.msra.mxu0 0.0
  %5648 = vmatprep.subr.mxu0 0.0
  %5649 = vmatpush1.msra.mxu0 0.0
  %5650 = vmatprep.subr.mxu0 0.0
  %5651 = vmatpush1.msra.mxu0 0.0
  %5652 = vmatprep.subr.mxu0 0.0
  %5653 = vmatpush1.msra.mxu0 0.0
  %5654 = vmatprep.subr.mxu0 0.0
  %5655 = vmatpush1.msra.mxu0 0.0
  %5656 = vmatprep.subr.mxu0 0.0
  %5657 = vmatpush1.msra.mxu0 0.0
  %5658 = vmatprep.subr.mxu0 0.0
  %5659 = vmatpush1.msra.mxu0 0.0
  %5660 = vmatprep.subr.mxu0 0.0
  %5661 = vmatpush1.msra.mxu0 0.0
  %5662 = vmatprep.subr.mxu0 0.0
  %5663 = vmatpush1.msra.mxu0 0.0
  %5664 = vmatprep.subr.mxu0 0.0
  %5665 = vmatpush1.msra.mxu0 0.0
  %5666 = vmatprep.subr.mxu0 0.0
  %5667 = vmatpush1.msra.mxu0 0.0
  %5668 = vmatprep.subr.mxu0 0.0
  %5669 = vmatpush1.msra.mxu0 0.0
  %5670 = vmatprep.subr.mxu0 0.0
  %5671 = vmatpush1.msra.mxu0 0.0
  %5672 = vmatprep.subr.mxu0 0.0
  %5673 = vmatpush1.msra.mxu0 0.0
  %5674 = vmatprep.subr.mxu0 0.0
  %5675 = vmatpush1.msra.mxu0 0.0
  %5676 = vmatprep.subr.mxu0 0.0
  %5677 = vmatpush1.msra.mxu0 0.0
  %5678 = vmatprep.subr.mxu0 0.0
  %5679 = vmatpush1.msra.mxu0 0.0
  %5680 = vmatprep.subr.mxu0 0.0
  %5681 = vmatpush1.msra.mxu0 0.0
  %5682 = vmatprep.subr.mxu0 0.0
  %5683 = vmatpush1.msra.mxu0 0.0
  %5684 = vmatprep.subr.mxu0 0.0
  %5685 = vmatpush1.msra.mxu0 0.0
  %5686 = vmatprep.subr.mxu0 0.0
  %5687 = vmatpush1.msra.mxu0 0.0
  %5688 = vmatprep.subr.mxu0 0.0
  %5689 = vmatpush1.msra.mxu0 0.0
  %5690 = vmatprep.subr.mxu0 0.0
  %5691 = vmatpush1.msra.mxu0 0.0
  %5692 = vmatprep.subr.mxu0 0.0
  %5693 = vmatpush1.msra.mxu0 0.0
  %5694 = vmatprep.subr.mxu0 0.0
  %5695 = vmatpush1.msra.mxu0 0.0
  %5696 = vmatprep.subr.mxu0 0.0
  %5697 = vmatpush1.msra.mxu0 0.0
  %5698 = vmatprep.subr.mxu0 0.0
  %5699 = vmatpush1.msra.mxu0 0.0
  %5700 = vmatprep.mubr.f32.mxu0 0.0
  %5701 = vmatmul.mubr.f32.gmra.mrb[0].mxu0 %v5634
  %v5702 = vpop.f32.mrb[0].mxu0
  %v5703 = vadd.f32 0.0, %v5702
  %v5704 = vpop.f32.mrb[0].mxu0
  %5705 = vdwg.mxu0
  %v5706 = vadd.f32 %v3632, %v5703
  %v5707 = vxor.u32 %v5706, 2147483648
  %v5708 = vmul.f32 %v5707, 1.442695
  %v5709 = vpow.pop %v5708
  %v5710 = vadd.f32 %v5709, 1.0
  %v5711 = vrcp.pop %v5710
  %v5712 = vmul.f32 1.0, %v5711
  %v5713 = vadd.f32 %v5703, %v3808
  %5715 = vrot.lane.b32.xlu0 %v5713, 64
  %v5716 = vpop.permute.xlu0 %5715
  %v5718 = vmul.f32 %v5712, %v5716
  %5720 = vrot.lane.b32.xlu0 %v5718, 64
  %v5721 = vpop.permute.xlu0 %5720
  %v5723 = vadd.f32 %v3632, %v5721
  %v5724 = vtanh.pop %v5723
  %v5725 = vsub.f32 1.0, %v5712
  %5727 = vrot.lane.b32.xlu0 %v5724, 96
  %v5728 = vpop.permute.xlu0 %5727
  %v5730 = vmul.f32 %v5725, %v5728
  %v5732 = vmul.f32 %v5712, %v5631
  %v5733 = vadd.f32 %v5730, %v5732
  %5734 = vrot.lane.b32.xlu0 %v5604, 96
  %v5735 = vpop.permute.xlu0 %5734
  %v5736 = vsel %vm63, %v5735, 0
  %5738 = vmatprep.subr.mxu0 0.0
  %5739 = vmatpush1.msra.mxu0 %v3520
  %5740 = vmatprep.subr.mxu0 0.0
  %5741 = vmatpush1.msra.mxu0 %v3521
  %5742 = vmatprep.subr.mxu0 0.0
  %5743 = vmatpush1.msra.mxu0 %v3522
  %5744 = vmatprep.subr.mxu0 0.0
  %5745 = vmatpush1.msra.mxu0 %v3523
  %5746 = vmatprep.subr.mxu0 0.0
  %5747 = vmatpush1.msra.mxu0 0.0
  %5748 = vmatprep.subr.mxu0 0.0
  %5749 = vmatpush1.msra.mxu0 0.0
  %5750 = vmatprep.subr.mxu0 0.0
  %5751 = vmatpush1.msra.mxu0 0.0
  %5752 = vmatprep.subr.mxu0 0.0
  %5753 = vmatpush1.msra.mxu0 0.0
  %5754 = vmatprep.subr.mxu0 0.0
  %5755 = vmatpush1.msra.mxu0 0.0
  %5756 = vmatprep.subr.mxu0 0.0
  %5757 = vmatpush1.msra.mxu0 0.0
  %5758 = vmatprep.subr.mxu0 0.0
  %5759 = vmatpush1.msra.mxu0 0.0
  %5760 = vmatprep.subr.mxu0 0.0
  %5761 = vmatpush1.msra.mxu0 0.0
  %5762 = vmatprep.subr.mxu0 0.0
  %5763 = vmatpush1.msra.mxu0 0.0
  %5764 = vmatprep.subr.mxu0 0.0
  %5765 = vmatpush1.msra.mxu0 0.0
  %5766 = vmatprep.subr.mxu0 0.0
  %5767 = vmatpush1.msra.mxu0 0.0
  %5768 = vmatprep.subr.mxu0 0.0
  %5769 = vmatpush1.msra.mxu0 0.0
  %5770 = vmatprep.subr.mxu0 0.0
  %5771 = vmatpush1.msra.mxu0 0.0
  %5772 = vmatprep.subr.mxu0 0.0
  %5773 = vmatpush1.msra.mxu0 0.0
  %5774 = vmatprep.subr.mxu0 0.0
  %5775 = vmatpush1.msra.mxu0 0.0
  %5776 = vmatprep.subr.mxu0 0.0
  %5777 = vmatpush1.msra.mxu0 0.0
  %5778 = vmatprep.subr.mxu0 0.0
  %5779 = vmatpush1.msra.mxu0 0.0
  %5780 = vmatprep.subr.mxu0 0.0
  %5781 = vmatpush1.msra.mxu0 0.0
  %5782 = vmatprep.subr.mxu0 0.0
  %5783 = vmatpush1.msra.mxu0 0.0
  %5784 = vmatprep.subr.mxu0 0.0
  %5785 = vmatpush1.msra.mxu0 0.0
  %5786 = vmatprep.subr.mxu0 0.0
  %5787 = vmatpush1.msra.mxu0 0.0
  %5788 = vmatprep.subr.mxu0 0.0
  %5789 = vmatpush1.msra.mxu0 0.0
  %5790 = vmatprep.subr.mxu0 0.0
  %5791 = vmatpush1.msra.mxu0 0.0
  %5792 = vmatprep.subr.mxu0 0.0
  %5793 = vmatpush1.msra.mxu0 0.0
  %5794 = vmatprep.subr.mxu0 0.0
  %5795 = vmatpush1.msra.mxu0 0.0
  %5796 = vmatprep.subr.mxu0 0.0
  %5797 = vmatpush1.msra.mxu0 0.0
  %5798 = vmatprep.subr.mxu0 0.0
  %5799 = vmatpush1.msra.mxu0 0.0
  %5800 = vmatprep.subr.mxu0 0.0
  %5801 = vmatpush1.msra.mxu0 0.0
  %5802 = vmatprep.mubr.f32.mxu0 0.0
  %5803 = vmatmul.mubr.f32.gmra.mrb[0].mxu0 %v5736
  %v5804 = vpop.f32.mrb[0].mxu0
  %v5805 = vadd.f32 0.0, %v5804
  %v5806 = vpop.f32.mrb[0].mxu0
  %5807 = vdwg.mxu0
  %v5809 = vrot.slane %v5805, 2
  %v5811 = vadd.f32 %v3716, %v5809
  %v5812 = vxor.u32 %v5811, 2147483648
  %v5813 = vmul.f32 %v5812, 1.442695
  %v5814 = vpow.pop %v5813
  %v5815 = vadd.f32 %v5814, 1.0
  %v5816 = vrcp.pop %v5815
  %v5817 = vmul.f32 1.0, %v5816
  %v5818 = vadd.f32 %v5805, %v3912
  %v5820 = vrot.slane %v5818, 2
  %5821 = vrot.lane.b32.xlu0 %v5820, 64
  %v5822 = vpop.permute.xlu0 %5821
  %v5824 = vmul.f32 %v5817, %v5822
  %5826 = vrot.lane.b32.xlu0 %v5824, 64
  %v5827 = vpop.permute.xlu0 %5826
  %v5829 = vadd.f32 %v3716, %v5827
  %v5830 = vtanh.pop %v5829
  %v5831 = vsub.f32 1.0, %v5817
  %5833 = vrot.lane.b32.xlu0 %v5830, 96
  %v5834 = vpop.permute.xlu0 %5833
  %v5836 = vmul.f32 %v5831, %v5834
  %v5837 = vrot.slane %v5604, 2
  %v5839 = vmul.f32 %v5817, %v5837
  %v5840 = vadd.f32 %v5836, %v5839
  %v5843 = vunpack.c.l.s4 1983009808
  %v5844 = vunpack.c.0.s8 %v5843
  %v5845 = vlaneseq
  %v5846 = vshrl.u32 %v5845, 7
  %v5847 = vsub.s32 %v5844, %v5846
  %v5848 = vrot.slane %v5733, %v5847
  %5849 = vrot.lane.b32.xlu0 %v5848, 96
  %v5850 = vpop.permute.xlu0 %5849
  %5852 = vst.msk [vmem:[#allocation3 + $0x4] sm:$0x3] %vm273, %v5850
  %v5854 = vcombine.high %v5840, %v5840
  %v5856 = vunpack.c.l.s4 1983009808
  %v5857 = vunpack.c.0.s8 %v5856
  %v5858 = vlaneseq
  %v5859 = vshrl.u32 %v5858, 7
  %v5860 = vsub.s32 %v5857, %v5859
  %v5861 = vrot.slane %v5854, %v5860
  %v5862 = vcombine.high %v5861, %v5861
  %5863 = vrot.lane.b32.xlu0 %v5862, 64
  %v5864 = vpop.permute.xlu0 %5863
  %5866 = vst.msk [vmem:[#allocation4 + $0x2] sm:$0x3] %vm3960, %v5864
  %5867 = vrot.lane.b32.xlu0 %v5733, 96
  %v5868 = vpop.permute.xlu0 %5867
  %v5869 = vsel %vm63, %v5868, 0
  %5871 = vmatprep.subr.mxu0 0.0
  %5872 = vmatpush1.msra.mxu0 %v3506
  %5873 = vmatprep.subr.mxu0 0.0
  %5874 = vmatpush1.msra.mxu0 %v3507
  %5875 = vmatprep.subr.mxu0 0.0
  %5876 = vmatpush1.msra.mxu0 %v3508
  %5877 = vmatprep.subr.mxu0 0.0
  %5878 = vmatpush1.msra.mxu0 %v3509
  %5879 = vmatprep.subr.mxu0 0.0
  %5880 = vmatpush1.msra.mxu0 0.0
  %5881 = vmatprep.subr.mxu0 0.0
  %5882 = vmatpush1.msra.mxu0 0.0
  %5883 = vmatprep.subr.mxu0 0.0
  %5884 = vmatpush1.msra.mxu0 0.0
  %5885 = vmatprep.subr.mxu0 0.0
  %5886 = vmatpush1.msra.mxu0 0.0
  %5887 = vmatprep.subr.mxu0 0.0
  %5888 = vmatpush1.msra.mxu0 0.0
  %5889 = vmatprep.subr.mxu0 0.0
  %5890 = vmatpush1.msra.mxu0 0.0
  %5891 = vmatprep.subr.mxu0 0.0
  %5892 = vmatpush1.msra.mxu0 0.0
  %5893 = vmatprep.subr.mxu0 0.0
  %5894 = vmatpush1.msra.mxu0 0.0
  %5895 = vmatprep.subr.mxu0 0.0
  %5896 = vmatpush1.msra.mxu0 0.0
  %5897 = vmatprep.subr.mxu0 0.0
  %5898 = vmatpush1.msra.mxu0 0.0
  %5899 = vmatprep.subr.mxu0 0.0
  %5900 = vmatpush1.msra.mxu0 0.0
  %5901 = vmatprep.subr.mxu0 0.0
  %5902 = vmatpush1.msra.mxu0 0.0
  %5903 = vmatprep.subr.mxu0 0.0
  %5904 = vmatpush1.msra.mxu0 0.0
  %5905 = vmatprep.subr.mxu0 0.0
  %5906 = vmatpush1.msra.mxu0 0.0
  %5907 = vmatprep.subr.mxu0 0.0
  %5908 = vmatpush1.msra.mxu0 0.0
  %5909 = vmatprep.subr.mxu0 0.0
  %5910 = vmatpush1.msra.mxu0 0.0
  %5911 = vmatprep.subr.mxu0 0.0
  %5912 = vmatpush1.msra.mxu0 0.0
  %5913 = vmatprep.subr.mxu0 0.0
  %5914 = vmatpush1.msra.mxu0 0.0
  %5915 = vmatprep.subr.mxu0 0.0
  %5916 = vmatpush1.msra.mxu0 0.0
  %5917 = vmatprep.subr.mxu0 0.0
  %5918 = vmatpush1.msra.mxu0 0.0
  %5919 = vmatprep.subr.mxu0 0.0
  %5920 = vmatpush1.msra.mxu0 0.0
  %5921 = vmatprep.subr.mxu0 0.0
  %5922 = vmatpush1.msra.mxu0 0.0
  %5923 = vmatprep.subr.mxu0 0.0
  %5924 = vmatpush1.msra.mxu0 0.0
  %5925 = vmatprep.subr.mxu0 0.0
  %5926 = vmatpush1.msra.mxu0 0.0
  %5927 = vmatprep.subr.mxu0 0.0
  %5928 = vmatpush1.msra.mxu0 0.0
  %5929 = vmatprep.subr.mxu0 0.0
  %5930 = vmatpush1.msra.mxu0 0.0
  %5931 = vmatprep.subr.mxu0 0.0
  %5932 = vmatpush1.msra.mxu0 0.0
  %5933 = vmatprep.subr.mxu0 0.0
  %5934 = vmatpush1.msra.mxu0 0.0
  %5935 = vmatprep.mubr.f32.mxu0 0.0
  %5936 = vmatmul.mubr.f32.gmra.mrb[0].mxu0 %v5869
  %v5937 = vpop.f32.mrb[0].mxu0
  %v5938 = vadd.f32 0.0, %v5937
  %v5939 = vpop.f32.mrb[0].mxu0
  %5940 = vdwg.mxu0
  %v5942 = vrot.slane %v5938, 6
  %v5944 = vadd.f32 %v3632, %v5942
  %v5945 = vxor.u32 %v5944, 2147483648
  %v5946 = vmul.f32 %v5945, 1.442695
  %v5947 = vpow.pop %v5946
  %v5948 = vadd.f32 %v5947, 1.0
  %v5949 = vrcp.pop %v5948
  %v5950 = vmul.f32 1.0, %v5949
  %v5951 = vadd.f32 %v5938, %v3808
  %v5953 = vrot.slane %v5951, 6
  %5954 = vrot.lane.b32.xlu0 %v5953, 64
  %v5955 = vpop.permute.xlu0 %5954
  %v5957 = vmul.f32 %v5950, %v5955
  %5959 = vrot.lane.b32.xlu0 %v5957, 64
  %v5960 = vpop.permute.xlu0 %5959
  %v5962 = vadd.f32 %v3632, %v5960
  %v5963 = vtanh.pop %v5962
  %v5964 = vsub.f32 1.0, %v5950
  %5966 = vrot.lane.b32.xlu0 %v5963, 96
  %v5967 = vpop.permute.xlu0 %5966
  %v5969 = vmul.f32 %v5964, %v5967
  %v5970 = vrot.slane %v5733, 6
  %v5972 = vmul.f32 %v5950, %v5970
  %v5973 = vadd.f32 %v5969, %v5972
  %v5974 = vrot.slane %v5840, 6
  %5975 = vrot.lane.b32.xlu0 %v5974, 96
  %v5976 = vpop.permute.xlu0 %5975
  %v5977 = vsel %vm63, %v5976, 0
  %5979 = vmatprep.subr.mxu0 0.0
  %5980 = vmatpush1.msra.mxu0 %v3520
  %5981 = vmatprep.subr.mxu0 0.0
  %5982 = vmatpush1.msra.mxu0 %v3521
  %5983 = vmatprep.subr.mxu0 0.0
  %5984 = vmatpush1.msra.mxu0 %v3522
  %5985 = vmatprep.subr.mxu0 0.0
  %5986 = vmatpush1.msra.mxu0 %v3523
  %5987 = vmatprep.subr.mxu0 0.0
  %5988 = vmatpush1.msra.mxu0 0.0
  %5989 = vmatprep.subr.mxu0 0.0
  %5990 = vmatpush1.msra.mxu0 0.0
  %5991 = vmatprep.subr.mxu0 0.0
  %5992 = vmatpush1.msra.mxu0 0.0
  %5993 = vmatprep.subr.mxu0 0.0
  %5994 = vmatpush1.msra.mxu0 0.0
  %5995 = vmatprep.subr.mxu0 0.0
  %5996 = vmatpush1.msra.mxu0 0.0
  %5997 = vmatprep.subr.mxu0 0.0
  %5998 = vmatpush1.msra.mxu0 0.0
  %5999 = vmatprep.subr.mxu0 0.0
  %6000 = vmatpush1.msra.mxu0 0.0
  %6001 = vmatprep.subr.mxu0 0.0
  %6002 = vmatpush1.msra.mxu0 0.0
  %6003 = vmatprep.subr.mxu0 0.0
  %6004 = vmatpush1.msra.mxu0 0.0
  %6005 = vmatprep.subr.mxu0 0.0
  %6006 = vmatpush1.msra.mxu0 0.0
  %6007 = vmatprep.subr.mxu0 0.0
  %6008 = vmatpush1.msra.mxu0 0.0
  %6009 = vmatprep.subr.mxu0 0.0
  %6010 = vmatpush1.msra.mxu0 0.0
  %6011 = vmatprep.subr.mxu0 0.0
  %6012 = vmatpush1.msra.mxu0 0.0
  %6013 = vmatprep.subr.mxu0 0.0
  %6014 = vmatpush1.msra.mxu0 0.0
  %6015 = vmatprep.subr.mxu0 0.0
  %6016 = vmatpush1.msra.mxu0 0.0
  %6017 = vmatprep.subr.mxu0 0.0
  %6018 = vmatpush1.msra.mxu0 0.0
  %6019 = vmatprep.subr.mxu0 0.0
  %6020 = vmatpush1.msra.mxu0 0.0
  %6021 = vmatprep.subr.mxu0 0.0
  %6022 = vmatpush1.msra.mxu0 0.0
  %6023 = vmatprep.subr.mxu0 0.0
  %6024 = vmatpush1.msra.mxu0 0.0
  %6025 = vmatprep.subr.mxu0 0.0
  %6026 = vmatpush1.msra.mxu0 0.0
  %6027 = vmatprep.subr.mxu0 0.0
  %6028 = vmatpush1.msra.mxu0 0.0
  %6029 = vmatprep.subr.mxu0 0.0
  %6030 = vmatpush1.msra.mxu0 0.0
  %6031 = vmatprep.subr.mxu0 0.0
  %6032 = vmatpush1.msra.mxu0 0.0
  %6033 = vmatprep.subr.mxu0 0.0
  %6034 = vmatpush1.msra.mxu0 0.0
  %6035 = vmatprep.subr.mxu0 0.0
  %6036 = vmatpush1.msra.mxu0 0.0
  %6037 = vmatprep.subr.mxu0 0.0
  %6038 = vmatpush1.msra.mxu0 0.0
  %6039 = vmatprep.subr.mxu0 0.0
  %6040 = vmatpush1.msra.mxu0 0.0
  %6041 = vmatprep.subr.mxu0 0.0
  %6042 = vmatpush1.msra.mxu0 0.0
  %6043 = vmatprep.mubr.f32.mxu0 0.0
  %6044 = vmatmul.mubr.f32.gmra.mrb[0].mxu0 %v5977
  %v6045 = vpop.f32.mrb[0].mxu0
  %v6046 = vadd.f32 0.0, %v6045
  %v6047 = vpop.f32.mrb[0].mxu0
  %6048 = vdwg.mxu0
  %v6050 = vrot.slane %v6046, 4
  %v6052 = vadd.f32 %v3716, %v6050
  %v6053 = vxor.u32 %v6052, 2147483648
  %v6054 = vmul.f32 %v6053, 1.442695
  %v6055 = vpow.pop %v6054
  %v6056 = vadd.f32 %v6055, 1.0
  %v6057 = vrcp.pop %v6056
  %v6058 = vmul.f32 1.0, %v6057
  %v6059 = vadd.f32 %v6046, %v3912
  %v6061 = vrot.slane %v6059, 4
  %6062 = vrot.lane.b32.xlu0 %v6061, 64
  %v6063 = vpop.permute.xlu0 %6062
  %v6065 = vmul.f32 %v6058, %v6063
  %6067 = vrot.lane.b32.xlu0 %v6065, 64
  %v6068 = vpop.permute.xlu0 %6067
  %v6070 = vadd.f32 %v3716, %v6068
  %v6071 = vtanh.pop %v6070
  %v6072 = vsub.f32 1.0, %v6058
  %6074 = vrot.lane.b32.xlu0 %v6071, 96
  %v6075 = vpop.permute.xlu0 %6074
  %v6077 = vmul.f32 %v6072, %v6075
  %v6078 = vrot.slane %v5840, 2
  %v6080 = vmul.f32 %v6058, %v6078
  %v6081 = vadd.f32 %v6077, %v6080
  %v6084 = vunpack.c.l.s4 1983009808
  %v6085 = vunpack.c.0.s8 %v6084
  %v6086 = vlaneseq
  %v6087 = vshrl.u32 %v6086, 7
  %v6088 = vsub.s32 %v6085, %v6087
  %v6089 = vrot.slane %v5973, %v6088
  %v6090 = vcombine.high %v6089, %v6089
  %6092 = vst.msk [vmem:[#allocation3 + $0x4] sm:$0x3] %vm275, %v6090
  %v6094 = vcombine.high %v6081, %v6081
  %v6096 = vunpack.c.l.s4 1983009808
  %v6097 = vunpack.c.0.s8 %v6096
  %v6098 = vlaneseq
  %v6099 = vshrl.u32 %v6098, 7
  %v6100 = vsub.s32 %v6097, %v6099
  %v6101 = vrot.slane %v6094, %v6100
  %6102 = vrot.lane.b32.xlu0 %v6101, 32
  %v6103 = vpop.permute.xlu0 %6102
  %6105 = vst.msk [vmem:[#allocation4 + $0x2] sm:$0x3] %vm4200, %v6103
  %v6106 = vrot.slane %v5973, 2
  %6107 = vrot.lane.b32.xlu0 %v6106, 96
  %v6108 = vpop.permute.xlu0 %6107
  %v6109 = vsel %vm63, %v6108, 0
  %6111 = vmatprep.subr.mxu0 0.0
  %6112 = vmatpush1.msra.mxu0 %v3506
  %6113 = vmatprep.subr.mxu0 0.0
  %6114 = vmatpush1.msra.mxu0 %v3507
  %6115 = vmatprep.subr.mxu0 0.0
  %6116 = vmatpush1.msra.mxu0 %v3508
  %6117 = vmatprep.subr.mxu0 0.0
  %6118 = vmatpush1.msra.mxu0 %v3509
  %6119 = vmatprep.subr.mxu0 0.0
  %6120 = vmatpush1.msra.mxu0 0.0
  %6121 = vmatprep.subr.mxu0 0.0
  %6122 = vmatpush1.msra.mxu0 0.0
  %6123 = vmatprep.subr.mxu0 0.0
  %6124 = vmatpush1.msra.mxu0 0.0
  %6125 = vmatprep.subr.mxu0 0.0
  %6126 = vmatpush1.msra.mxu0 0.0
  %6127 = vmatprep.subr.mxu0 0.0
  %6128 = vmatpush1.msra.mxu0 0.0
  %6129 = vmatprep.subr.mxu0 0.0
  %6130 = vmatpush1.msra.mxu0 0.0
  %6131 = vmatprep.subr.mxu0 0.0
  %6132 = vmatpush1.msra.mxu0 0.0
  %6133 = vmatprep.subr.mxu0 0.0
  %6134 = vmatpush1.msra.mxu0 0.0
  %6135 = vmatprep.subr.mxu0 0.0
  %6136 = vmatpush1.msra.mxu0 0.0
  %6137 = vmatprep.subr.mxu0 0.0
  %6138 = vmatpush1.msra.mxu0 0.0
  %6139 = vmatprep.subr.mxu0 0.0
  %6140 = vmatpush1.msra.mxu0 0.0
  %6141 = vmatprep.subr.mxu0 0.0
  %6142 = vmatpush1.msra.mxu0 0.0
  %6143 = vmatprep.subr.mxu0 0.0
  %6144 = vmatpush1.msra.mxu0 0.0
  %6145 = vmatprep.subr.mxu0 0.0
  %6146 = vmatpush1.msra.mxu0 0.0
  %6147 = vmatprep.subr.mxu0 0.0
  %6148 = vmatpush1.msra.mxu0 0.0
  %6149 = vmatprep.subr.mxu0 0.0
  %6150 = vmatpush1.msra.mxu0 0.0
  %6151 = vmatprep.subr.mxu0 0.0
  %6152 = vmatpush1.msra.mxu0 0.0
  %6153 = vmatprep.subr.mxu0 0.0
  %6154 = vmatpush1.msra.mxu0 0.0
  %6155 = vmatprep.subr.mxu0 0.0
  %6156 = vmatpush1.msra.mxu0 0.0
  %6157 = vmatprep.subr.mxu0 0.0
  %6158 = vmatpush1.msra.mxu0 0.0
  %6159 = vmatprep.subr.mxu0 0.0
  %6160 = vmatpush1.msra.mxu0 0.0
  %6161 = vmatprep.subr.mxu0 0.0
  %6162 = vmatpush1.msra.mxu0 0.0
  %6163 = vmatprep.subr.mxu0 0.0
  %6164 = vmatpush1.msra.mxu0 0.0
  %6165 = vmatprep.subr.mxu0 0.0
  %6166 = vmatpush1.msra.mxu0 0.0
  %6167 = vmatprep.subr.mxu0 0.0
  %6168 = vmatpush1.msra.mxu0 0.0
  %6169 = vmatprep.subr.mxu0 0.0
  %6170 = vmatpush1.msra.mxu0 0.0
  %6171 = vmatprep.subr.mxu0 0.0
  %6172 = vmatpush1.msra.mxu0 0.0
  %6173 = vmatprep.subr.mxu0 0.0
  %6174 = vmatpush1.msra.mxu0 0.0
  %6175 = vmatprep.mubr.f32.mxu0 0.0
  %6176 = vmatmul.mubr.f32.gmra.mrb[0].mxu0 %v6109
  %v6177 = vpop.f32.mrb[0].mxu0
  %v6178 = vadd.f32 0.0, %v6177
  %v6179 = vpop.f32.mrb[0].mxu0
  %6180 = vdwg.mxu0
  %v6182 = vrot.slane %v6178, 4
  %v6184 = vadd.f32 %v3632, %v6182
  %v6185 = vxor.u32 %v6184, 2147483648
  %v6186 = vmul.f32 %v6185, 1.442695
  %v6187 = vpow.pop %v6186
  %v6188 = vadd.f32 %v6187, 1.0
  %v6189 = vrcp.pop %v6188
  %v6190 = vmul.f32 1.0, %v6189
  %v6191 = vadd.f32 %v6178, %v3808
  %v6193 = vrot.slane %v6191, 4
  %6194 = vrot.lane.b32.xlu0 %v6193, 64
  %v6195 = vpop.permute.xlu0 %6194
  %v6197 = vmul.f32 %v6190, %v6195
  %6199 = vrot.lane.b32.xlu0 %v6197, 64
  %v6200 = vpop.permute.xlu0 %6199
  %v6202 = vadd.f32 %v3632, %v6200
  %v6203 = vtanh.pop %v6202
  %v6204 = vsub.f32 1.0, %v6190
  %6206 = vrot.lane.b32.xlu0 %v6203, 96
  %v6207 = vpop.permute.xlu0 %6206
  %v6209 = vmul.f32 %v6204, %v6207
  %v6210 = vrot.slane %v5973, 6
  %v6212 = vmul.f32 %v6190, %v6210
  %v6213 = vadd.f32 %v6209, %v6212
  %v6214 = vrot.slane %v6081, 4
  %6215 = vrot.lane.b32.xlu0 %v6214, 96
  %v6216 = vpop.permute.xlu0 %6215
  %v6217 = vsel %vm63, %v6216, 0
  %6219 = vmatprep.subr.mxu0 0.0
  %6220 = vmatpush1.msra.mxu0 %v3520
  %6221 = vmatprep.subr.mxu0 0.0
  %6222 = vmatpush1.msra.mxu0 %v3521
  %6223 = vmatprep.subr.mxu0 0.0
  %6224 = vmatpush1.msra.mxu0 %v3522
  %6225 = vmatprep.subr.mxu0 0.0
  %6226 = vmatpush1.msra.mxu0 %v3523
  %6227 = vmatprep.subr.mxu0 0.0
  %6228 = vmatpush1.msra.mxu0 0.0
  %6229 = vmatprep.subr.mxu0 0.0
  %6230 = vmatpush1.msra.mxu0 0.0
  %6231 = vmatprep.subr.mxu0 0.0
  %6232 = vmatpush1.msra.mxu0 0.0
  %6233 = vmatprep.subr.mxu0 0.0
  %6234 = vmatpush1.msra.mxu0 0.0
  %6235 = vmatprep.subr.mxu0 0.0
  %6236 = vmatpush1.msra.mxu0 0.0
  %6237 = vmatprep.subr.mxu0 0.0
  %6238 = vmatpush1.msra.mxu0 0.0
  %6239 = vmatprep.subr.mxu0 0.0
  %6240 = vmatpush1.msra.mxu0 0.0
  %6241 = vmatprep.subr.mxu0 0.0
  %6242 = vmatpush1.msra.mxu0 0.0
  %6243 = vmatprep.subr.mxu0 0.0
  %6244 = vmatpush1.msra.mxu0 0.0
  %6245 = vmatprep.subr.mxu0 0.0
  %6246 = vmatpush1.msra.mxu0 0.0
  %6247 = vmatprep.subr.mxu0 0.0
  %6248 = vmatpush1.msra.mxu0 0.0
  %6249 = vmatprep.subr.mxu0 0.0
  %6250 = vmatpush1.msra.mxu0 0.0
  %6251 = vmatprep.subr.mxu0 0.0
  %6252 = vmatpush1.msra.mxu0 0.0
  %6253 = vmatprep.subr.mxu0 0.0
  %6254 = vmatpush1.msra.mxu0 0.0
  %6255 = vmatprep.subr.mxu0 0.0
  %6256 = vmatpush1.msra.mxu0 0.0
  %6257 = vmatprep.subr.mxu0 0.0
  %6258 = vmatpush1.msra.mxu0 0.0
  %6259 = vmatprep.subr.mxu0 0.0
  %6260 = vmatpush1.msra.mxu0 0.0
  %6261 = vmatprep.subr.mxu0 0.0
  %6262 = vmatpush1.msra.mxu0 0.0
  %6263 = vmatprep.subr.mxu0 0.0
  %6264 = vmatpush1.msra.mxu0 0.0
  %6265 = vmatprep.subr.mxu0 0.0
  %6266 = vmatpush1.msra.mxu0 0.0
  %6267 = vmatprep.subr.mxu0 0.0
  %6268 = vmatpush1.msra.mxu0 0.0
  %6269 = vmatprep.subr.mxu0 0.0
  %6270 = vmatpush1.msra.mxu0 0.0
  %6271 = vmatprep.subr.mxu0 0.0
  %6272 = vmatpush1.msra.mxu0 0.0
  %6273 = vmatprep.subr.mxu0 0.0
  %6274 = vmatpush1.msra.mxu0 0.0
  %6275 = vmatprep.subr.mxu0 0.0
  %6276 = vmatpush1.msra.mxu0 0.0
  %6277 = vmatprep.subr.mxu0 0.0
  %6278 = vmatpush1.msra.mxu0 0.0
  %6279 = vmatprep.subr.mxu0 0.0
  %6280 = vmatpush1.msra.mxu0 0.0
  %6281 = vmatprep.subr.mxu0 0.0
  %6282 = vmatpush1.msra.mxu0 0.0
  %6283 = vmatprep.mubr.f32.mxu0 0.0
  %6284 = vmatmul.mubr.f32.gmra.mrb[0].mxu0 %v6217
  %v6285 = vpop.f32.mrb[0].mxu0
  %v6286 = vadd.f32 0.0, %v6285
  %v6287 = vpop.f32.mrb[0].mxu0
  %6288 = vdwg.mxu0
  %v6290 = vrot.slane %v6286, 6
  %v6292 = vadd.f32 %v3716, %v6290
  %v6293 = vxor.u32 %v6292, 2147483648
  %v6294 = vmul.f32 %v6293, 1.442695
  %v6295 = vpow.pop %v6294
  %v6296 = vadd.f32 %v6295, 1.0
  %v6297 = vrcp.pop %v6296
  %v6298 = vmul.f32 1.0, %v6297
  %v6299 = vadd.f32 %v6286, %v3912
  %v6301 = vrot.slane %v6299, 6
  %6302 = vrot.lane.b32.xlu0 %v6301, 64
  %v6303 = vpop.permute.xlu0 %6302
  %v6305 = vmul.f32 %v6298, %v6303
  %6307 = vrot.lane.b32.xlu0 %v6305, 64
  %v6308 = vpop.permute.xlu0 %6307
  %v6310 = vadd.f32 %v3716, %v6308
  %v6311 = vtanh.pop %v6310
  %v6312 = vsub.f32 1.0, %v6298
  %6314 = vrot.lane.b32.xlu0 %v6311, 96
  %v6315 = vpop.permute.xlu0 %6314
  %v6317 = vmul.f32 %v6312, %v6315
  %v6318 = vrot.slane %v6081, 2
  %v6320 = vmul.f32 %v6298, %v6318
  %v6321 = vadd.f32 %v6317, %v6320
  %v6323 = vcombine.high %v6213, %v6213
  %v6325 = vunpack.c.l.s4 1983009808
  %v6326 = vunpack.c.0.s8 %v6325
  %v6327 = vlaneseq
  %v6328 = vshrl.u32 %v6327, 7
  %v6329 = vsub.s32 %v6326, %v6328
  %v6330 = vrot.slane %v6323, %v6329
  %6331 = vrot.lane.b32.xlu0 %v6330, 32
  %v6332 = vpop.permute.xlu0 %6331
  %6334 = vst.msk [vmem:[#allocation3 + $0x4] sm:$0x3] %vm4200, %v6332
  %v6337 = vunpack.c.l.s4 1983009808
  %v6338 = vunpack.c.0.s8 %v6337
  %v6339 = vlaneseq
  %v6340 = vshrl.u32 %v6339, 7
  %v6341 = vsub.s32 %v6338, %v6340
  %v6342 = vrot.slane %v6321, %v6341
  %v6343 = vcombine.high %v6342, %v6342
  %6345 = vst.msk [vmem:[#allocation4 + $0x2] sm:$0x3] %vm275, %v6343
  %v6346 = vrot.slane %v6213, 4
  %6347 = vrot.lane.b32.xlu0 %v6346, 96
  %v6348 = vpop.permute.xlu0 %6347
  %v6349 = vsel %vm63, %v6348, 0
  %6351 = vmatprep.subr.mxu0 0.0
  %6352 = vmatpush1.msra.mxu0 %v3506
  %6353 = vmatprep.subr.mxu0 0.0
  %6354 = vmatpush1.msra.mxu0 %v3507
  %6355 = vmatprep.subr.mxu0 0.0
  %6356 = vmatpush1.msra.mxu0 %v3508
  %6357 = vmatprep.subr.mxu0 0.0
  %6358 = vmatpush1.msra.mxu0 %v3509
  %6359 = vmatprep.subr.mxu0 0.0
  %6360 = vmatpush1.msra.mxu0 0.0
  %6361 = vmatprep.subr.mxu0 0.0
  %6362 = vmatpush1.msra.mxu0 0.0
  %6363 = vmatprep.subr.mxu0 0.0
  %6364 = vmatpush1.msra.mxu0 0.0
  %6365 = vmatprep.subr.mxu0 0.0
  %6366 = vmatpush1.msra.mxu0 0.0
  %6367 = vmatprep.subr.mxu0 0.0
  %6368 = vmatpush1.msra.mxu0 0.0
  %6369 = vmatprep.subr.mxu0 0.0
  %6370 = vmatpush1.msra.mxu0 0.0
  %6371 = vmatprep.subr.mxu0 0.0
  %6372 = vmatpush1.msra.mxu0 0.0
  %6373 = vmatprep.subr.mxu0 0.0
  %6374 = vmatpush1.msra.mxu0 0.0
  %6375 = vmatprep.subr.mxu0 0.0
  %6376 = vmatpush1.msra.mxu0 0.0
  %6377 = vmatprep.subr.mxu0 0.0
  %6378 = vmatpush1.msra.mxu0 0.0
  %6379 = vmatprep.subr.mxu0 0.0
  %6380 = vmatpush1.msra.mxu0 0.0
  %6381 = vmatprep.subr.mxu0 0.0
  %6382 = vmatpush1.msra.mxu0 0.0
  %6383 = vmatprep.subr.mxu0 0.0
  %6384 = vmatpush1.msra.mxu0 0.0
  %6385 = vmatprep.subr.mxu0 0.0
  %6386 = vmatpush1.msra.mxu0 0.0
  %6387 = vmatprep.subr.mxu0 0.0
  %6388 = vmatpush1.msra.mxu0 0.0
  %6389 = vmatprep.subr.mxu0 0.0
  %6390 = vmatpush1.msra.mxu0 0.0
  %6391 = vmatprep.subr.mxu0 0.0
  %6392 = vmatpush1.msra.mxu0 0.0
  %6393 = vmatprep.subr.mxu0 0.0
  %6394 = vmatpush1.msra.mxu0 0.0
  %6395 = vmatprep.subr.mxu0 0.0
  %6396 = vmatpush1.msra.mxu0 0.0
  %6397 = vmatprep.subr.mxu0 0.0
  %6398 = vmatpush1.msra.mxu0 0.0
  %6399 = vmatprep.subr.mxu0 0.0
  %6400 = vmatpush1.msra.mxu0 0.0
  %6401 = vmatprep.subr.mxu0 0.0
  %6402 = vmatpush1.msra.mxu0 0.0
  %6403 = vmatprep.subr.mxu0 0.0
  %6404 = vmatpush1.msra.mxu0 0.0
  %6405 = vmatprep.subr.mxu0 0.0
  %6406 = vmatpush1.msra.mxu0 0.0
  %6407 = vmatprep.subr.mxu0 0.0
  %6408 = vmatpush1.msra.mxu0 0.0
  %6409 = vmatprep.subr.mxu0 0.0
  %6410 = vmatpush1.msra.mxu0 0.0
  %6411 = vmatprep.subr.mxu0 0.0
  %6412 = vmatpush1.msra.mxu0 0.0
  %6413 = vmatprep.subr.mxu0 0.0
  %6414 = vmatpush1.msra.mxu0 0.0
  %6415 = vmatprep.mubr.f32.mxu0 0.0
  %6416 = vmatmul.mubr.f32.gmra.mrb[0].mxu0 %v6349
  %v6417 = vpop.f32.mrb[0].mxu0
  %v6418 = vadd.f32 0.0, %v6417
  %v6419 = vpop.f32.mrb[0].mxu0
  %6420 = vdwg.mxu0
  %v6422 = vrot.slane %v6418, 2
  %v6424 = vadd.f32 %v3632, %v6422
  %v6425 = vxor.u32 %v6424, 2147483648
  %v6426 = vmul.f32 %v6425, 1.442695
  %v6427 = vpow.pop %v6426
  %v6428 = vadd.f32 %v6427, 1.0
  %v6429 = vrcp.pop %v6428
  %v6430 = vmul.f32 1.0, %v6429
  %v6431 = vadd.f32 %v6418, %v3808
  %v6433 = vrot.slane %v6431, 2
  %6434 = vrot.lane.b32.xlu0 %v6433, 64
  %v6435 = vpop.permute.xlu0 %6434
  %v6437 = vmul.f32 %v6430, %v6435
  %6439 = vrot.lane.b32.xlu0 %v6437, 64
  %v6440 = vpop.permute.xlu0 %6439
  %v6442 = vadd.f32 %v3632, %v6440
  %v6443 = vtanh.pop %v6442
  %v6444 = vsub.f32 1.0, %v6430
  %6446 = vrot.lane.b32.xlu0 %v6443, 96
  %v6447 = vpop.permute.xlu0 %6446
  %v6449 = vmul.f32 %v6444, %v6447
  %v6450 = vrot.slane %v6213, 6
  %v6452 = vmul.f32 %v6430, %v6450
  %v6453 = vadd.f32 %v6449, %v6452
  %v6454 = vrot.slane %v6321, 2
  %6455 = vrot.lane.b32.xlu0 %v6454, 96
  %v6456 = vpop.permute.xlu0 %6455
  %v6457 = vsel %vm63, %v6456, 0
  %6459 = vmatprep.subr.mxu0 0.0
  %6460 = vmatpush1.msra.mxu0 %v3520
  %6461 = vmatprep.subr.mxu0 0.0
  %6462 = vmatpush1.msra.mxu0 %v3521
  %6463 = vmatprep.subr.mxu0 0.0
  %6464 = vmatpush1.msra.mxu0 %v3522
  %6465 = vmatprep.subr.mxu0 0.0
  %6466 = vmatpush1.msra.mxu0 %v3523
  %6467 = vmatprep.subr.mxu0 0.0
  %6468 = vmatpush1.msra.mxu0 0.0
  %6469 = vmatprep.subr.mxu0 0.0
  %6470 = vmatpush1.msra.mxu0 0.0
  %6471 = vmatprep.subr.mxu0 0.0
  %6472 = vmatpush1.msra.mxu0 0.0
  %6473 = vmatprep.subr.mxu0 0.0
  %6474 = vmatpush1.msra.mxu0 0.0
  %6475 = vmatprep.subr.mxu0 0.0
  %6476 = vmatpush1.msra.mxu0 0.0
  %6477 = vmatprep.subr.mxu0 0.0
  %6478 = vmatpush1.msra.mxu0 0.0
  %6479 = vmatprep.subr.mxu0 0.0
  %6480 = vmatpush1.msra.mxu0 0.0
  %6481 = vmatprep.subr.mxu0 0.0
  %6482 = vmatpush1.msra.mxu0 0.0
  %6483 = vmatprep.subr.mxu0 0.0
  %6484 = vmatpush1.msra.mxu0 0.0
  %6485 = vmatprep.subr.mxu0 0.0
  %6486 = vmatpush1.msra.mxu0 0.0
  %6487 = vmatprep.subr.mxu0 0.0
  %6488 = vmatpush1.msra.mxu0 0.0
  %6489 = vmatprep.subr.mxu0 0.0
  %6490 = vmatpush1.msra.mxu0 0.0
  %6491 = vmatprep.subr.mxu0 0.0
  %6492 = vmatpush1.msra.mxu0 0.0
  %6493 = vmatprep.subr.mxu0 0.0
  %6494 = vmatpush1.msra.mxu0 0.0
  %6495 = vmatprep.subr.mxu0 0.0
  %6496 = vmatpush1.msra.mxu0 0.0
  %6497 = vmatprep.subr.mxu0 0.0
  %6498 = vmatpush1.msra.mxu0 0.0
  %6499 = vmatprep.subr.mxu0 0.0
  %6500 = vmatpush1.msra.mxu0 0.0
  %6501 = vmatprep.subr.mxu0 0.0
  %6502 = vmatpush1.msra.mxu0 0.0
  %6503 = vmatprep.subr.mxu0 0.0
  %6504 = vmatpush1.msra.mxu0 0.0
  %6505 = vmatprep.subr.mxu0 0.0
  %6506 = vmatpush1.msra.mxu0 0.0
  %6507 = vmatprep.subr.mxu0 0.0
  %6508 = vmatpush1.msra.mxu0 0.0
  %6509 = vmatprep.subr.mxu0 0.0
  %6510 = vmatpush1.msra.mxu0 0.0
  %6511 = vmatprep.subr.mxu0 0.0
  %6512 = vmatpush1.msra.mxu0 0.0
  %6513 = vmatprep.subr.mxu0 0.0
  %6514 = vmatpush1.msra.mxu0 0.0
  %6515 = vmatprep.subr.mxu0 0.0
  %6516 = vmatpush1.msra.mxu0 0.0
  %6517 = vmatprep.subr.mxu0 0.0
  %6518 = vmatpush1.msra.mxu0 0.0
  %6519 = vmatprep.subr.mxu0 0.0
  %6520 = vmatpush1.msra.mxu0 0.0
  %6521 = vmatprep.subr.mxu0 0.0
  %6522 = vmatpush1.msra.mxu0 0.0
  %6523 = vmatprep.mubr.f32.mxu0 0.0
  %6524 = vmatmul.mubr.f32.gmra.mrb[0].mxu0 %v6457
  %v6525 = vpop.f32.mrb[0].mxu0
  %v6526 = vadd.f32 0.0, %v6525
  %v6527 = vpop.f32.mrb[0].mxu0
  %6528 = vdwg.mxu0
  %v6529 = vadd.f32 %v3716, %v6526
  %v6530 = vxor.u32 %v6529, 2147483648
  %v6531 = vmul.f32 %v6530, 1.442695
  %v6532 = vpow.pop %v6531
  %v6533 = vadd.f32 %v6532, 1.0
  %v6534 = vrcp.pop %v6533
  %v6535 = vmul.f32 1.0, %v6534
  %v6536 = vadd.f32 %v6526, %v3912
  %6538 = vrot.lane.b32.xlu0 %v6536, 64
  %v6539 = vpop.permute.xlu0 %6538
  %v6541 = vmul.f32 %v6535, %v6539
  %6543 = vrot.lane.b32.xlu0 %v6541, 64
  %v6544 = vpop.permute.xlu0 %6543
  %v6546 = vadd.f32 %v3716, %v6544
  %v6547 = vtanh.pop %v6546
  %v6548 = vsub.f32 1.0, %v6535
  %6550 = vrot.lane.b32.xlu0 %v6547, 96
  %v6551 = vpop.permute.xlu0 %6550
  %v6553 = vmul.f32 %v6548, %v6551
  %v6555 = vmul.f32 %v6535, %v6454
  %v6556 = vadd.f32 %v6553, %v6555
  %v6558 = vcombine.high %v6453, %v6453
  %v6560 = vunpack.c.l.s4 1983009808
  %v6561 = vunpack.c.0.s8 %v6560
  %v6562 = vlaneseq
  %v6563 = vshrl.u32 %v6562, 7
  %v6564 = vsub.s32 %v6561, %v6563
  %v6565 = vrot.slane %v6558, %v6564
  %v6566 = vcombine.high %v6565, %v6565
  %6567 = vrot.lane.b32.xlu0 %v6566, 64
  %v6568 = vpop.permute.xlu0 %6567
  %6570 = vst.msk [vmem:[#allocation3 + $0x4] sm:$0x3] %vm3960, %v6568
  %v6573 = vunpack.c.l.s4 1983009808
  %v6574 = vunpack.c.0.s8 %v6573
  %v6575 = vlaneseq
  %v6576 = vshrl.u32 %v6575, 7
  %v6577 = vsub.s32 %v6574, %v6576
  %v6578 = vrot.slane %v6556, %v6577
  %6579 = vrot.lane.b32.xlu0 %v6578, 96
  %v6580 = vpop.permute.xlu0 %6579
  %6582 = vst.msk [vmem:[#allocation4 + $0x2] sm:$0x3] %vm273, %v6580
  %v6583 = vrot.slane %v6453, 6
  %6584 = vrot.lane.b32.xlu0 %v6583, 96
  %v6585 = vpop.permute.xlu0 %6584
  %v6586 = vsel %vm63, %v6585, 0
  %6588 = vmatprep.subr.mxu0 0.0
  %6589 = vmatpush1.msra.mxu0 %v3506
  %6590 = vmatprep.subr.mxu0 0.0
  %6591 = vmatpush1.msra.mxu0 %v3507
  %6592 = vmatprep.subr.mxu0 0.0
  %6593 = vmatpush1.msra.mxu0 %v3508
  %6594 = vmatprep.subr.mxu0 0.0
  %6595 = vmatpush1.msra.mxu0 %v3509
  %6596 = vmatprep.subr.mxu0 0.0
  %6597 = vmatpush1.msra.mxu0 0.0
  %6598 = vmatprep.subr.mxu0 0.0
  %6599 = vmatpush1.msra.mxu0 0.0
  %6600 = vmatprep.subr.mxu0 0.0
  %6601 = vmatpush1.msra.mxu0 0.0
  %6602 = vmatprep.subr.mxu0 0.0
  %6603 = vmatpush1.msra.mxu0 0.0
  %6604 = vmatprep.subr.mxu0 0.0
  %6605 = vmatpush1.msra.mxu0 0.0
  %6606 = vmatprep.subr.mxu0 0.0
  %6607 = vmatpush1.msra.mxu0 0.0
  %6608 = vmatprep.subr.mxu0 0.0
  %6609 = vmatpush1.msra.mxu0 0.0
  %6610 = vmatprep.subr.mxu0 0.0
  %6611 = vmatpush1.msra.mxu0 0.0
  %6612 = vmatprep.subr.mxu0 0.0
  %6613 = vmatpush1.msra.mxu0 0.0
  %6614 = vmatprep.subr.mxu0 0.0
  %6615 = vmatpush1.msra.mxu0 0.0
  %6616 = vmatprep.subr.mxu0 0.0
  %6617 = vmatpush1.msra.mxu0 0.0
  %6618 = vmatprep.subr.mxu0 0.0
  %6619 = vmatpush1.msra.mxu0 0.0
  %6620 = vmatprep.subr.mxu0 0.0
  %6621 = vmatpush1.msra.mxu0 0.0
  %6622 = vmatprep.subr.mxu0 0.0
  %6623 = vmatpush1.msra.mxu0 0.0
  %6624 = vmatprep.subr.mxu0 0.0
  %6625 = vmatpush1.msra.mxu0 0.0
  %6626 = vmatprep.subr.mxu0 0.0
  %6627 = vmatpush1.msra.mxu0 0.0
  %6628 = vmatprep.subr.mxu0 0.0
  %6629 = vmatpush1.msra.mxu0 0.0
  %6630 = vmatprep.subr.mxu0 0.0
  %6631 = vmatpush1.msra.mxu0 0.0
  %6632 = vmatprep.subr.mxu0 0.0
  %6633 = vmatpush1.msra.mxu0 0.0
  %6634 = vmatprep.subr.mxu0 0.0
  %6635 = vmatpush1.msra.mxu0 0.0
  %6636 = vmatprep.subr.mxu0 0.0
  %6637 = vmatpush1.msra.mxu0 0.0
  %6638 = vmatprep.subr.mxu0 0.0
  %6639 = vmatpush1.msra.mxu0 0.0
  %6640 = vmatprep.subr.mxu0 0.0
  %6641 = vmatpush1.msra.mxu0 0.0
  %6642 = vmatprep.subr.mxu0 0.0
  %6643 = vmatpush1.msra.mxu0 0.0
  %6644 = vmatprep.subr.mxu0 0.0
  %6645 = vmatpush1.msra.mxu0 0.0
  %6646 = vmatprep.subr.mxu0 0.0
  %6647 = vmatpush1.msra.mxu0 0.0
  %6648 = vmatprep.subr.mxu0 0.0
  %6649 = vmatpush1.msra.mxu0 0.0
  %6650 = vmatprep.subr.mxu0 0.0
  %6651 = vmatpush1.msra.mxu0 0.0
  %6652 = vmatprep.mubr.f32.mxu0 0.0
  %6653 = vmatmul.mubr.f32.gmra.mrb[0].mxu0 %v6586
  %v6654 = vpop.f32.mrb[0].mxu0
  %v6655 = vadd.f32 0.0, %v6654
  %v6656 = vpop.f32.mrb[0].mxu0
  %6657 = vdwg.mxu0
  %v6658 = vadd.f32 %v3637, %v6655
  %v6659 = vxor.u32 %v6658, 2147483648
  %v6660 = vmul.f32 %v6659, 1.442695
  %v6661 = vpow.pop %v6660
  %v6662 = vadd.f32 %v6661, 1.0
  %v6663 = vrcp.pop %v6662
  %v6664 = vmul.f32 1.0, %v6663
  %v6665 = vadd.f32 %v6655, %v3808
  %6667 = vrot.lane.b32.xlu0 %v6665, 64
  %v6668 = vpop.permute.xlu0 %6667
  %v6670 = vmul.f32 %v6664, %v6668
  %6672 = vrot.lane.b32.xlu0 %v6670, 64
  %v6673 = vpop.permute.xlu0 %6672
  %v6675 = vadd.f32 %v3637, %v6673
  %v6676 = vtanh.pop %v6675
  %v6677 = vsub.f32 1.0, %v6664
  %6679 = vrot.lane.b32.xlu0 %v6676, 96
  %v6680 = vpop.permute.xlu0 %6679
  %v6682 = vmul.f32 %v6677, %v6680
  %v6684 = vmul.f32 %v6664, %v6583
  %v6685 = vadd.f32 %v6682, %v6684
  %6686 = vrot.lane.b32.xlu0 %v6556, 96
  %v6687 = vpop.permute.xlu0 %6686
  %v6688 = vsel %vm63, %v6687, 0
  %6690 = vmatprep.subr.mxu0 0.0
  %6691 = vmatpush1.msra.mxu0 %v3520
  %6692 = vmatprep.subr.mxu0 0.0
  %6693 = vmatpush1.msra.mxu0 %v3521
  %6694 = vmatprep.subr.mxu0 0.0
  %6695 = vmatpush1.msra.mxu0 %v3522
  %6696 = vmatprep.subr.mxu0 0.0
  %6697 = vmatpush1.msra.mxu0 %v3523
  %6698 = vmatprep.subr.mxu0 0.0
  %6699 = vmatpush1.msra.mxu0 0.0
  %6700 = vmatprep.subr.mxu0 0.0
  %6701 = vmatpush1.msra.mxu0 0.0
  %6702 = vmatprep.subr.mxu0 0.0
  %6703 = vmatpush1.msra.mxu0 0.0
  %6704 = vmatprep.subr.mxu0 0.0
  %6705 = vmatpush1.msra.mxu0 0.0
  %6706 = vmatprep.subr.mxu0 0.0
  %6707 = vmatpush1.msra.mxu0 0.0
  %6708 = vmatprep.subr.mxu0 0.0
  %6709 = vmatpush1.msra.mxu0 0.0
  %6710 = vmatprep.subr.mxu0 0.0
  %6711 = vmatpush1.msra.mxu0 0.0
  %6712 = vmatprep.subr.mxu0 0.0
  %6713 = vmatpush1.msra.mxu0 0.0
  %6714 = vmatprep.subr.mxu0 0.0
  %6715 = vmatpush1.msra.mxu0 0.0
  %6716 = vmatprep.subr.mxu0 0.0
  %6717 = vmatpush1.msra.mxu0 0.0
  %6718 = vmatprep.subr.mxu0 0.0
  %6719 = vmatpush1.msra.mxu0 0.0
  %6720 = vmatprep.subr.mxu0 0.0
  %6721 = vmatpush1.msra.mxu0 0.0
  %6722 = vmatprep.subr.mxu0 0.0
  %6723 = vmatpush1.msra.mxu0 0.0
  %6724 = vmatprep.subr.mxu0 0.0
  %6725 = vmatpush1.msra.mxu0 0.0
  %6726 = vmatprep.subr.mxu0 0.0
  %6727 = vmatpush1.msra.mxu0 0.0
  %6728 = vmatprep.subr.mxu0 0.0
  %6729 = vmatpush1.msra.mxu0 0.0
  %6730 = vmatprep.subr.mxu0 0.0
  %6731 = vmatpush1.msra.mxu0 0.0
  %6732 = vmatprep.subr.mxu0 0.0
  %6733 = vmatpush1.msra.mxu0 0.0
  %6734 = vmatprep.subr.mxu0 0.0
  %6735 = vmatpush1.msra.mxu0 0.0
  %6736 = vmatprep.subr.mxu0 0.0
  %6737 = vmatpush1.msra.mxu0 0.0
  %6738 = vmatprep.subr.mxu0 0.0
  %6739 = vmatpush1.msra.mxu0 0.0
  %6740 = vmatprep.subr.mxu0 0.0
  %6741 = vmatpush1.msra.mxu0 0.0
  %6742 = vmatprep.subr.mxu0 0.0
  %6743 = vmatpush1.msra.mxu0 0.0
  %6744 = vmatprep.subr.mxu0 0.0
  %6745 = vmatpush1.msra.mxu0 0.0
  %6746 = vmatprep.subr.mxu0 0.0
  %6747 = vmatpush1.msra.mxu0 0.0
  %6748 = vmatprep.subr.mxu0 0.0
  %6749 = vmatpush1.msra.mxu0 0.0
  %6750 = vmatprep.subr.mxu0 0.0
  %6751 = vmatpush1.msra.mxu0 0.0
  %6752 = vmatprep.subr.mxu0 0.0
  %6753 = vmatpush1.msra.mxu0 0.0
  %6754 = vmatprep.mubr.f32.mxu0 0.0
  %6755 = vmatmul.mubr.f32.gmra.mrb[0].mxu0 %v6688
  %v6756 = vpop.f32.mrb[0].mxu0
  %v6757 = vadd.f32 0.0, %v6756
  %v6758 = vpop.f32.mrb[0].mxu0
  %6759 = vdwg.mxu0
  %v6761 = vrot.slane %v6757, 2
  %v6763 = vadd.f32 %v3711, %v6761
  %v6764 = vxor.u32 %v6763, 2147483648
  %v6765 = vmul.f32 %v6764, 1.442695
  %v6766 = vpow.pop %v6765
  %v6767 = vadd.f32 %v6766, 1.0
  %v6768 = vrcp.pop %v6767
  %v6769 = vmul.f32 1.0, %v6768
  %v6770 = vadd.f32 %v6757, %v3912
  %v6772 = vrot.slane %v6770, 2
  %6773 = vrot.lane.b32.xlu0 %v6772, 64
  %v6774 = vpop.permute.xlu0 %6773
  %v6776 = vmul.f32 %v6769, %v6774
  %6778 = vrot.lane.b32.xlu0 %v6776, 64
  %v6779 = vpop.permute.xlu0 %6778
  %v6781 = vadd.f32 %v3711, %v6779
  %v6782 = vtanh.pop %v6781
  %v6783 = vsub.f32 1.0, %v6769
  %6785 = vrot.lane.b32.xlu0 %v6782, 96
  %v6786 = vpop.permute.xlu0 %6785
  %v6788 = vmul.f32 %v6783, %v6786
  %v6789 = vrot.slane %v6556, 2
  %v6791 = vmul.f32 %v6769, %v6789
  %v6792 = vadd.f32 %v6788, %v6791
  %v6795 = vunpack.c.l.s4 1983009808
  %v6796 = vunpack.c.0.s8 %v6795
  %v6797 = vlaneseq
  %v6798 = vshrl.u32 %v6797, 7
  %v6799 = vsub.s32 %v6796, %v6798
  %v6800 = vrot.slane %v6685, %v6799
  %6801 = vrot.lane.b32.xlu0 %v6800, 96
  %v6802 = vpop.permute.xlu0 %6801
  %6804 = vst.msk [vmem:[#allocation3 + $0x6] sm:$0x3] %vm273, %v6802
  %v6806 = vcombine.high %v6792, %v6792
  %v6808 = vunpack.c.l.s4 1983009808
  %v6809 = vunpack.c.0.s8 %v6808
  %v6810 = vlaneseq
  %v6811 = vshrl.u32 %v6810, 7
  %v6812 = vsub.s32 %v6809, %v6811
  %v6813 = vrot.slane %v6806, %v6812
  %v6814 = vcombine.high %v6813, %v6813
  %6815 = vrot.lane.b32.xlu0 %v6814, 64
  %v6816 = vpop.permute.xlu0 %6815
  %6818 = vst.msk [vmem:[#allocation4] sm:$0x3] %vm3960, %v6816
  %6819 = vrot.lane.b32.xlu0 %v6685, 96
  %v6820 = vpop.permute.xlu0 %6819
  %v6821 = vsel %vm63, %v6820, 0
  %6823 = vmatprep.subr.mxu0 0.0
  %6824 = vmatpush1.msra.mxu0 %v3506
  %6825 = vmatprep.subr.mxu0 0.0
  %6826 = vmatpush1.msra.mxu0 %v3507
  %6827 = vmatprep.subr.mxu0 0.0
  %6828 = vmatpush1.msra.mxu0 %v3508
  %6829 = vmatprep.subr.mxu0 0.0
  %6830 = vmatpush1.msra.mxu0 %v3509
  %6831 = vmatprep.subr.mxu0 0.0
  %6832 = vmatpush1.msra.mxu0 0.0
  %6833 = vmatprep.subr.mxu0 0.0
  %6834 = vmatpush1.msra.mxu0 0.0
  %6835 = vmatprep.subr.mxu0 0.0
  %6836 = vmatpush1.msra.mxu0 0.0
  %6837 = vmatprep.subr.mxu0 0.0
  %6838 = vmatpush1.msra.mxu0 0.0
  %6839 = vmatprep.subr.mxu0 0.0
  %6840 = vmatpush1.msra.mxu0 0.0
  %6841 = vmatprep.subr.mxu0 0.0
  %6842 = vmatpush1.msra.mxu0 0.0
  %6843 = vmatprep.subr.mxu0 0.0
  %6844 = vmatpush1.msra.mxu0 0.0
  %6845 = vmatprep.subr.mxu0 0.0
  %6846 = vmatpush1.msra.mxu0 0.0
  %6847 = vmatprep.subr.mxu0 0.0
  %6848 = vmatpush1.msra.mxu0 0.0
  %6849 = vmatprep.subr.mxu0 0.0
  %6850 = vmatpush1.msra.mxu0 0.0
  %6851 = vmatprep.subr.mxu0 0.0
  %6852 = vmatpush1.msra.mxu0 0.0
  %6853 = vmatprep.subr.mxu0 0.0
  %6854 = vmatpush1.msra.mxu0 0.0
  %6855 = vmatprep.subr.mxu0 0.0
  %6856 = vmatpush1.msra.mxu0 0.0
  %6857 = vmatprep.subr.mxu0 0.0
  %6858 = vmatpush1.msra.mxu0 0.0
  %6859 = vmatprep.subr.mxu0 0.0
  %6860 = vmatpush1.msra.mxu0 0.0
  %6861 = vmatprep.subr.mxu0 0.0
  %6862 = vmatpush1.msra.mxu0 0.0
  %6863 = vmatprep.subr.mxu0 0.0
  %6864 = vmatpush1.msra.mxu0 0.0
  %6865 = vmatprep.subr.mxu0 0.0
  %6866 = vmatpush1.msra.mxu0 0.0
  %6867 = vmatprep.subr.mxu0 0.0
  %6868 = vmatpush1.msra.mxu0 0.0
  %6869 = vmatprep.subr.mxu0 0.0
  %6870 = vmatpush1.msra.mxu0 0.0
  %6871 = vmatprep.subr.mxu0 0.0
  %6872 = vmatpush1.msra.mxu0 0.0
  %6873 = vmatprep.subr.mxu0 0.0
  %6874 = vmatpush1.msra.mxu0 0.0
  %6875 = vmatprep.subr.mxu0 0.0
  %6876 = vmatpush1.msra.mxu0 0.0
  %6877 = vmatprep.subr.mxu0 0.0
  %6878 = vmatpush1.msra.mxu0 0.0
  %6879 = vmatprep.subr.mxu0 0.0
  %6880 = vmatpush1.msra.mxu0 0.0
  %6881 = vmatprep.subr.mxu0 0.0
  %6882 = vmatpush1.msra.mxu0 0.0
  %6883 = vmatprep.subr.mxu0 0.0
  %6884 = vmatpush1.msra.mxu0 0.0
  %6885 = vmatprep.subr.mxu0 0.0
  %6886 = vmatpush1.msra.mxu0 0.0
  %6887 = vmatprep.mubr.f32.mxu0 0.0
  %6888 = vmatmul.mubr.f32.gmra.mrb[0].mxu0 %v6821
  %v6889 = vpop.f32.mrb[0].mxu0
  %v6890 = vadd.f32 0.0, %v6889
  %v6891 = vpop.f32.mrb[0].mxu0
  %6892 = vdwg.mxu0
  %v6894 = vrot.slane %v6890, 6
  %v6896 = vadd.f32 %v3637, %v6894
  %v6897 = vxor.u32 %v6896, 2147483648
  %v6898 = vmul.f32 %v6897, 1.442695
  %v6899 = vpow.pop %v6898
  %v6900 = vadd.f32 %v6899, 1.0
  %v6901 = vrcp.pop %v6900
  %v6902 = vmul.f32 1.0, %v6901
  %v6903 = vadd.f32 %v6890, %v3808
  %v6905 = vrot.slane %v6903, 6
  %6906 = vrot.lane.b32.xlu0 %v6905, 64
  %v6907 = vpop.permute.xlu0 %6906
  %v6909 = vmul.f32 %v6902, %v6907
  %6911 = vrot.lane.b32.xlu0 %v6909, 64
  %v6912 = vpop.permute.xlu0 %6911
  %v6914 = vadd.f32 %v3637, %v6912
  %v6915 = vtanh.pop %v6914
  %v6916 = vsub.f32 1.0, %v6902
  %6918 = vrot.lane.b32.xlu0 %v6915, 96
  %v6919 = vpop.permute.xlu0 %6918
  %v6921 = vmul.f32 %v6916, %v6919
  %v6922 = vrot.slane %v6685, 6
  %v6924 = vmul.f32 %v6902, %v6922
  %v6925 = vadd.f32 %v6921, %v6924
  %v6926 = vrot.slane %v6792, 6
  %6927 = vrot.lane.b32.xlu0 %v6926, 96
  %v6928 = vpop.permute.xlu0 %6927
  %v6929 = vsel %vm63, %v6928, 0
  %6931 = vmatprep.subr.mxu0 0.0
  %6932 = vmatpush1.msra.mxu0 %v3520
  %6933 = vmatprep.subr.mxu0 0.0
  %6934 = vmatpush1.msra.mxu0 %v3521
  %6935 = vmatprep.subr.mxu0 0.0
  %6936 = vmatpush1.msra.mxu0 %v3522
  %6937 = vmatprep.subr.mxu0 0.0
  %6938 = vmatpush1.msra.mxu0 %v3523
  %6939 = vmatprep.subr.mxu0 0.0
  %6940 = vmatpush1.msra.mxu0 0.0
  %6941 = vmatprep.subr.mxu0 0.0
  %6942 = vmatpush1.msra.mxu0 0.0
  %6943 = vmatprep.subr.mxu0 0.0
  %6944 = vmatpush1.msra.mxu0 0.0
  %6945 = vmatprep.subr.mxu0 0.0
  %6946 = vmatpush1.msra.mxu0 0.0
  %6947 = vmatprep.subr.mxu0 0.0
  %6948 = vmatpush1.msra.mxu0 0.0
  %6949 = vmatprep.subr.mxu0 0.0
  %6950 = vmatpush1.msra.mxu0 0.0
  %6951 = vmatprep.subr.mxu0 0.0
  %6952 = vmatpush1.msra.mxu0 0.0
  %6953 = vmatprep.subr.mxu0 0.0
  %6954 = vmatpush1.msra.mxu0 0.0
  %6955 = vmatprep.subr.mxu0 0.0
  %6956 = vmatpush1.msra.mxu0 0.0
  %6957 = vmatprep.subr.mxu0 0.0
  %6958 = vmatpush1.msra.mxu0 0.0
  %6959 = vmatprep.subr.mxu0 0.0
  %6960 = vmatpush1.msra.mxu0 0.0
  %6961 = vmatprep.subr.mxu0 0.0
  %6962 = vmatpush1.msra.mxu0 0.0
  %6963 = vmatprep.subr.mxu0 0.0
  %6964 = vmatpush1.msra.mxu0 0.0
  %6965 = vmatprep.subr.mxu0 0.0
  %6966 = vmatpush1.msra.mxu0 0.0
  %6967 = vmatprep.subr.mxu0 0.0
  %6968 = vmatpush1.msra.mxu0 0.0
  %6969 = vmatprep.subr.mxu0 0.0
  %6970 = vmatpush1.msra.mxu0 0.0
  %6971 = vmatprep.subr.mxu0 0.0
  %6972 = vmatpush1.msra.mxu0 0.0
  %6973 = vmatprep.subr.mxu0 0.0
  %6974 = vmatpush1.msra.mxu0 0.0
  %6975 = vmatprep.subr.mxu0 0.0
  %6976 = vmatpush1.msra.mxu0 0.0
  %6977 = vmatprep.subr.mxu0 0.0
  %6978 = vmatpush1.msra.mxu0 0.0
  %6979 = vmatprep.subr.mxu0 0.0
  %6980 = vmatpush1.msra.mxu0 0.0
  %6981 = vmatprep.subr.mxu0 0.0
  %6982 = vmatpush1.msra.mxu0 0.0
  %6983 = vmatprep.subr.mxu0 0.0
  %6984 = vmatpush1.msra.mxu0 0.0
  %6985 = vmatprep.subr.mxu0 0.0
  %6986 = vmatpush1.msra.mxu0 0.0
  %6987 = vmatprep.subr.mxu0 0.0
  %6988 = vmatpush1.msra.mxu0 0.0
  %6989 = vmatprep.subr.mxu0 0.0
  %6990 = vmatpush1.msra.mxu0 0.0
  %6991 = vmatprep.subr.mxu0 0.0
  %6992 = vmatpush1.msra.mxu0 0.0
  %6993 = vmatprep.subr.mxu0 0.0
  %6994 = vmatpush1.msra.mxu0 0.0
  %6995 = vmatprep.mubr.f32.mxu0 0.0
  %6996 = vmatmul.mubr.f32.gmra.mrb[0].mxu0 %v6929
  %v6997 = vpop.f32.mrb[0].mxu0
  %v6998 = vadd.f32 0.0, %v6997
  %v6999 = vpop.f32.mrb[0].mxu0
  %7000 = vdwg.mxu0
  %v7002 = vrot.slane %v6998, 4
  %v7004 = vadd.f32 %v3711, %v7002
  %v7005 = vxor.u32 %v7004, 2147483648
  %v7006 = vmul.f32 %v7005, 1.442695
  %v7007 = vpow.pop %v7006
  %v7008 = vadd.f32 %v7007, 1.0
  %v7009 = vrcp.pop %v7008
  %v7010 = vmul.f32 1.0, %v7009
  %v7011 = vadd.f32 %v6998, %v3912
  %v7013 = vrot.slane %v7011, 4
  %7014 = vrot.lane.b32.xlu0 %v7013, 64
  %v7015 = vpop.permute.xlu0 %7014
  %v7017 = vmul.f32 %v7010, %v7015
  %7019 = vrot.lane.b32.xlu0 %v7017, 64
  %v7020 = vpop.permute.xlu0 %7019
  %v7022 = vadd.f32 %v3711, %v7020
  %v7023 = vtanh.pop %v7022
  %v7024 = vsub.f32 1.0, %v7010
  %7026 = vrot.lane.b32.xlu0 %v7023, 96
  %v7027 = vpop.permute.xlu0 %7026
  %v7029 = vmul.f32 %v7024, %v7027
  %v7030 = vrot.slane %v6792, 2
  %v7032 = vmul.f32 %v7010, %v7030
  %v7033 = vadd.f32 %v7029, %v7032
  %v7036 = vunpack.c.l.s4 1983009808
  %v7037 = vunpack.c.0.s8 %v7036
  %v7038 = vlaneseq
  %v7039 = vshrl.u32 %v7038, 7
  %v7040 = vsub.s32 %v7037, %v7039
  %v7041 = vrot.slane %v6925, %v7040
  %v7042 = vcombine.high %v7041, %v7041
  %7044 = vst.msk [vmem:[#allocation3 + $0x6] sm:$0x3] %vm275, %v7042
  %v7046 = vcombine.high %v7033, %v7033
  %v7048 = vunpack.c.l.s4 1983009808
  %v7049 = vunpack.c.0.s8 %v7048
  %v7050 = vlaneseq
  %v7051 = vshrl.u32 %v7050, 7
  %v7052 = vsub.s32 %v7049, %v7051
  %v7053 = vrot.slane %v7046, %v7052
  %7054 = vrot.lane.b32.xlu0 %v7053, 32
  %v7055 = vpop.permute.xlu0 %7054
  %7057 = vst.msk [vmem:[#allocation4] sm:$0x3] %vm4200, %v7055
  %v7058 = vrot.slane %v6925, 2
  %7059 = vrot.lane.b32.xlu0 %v7058, 96
  %v7060 = vpop.permute.xlu0 %7059
  %v7061 = vsel %vm63, %v7060, 0
  %7063 = vmatprep.subr.mxu0 0.0
  %7064 = vmatpush1.msra.mxu0 %v3506
  %7065 = vmatprep.subr.mxu0 0.0
  %7066 = vmatpush1.msra.mxu0 %v3507
  %7067 = vmatprep.subr.mxu0 0.0
  %7068 = vmatpush1.msra.mxu0 %v3508
  %7069 = vmatprep.subr.mxu0 0.0
  %7070 = vmatpush1.msra.mxu0 %v3509
  %7071 = vmatprep.subr.mxu0 0.0
  %7072 = vmatpush1.msra.mxu0 0.0
  %7073 = vmatprep.subr.mxu0 0.0
  %7074 = vmatpush1.msra.mxu0 0.0
  %7075 = vmatprep.subr.mxu0 0.0
  %7076 = vmatpush1.msra.mxu0 0.0
  %7077 = vmatprep.subr.mxu0 0.0
  %7078 = vmatpush1.msra.mxu0 0.0
  %7079 = vmatprep.subr.mxu0 0.0
  %7080 = vmatpush1.msra.mxu0 0.0
  %7081 = vmatprep.subr.mxu0 0.0
  %7082 = vmatpush1.msra.mxu0 0.0
  %7083 = vmatprep.subr.mxu0 0.0
  %7084 = vmatpush1.msra.mxu0 0.0
  %7085 = vmatprep.subr.mxu0 0.0
  %7086 = vmatpush1.msra.mxu0 0.0
  %7087 = vmatprep.subr.mxu0 0.0
  %7088 = vmatpush1.msra.mxu0 0.0
  %7089 = vmatprep.subr.mxu0 0.0
  %7090 = vmatpush1.msra.mxu0 0.0
  %7091 = vmatprep.subr.mxu0 0.0
  %7092 = vmatpush1.msra.mxu0 0.0
  %7093 = vmatprep.subr.mxu0 0.0
  %7094 = vmatpush1.msra.mxu0 0.0
  %7095 = vmatprep.subr.mxu0 0.0
  %7096 = vmatpush1.msra.mxu0 0.0
  %7097 = vmatprep.subr.mxu0 0.0
  %7098 = vmatpush1.msra.mxu0 0.0
  %7099 = vmatprep.subr.mxu0 0.0
  %7100 = vmatpush1.msra.mxu0 0.0
  %7101 = vmatprep.subr.mxu0 0.0
  %7102 = vmatpush1.msra.mxu0 0.0
  %7103 = vmatprep.subr.mxu0 0.0
  %7104 = vmatpush1.msra.mxu0 0.0
  %7105 = vmatprep.subr.mxu0 0.0
  %7106 = vmatpush1.msra.mxu0 0.0
  %7107 = vmatprep.subr.mxu0 0.0
  %7108 = vmatpush1.msra.mxu0 0.0
  %7109 = vmatprep.subr.mxu0 0.0
  %7110 = vmatpush1.msra.mxu0 0.0
  %7111 = vmatprep.subr.mxu0 0.0
  %7112 = vmatpush1.msra.mxu0 0.0
  %7113 = vmatprep.subr.mxu0 0.0
  %7114 = vmatpush1.msra.mxu0 0.0
  %7115 = vmatprep.subr.mxu0 0.0
  %7116 = vmatpush1.msra.mxu0 0.0
  %7117 = vmatprep.subr.mxu0 0.0
  %7118 = vmatpush1.msra.mxu0 0.0
  %7119 = vmatprep.subr.mxu0 0.0
  %7120 = vmatpush1.msra.mxu0 0.0
  %7121 = vmatprep.subr.mxu0 0.0
  %7122 = vmatpush1.msra.mxu0 0.0
  %7123 = vmatprep.subr.mxu0 0.0
  %7124 = vmatpush1.msra.mxu0 0.0
  %7125 = vmatprep.subr.mxu0 0.0
  %7126 = vmatpush1.msra.mxu0 0.0
  %7127 = vmatprep.mubr.f32.mxu0 0.0
  %7128 = vmatmul.mubr.f32.gmra.mrb[0].mxu0 %v7061
  %v7129 = vpop.f32.mrb[0].mxu0
  %v7130 = vadd.f32 0.0, %v7129
  %v7131 = vpop.f32.mrb[0].mxu0
  %7132 = vdwg.mxu0
  %v7134 = vrot.slane %v7130, 4
  %v7136 = vadd.f32 %v3637, %v7134
  %v7137 = vxor.u32 %v7136, 2147483648
  %v7138 = vmul.f32 %v7137, 1.442695
  %v7139 = vpow.pop %v7138
  %v7140 = vadd.f32 %v7139, 1.0
  %v7141 = vrcp.pop %v7140
  %v7142 = vmul.f32 1.0, %v7141
  %v7143 = vadd.f32 %v7130, %v3808
  %v7145 = vrot.slane %v7143, 4
  %7146 = vrot.lane.b32.xlu0 %v7145, 64
  %v7147 = vpop.permute.xlu0 %7146
  %v7149 = vmul.f32 %v7142, %v7147
  %7151 = vrot.lane.b32.xlu0 %v7149, 64
  %v7152 = vpop.permute.xlu0 %7151
  %v7154 = vadd.f32 %v3637, %v7152
  %v7155 = vtanh.pop %v7154
  %v7156 = vsub.f32 1.0, %v7142
  %7158 = vrot.lane.b32.xlu0 %v7155, 96
  %v7159 = vpop.permute.xlu0 %7158
  %v7161 = vmul.f32 %v7156, %v7159
  %v7162 = vrot.slane %v6925, 6
  %v7164 = vmul.f32 %v7142, %v7162
  %v7165 = vadd.f32 %v7161, %v7164
  %v7166 = vrot.slane %v7033, 4
  %7167 = vrot.lane.b32.xlu0 %v7166, 96
  %v7168 = vpop.permute.xlu0 %7167
  %v7169 = vsel %vm63, %v7168, 0
  %7171 = vmatprep.subr.mxu0 0.0
  %7172 = vmatpush1.msra.mxu0 %v3520
  %7173 = vmatprep.subr.mxu0 0.0
  %7174 = vmatpush1.msra.mxu0 %v3521
  %7175 = vmatprep.subr.mxu0 0.0
  %7176 = vmatpush1.msra.mxu0 %v3522
  %7177 = vmatprep.subr.mxu0 0.0
  %7178 = vmatpush1.msra.mxu0 %v3523
  %7179 = vmatprep.subr.mxu0 0.0
  %7180 = vmatpush1.msra.mxu0 0.0
  %7181 = vmatprep.subr.mxu0 0.0
  %7182 = vmatpush1.msra.mxu0 0.0
  %7183 = vmatprep.subr.mxu0 0.0
  %7184 = vmatpush1.msra.mxu0 0.0
  %7185 = vmatprep.subr.mxu0 0.0
  %7186 = vmatpush1.msra.mxu0 0.0
  %7187 = vmatprep.subr.mxu0 0.0
  %7188 = vmatpush1.msra.mxu0 0.0
  %7189 = vmatprep.subr.mxu0 0.0
  %7190 = vmatpush1.msra.mxu0 0.0
  %7191 = vmatprep.subr.mxu0 0.0
  %7192 = vmatpush1.msra.mxu0 0.0
  %7193 = vmatprep.subr.mxu0 0.0
  %7194 = vmatpush1.msra.mxu0 0.0
  %7195 = vmatprep.subr.mxu0 0.0
  %7196 = vmatpush1.msra.mxu0 0.0
  %7197 = vmatprep.subr.mxu0 0.0
  %7198 = vmatpush1.msra.mxu0 0.0
  %7199 = vmatprep.subr.mxu0 0.0
  %7200 = vmatpush1.msra.mxu0 0.0
  %7201 = vmatprep.subr.mxu0 0.0
  %7202 = vmatpush1.msra.mxu0 0.0
  %7203 = vmatprep.subr.mxu0 0.0
  %7204 = vmatpush1.msra.mxu0 0.0
  %7205 = vmatprep.subr.mxu0 0.0
  %7206 = vmatpush1.msra.mxu0 0.0
  %7207 = vmatprep.subr.mxu0 0.0
  %7208 = vmatpush1.msra.mxu0 0.0
  %7209 = vmatprep.subr.mxu0 0.0
  %7210 = vmatpush1.msra.mxu0 0.0
  %7211 = vmatprep.subr.mxu0 0.0
  %7212 = vmatpush1.msra.mxu0 0.0
  %7213 = vmatprep.subr.mxu0 0.0
  %7214 = vmatpush1.msra.mxu0 0.0
  %7215 = vmatprep.subr.mxu0 0.0
  %7216 = vmatpush1.msra.mxu0 0.0
  %7217 = vmatprep.subr.mxu0 0.0
  %7218 = vmatpush1.msra.mxu0 0.0
  %7219 = vmatprep.subr.mxu0 0.0
  %7220 = vmatpush1.msra.mxu0 0.0
  %7221 = vmatprep.subr.mxu0 0.0
  %7222 = vmatpush1.msra.mxu0 0.0
  %7223 = vmatprep.subr.mxu0 0.0
  %7224 = vmatpush1.msra.mxu0 0.0
  %7225 = vmatprep.subr.mxu0 0.0
  %7226 = vmatpush1.msra.mxu0 0.0
  %7227 = vmatprep.subr.mxu0 0.0
  %7228 = vmatpush1.msra.mxu0 0.0
  %7229 = vmatprep.subr.mxu0 0.0
  %7230 = vmatpush1.msra.mxu0 0.0
  %7231 = vmatprep.subr.mxu0 0.0
  %7232 = vmatpush1.msra.mxu0 0.0
  %7233 = vmatprep.subr.mxu0 0.0
  %7234 = vmatpush1.msra.mxu0 0.0
  %7235 = vmatprep.mubr.f32.mxu0 0.0
  %7236 = vmatmul.mubr.f32.gmra.mrb[0].mxu0 %v7169
  %v7237 = vpop.f32.mrb[0].mxu0
  %v7238 = vadd.f32 0.0, %v7237
  %v7239 = vpop.f32.mrb[0].mxu0
  %7240 = vdwg.mxu0
  %v7242 = vrot.slane %v7238, 6
  %v7244 = vadd.f32 %v3711, %v7242
  %v7245 = vxor.u32 %v7244, 2147483648
  %v7246 = vmul.f32 %v7245, 1.442695
  %v7247 = vpow.pop %v7246
  %v7248 = vadd.f32 %v7247, 1.0
  %v7249 = vrcp.pop %v7248
  %v7250 = vmul.f32 1.0, %v7249
  %v7251 = vadd.f32 %v7238, %v3912
  %v7253 = vrot.slane %v7251, 6
  %7254 = vrot.lane.b32.xlu0 %v7253, 64
  %v7255 = vpop.permute.xlu0 %7254
  %v7257 = vmul.f32 %v7250, %v7255
  %7259 = vrot.lane.b32.xlu0 %v7257, 64
  %v7260 = vpop.permute.xlu0 %7259
  %v7262 = vadd.f32 %v3711, %v7260
  %v7263 = vtanh.pop %v7262
  %v7264 = vsub.f32 1.0, %v7250
  %7266 = vrot.lane.b32.xlu0 %v7263, 96
  %v7267 = vpop.permute.xlu0 %7266
  %v7269 = vmul.f32 %v7264, %v7267
  %v7270 = vrot.slane %v7033, 2
  %v7272 = vmul.f32 %v7250, %v7270
  %v7273 = vadd.f32 %v7269, %v7272
  %v7275 = vcombine.high %v7165, %v7165
  %v7277 = vunpack.c.l.s4 1983009808
  %v7278 = vunpack.c.0.s8 %v7277
  %v7279 = vlaneseq
  %v7280 = vshrl.u32 %v7279, 7
  %v7281 = vsub.s32 %v7278, %v7280
  %v7282 = vrot.slane %v7275, %v7281
  %7283 = vrot.lane.b32.xlu0 %v7282, 32
  %v7284 = vpop.permute.xlu0 %7283
  %7286 = vst.msk [vmem:[#allocation3 + $0x6] sm:$0x3] %vm4200, %v7284
  %v7289 = vunpack.c.l.s4 1983009808
  %v7290 = vunpack.c.0.s8 %v7289
  %v7291 = vlaneseq
  %v7292 = vshrl.u32 %v7291, 7
  %v7293 = vsub.s32 %v7290, %v7292
  %v7294 = vrot.slane %v7273, %v7293
  %v7295 = vcombine.high %v7294, %v7294
  %7297 = vst.msk [vmem:[#allocation4] sm:$0x3] %vm275, %v7295
  %v7298 = vrot.slane %v7165, 4
  %7299 = vrot.lane.b32.xlu0 %v7298, 96
  %v7300 = vpop.permute.xlu0 %7299
  %v7301 = vsel %vm63, %v7300, 0
  %7303 = vmatprep.subr.mxu0 0.0
  %7304 = vmatpush1.msra.mxu0 %v3506
  %7305 = vmatprep.subr.mxu0 0.0
  %7306 = vmatpush1.msra.mxu0 %v3507
  %7307 = vmatprep.subr.mxu0 0.0
  %7308 = vmatpush1.msra.mxu0 %v3508
  %7309 = vmatprep.subr.mxu0 0.0
  %7310 = vmatpush1.msra.mxu0 %v3509
  %7311 = vmatprep.subr.mxu0 0.0
  %7312 = vmatpush1.msra.mxu0 0.0
  %7313 = vmatprep.subr.mxu0 0.0
  %7314 = vmatpush1.msra.mxu0 0.0
  %7315 = vmatprep.subr.mxu0 0.0
  %7316 = vmatpush1.msra.mxu0 0.0
  %7317 = vmatprep.subr.mxu0 0.0
  %7318 = vmatpush1.msra.mxu0 0.0
  %7319 = vmatprep.subr.mxu0 0.0
  %7320 = vmatpush1.msra.mxu0 0.0
  %7321 = vmatprep.subr.mxu0 0.0
  %7322 = vmatpush1.msra.mxu0 0.0
  %7323 = vmatprep.subr.mxu0 0.0
  %7324 = vmatpush1.msra.mxu0 0.0
  %7325 = vmatprep.subr.mxu0 0.0
  %7326 = vmatpush1.msra.mxu0 0.0
  %7327 = vmatprep.subr.mxu0 0.0
  %7328 = vmatpush1.msra.mxu0 0.0
  %7329 = vmatprep.subr.mxu0 0.0
  %7330 = vmatpush1.msra.mxu0 0.0
  %7331 = vmatprep.subr.mxu0 0.0
  %7332 = vmatpush1.msra.mxu0 0.0
  %7333 = vmatprep.subr.mxu0 0.0
  %7334 = vmatpush1.msra.mxu0 0.0
  %7335 = vmatprep.subr.mxu0 0.0
  %7336 = vmatpush1.msra.mxu0 0.0
  %7337 = vmatprep.subr.mxu0 0.0
  %7338 = vmatpush1.msra.mxu0 0.0
  %7339 = vmatprep.subr.mxu0 0.0
  %7340 = vmatpush1.msra.mxu0 0.0
  %7341 = vmatprep.subr.mxu0 0.0
  %7342 = vmatpush1.msra.mxu0 0.0
  %7343 = vmatprep.subr.mxu0 0.0
  %7344 = vmatpush1.msra.mxu0 0.0
  %7345 = vmatprep.subr.mxu0 0.0
  %7346 = vmatpush1.msra.mxu0 0.0
  %7347 = vmatprep.subr.mxu0 0.0
  %7348 = vmatpush1.msra.mxu0 0.0
  %7349 = vmatprep.subr.mxu0 0.0
  %7350 = vmatpush1.msra.mxu0 0.0
  %7351 = vmatprep.subr.mxu0 0.0
  %7352 = vmatpush1.msra.mxu0 0.0
  %7353 = vmatprep.subr.mxu0 0.0
  %7354 = vmatpush1.msra.mxu0 0.0
  %7355 = vmatprep.subr.mxu0 0.0
  %7356 = vmatpush1.msra.mxu0 0.0
  %7357 = vmatprep.subr.mxu0 0.0
  %7358 = vmatpush1.msra.mxu0 0.0
  %7359 = vmatprep.subr.mxu0 0.0
  %7360 = vmatpush1.msra.mxu0 0.0
  %7361 = vmatprep.subr.mxu0 0.0
  %7362 = vmatpush1.msra.mxu0 0.0
  %7363 = vmatprep.subr.mxu0 0.0
  %7364 = vmatpush1.msra.mxu0 0.0
  %7365 = vmatprep.subr.mxu0 0.0
  %7366 = vmatpush1.msra.mxu0 0.0
  %7367 = vmatprep.mubr.f32.mxu0 0.0
  %7368 = vmatmul.mubr.f32.gmra.mrb[0].mxu0 %v7301
  %v7369 = vpop.f32.mrb[0].mxu0
  %v7370 = vadd.f32 0.0, %v7369
  %v7371 = vpop.f32.mrb[0].mxu0
  %7372 = vdwg.mxu0
  %v7374 = vrot.slane %v7370, 2
  %v7376 = vadd.f32 %v3637, %v7374
  %v7377 = vxor.u32 %v7376, 2147483648
  %v7378 = vmul.f32 %v7377, 1.442695
  %v7379 = vpow.pop %v7378
  %v7380 = vadd.f32 %v7379, 1.0
  %v7381 = vrcp.pop %v7380
  %v7382 = vmul.f32 1.0, %v7381
  %v7383 = vadd.f32 %v7370, %v3808
  %v7385 = vrot.slane %v7383, 2
  %7386 = vrot.lane.b32.xlu0 %v7385, 64
  %v7387 = vpop.permute.xlu0 %7386
  %v7389 = vmul.f32 %v7382, %v7387
  %7391 = vrot.lane.b32.xlu0 %v7389, 64
  %v7392 = vpop.permute.xlu0 %7391
  %v7394 = vadd.f32 %v3637, %v7392
  %v7395 = vtanh.pop %v7394
  %v7396 = vsub.f32 1.0, %v7382
  %7398 = vrot.lane.b32.xlu0 %v7395, 96
  %v7399 = vpop.permute.xlu0 %7398
  %v7401 = vmul.f32 %v7396, %v7399
  %v7402 = vrot.slane %v7165, 6
  %v7404 = vmul.f32 %v7382, %v7402
  %v7405 = vadd.f32 %v7401, %v7404
  %v7406 = vrot.slane %v7273, 2
  %7407 = vrot.lane.b32.xlu0 %v7406, 96
  %v7408 = vpop.permute.xlu0 %7407
  %v7409 = vsel %vm63, %v7408, 0
  %7411 = vmatprep.subr.mxu0 0.0
  %7412 = vmatpush1.msra.mxu0 %v3520
  %7413 = vmatprep.subr.mxu0 0.0
  %7414 = vmatpush1.msra.mxu0 %v3521
  %7415 = vmatprep.subr.mxu0 0.0
  %7416 = vmatpush1.msra.mxu0 %v3522
  %7417 = vmatprep.subr.mxu0 0.0
  %7418 = vmatpush1.msra.mxu0 %v3523
  %7419 = vmatprep.subr.mxu0 0.0
  %7420 = vmatpush1.msra.mxu0 0.0
  %7421 = vmatprep.subr.mxu0 0.0
  %7422 = vmatpush1.msra.mxu0 0.0
  %7423 = vmatprep.subr.mxu0 0.0
  %7424 = vmatpush1.msra.mxu0 0.0
  %7425 = vmatprep.subr.mxu0 0.0
  %7426 = vmatpush1.msra.mxu0 0.0
  %7427 = vmatprep.subr.mxu0 0.0
  %7428 = vmatpush1.msra.mxu0 0.0
  %7429 = vmatprep.subr.mxu0 0.0
  %7430 = vmatpush1.msra.mxu0 0.0
  %7431 = vmatprep.subr.mxu0 0.0
  %7432 = vmatpush1.msra.mxu0 0.0
  %7433 = vmatprep.subr.mxu0 0.0
  %7434 = vmatpush1.msra.mxu0 0.0
  %7435 = vmatprep.subr.mxu0 0.0
  %7436 = vmatpush1.msra.mxu0 0.0
  %7437 = vmatprep.subr.mxu0 0.0
  %7438 = vmatpush1.msra.mxu0 0.0
  %7439 = vmatprep.subr.mxu0 0.0
  %7440 = vmatpush1.msra.mxu0 0.0
  %7441 = vmatprep.subr.mxu0 0.0
  %7442 = vmatpush1.msra.mxu0 0.0
  %7443 = vmatprep.subr.mxu0 0.0
  %7444 = vmatpush1.msra.mxu0 0.0
  %7445 = vmatprep.subr.mxu0 0.0
  %7446 = vmatpush1.msra.mxu0 0.0
  %7447 = vmatprep.subr.mxu0 0.0
  %7448 = vmatpush1.msra.mxu0 0.0
  %7449 = vmatprep.subr.mxu0 0.0
  %7450 = vmatpush1.msra.mxu0 0.0
  %7451 = vmatprep.subr.mxu0 0.0
  %7452 = vmatpush1.msra.mxu0 0.0
  %7453 = vmatprep.subr.mxu0 0.0
  %7454 = vmatpush1.msra.mxu0 0.0
  %7455 = vmatprep.subr.mxu0 0.0
  %7456 = vmatpush1.msra.mxu0 0.0
  %7457 = vmatprep.subr.mxu0 0.0
  %7458 = vmatpush1.msra.mxu0 0.0
  %7459 = vmatprep.subr.mxu0 0.0
  %7460 = vmatpush1.msra.mxu0 0.0
  %7461 = vmatprep.subr.mxu0 0.0
  %7462 = vmatpush1.msra.mxu0 0.0
  %7463 = vmatprep.subr.mxu0 0.0
  %7464 = vmatpush1.msra.mxu0 0.0
  %7465 = vmatprep.subr.mxu0 0.0
  %7466 = vmatpush1.msra.mxu0 0.0
  %7467 = vmatprep.subr.mxu0 0.0
  %7468 = vmatpush1.msra.mxu0 0.0
  %7469 = vmatprep.subr.mxu0 0.0
  %7470 = vmatpush1.msra.mxu0 0.0
  %7471 = vmatprep.subr.mxu0 0.0
  %7472 = vmatpush1.msra.mxu0 0.0
  %7473 = vmatprep.subr.mxu0 0.0
  %7474 = vmatpush1.msra.mxu0 0.0
  %7475 = vmatprep.mubr.f32.mxu0 0.0
  %7476 = vmatmul.mubr.f32.gmra.mrb[0].mxu0 %v7409
  %v7477 = vpop.f32.mrb[0].mxu0
  %v7478 = vadd.f32 0.0, %v7477
  %v7479 = vpop.f32.mrb[0].mxu0
  %7480 = vdwg.mxu0
  %v7481 = vadd.f32 %v3711, %v7478
  %v7482 = vxor.u32 %v7481, 2147483648
  %v7483 = vmul.f32 %v7482, 1.442695
  %v7484 = vpow.pop %v7483
  %v7485 = vadd.f32 %v7484, 1.0
  %v7486 = vrcp.pop %v7485
  %v7487 = vmul.f32 1.0, %v7486
  %v7488 = vadd.f32 %v7478, %v3912
  %7490 = vrot.lane.b32.xlu0 %v7488, 64
  %v7491 = vpop.permute.xlu0 %7490
  %v7493 = vmul.f32 %v7487, %v7491
  %7495 = vrot.lane.b32.xlu0 %v7493, 64
  %v7496 = vpop.permute.xlu0 %7495
  %v7498 = vadd.f32 %v3711, %v7496
  %v7499 = vtanh.pop %v7498
  %v7500 = vsub.f32 1.0, %v7487
  %7502 = vrot.lane.b32.xlu0 %v7499, 96
  %v7503 = vpop.permute.xlu0 %7502
  %v7505 = vmul.f32 %v7500, %v7503
  %v7507 = vmul.f32 %v7487, %v7406
  %v7508 = vadd.f32 %v7505, %v7507
  %v7510 = vcombine.high %v7405, %v7405
  %v7512 = vunpack.c.l.s4 1983009808
  %v7513 = vunpack.c.0.s8 %v7512
  %v7514 = vlaneseq
  %v7515 = vshrl.u32 %v7514, 7
  %v7516 = vsub.s32 %v7513, %v7515
  %v7517 = vrot.slane %v7510, %v7516
  %v7518 = vcombine.high %v7517, %v7517
  %7519 = vrot.lane.b32.xlu0 %v7518, 64
  %v7520 = vpop.permute.xlu0 %7519
  %7522 = vst.msk [vmem:[#allocation3 + $0x6] sm:$0x3] %vm3960, %v7520
  %v7525 = vunpack.c.l.s4 1983009808
  %v7526 = vunpack.c.0.s8 %v7525
  %v7527 = vlaneseq
  %v7528 = vshrl.u32 %v7527, 7
  %v7529 = vsub.s32 %v7526, %v7528
  %v7530 = vrot.slane %v7508, %v7529
  %7531 = vrot.lane.b32.xlu0 %v7530, 96
  %v7532 = vpop.permute.xlu0 %7531
  %7534 = vst.msk [vmem:[#allocation4] sm:$0x3] %vm273, %v7532
  %v7535 = vld [vmem:[#allocation3] sm:$0xff]
  %v7536 = vld [vmem:[#allocation4] sm:$0xff]
  %v7537 = vadd.f32 %v7535, %v7536
  %v7538 = vmul.f32 %v7537, 0.5
  %7539 = vst [vmem:[%s2] sm:$0xff] %v7538
  // Predicated region
  $region10: #{_lambda_.1} parent=0 // pred_check
    _
  $region11: #{_lambda_.1} parent=0 // pred_check_branch
    %7541 = sbr.rel (0) target = $region13
  $region12: #{_lambda_.1} parent=0 // pred_region
    _
  $region13: #{_lambda_.1} parent=0 // pred_fallthru
    _
  // Predicated region
  $region14: #{_lambda_.1} parent=0 // pred_check
    _
  $region15: #{_lambda_.1} parent=0 // pred_check_branch
    %7543 = sbr.rel (0) target = $region17
  $region16: #{_lambda_.1} parent=0 // pred_region
    _
  $region17: #{_lambda_.1} parent=0 // pred_fallthru
    _

</llo_original>
